<compile_context>
chip_gen: v7x
topology: tpu7x:2x2x1
jax: 0.10.0
libtpu: 0.0.40
codegen_flags: <defaults>
</compile_context>

<pallas_src>
import functools

import jax
import jax.numpy as jnp
from jax.experimental import pallas as pl
from jax.experimental.pallas import tpu as pltpu


# ----------------------------------------------------------------------------
# Head layout constants
# ----------------------------------------------------------------------------
ORDER = ("reg", "height", "dim", "rot", "vel", "heatmap")
HEAD_CHANNELS = {"reg": 2, "height": 1, "dim": 3, "rot": 2, "vel": 2, "heatmap": 3}

_OFFSETS = {}
_off = 0
for _n in ORDER:
    _OFFSETS[_n] = _off
    _off += HEAD_CHANNELS[_n]
C_TOTAL = _off                 # 13 real output channels
C_PAD = 128                    # zero-padded to a full lane tile (lane-dense GEMM/stores)
DIM_LO, DIM_HI = _OFFSETS["dim"], _OFFSETS["dim"] + HEAD_CHANNELS["dim"]
HM_LO, HM_HI = _OFFSETS["heatmap"], _OFFSETS["heatmap"] + HEAD_CHANNELS["heatmap"]


# ----------------------------------------------------------------------------
# Fused Pallas kernel: shared conv + 6x conv1 + 6x conv2 + get_bboxes post-proc
# ----------------------------------------------------------------------------
def _fused_head_kernel(x_ref, ws_ref, bs_ref, w1_ref, b1_ref, w2_ref, b2_ref,
                       o_ref,
                       xpad, col0, h0pad, col1, h1pad,
                       *, H, W, Cin, Cs, Chc):
    HW = H * W

    def im2col(pad_ref, col_ref, C):
        # one-shot im2col: 9 copies into contiguous (HW, 9*C) VMEM scratch
        for dh in range(3):
            for dw in range(3):
                t = dh * 3 + dw
                patch = pad_ref[pl.ds(dh, H), pl.ds(dw, W), :]
                col_ref[:, pl.ds(t * C, C)] = patch.reshape(HW, C)

    # ---- stage 0: zero-halo the input inside VMEM (no HBM pad round trip) ----
    xpad[...] = jnp.zeros_like(xpad)
    xpad[pl.ds(1, H), pl.ds(1, W), :] = x_ref[0]
    im2col(xpad, col0, Cin)

    # ---- shared_conv (+folded BN) + ReLU : single GEMM, K = 9*Cin ----
    h0 = jnp.dot(col0[...], ws_ref[...], preferred_element_type=jnp.float32)
    h0 = jnp.maximum(h0 + bs_ref[...], 0.0)                      # (HW, Cs)

    h0pad[...] = jnp.zeros_like(h0pad)
    h0pad[pl.ds(1, H), pl.ds(1, W), :] = h0.reshape(H, W, Cs)
    im2col(h0pad, col1, Cs)

    # ---- all 6 branch conv1 (+BN) + ReLU fused: one GEMM, K = 9*Cs, N = 6*Chead ----
    h1 = jnp.dot(col1[...], w1_ref[...], preferred_element_type=jnp.float32)
    h1 = jnp.maximum(h1 + b1_ref[...], 0.0)                      # (HW, 6*Chead)

    h1pad[...] = jnp.zeros_like(h1pad)
    h1pad[pl.ds(1, H), pl.ds(1, W), :] = h1.reshape(H, W, Chc)

    # ---- all 6 branch conv2 fused via block-diagonal weight (K = 6*Chead per tap,
    #      N = C_PAD = 128 lane-dense), accumulated over the 9 taps ----
    y = jnp.zeros((HW, C_PAD), jnp.float32)
    for dh in range(3):
        for dw in range(3):
            t = dh * 3 + dw
            patch = h1pad[pl.ds(dh, H), pl.ds(dw, W), :].reshape(HW, Chc)
            y = y + jnp.dot(patch, w2_ref[pl.ds(t * Chc, Chc), :],
                            preferred_element_type=jnp.float32)
    y = y + b2_ref[...]

    # ---- get_bboxes post-processing, fused on a lane-dense channel-major block ----
    yt = y.T                                                     # (C_PAD, HW), aligned
    ch = jax.lax.broadcasted_iota(jnp.int32, yt.shape, 0)
    is_sig = (ch >= HM_LO) & (ch < HM_HI)                        # heatmap -> sigmoid
    is_exp = (ch >= DIM_LO) & (ch < DIM_HI)                      # dim     -> exp
    yt = jnp.where(is_sig, jax.nn.sigmoid(yt),
                   jnp.where(is_exp, jnp.exp(yt), yt))
    o_ref[...] = yt.reshape(1, C_PAD, HW).astype(o_ref.dtype)    # unmasked full-width store


def fused_center_head(x_nhwc, packed):
    """x_nhwc: (N,H,W,Cin) -> channel-major (N, C_PAD, H*W)."""
    ws, bs, w1, b1, w2, b2 = packed
    N, H, W, Cin = x_nhwc.shape
    Cs = ws.shape[1]
    Chc = w1.shape[1]

    kernel = functools.partial(_fused_head_kernel, H=H, W=W, Cin=Cin, Cs=Cs, Chc=Chc)
    return pl.pallas_call(
        kernel,
        out_shape=jax.ShapeDtypeStruct((N, C_PAD, H * W), jnp.float32),
        grid_spec=pltpu.PrefetchScalarGridSpec(
            num_scalar_prefetch=0,
            grid=(N,),
            in_specs=[
                pl.BlockSpec((1, H, W, Cin), lambda n: (n, 0, 0, 0)),
                pl.BlockSpec(ws.shape, lambda n: (0, 0)),
                pl.BlockSpec(bs.shape, lambda n: (0, 0)),
                pl.BlockSpec(w1.shape, lambda n: (0, 0)),
                pl.BlockSpec(b1.shape, lambda n: (0, 0)),
                pl.BlockSpec(w2.shape, lambda n: (0, 0)),
                pl.BlockSpec(b2.shape, lambda n: (0, 0)),
            ],
            out_specs=pl.BlockSpec((1, C_PAD, H * W), lambda n: (n, 0, 0)),
            scratch_shapes=[
                pltpu.VMEM((H + 2, W + 2, Cin), jnp.float32),    # padded input
                pltpu.VMEM((H * W, 9 * Cin), jnp.float32),       # im2col (shared conv)
                pltpu.VMEM((H + 2, W + 2, Cs), jnp.float32),     # padded shared features
                pltpu.VMEM((H * W, 9 * Cs), jnp.float32),        # im2col (fused conv1)
                pltpu.VMEM((H + 2, W + 2, 6 * HEAD_CHANNELS_SUM_CH), jnp.float32)
                if False else
                pltpu.VMEM((H + 2, W + 2, Chc), jnp.float32),    # padded fused conv1 out
            ],
        ),
        compiler_params=pltpu.CompilerParams(
            dimension_semantics=("parallel",)),    # N images -> both TCs on v7x
    )(x_nhwc, ws, bs, w1, b1, w2, b2)


HEAD_CHANNELS_SUM_CH = 0  # placeholder (unused branch above); kept for clarity


# ----------------------------------------------------------------------------
# Parameter construction (Conv + folded inference-mode BN) and fused packing
# ----------------------------------------------------------------------------
def _conv_bn_folded(key, cin, cout, eps=1e-5):
    kw, kg, kb, km, kv = jax.random.split(key, 5)
    w = 0.05 * jax.random.normal(kw, (3, 3, cin, cout), jnp.float32)
    gamma = 1.0 + 0.1 * jax.random.normal(kg, (cout,), jnp.float32)
    beta = 0.1 * jax.random.normal(kb, (cout,), jnp.float32)
    mean = 0.1 * jax.random.normal(km, (cout,), jnp.float32)
    var = 1.0 + 0.05 * jnp.abs(jax.random.normal(kv, (cout,), jnp.float32))
    s = gamma / jnp.sqrt(var + eps)
    return w * s, beta - mean * s


def build_params(key, cin, c_share, c_head):
    params = {}
    key, k = jax.random.split(key)
    params["shared"] = _conv_bn_folded(k, cin, c_share)
    for name in ORDER:
        cout = HEAD_CHANNELS[name]
        key, k1, k2 = jax.random.split(key, 3)
        w1, b1 = _conv_bn_folded(k1, c_share, c_head)
        w2 = 0.05 * jax.random.normal(k2, (3, 3, c_head, cout), jnp.float32)
        if name == "heatmap":
            b2 = jnp.full((cout,), -2.19, jnp.float32)   # CenterHead heatmap bias init
        else:
            b2 = jnp.zeros((cout,), jnp.float32)
        params[name] = {"conv1": (w1, b1), "conv2": (w2, b2)}
    return params


def pack_params(params):
    """Flatten to 2-D GEMM weights; concat conv1s on Cout; block-diag conv2s, pad to 128."""
    ws, bs = params["shared"]
    cin, cs = ws.shape[2], ws.shape[3]
    ch = params[ORDER[0]]["conv1"][0].shape[3]

    ws_p = ws.reshape(9 * cin, cs)
    bs_p = bs.reshape(1, cs)

    w1_p = jnp.concatenate([params[n]["conv1"][0] for n in ORDER], axis=3)
    w1_p = w1_p.reshape(9 * cs, 6 * ch)
    b1_p = jnp.concatenate([params[n]["conv1"][1] for n in ORDER]).reshape(1, 6 * ch)

    w2_p = jnp.zeros((9, 6 * ch, C_PAD), jnp.float32)
    b2_p = jnp.zeros((1, C_PAD), jnp.float32)
    for b, n in enumerate(ORDER):
        wb, bb = params[n]["conv2"]
        c = HEAD_CHANNELS[n]
        off = _OFFSETS[n]
        w2_p = w2_p.at[:, b * ch:(b + 1) * ch, off:off + c].set(wb.reshape(9, ch, c))
        b2_p = b2_p.at[0, off:off + c].set(bb)
    w2_p = w2_p.reshape(9 * 6 * ch, C_PAD)
    return ws_p, bs_p, w1_p, b1_p, w2_p, b2_p


# ----------------------------------------------------------------------------
# Public forward (NCHW in, list of NCHW outs in get_bboxes order)
# ----------------------------------------------------------------------------
def subclass_center_head_bbox(x_nchw, packed):
    N, Cin, H, W = x_nchw.shape
    x = jnp.transpose(x_nchw, (0, 2, 3, 1))                   # NCHW -> NHWC
    out = fused_center_head(x, packed)                        # (N, C_PAD, H*W)
    out = out[:, :C_TOTAL].reshape(N, C_TOTAL, H, W)          # already channel-major

    def sl(name):
        o = _OFFSETS[name]
        return out[:, o:o + HEAD_CHANNELS[name]]

    # output order of SubclassCenterHeadBBox.get_bboxes
    return [sl("heatmap"), sl("rot"), sl("height"), sl("dim"), sl("vel"), sl("reg")]


# ----------------------------------------------------------------------------
# Pure-JAX reference (per-branch convs, for correctness check)
# ----------------------------------------------------------------------------
_FINAL_ACT = {"heatmap": "sigmoid", "dim": "exp"}


def _conv_ref(x, w, b, act):
    y = jax.lax.conv_general_dilated(
        x, w, window_strides=(1, 1), padding="SAME",
        dimension_numbers=("NHWC", "HWIO", "NHWC")) + b
    if act == "relu":
        y = jnp.maximum(y, 0.0)
    elif act == "sigmoid":
        y = jax.nn.sigmoid(y)
    elif act == "exp":
        y = jnp.exp(y)
    return y


def reference(x_nchw, params):
    x = jnp.transpose(x_nchw, (0, 2, 3, 1))
    x = _conv_ref(x, *params["shared"], act="relu")
    outs = {}
    for name in ORDER:
        h = _conv_ref(x, *params[name]["conv1"], act="relu")
        h = _conv_ref(h, *params[name]["conv2"], act=_FINAL_ACT.get(name, "none"))
        outs[name] = jnp.transpose(h, (0, 3, 1, 2))
    return [outs["heatmap"], outs["rot"], outs["height"],
            outs["dim"], outs["vel"], outs["reg"]]


if __name__ == "__main__":
    N, Cin, H, W = 2, 32, 16, 16          # small BEV feature map
    C_SHARE, C_HEAD = 32, 32

    key = jax.random.PRNGKey(0)
    kparams, kx = jax.random.split(key)
    params = build_params(kparams, Cin, C_SHARE, C_HEAD)
    packed = pack_params(params)
    x = jax.random.normal(kx, (N, Cin, H, W), jnp.float32)

    outs = subclass_center_head_bbox(x, packed)
    outs = jax.block_until_ready(outs)

    refs = reference(x, params)
    for got, want in zip(outs, refs):
        assert got.shape == want.shape, (got.shape, want.shape)
        assert jnp.allclose(got, want, atol=1e-4, rtol=1e-4), \
            float(jnp.max(jnp.abs(got - want)))

    print("KERNEL_OK")
</pallas_src>

<mosaic_0001>
module attributes {stable_mosaic.version = 11 : i64} {
  func.func @_fused_head_kernel(%arg0: i32, %arg1: memref<1x16x16x32xf32, #tpu.memory_space<vmem>>, %arg2: memref<288x32xf32, #tpu.memory_space<vmem>>, %arg3: memref<1x32xf32, #tpu.memory_space<vmem>>, %arg4: memref<288x192xf32, #tpu.memory_space<vmem>>, %arg5: memref<1x192xf32, #tpu.memory_space<vmem>>, %arg6: memref<1728x128xf32, #tpu.memory_space<vmem>>, %arg7: memref<1x128xf32, #tpu.memory_space<vmem>>, %arg8: memref<1x128x256xf32, #tpu.memory_space<vmem>>, %arg9: memref<18x18x32xf32, #tpu.memory_space<vmem>>, %arg10: memref<256x288xf32, #tpu.memory_space<vmem>>, %arg11: memref<18x18x32xf32, #tpu.memory_space<vmem>>, %arg12: memref<256x288xf32, #tpu.memory_space<vmem>>, %arg13: memref<18x18x192xf32, #tpu.memory_space<vmem>>) attributes {dimension_semantics = [#tpu.dimension_semantics<parallel>], iteration_bounds = array<i64: 2>, scalar_prefetch = 0 : i64, scratch_operands = 5 : i64, tpu.core_type = #tpu.core_type<tc>, window_params = [{transform_indices = @transform_0, window_bounds = array<i64: 1, 16, 16, 32>}, {pipeline_mode = #tpu.pipeline_mode<synchronous>, transform_indices = @transform_1, window_bounds = array<i64: 288, 32>}, {pipeline_mode = #tpu.pipeline_mode<synchronous>, transform_indices = @transform_2, window_bounds = array<i64: 1, 32>}, {pipeline_mode = #tpu.pipeline_mode<synchronous>, transform_indices = @transform_3, window_bounds = array<i64: 288, 192>}, {pipeline_mode = #tpu.pipeline_mode<synchronous>, transform_indices = @transform_4, window_bounds = array<i64: 1, 192>}, {pipeline_mode = #tpu.pipeline_mode<synchronous>, transform_indices = @transform_5, window_bounds = array<i64: 1728, 128>}, {pipeline_mode = #tpu.pipeline_mode<synchronous>, transform_indices = @transform_6, window_bounds = array<i64: 1, 128>}, {transform_indices = @transform_7, window_bounds = array<i64: 1, 128, 256>}]} {
    %cst = arith.constant 0.000000e+00 : f32
    %0 = vector.broadcast %cst : f32 to vector<18x18x32xf32>
    %c0 = arith.constant 0 : index
    %c0_0 = arith.constant 0 : index
    %c0_1 = arith.constant 0 : index
    %1 = vector.load %arg9[%c0, %c0_0, %c0_1] : memref<18x18x32xf32, #tpu.memory_space<vmem>>, vector<18x18x32xf32>
    tpu.vector_store %arg9[%c0, %c0_0, %c0_1], %0 {strides = array<i32>} : memref<18x18x32xf32, #tpu.memory_space<vmem>>, vector<18x18x32xf32>,
    %c0_2 = arith.constant 0 : index
    %c0_3 = arith.constant 0 : index
    %c0_4 = arith.constant 0 : index
    %c0_5 = arith.constant 0 : index
    %2 = vector.load %arg1[%c0_2, %c0_3, %c0_4, %c0_5] : memref<1x16x16x32xf32, #tpu.memory_space<vmem>>, vector<1x16x16x32xf32>
    %3 = vector.shape_cast %2 : vector<1x16x16x32xf32> to vector<16x16x32xf32>
    %c1 = arith.constant 1 : index
    %c1_6 = arith.constant 1 : index
    %c0_7 = arith.constant 0 : index
    %4 = vector.load %arg9[%c1, %c1_6, %c0_7] : memref<18x18x32xf32, #tpu.memory_space<vmem>>, vector<16x16x32xf32>
    tpu.vector_store %arg9[%c1, %c1_6, %c0_7], %3 {strides = array<i32>} : memref<18x18x32xf32, #tpu.memory_space<vmem>>, vector<16x16x32xf32>,
    %c0_8 = arith.constant 0 : index
    %c0_9 = arith.constant 0 : index
    %c0_10 = arith.constant 0 : index
    %5 = vector.load %arg9[%c0_8, %c0_9, %c0_10] : memref<18x18x32xf32, #tpu.memory_space<vmem>>, vector<16x16x32xf32>
    %6 = vector.shape_cast %5 : vector<16x16x32xf32> to vector<256x32xf32>
    %c0_11 = arith.constant 0 : index
    %c0_12 = arith.constant 0 : index
    %7 = vector.load %arg10[%c0_11, %c0_12] : memref<256x288xf32, #tpu.memory_space<vmem>>, vector<256x32xf32>
    tpu.vector_store %arg10[%c0_11, %c0_12], %6 {strides = array<i32>} : memref<256x288xf32, #tpu.memory_space<vmem>>, vector<256x32xf32>,
    %c0_13 = arith.constant 0 : index
    %c1_14 = arith.constant 1 : index
    %c0_15 = arith.constant 0 : index
    %8 = vector.load %arg9[%c0_13, %c1_14, %c0_15] : memref<18x18x32xf32, #tpu.memory_space<vmem>>, vector<16x16x32xf32>
    %9 = vector.shape_cast %8 : vector<16x16x32xf32> to vector<256x32xf32>
    %c0_16 = arith.constant 0 : index
    %c32 = arith.constant 32 : index
    %10 = vector.load %arg10[%c0_16, %c32] : memref<256x288xf32, #tpu.memory_space<vmem>>, vector<256x32xf32>
    tpu.vector_store %arg10[%c0_16, %c32], %9 {strides = array<i32>} : memref<256x288xf32, #tpu.memory_space<vmem>>, vector<256x32xf32>,
    %c0_17 = arith.constant 0 : index
    %c2 = arith.constant 2 : index
    %c0_18 = arith.constant 0 : index
    %11 = vector.load %arg9[%c0_17, %c2, %c0_18] : memref<18x18x32xf32, #tpu.memory_space<vmem>>, vector<16x16x32xf32>
    %12 = vector.shape_cast %11 : vector<16x16x32xf32> to vector<256x32xf32>
    %c0_19 = arith.constant 0 : index
    %c64 = arith.constant 64 : index
    %13 = vector.load %arg10[%c0_19, %c64] : memref<256x288xf32, #tpu.memory_space<vmem>>, vector<256x32xf32>
    tpu.vector_store %arg10[%c0_19, %c64], %12 {strides = array<i32>} : memref<256x288xf32, #tpu.memory_space<vmem>>, vector<256x32xf32>,
    %c1_20 = arith.constant 1 : index
    %c0_21 = arith.constant 0 : index
    %c0_22 = arith.constant 0 : index
    %14 = vector.load %arg9[%c1_20, %c0_21, %c0_22] : memref<18x18x32xf32, #tpu.memory_space<vmem>>, vector<16x16x32xf32>
    %15 = vector.shape_cast %14 : vector<16x16x32xf32> to vector<256x32xf32>
    %c0_23 = arith.constant 0 : index
    %c96 = arith.constant 96 : index
    %16 = vector.load %arg10[%c0_23, %c96] : memref<256x288xf32, #tpu.memory_space<vmem>>, vector<256x32xf32>
    tpu.vector_store %arg10[%c0_23, %c96], %15 {strides = array<i32>} : memref<256x288xf32, #tpu.memory_space<vmem>>, vector<256x32xf32>,
    %c1_24 = arith.constant 1 : index
    %c1_25 = arith.constant 1 : index
    %c0_26 = arith.constant 0 : index
    %17 = vector.load %arg9[%c1_24, %c1_25, %c0_26] : memref<18x18x32xf32, #tpu.memory_space<vmem>>, vector<16x16x32xf32>
    %18 = vector.shape_cast %17 : vector<16x16x32xf32> to vector<256x32xf32>
    %c0_27 = arith.constant 0 : index
    %c128 = arith.constant 128 : index
    %19 = vector.load %arg10[%c0_27, %c128] : memref<256x288xf32, #tpu.memory_space<vmem>>, vector<256x32xf32>
    tpu.vector_store %arg10[%c0_27, %c128], %18 {strides = array<i32>} : memref<256x288xf32, #tpu.memory_space<vmem>>, vector<256x32xf32>,
    %c1_28 = arith.constant 1 : index
    %c2_29 = arith.constant 2 : index
    %c0_30 = arith.constant 0 : index
    %20 = vector.load %arg9[%c1_28, %c2_29, %c0_30] : memref<18x18x32xf32, #tpu.memory_space<vmem>>, vector<16x16x32xf32>
    %21 = vector.shape_cast %20 : vector<16x16x32xf32> to vector<256x32xf32>
    %c0_31 = arith.constant 0 : index
    %c160 = arith.constant 160 : index
    %22 = vector.load %arg10[%c0_31, %c160] : memref<256x288xf32, #tpu.memory_space<vmem>>, vector<256x32xf32>
    tpu.vector_store %arg10[%c0_31, %c160], %21 {strides = array<i32>} : memref<256x288xf32, #tpu.memory_space<vmem>>, vector<256x32xf32>,
    %c2_32 = arith.constant 2 : index
    %c0_33 = arith.constant 0 : index
    %c0_34 = arith.constant 0 : index
    %23 = vector.load %arg9[%c2_32, %c0_33, %c0_34] : memref<18x18x32xf32, #tpu.memory_space<vmem>>, vector<16x16x32xf32>
    %24 = vector.shape_cast %23 : vector<16x16x32xf32> to vector<256x32xf32>
    %c0_35 = arith.constant 0 : index
    %c192 = arith.constant 192 : index
    %25 = vector.load %arg10[%c0_35, %c192] : memref<256x288xf32, #tpu.memory_space<vmem>>, vector<256x32xf32>
    tpu.vector_store %arg10[%c0_35, %c192], %24 {strides = array<i32>} : memref<256x288xf32, #tpu.memory_space<vmem>>, vector<256x32xf32>,
    %c2_36 = arith.constant 2 : index
    %c1_37 = arith.constant 1 : index
    %c0_38 = arith.constant 0 : index
    %26 = vector.load %arg9[%c2_36, %c1_37, %c0_38] : memref<18x18x32xf32, #tpu.memory_space<vmem>>, vector<16x16x32xf32>
    %27 = vector.shape_cast %26 : vector<16x16x32xf32> to vector<256x32xf32>
    %c0_39 = arith.constant 0 : index
    %c224 = arith.constant 224 : index
    %28 = vector.load %arg10[%c0_39, %c224] : memref<256x288xf32, #tpu.memory_space<vmem>>, vector<256x32xf32>
    tpu.vector_store %arg10[%c0_39, %c224], %27 {strides = array<i32>} : memref<256x288xf32, #tpu.memory_space<vmem>>, vector<256x32xf32>,
    %c2_40 = arith.constant 2 : index
    %c2_41 = arith.constant 2 : index
    %c0_42 = arith.constant 0 : index
    %29 = vector.load %arg9[%c2_40, %c2_41, %c0_42] : memref<18x18x32xf32, #tpu.memory_space<vmem>>, vector<16x16x32xf32>
    %30 = vector.shape_cast %29 : vector<16x16x32xf32> to vector<256x32xf32>
    %c0_43 = arith.constant 0 : index
    %c256 = arith.constant 256 : index
    %31 = vector.load %arg10[%c0_43, %c256] : memref<256x288xf32, #tpu.memory_space<vmem>>, vector<256x32xf32>
    tpu.vector_store %arg10[%c0_43, %c256], %30 {strides = array<i32>} : memref<256x288xf32, #tpu.memory_space<vmem>>, vector<256x32xf32>,
    %c0_44 = arith.constant 0 : index
    %c0_45 = arith.constant 0 : index
    %32 = vector.load %arg10[%c0_44, %c0_45] : memref<256x288xf32, #tpu.memory_space<vmem>>, vector<256x288xf32>
    %c0_46 = arith.constant 0 : index
    %c0_47 = arith.constant 0 : index
    %33 = vector.load %arg2[%c0_46, %c0_47] : memref<288x32xf32, #tpu.memory_space<vmem>>, vector<288x32xf32>
    %cst_48 = arith.constant dense<0.000000e+00> : vector<256x32xf32>
    %34 = tpu.matmul %32, %33, %cst_48 {dimension_numbers = #tpu.dot_dimension_numbers<[1], [0], [0], [1], [0, 0, 1, 1], [], []>} : vector<256x288xf32>, vector<288x32xf32>, vector<256x32xf32> -> vector<256x32xf32>
    %c0_49 = arith.constant 0 : index
    %c0_50 = arith.constant 0 : index
    %35 = vector.load %arg3[%c0_49, %c0_50] : memref<1x32xf32, #tpu.memory_space<vmem>>, vector<1x32xf32>
    %36 = vector.broadcast %35 : vector<1x32xf32> to vector<256x32xf32>
    %37 = arith.addf %34, %36 : vector<256x32xf32>
    %cst_51 = arith.constant 0.000000e+00 : f32
    %38 = vector.broadcast %cst_51 : f32 to vector<256x32xf32>
    %39 = arith.maximumf %37, %38 : vector<256x32xf32>
    %cst_52 = arith.constant 0.000000e+00 : f32
    %40 = vector.broadcast %cst_52 : f32 to vector<18x18x32xf32>
    %c0_53 = arith.constant 0 : index
    %c0_54 = arith.constant 0 : index
    %c0_55 = arith.constant 0 : index
    %41 = vector.load %arg11[%c0_53, %c0_54, %c0_55] : memref<18x18x32xf32, #tpu.memory_space<vmem>>, vector<18x18x32xf32>
    tpu.vector_store %arg11[%c0_53, %c0_54, %c0_55], %40 {strides = array<i32>} : memref<18x18x32xf32, #tpu.memory_space<vmem>>, vector<18x18x32xf32>,
    %42 = vector.shape_cast %39 : vector<256x32xf32> to vector<16x16x32xf32>
    %c1_56 = arith.constant 1 : index
    %c1_57 = arith.constant 1 : index
    %c0_58 = arith.constant 0 : index
    %43 = vector.load %arg11[%c1_56, %c1_57, %c0_58] : memref<18x18x32xf32, #tpu.memory_space<vmem>>, vector<16x16x32xf32>
    tpu.vector_store %arg11[%c1_56, %c1_57, %c0_58], %42 {strides = array<i32>} : memref<18x18x32xf32, #tpu.memory_space<vmem>>, vector<16x16x32xf32>,
    %c0_59 = arith.constant 0 : index
    %c0_60 = arith.constant 0 : index
    %c0_61 = arith.constant 0 : index
    %44 = vector.load %arg11[%c0_59, %c0_60, %c0_61] : memref<18x18x32xf32, #tpu.memory_space<vmem>>, vector<16x16x32xf32>
    %45 = vector.shape_cast %44 : vector<16x16x32xf32> to vector<256x32xf32>
    %c0_62 = arith.constant 0 : index
    %c0_63 = arith.constant 0 : index
    %46 = vector.load %arg12[%c0_62, %c0_63] : memref<256x288xf32, #tpu.memory_space<vmem>>, vector<256x32xf32>
    tpu.vector_store %arg12[%c0_62, %c0_63], %45 {strides = array<i32>} : memref<256x288xf32, #tpu.memory_space<vmem>>, vector<256x32xf32>,
    %c0_64 = arith.constant 0 : index
    %c1_65 = arith.constant 1 : index
    %c0_66 = arith.constant 0 : index
    %47 = vector.load %arg11[%c0_64, %c1_65, %c0_66] : memref<18x18x32xf32, #tpu.memory_space<vmem>>, vector<16x16x32xf32>
    %48 = vector.shape_cast %47 : vector<16x16x32xf32> to vector<256x32xf32>
    %c0_67 = arith.constant 0 : index
    %c32_68 = arith.constant 32 : index
    %49 = vector.load %arg12[%c0_67, %c32_68] : memref<256x288xf32, #tpu.memory_space<vmem>>, vector<256x32xf32>
    tpu.vector_store %arg12[%c0_67, %c32_68], %48 {strides = array<i32>} : memref<256x288xf32, #tpu.memory_space<vmem>>, vector<256x32xf32>,
    %c0_69 = arith.constant 0 : index
    %c2_70 = arith.constant 2 : index
    %c0_71 = arith.constant 0 : index
    %50 = vector.load %arg11[%c0_69, %c2_70, %c0_71] : memref<18x18x32xf32, #tpu.memory_space<vmem>>, vector<16x16x32xf32>
    %51 = vector.shape_cast %50 : vector<16x16x32xf32> to vector<256x32xf32>
    %c0_72 = arith.constant 0 : index
    %c64_73 = arith.constant 64 : index
    %52 = vector.load %arg12[%c0_72, %c64_73] : memref<256x288xf32, #tpu.memory_space<vmem>>, vector<256x32xf32>
    tpu.vector_store %arg12[%c0_72, %c64_73], %51 {strides = array<i32>} : memref<256x288xf32, #tpu.memory_space<vmem>>, vector<256x32xf32>,
    %c1_74 = arith.constant 1 : index
    %c0_75 = arith.constant 0 : index
    %c0_76 = arith.constant 0 : index
    %53 = vector.load %arg11[%c1_74, %c0_75, %c0_76] : memref<18x18x32xf32, #tpu.memory_space<vmem>>, vector<16x16x32xf32>
    %54 = vector.shape_cast %53 : vector<16x16x32xf32> to vector<256x32xf32>
    %c0_77 = arith.constant 0 : index
    %c96_78 = arith.constant 96 : index
    %55 = vector.load %arg12[%c0_77, %c96_78] : memref<256x288xf32, #tpu.memory_space<vmem>>, vector<256x32xf32>
    tpu.vector_store %arg12[%c0_77, %c96_78], %54 {strides = array<i32>} : memref<256x288xf32, #tpu.memory_space<vmem>>, vector<256x32xf32>,
    %c1_79 = arith.constant 1 : index
    %c1_80 = arith.constant 1 : index
    %c0_81 = arith.constant 0 : index
    %56 = vector.load %arg11[%c1_79, %c1_80, %c0_81] : memref<18x18x32xf32, #tpu.memory_space<vmem>>, vector<16x16x32xf32>
    %57 = vector.shape_cast %56 : vector<16x16x32xf32> to vector<256x32xf32>
    %c0_82 = arith.constant 0 : index
    %c128_83 = arith.constant 128 : index
    %58 = vector.load %arg12[%c0_82, %c128_83] : memref<256x288xf32, #tpu.memory_space<vmem>>, vector<256x32xf32>
    tpu.vector_store %arg12[%c0_82, %c128_83], %57 {strides = array<i32>} : memref<256x288xf32, #tpu.memory_space<vmem>>, vector<256x32xf32>,
    %c1_84 = arith.constant 1 : index
    %c2_85 = arith.constant 2 : index
    %c0_86 = arith.constant 0 : index
    %59 = vector.load %arg11[%c1_84, %c2_85, %c0_86] : memref<18x18x32xf32, #tpu.memory_space<vmem>>, vector<16x16x32xf32>
    %60 = vector.shape_cast %59 : vector<16x16x32xf32> to vector<256x32xf32>
    %c0_87 = arith.constant 0 : index
    %c160_88 = arith.constant 160 : index
    %61 = vector.load %arg12[%c0_87, %c160_88] : memref<256x288xf32, #tpu.memory_space<vmem>>, vector<256x32xf32>
    tpu.vector_store %arg12[%c0_87, %c160_88], %60 {strides = array<i32>} : memref<256x288xf32, #tpu.memory_space<vmem>>, vector<256x32xf32>,
    %c2_89 = arith.constant 2 : index
    %c0_90 = arith.constant 0 : index
    %c0_91 = arith.constant 0 : index
    %62 = vector.load %arg11[%c2_89, %c0_90, %c0_91] : memref<18x18x32xf32, #tpu.memory_space<vmem>>, vector<16x16x32xf32>
    %63 = vector.shape_cast %62 : vector<16x16x32xf32> to vector<256x32xf32>
    %c0_92 = arith.constant 0 : index
    %c192_93 = arith.constant 192 : index
    %64 = vector.load %arg12[%c0_92, %c192_93] : memref<256x288xf32, #tpu.memory_space<vmem>>, vector<256x32xf32>
    tpu.vector_store %arg12[%c0_92, %c192_93], %63 {strides = array<i32>} : memref<256x288xf32, #tpu.memory_space<vmem>>, vector<256x32xf32>,
    %c2_94 = arith.constant 2 : index
    %c1_95 = arith.constant 1 : index
    %c0_96 = arith.constant 0 : index
    %65 = vector.load %arg11[%c2_94, %c1_95, %c0_96] : memref<18x18x32xf32, #tpu.memory_space<vmem>>, vector<16x16x32xf32>
    %66 = vector.shape_cast %65 : vector<16x16x32xf32> to vector<256x32xf32>
    %c0_97 = arith.constant 0 : index
    %c224_98 = arith.constant 224 : index
    %67 = vector.load %arg12[%c0_97, %c224_98] : memref<256x288xf32, #tpu.memory_space<vmem>>, vector<256x32xf32>
    tpu.vector_store %arg12[%c0_97, %c224_98], %66 {strides = array<i32>} : memref<256x288xf32, #tpu.memory_space<vmem>>, vector<256x32xf32>,
    %c2_99 = arith.constant 2 : index
    %c2_100 = arith.constant 2 : index
    %c0_101 = arith.constant 0 : index
    %68 = vector.load %arg11[%c2_99, %c2_100, %c0_101] : memref<18x18x32xf32, #tpu.memory_space<vmem>>, vector<16x16x32xf32>
    %69 = vector.shape_cast %68 : vector<16x16x32xf32> to vector<256x32xf32>
    %c0_102 = arith.constant 0 : index
    %c256_103 = arith.constant 256 : index
    %70 = vector.load %arg12[%c0_102, %c256_103] : memref<256x288xf32, #tpu.memory_space<vmem>>, vector<256x32xf32>
    tpu.vector_store %arg12[%c0_102, %c256_103], %69 {strides = array<i32>} : memref<256x288xf32, #tpu.memory_space<vmem>>, vector<256x32xf32>,
    %c0_104 = arith.constant 0 : index
    %c0_105 = arith.constant 0 : index
    %71 = vector.load %arg12[%c0_104, %c0_105] : memref<256x288xf32, #tpu.memory_space<vmem>>, vector<256x288xf32>
    %c0_106 = arith.constant 0 : index
    %c0_107 = arith.constant 0 : index
    %72 = vector.load %arg4[%c0_106, %c0_107] : memref<288x192xf32, #tpu.memory_space<vmem>>, vector<288x192xf32>
    %cst_108 = arith.constant dense<0.000000e+00> : vector<256x192xf32>
    %73 = tpu.matmul %71, %72, %cst_108 {dimension_numbers = #tpu.dot_dimension_numbers<[1], [0], [0], [1], [0, 0, 1, 1], [], []>} : vector<256x288xf32>, vector<288x192xf32>, vector<256x192xf32> -> vector<256x192xf32>
    %c0_109 = arith.constant 0 : index
    %c0_110 = arith.constant 0 : index
    %74 = vector.load %arg5[%c0_109, %c0_110] : memref<1x192xf32, #tpu.memory_space<vmem>>, vector<1x192xf32>
    %75 = vector.broadcast %74 : vector<1x192xf32> to vector<256x192xf32>
    %76 = arith.addf %73, %75 : vector<256x192xf32>
    %cst_111 = arith.constant 0.000000e+00 : f32
    %77 = vector.broadcast %cst_111 : f32 to vector<256x192xf32>
    %78 = arith.maximumf %76, %77 : vector<256x192xf32>
    %cst_112 = arith.constant 0.000000e+00 : f32
    %79 = vector.broadcast %cst_112 : f32 to vector<18x18x192xf32>
    %c0_113 = arith.constant 0 : index
    %c0_114 = arith.constant 0 : index
    %c0_115 = arith.constant 0 : index
    %80 = vector.load %arg13[%c0_113, %c0_114, %c0_115] : memref<18x18x192xf32, #tpu.memory_space<vmem>>, vector<18x18x192xf32>
    tpu.vector_store %arg13[%c0_113, %c0_114, %c0_115], %79 {strides = array<i32>} : memref<18x18x192xf32, #tpu.memory_space<vmem>>, vector<18x18x192xf32>,
    %81 = vector.shape_cast %78 : vector<256x192xf32> to vector<16x16x192xf32>
    %c1_116 = arith.constant 1 : index
    %c1_117 = arith.constant 1 : index
    %c0_118 = arith.constant 0 : index
    %82 = vector.load %arg13[%c1_116, %c1_117, %c0_118] : memref<18x18x192xf32, #tpu.memory_space<vmem>>, vector<16x16x192xf32>
    tpu.vector_store %arg13[%c1_116, %c1_117, %c0_118], %81 {strides = array<i32>} : memref<18x18x192xf32, #tpu.memory_space<vmem>>, vector<16x16x192xf32>,
    %cst_119 = arith.constant 0.000000e+00 : f32
    %83 = vector.broadcast %cst_119 : f32 to vector<256x128xf32>
    %c0_120 = arith.constant 0 : index
    %c0_121 = arith.constant 0 : index
    %c0_122 = arith.constant 0 : index
    %84 = vector.load %arg13[%c0_120, %c0_121, %c0_122] : memref<18x18x192xf32, #tpu.memory_space<vmem>>, vector<16x16x192xf32>
    %85 = vector.shape_cast %84 : vector<16x16x192xf32> to vector<256x192xf32>
    %c0_123 = arith.constant 0 : index
    %c0_124 = arith.constant 0 : index
    %86 = vector.load %arg6[%c0_123, %c0_124] : memref<1728x128xf32, #tpu.memory_space<vmem>>, vector<192x128xf32>
    %cst_125 = arith.constant dense<0.000000e+00> : vector<256x128xf32>
    %87 = tpu.matmul %85, %86, %cst_125 {dimension_numbers = #tpu.dot_dimension_numbers<[1], [0], [0], [1], [0, 0, 1, 1], [], []>} : vector<256x192xf32>, vector<192x128xf32>, vector<256x128xf32> -> vector<256x128xf32>
    %88 = arith.addf %83, %87 : vector<256x128xf32>
    %c0_126 = arith.constant 0 : index
    %c1_127 = arith.constant 1 : index
    %c0_128 = arith.constant 0 : index
    %89 = vector.load %arg13[%c0_126, %c1_127, %c0_128] : memref<18x18x192xf32, #tpu.memory_space<vmem>>, vector<16x16x192xf32>
    %90 = vector.shape_cast %89 : vector<16x16x192xf32> to vector<256x192xf32>
    %c192_129 = arith.constant 192 : index
    %c0_130 = arith.constant 0 : index
    %91 = vector.load %arg6[%c192_129, %c0_130] : memref<1728x128xf32, #tpu.memory_space<vmem>>, vector<192x128xf32>
    %cst_131 = arith.constant dense<0.000000e+00> : vector<256x128xf32>
    %92 = tpu.matmul %90, %91, %cst_131 {dimension_numbers = #tpu.dot_dimension_numbers<[1], [0], [0], [1], [0, 0, 1, 1], [], []>} : vector<256x192xf32>, vector<192x128xf32>, vector<256x128xf32> -> vector<256x128xf32>
    %93 = arith.addf %88, %92 : vector<256x128xf32>
    %c0_132 = arith.constant 0 : index
    %c2_133 = arith.constant 2 : index
    %c0_134 = arith.constant 0 : index
    %94 = vector.load %arg13[%c0_132, %c2_133, %c0_134] : memref<18x18x192xf32, #tpu.memory_space<vmem>>, vector<16x16x192xf32>
    %95 = vector.shape_cast %94 : vector<16x16x192xf32> to vector<256x192xf32>
    %c384 = arith.constant 384 : index
    %c0_135 = arith.constant 0 : index
    %96 = vector.load %arg6[%c384, %c0_135] : memref<1728x128xf32, #tpu.memory_space<vmem>>, vector<192x128xf32>
    %cst_136 = arith.constant dense<0.000000e+00> : vector<256x128xf32>
    %97 = tpu.matmul %95, %96, %cst_136 {dimension_numbers = #tpu.dot_dimension_numbers<[1], [0], [0], [1], [0, 0, 1, 1], [], []>} : vector<256x192xf32>, vector<192x128xf32>, vector<256x128xf32> -> vector<256x128xf32>
    %98 = arith.addf %93, %97 : vector<256x128xf32>
    %c1_137 = arith.constant 1 : index
    %c0_138 = arith.constant 0 : index
    %c0_139 = arith.constant 0 : index
    %99 = vector.load %arg13[%c1_137, %c0_138, %c0_139] : memref<18x18x192xf32, #tpu.memory_space<vmem>>, vector<16x16x192xf32>
    %100 = vector.shape_cast %99 : vector<16x16x192xf32> to vector<256x192xf32>
    %c576 = arith.constant 576 : index
    %c0_140 = arith.constant 0 : index
    %101 = vector.load %arg6[%c576, %c0_140] : memref<1728x128xf32, #tpu.memory_space<vmem>>, vector<192x128xf32>
    %cst_141 = arith.constant dense<0.000000e+00> : vector<256x128xf32>
    %102 = tpu.matmul %100, %101, %cst_141 {dimension_numbers = #tpu.dot_dimension_numbers<[1], [0], [0], [1], [0, 0, 1, 1], [], []>} : vector<256x192xf32>, vector<192x128xf32>, vector<256x128xf32> -> vector<256x128xf32>
    %103 = arith.addf %98, %102 : vector<256x128xf32>
    %c1_142 = arith.constant 1 : index
    %c1_143 = arith.constant 1 : index
    %c0_144 = arith.constant 0 : index
    %104 = vector.load %arg13[%c1_142, %c1_143, %c0_144] : memref<18x18x192xf32, #tpu.memory_space<vmem>>, vector<16x16x192xf32>
    %105 = vector.shape_cast %104 : vector<16x16x192xf32> to vector<256x192xf32>
    %c768 = arith.constant 768 : index
    %c0_145 = arith.constant 0 : index
    %106 = vector.load %arg6[%c768, %c0_145] : memref<1728x128xf32, #tpu.memory_space<vmem>>, vector<192x128xf32>
    %cst_146 = arith.constant dense<0.000000e+00> : vector<256x128xf32>
    %107 = tpu.matmul %105, %106, %cst_146 {dimension_numbers = #tpu.dot_dimension_numbers<[1], [0], [0], [1], [0, 0, 1, 1], [], []>} : vector<256x192xf32>, vector<192x128xf32>, vector<256x128xf32> -> vector<256x128xf32>
    %108 = arith.addf %103, %107 : vector<256x128xf32>
    %c1_147 = arith.constant 1 : index
    %c2_148 = arith.constant 2 : index
    %c0_149 = arith.constant 0 : index
    %109 = vector.load %arg13[%c1_147, %c2_148, %c0_149] : memref<18x18x192xf32, #tpu.memory_space<vmem>>, vector<16x16x192xf32>
    %110 = vector.shape_cast %109 : vector<16x16x192xf32> to vector<256x192xf32>
    %c960 = arith.constant 960 : index
    %c0_150 = arith.constant 0 : index
    %111 = vector.load %arg6[%c960, %c0_150] : memref<1728x128xf32, #tpu.memory_space<vmem>>, vector<192x128xf32>
    %cst_151 = arith.constant dense<0.000000e+00> : vector<256x128xf32>
    %112 = tpu.matmul %110, %111, %cst_151 {dimension_numbers = #tpu.dot_dimension_numbers<[1], [0], [0], [1], [0, 0, 1, 1], [], []>} : vector<256x192xf32>, vector<192x128xf32>, vector<256x128xf32> -> vector<256x128xf32>
    %113 = arith.addf %108, %112 : vector<256x128xf32>
    %c2_152 = arith.constant 2 : index
    %c0_153 = arith.constant 0 : index
    %c0_154 = arith.constant 0 : index
    %114 = vector.load %arg13[%c2_152, %c0_153, %c0_154] : memref<18x18x192xf32, #tpu.memory_space<vmem>>, vector<16x16x192xf32>
    %115 = vector.shape_cast %114 : vector<16x16x192xf32> to vector<256x192xf32>
    %c1152 = arith.constant 1152 : index
    %c0_155 = arith.constant 0 : index
    %116 = vector.load %arg6[%c1152, %c0_155] : memref<1728x128xf32, #tpu.memory_space<vmem>>, vector<192x128xf32>
    %cst_156 = arith.constant dense<0.000000e+00> : vector<256x128xf32>
    %117 = tpu.matmul %115, %116, %cst_156 {dimension_numbers = #tpu.dot_dimension_numbers<[1], [0], [0], [1], [0, 0, 1, 1], [], []>} : vector<256x192xf32>, vector<192x128xf32>, vector<256x128xf32> -> vector<256x128xf32>
    %118 = arith.addf %113, %117 : vector<256x128xf32>
    %c2_157 = arith.constant 2 : index
    %c1_158 = arith.constant 1 : index
    %c0_159 = arith.constant 0 : index
    %119 = vector.load %arg13[%c2_157, %c1_158, %c0_159] : memref<18x18x192xf32, #tpu.memory_space<vmem>>, vector<16x16x192xf32>
    %120 = vector.shape_cast %119 : vector<16x16x192xf32> to vector<256x192xf32>
    %c1344 = arith.constant 1344 : index
    %c0_160 = arith.constant 0 : index
    %121 = vector.load %arg6[%c1344, %c0_160] : memref<1728x128xf32, #tpu.memory_space<vmem>>, vector<192x128xf32>
    %cst_161 = arith.constant dense<0.000000e+00> : vector<256x128xf32>
    %122 = tpu.matmul %120, %121, %cst_161 {dimension_numbers = #tpu.dot_dimension_numbers<[1], [0], [0], [1], [0, 0, 1, 1], [], []>} : vector<256x192xf32>, vector<192x128xf32>, vector<256x128xf32> -> vector<256x128xf32>
    %123 = arith.addf %118, %122 : vector<256x128xf32>
    %c2_162 = arith.constant 2 : index
    %c2_163 = arith.constant 2 : index
    %c0_164 = arith.constant 0 : index
    %124 = vector.load %arg13[%c2_162, %c2_163, %c0_164] : memref<18x18x192xf32, #tpu.memory_space<vmem>>, vector<16x16x192xf32>
    %125 = vector.shape_cast %124 : vector<16x16x192xf32> to vector<256x192xf32>
    %c1536 = arith.constant 1536 : index
    %c0_165 = arith.constant 0 : index
    %126 = vector.load %arg6[%c1536, %c0_165] : memref<1728x128xf32, #tpu.memory_space<vmem>>, vector<192x128xf32>
    %cst_166 = arith.constant dense<0.000000e+00> : vector<256x128xf32>
    %127 = tpu.matmul %125, %126, %cst_166 {dimension_numbers = #tpu.dot_dimension_numbers<[1], [0], [0], [1], [0, 0, 1, 1], [], []>} : vector<256x192xf32>, vector<192x128xf32>, vector<256x128xf32> -> vector<256x128xf32>
    %128 = arith.addf %123, %127 : vector<256x128xf32>
    %c0_167 = arith.constant 0 : index
    %c0_168 = arith.constant 0 : index
    %129 = vector.load %arg7[%c0_167, %c0_168] : memref<1x128xf32, #tpu.memory_space<vmem>>, vector<1x128xf32>
    %130 = vector.broadcast %129 : vector<1x128xf32> to vector<256x128xf32>
    %131 = arith.addf %128, %130 : vector<256x128xf32>
    %132 = tpu.transpose %131, [1, 0] : vector<256x128xf32> -> vector<128x256xf32>
    %133 = tpu.iota {dimensions = array<i32: 0>} : vector<128x256xi32>
    %c10_i32 = arith.constant 10 : i32
    %134 = vector.broadcast %c10_i32 : i32 to vector<128x256xi32>
    %135 = arith.cmpi sge, %133, %134 : vector<128x256xi32>
    %c13_i32 = arith.constant 13 : i32
    %136 = vector.broadcast %c13_i32 : i32 to vector<128x256xi32>
    %137 = arith.cmpi slt, %133, %136 : vector<128x256xi32>
    %138 = arith.andi %135, %137 : vector<128x256xi1>
    %c3_i32 = arith.constant 3 : i32
    %139 = vector.broadcast %c3_i32 : i32 to vector<128x256xi32>
    %140 = arith.cmpi sge, %133, %139 : vector<128x256xi32>
    %c6_i32 = arith.constant 6 : i32
    %141 = vector.broadcast %c6_i32 : i32 to vector<128x256xi32>
    %142 = arith.cmpi slt, %133, %141 : vector<128x256xi32>
    %143 = arith.andi %140, %142 : vector<128x256xi1>
    %144 = arith.negf %132 : vector<128x256xf32>
    %145 = math.exp %144 : vector<128x256xf32>
    %cst_169 = arith.constant 1.000000e+00 : f32
    %146 = vector.broadcast %cst_169 : f32 to vector<128x256xf32>
    %147 = arith.addf %146, %145 : vector<128x256xf32>
    %148 = arith.divf %146, %147 : vector<128x256xf32>
    %149 = math.exp %132 : vector<128x256xf32>
    %150 = arith.select %143, %149, %132 : vector<128x256xi1>, vector<128x256xf32>
    %151 = arith.select %138, %148, %150 : vector<128x256xi1>, vector<128x256xf32>
    %152 = vector.shape_cast %151 : vector<128x256xf32> to vector<1x128x256xf32>
    %c0_170 = arith.constant 0 : index
    %c0_171 = arith.constant 0 : index
    %c0_172 = arith.constant 0 : index
    %153 = vector.load %arg8[%c0_170, %c0_171, %c0_172] : memref<1x128x256xf32, #tpu.memory_space<vmem>>, vector<1x128x256xf32>
    tpu.vector_store %arg8[%c0_170, %c0_171, %c0_172], %152 {strides = array<i32>} : memref<1x128x256xf32, #tpu.memory_space<vmem>>, vector<1x128x256xf32>,
    return
  }
  func.func @transform_0(%arg0: i32) -> (i32, i32, i32, i32) {
    %c0_i32 = arith.constant 0 : i32
    %c0_i32_0 = arith.constant 0 : i32
    %c0_i32_1 = arith.constant 0 : i32
    %c0_i32_2 = arith.constant 0 : i32
    return %arg0, %c0_i32, %c0_i32_0, %c0_i32_1 : i32, i32, i32, i32
  }
  func.func @transform_1(%arg0: i32) -> (i32, i32) {
    %c0_i32 = arith.constant 0 : i32
    %c0_i32_0 = arith.constant 0 : i32
    %c0_i32_1 = arith.constant 0 : i32
    return %c0_i32, %c0_i32_0 : i32, i32
  }
  func.func @transform_2(%arg0: i32) -> (i32, i32) {
    %c0_i32 = arith.constant 0 : i32
    %c0_i32_0 = arith.constant 0 : i32
    %c0_i32_1 = arith.constant 0 : i32
    return %c0_i32, %c0_i32_0 : i32, i32
  }
  func.func @transform_3(%arg0: i32) -> (i32, i32) {
    %c0_i32 = arith.constant 0 : i32
    %c0_i32_0 = arith.constant 0 : i32
    %c0_i32_1 = arith.constant 0 : i32
    return %c0_i32, %c0_i32_0 : i32, i32
  }
  func.func @transform_4(%arg0: i32) -> (i32, i32) {
    %c0_i32 = arith.constant 0 : i32
    %c0_i32_0 = arith.constant 0 : i32
    %c0_i32_1 = arith.constant 0 : i32
    return %c0_i32, %c0_i32_0 : i32, i32
  }
  func.func @transform_5(%arg0: i32) -> (i32, i32) {
    %c0_i32 = arith.constant 0 : i32
    %c0_i32_0 = arith.constant 0 : i32
    %c0_i32_1 = arith.constant 0 : i32
    return %c0_i32, %c0_i32_0 : i32, i32
  }
  func.func @transform_6(%arg0: i32) -> (i32, i32) {
    %c0_i32 = arith.constant 0 : i32
    %c0_i32_0 = arith.constant 0 : i32
    %c0_i32_1 = arith.constant 0 : i32
    return %c0_i32, %c0_i32_0 : i32, i32
  }
  func.func @transform_7(%arg0: i32) -> (i32, i32, i32) {
    %c0_i32 = arith.constant 0 : i32
    %c0_i32_0 = arith.constant 0 : i32
    %c0_i32_1 = arith.constant 0 : i32
    return %arg0, %c0_i32, %c0_i32_0 : i32, i32, i32
  }
}

</mosaic_0001>

<llo_original>
// kernel: tpu_custom_call.1
$region0: #{tpu_custom_call.1}
  #allocation0 [shape = 'u32[]', space=smem, size = 0x4, offset = 0x4, fixed_abs, tag = 'smem constant byte address 0x4 - core index']
  #allocation1 [shape = 'u32[144,128]{1,0:T(1,128)}', space=vmem, size = 0x12000, scoped, tag = 'internal scratch']
  #allocation2 [shape = 'f32[18,18,32]{2,1,0:T(8,128)}', space=vmem, size = 0x36000, scoped, tag = 'scratch operand']
  #allocation3 [shape = 'f32[256,288]{1,0:T(8,128)}', space=vmem, size = 0x60000, scoped, tag = 'scratch operand']
  #allocation4 [shape = 'f32[18,18,32]{2,1,0:T(8,128)}', space=vmem, size = 0x36000, scoped, tag = 'scratch operand']
  #allocation5 [shape = 'f32[256,288]{1,0:T(8,128)}', space=vmem, size = 0x60000, scoped, tag = 'scratch operand']
  #allocation6 [shape = 'f32[18,18,192]{2,1,0:T(8,128)}', space=vmem, size = 0x6c000, scoped, tag = 'scratch operand']
  %s0 = inlined_call_operand.hbm [shape: f32[2,16,16,32], index: 0, kind: input, shape index: {}]
  %s1 = inlined_call_operand.vmem [shape: f32[288,32], index: 1, kind: input, shape index: {}]
  %s2 = inlined_call_operand.vmem [shape: f32[1,32], index: 2, kind: input, shape index: {}]
  %s3 = inlined_call_operand.hbm [shape: f32[288,192], index: 3, kind: input, shape index: {}]
  %s4 = inlined_call_operand.vmem [shape: f32[1,192], index: 4, kind: input, shape index: {}]
  %s5 = inlined_call_operand.hbm [shape: f32[1728,128], index: 5, kind: input, shape index: {}]
  %s6 = inlined_call_operand.vmem [shape: f32[1,128], index: 6, kind: input, shape index: {}]
  %s7 = inlined_call_operand.hbm [shape: f32[2,128,256], index: 7, kind: output, shape index: {}]
  %s8 = sld [smem:[#allocation0]]
  $region73: #{tpu_custom_call.1} parent=0
    _
  %s10 = ssub.s32 1, %s8
  %s11 = scalar_select 0, %s10, %s8
  $region1: #{tpu_custom_call.1} parent=0
    #allocation7 [shape = 'u8[262144]{0}', space=vmem, size = 0x40000, scoped, tag = 'input window, operand 0']
    #allocation8 [shape = 's32[2]{0}', space=sflag, size = 0x8, scoped, tag = 'scoped memory for tpu_custom_call.1']
    #allocation9 [shape = 's32[2]{0}', space=sflag, size = 0x8, scoped, tag = 'scoped memory for tpu_custom_call.1']
    #allocation10 [shape = 'u8[294912]{0}', space=vmem, size = 0x48000, scoped, tag = 'input window, operand 3, single buffered']
    #allocation11 [shape = 's32[1]{0}', space=sflag, size = 0x4, scoped, tag = 'scoped memory for tpu_custom_call.1']
    #allocation12 [shape = 'u8[884736]{0}', space=vmem, size = 0xd8000, scoped, tag = 'input window, operand 5, single buffered']
    #allocation13 [shape = 'u8[262144]{0}', space=vmem, size = 0x40000, scoped, tag = 'output window, operand 0']
    %12 = vsyncpa [#allocation8], 0
    %s13 = scalar_lea.sflag [#allocation8], 1
    %14 = vsyncpa %s13, 0
    %15 = vsyncpa [#allocation11], 0
    %16 = vsyncpa [#allocation9], 0
    %s17 = scalar_lea.sflag [#allocation9], 1
    %18 = vsyncpa %s17, 0
    loop: start=0, step=1, limit=4
    $region2: #{tpu_custom_call.1} parent=1 // loop_pre_header
      _
    $region3: #{tpu_custom_call.1} parent=1 // loop_header
      %s20 = sphi 0, %s24
      %p21 = scmp.ge.s32.totalorder %s20, 4
      %s30 = sphi 0, %s32
      %s33 = sphi 0, %s30
      %s34 = sphi 0, %s33
      %s50 = sphi 0, %s34
      %s54 = sphi 0, %s54
      %s56 = sphi 0, %s54
      %s57 = sphi 0, %s56
      %s71 = sphi 0, %s57
      %s75 = sphi 0, %s75
      %s77 = sphi 0, %s75
      %s78 = sphi 0, %s77
      %s92 = sphi 0, %s78
      %s96 = sphi 0, %s96
      %s98 = sphi 0, %s96
      %s99 = sphi 0, %s98
      %s113 = sphi 0, %s99
      %s117 = sphi 0, %s117
      %s119 = sphi 0, %s117
      %s120 = sphi 0, %s119
      %s134 = sphi 0, %s120
      %s138 = sphi 0, %s138
      %s140 = sphi 0, %s138
      %s141 = sphi 0, %s140
      %s155 = sphi 0, %s141
      %s159 = sphi 0, %s159
      %s161 = sphi 0, %s159
      %s162 = sphi 0, %s161
      %s176 = sphi 0, %s162
      %s182 = sphi 0, %s184
      %s185 = sphi 0, %s182
      %s186 = sphi 0, %s185
      %s202 = sphi 0, %s186
    $region4: #{tpu_custom_call.1} parent=1 // loop_header_branch
      %23 = sbr.rel (%p21) target = $region8
    $region5: #{tpu_custom_call.1} parent=1 // loop_body
      %s25 = ssub.s32 %s20, 1
      %s26 = ssub.s32 %s20, 2
      %s27 = sadd.s32 %s20, 1
      %s28 = ssub.s32 %s20, %s27
      %p29 = scmp.eq.s32.totalorder %s28, 0
      %s31 = sadd.s32 %s30, 1
      %s32 = scalar_select %p29, %s30, %s31
      %p35 = pneg %p29
      %p36 = scmp.eq.s32.totalorder %s20, 1
      %p37 = por %p35, %p36
      %p38 = scmp.ne.s32.totalorder %s30, %s33
      %p39 = scmp.eq.s32.totalorder %s20, 0
      %p40 = por %p38, %p39
      %p41 = scmp.ne.s32.totalorder %s30, %s33
      %p42 = scmp.eq.s32.totalorder %s25, 1
      %p43 = por %p41, %p42
      %p44 = scmp.ne.s32.totalorder %s33, %s34
      %p45 = scmp.eq.s32.totalorder %s25, 0
      %p46 = por %p44, %p45
      %p47 = scmp.ne.s32.totalorder %s33, %s34
      %p48 = scmp.eq.s32.totalorder %s26, 1
      %p49 = por %p47, %p48
      %p51 = scmp.ne.s32.totalorder %s34, %s50
      %p52 = scmp.eq.s32.totalorder %s26, 0
      %p53 = por %p51, %p52
      %s55 = sadd.s32 %s54, 1
      %p58 = scmp.eq.s32.totalorder %s20, 1
      %p59 = scmp.ne.s32.totalorder %s54, %s56
      %p60 = scmp.eq.s32.totalorder %s20, 0
      %p61 = por %p59, %p60
      %p62 = scmp.ne.s32.totalorder %s54, %s56
      %p63 = scmp.eq.s32.totalorder %s25, 1
      %p64 = por %p62, %p63
      %p65 = scmp.ne.s32.totalorder %s56, %s57
      %p66 = scmp.eq.s32.totalorder %s25, 0
      %p67 = por %p65, %p66
      %p68 = scmp.ne.s32.totalorder %s56, %s57
      %p69 = scmp.eq.s32.totalorder %s26, 1
      %p70 = por %p68, %p69
      %p72 = scmp.ne.s32.totalorder %s57, %s71
      %p73 = scmp.eq.s32.totalorder %s26, 0
      %p74 = por %p72, %p73
      %s76 = sadd.s32 %s75, 1
      %p79 = scmp.eq.s32.totalorder %s20, 1
      %p80 = scmp.ne.s32.totalorder %s75, %s77
      %p81 = scmp.eq.s32.totalorder %s20, 0
      %p82 = por %p80, %p81
      %p83 = scmp.ne.s32.totalorder %s75, %s77
      %p84 = scmp.eq.s32.totalorder %s25, 1
      %p85 = por %p83, %p84
      %p86 = scmp.ne.s32.totalorder %s77, %s78
      %p87 = scmp.eq.s32.totalorder %s25, 0
      %p88 = por %p86, %p87
      %p89 = scmp.ne.s32.totalorder %s77, %s78
      %p90 = scmp.eq.s32.totalorder %s26, 1
      %p91 = por %p89, %p90
      %p93 = scmp.ne.s32.totalorder %s78, %s92
      %p94 = scmp.eq.s32.totalorder %s26, 0
      %p95 = por %p93, %p94
      %s97 = sadd.s32 %s96, 1
      %p100 = scmp.eq.s32.totalorder %s20, 1
      %p101 = scmp.ne.s32.totalorder %s96, %s98
      %p102 = scmp.eq.s32.totalorder %s20, 0
      %p103 = por %p101, %p102
      %p104 = scmp.ne.s32.totalorder %s96, %s98
      %p105 = scmp.eq.s32.totalorder %s25, 1
      %p106 = por %p104, %p105
      %p107 = scmp.ne.s32.totalorder %s98, %s99
      %p108 = scmp.eq.s32.totalorder %s25, 0
      %p109 = por %p107, %p108
      %p110 = scmp.ne.s32.totalorder %s98, %s99
      %p111 = scmp.eq.s32.totalorder %s26, 1
      %p112 = por %p110, %p111
      %p114 = scmp.ne.s32.totalorder %s99, %s113
      %p115 = scmp.eq.s32.totalorder %s26, 0
      %p116 = por %p114, %p115
      %s118 = sadd.s32 %s117, 1
      %p121 = scmp.eq.s32.totalorder %s20, 1
      %p122 = scmp.ne.s32.totalorder %s117, %s119
      %p123 = scmp.eq.s32.totalorder %s20, 0
      %p124 = por %p122, %p123
      %p125 = scmp.ne.s32.totalorder %s117, %s119
      %p126 = scmp.eq.s32.totalorder %s25, 1
      %p127 = por %p125, %p126
      %p128 = scmp.ne.s32.totalorder %s119, %s120
      %p129 = scmp.eq.s32.totalorder %s25, 0
      %p130 = por %p128, %p129
      %p131 = scmp.ne.s32.totalorder %s119, %s120
      %p132 = scmp.eq.s32.totalorder %s26, 1
      %p133 = por %p131, %p132
      %p135 = scmp.ne.s32.totalorder %s120, %s134
      %p136 = scmp.eq.s32.totalorder %s26, 0
      %p137 = por %p135, %p136
      %s139 = sadd.s32 %s138, 1
      %p142 = scmp.eq.s32.totalorder %s20, 1
      %p143 = scmp.ne.s32.totalorder %s138, %s140
      %p144 = scmp.eq.s32.totalorder %s20, 0
      %p145 = por %p143, %p144
      %p146 = scmp.ne.s32.totalorder %s138, %s140
      %p147 = scmp.eq.s32.totalorder %s25, 1
      %p148 = por %p146, %p147
      %p149 = scmp.ne.s32.totalorder %s140, %s141
      %p150 = scmp.eq.s32.totalorder %s25, 0
      %p151 = por %p149, %p150
      %p152 = scmp.ne.s32.totalorder %s140, %s141
      %p153 = scmp.eq.s32.totalorder %s26, 1
      %p154 = por %p152, %p153
      %p156 = scmp.ne.s32.totalorder %s141, %s155
      %p157 = scmp.eq.s32.totalorder %s26, 0
      %p158 = por %p156, %p157
      %s160 = sadd.s32 %s159, 1
      %p163 = scmp.eq.s32.totalorder %s20, 1
      %p164 = scmp.ne.s32.totalorder %s159, %s161
      %p165 = scmp.eq.s32.totalorder %s20, 0
      %p166 = por %p164, %p165
      %p167 = scmp.ne.s32.totalorder %s159, %s161
      %p168 = scmp.eq.s32.totalorder %s25, 1
      %p169 = por %p167, %p168
      %p170 = scmp.ne.s32.totalorder %s161, %s162
      %p171 = scmp.eq.s32.totalorder %s25, 0
      %p172 = por %p170, %p171
      %p173 = scmp.ne.s32.totalorder %s161, %s162
      %p174 = scmp.eq.s32.totalorder %s26, 1
      %p175 = por %p173, %p174
      %p177 = scmp.ne.s32.totalorder %s162, %s176
      %p178 = scmp.eq.s32.totalorder %s26, 0
      %p179 = por %p177, %p178
      %s180 = ssub.s32 %s20, %s27
      %p181 = scmp.eq.s32.totalorder %s180, 0
      %s183 = sadd.s32 %s182, 1
      %s184 = scalar_select %p181, %s182, %s183
      %p187 = pneg %p181
      %p188 = scmp.eq.s32.totalorder %s20, 1
      %p189 = por %p187, %p188
      %p190 = scmp.ne.s32.totalorder %s182, %s185
      %p191 = scmp.eq.s32.totalorder %s20, 0
      %p192 = por %p190, %p191
      %p193 = scmp.ne.s32.totalorder %s182, %s185
      %p194 = scmp.eq.s32.totalorder %s25, 1
      %p195 = por %p193, %p194
      %p196 = scmp.ne.s32.totalorder %s185, %s186
      %p197 = scmp.eq.s32.totalorder %s25, 0
      %p198 = por %p196, %p197
      %p199 = scmp.ne.s32.totalorder %s185, %s186
      %p200 = scmp.eq.s32.totalorder %s26, 1
      %p201 = por %p199, %p200
      %p203 = scmp.ne.s32.totalorder %s186, %s202
      %p204 = scmp.eq.s32.totalorder %s26, 0
      %p205 = por %p203, %p204
      %p206 = scmp.le.s32.totalorder 1, %s20
      %p207 = scmp.lt.s32.totalorder %s20, 3
      %p208 = pnand %p206, %p207
      %p209 = pneg %p208
      // Predicated region
      $region9: #{tpu_custom_call.1} parent=5 // pred_check
        _
      $region10: #{tpu_custom_call.1} parent=5 // pred_check_branch
        %211 = sbr.rel (%p208) target = $region12
      $region11: #{tpu_custom_call.1} parent=5 // pred_region
        %s212 = ssub.s32 %s20, 1
        // Predicated region
        $region13: #{tpu_custom_call.1} parent=11 // pred_check
          %p213 = pneg %p67
        $region14: #{tpu_custom_call.1} parent=11 // pred_check_branch
          %215 = sbr.rel (%p213) target = $region16
        $region15: #{tpu_custom_call.1} parent=11 // pred_region
          _
        $region16: #{tpu_custom_call.1} parent=11 // pred_fallthru
          _
        // Predicated region
        $region17: #{tpu_custom_call.1} parent=11 // pred_check
          %p216 = pneg %p88
        $region18: #{tpu_custom_call.1} parent=11 // pred_check_branch
          %218 = sbr.rel (%p216) target = $region20
        $region19: #{tpu_custom_call.1} parent=11 // pred_region
          _
        $region20: #{tpu_custom_call.1} parent=11 // pred_fallthru
          _
        // Predicated region
        $region21: #{tpu_custom_call.1} parent=11 // pred_check
          %p219 = pneg %p109
        $region22: #{tpu_custom_call.1} parent=11 // pred_check_branch
          %221 = sbr.rel (%p219) target = $region24
        $region23: #{tpu_custom_call.1} parent=11 // pred_region
          %s223 = ssub.s32 9216, 9216
          %224 = vsyncadd [#allocation11], %s223
          %s225 = sshll.u32 [#allocation10], 4
          %s226 = int_to_ptr.vmem [resolvable:$true] %s225
          %231 = dma.hbm_to_vmem [thread:$0]  %s3, 9216, %s226, [#allocation11], 256, 256, 16
        $region24: #{tpu_custom_call.1} parent=11 // pred_fallthru
          _
        // Predicated region
        $region25: #{tpu_custom_call.1} parent=11 // pred_check
          %p232 = pneg %p130
        $region26: #{tpu_custom_call.1} parent=11 // pred_check_branch
          %234 = sbr.rel (%p232) target = $region28
        $region27: #{tpu_custom_call.1} parent=11 // pred_region
          _
        $region28: #{tpu_custom_call.1} parent=11 // pred_fallthru
          _
        // Predicated region
        $region29: #{tpu_custom_call.1} parent=11 // pred_check
          %p235 = pneg %p151
        $region30: #{tpu_custom_call.1} parent=11 // pred_check_branch
          %237 = sbr.rel (%p235) target = $region32
        $region31: #{tpu_custom_call.1} parent=11 // pred_region
          %s239 = ssub.s32 27648, 27648
          %240 = vsyncadd [#allocation11], %s239
          %s241 = sshll.u32 [#allocation12], 4
          %s242 = int_to_ptr.vmem [resolvable:$true] %s241
          %247 = dma.hbm_to_vmem [thread:$0]  %s5, 27648, %s242, [#allocation11], 128, 128, 8
        $region32: #{tpu_custom_call.1} parent=11 // pred_fallthru
          _
        // Predicated region
        $region33: #{tpu_custom_call.1} parent=11 // pred_check
          %p248 = pneg %p172
        $region34: #{tpu_custom_call.1} parent=11 // pred_check_branch
          %250 = sbr.rel (%p248) target = $region36
        $region35: #{tpu_custom_call.1} parent=11 // pred_region
          _
        $region36: #{tpu_custom_call.1} parent=11 // pred_fallthru
          _
      $region12: #{tpu_custom_call.1} parent=5 // pred_fallthru
        _
      %p251 = scmp.lt.s32.totalorder %s20, 2
      // Predicated region
      $region37: #{tpu_custom_call.1} parent=5 // pred_check
        %p252 = pneg %p251
      $region38: #{tpu_custom_call.1} parent=5 // pred_check_branch
        %254 = sbr.rel (%p252) target = $region40
      $region39: #{tpu_custom_call.1} parent=5 // pred_region
        // Predicated region
        $region41: #{tpu_custom_call.1} parent=39 // pred_check
          %p255 = pneg %p40
        $region42: #{tpu_custom_call.1} parent=39 // pred_check_branch
          %257 = sbr.rel (%p255) target = $region44
        $region43: #{tpu_custom_call.1} parent=39 // pred_region
          %s258 = sand.u32 %s30, 1
          %s259 = scalar_lea.sflag [#allocation8], %s258
          %s260 = sand.u32 %s30, 1
          %s261 = smul.addr %s260, 256
          %s262 = scalar_lea.vmem [#allocation7], %s261
          %s264 = ssub.s32 4096, 4096
          %265 = vsyncadd %s259, %s264
          %s266 = smul.addr %s20, 32
          %s267 = smul.addr %s266, 128
          %s268 = scalar_lea.hbm %s0, %s267
          %s269 = sshll.u32 %s262, 4
          %s270 = int_to_ptr.vmem [resolvable:$true] %s269
          %275 = dma.hbm_to_vmem [thread:$0]  %s268, 4096, %s270, %s259, 128, 128, 8
        $region44: #{tpu_custom_call.1} parent=39 // pred_fallthru
          _
      $region40: #{tpu_custom_call.1} parent=5 // pred_fallthru
        _
      %p276 = scmp.le.s32.totalorder 1, %s20
      %p277 = scmp.lt.s32.totalorder %s20, 3
      %p278 = pnand %p276, %p277
      %p279 = pneg %p278
      // Predicated region
      $region45: #{tpu_custom_call.1} parent=5 // pred_check
        _
      $region46: #{tpu_custom_call.1} parent=5 // pred_check_branch
        %281 = sbr.rel (%p278) target = $region48
      $region47: #{tpu_custom_call.1} parent=5 // pred_region
        %s282 = ssub.s32 %s20, 1
        %s283 = sand.u32 %s33, 1
        %s284 = scalar_lea.sflag [#allocation8], %s283
        %s285 = sand.u32 %s33, 1
        %s286 = smul.addr %s285, 256
        %s287 = scalar_lea.vmem [#allocation7], %s286
        // Predicated region
        $region49: #{tpu_custom_call.1} parent=47 // pred_check
          %p288 = pneg %p46
        $region50: #{tpu_custom_call.1} parent=47 // pred_check_branch
          %290 = sbr.rel (%p288) target = $region52
        $region51: #{tpu_custom_call.1} parent=47 // pred_region
          %291 = dma.done %s284, 4096
        $region52: #{tpu_custom_call.1} parent=47 // pred_fallthru
          _
        // Predicated region
        $region53: #{tpu_custom_call.1} parent=47 // pred_check
          %p292 = pneg %p109
        $region54: #{tpu_custom_call.1} parent=47 // pred_check_branch
          %294 = sbr.rel (%p292) target = $region56
        $region55: #{tpu_custom_call.1} parent=47 // pred_region
          %295 = dma.done [#allocation11], 9216
        $region56: #{tpu_custom_call.1} parent=47 // pred_fallthru
          _
        // Predicated region
        $region57: #{tpu_custom_call.1} parent=47 // pred_check
          %p296 = pneg %p151
        $region58: #{tpu_custom_call.1} parent=47 // pred_check_branch
          %298 = sbr.rel (%p296) target = $region60
        $region59: #{tpu_custom_call.1} parent=47 // pred_region
          %299 = dma.done [#allocation11], 27648
        $region60: #{tpu_custom_call.1} parent=47 // pred_fallthru
          _
        %s300 = sand.u32 %s33, 1
        %s301 = scalar_lea.sflag [#allocation8], %s300
        %s302 = sand.u32 %s33, 1
        %s303 = smul.addr %s302, 256
        %s304 = scalar_lea.vmem [#allocation7], %s303
        %p305 = pneg %p46
        %p306 = pneg %p43
        %p307 = pneg %p67
        %p308 = pneg %p64
        %p309 = pneg %p88
        %p310 = pneg %p85
        %p311 = pneg %p109
        %p312 = pneg %p106
        %p313 = pneg %p130
        %p314 = pneg %p127
        %p315 = pneg %p151
        %p316 = pneg %p148
        %p317 = pneg %p172
        %p318 = pneg %p169
        %p319 = pneg %p198
        %p320 = pneg %p195
        %s321 = sand.u32 %s185, 1
        %s322 = scalar_lea.sflag [#allocation9], %s321
        %s323 = sand.u32 %s185, 1
        %s324 = smul.addr %s323, 256
        %s325 = scalar_lea.vmem [#allocation13], %s324
        %vm326 = vcmask 261120
        %327 = vst.msk [vmem:[#allocation2] sm:$0xff] %vm326, 0.0
        %328 = vst.msk [vmem:[#allocation2 + $0x8] sm:$0xff] %vm326, 0.0
        %vm329 = vcmask 254976
        %330 = vst.msk [vmem:[#allocation2 + $0x10] sm:$0x3] %vm329, 0.0
        %331 = vst.msk [vmem:[#allocation2 + $0x18] sm:$0xff] %vm326, 0.0
        %332 = vst.msk [vmem:[#allocation2 + $0x20] sm:$0xff] %vm326, 0.0
        %333 = vst.msk [vmem:[#allocation2 + $0x28] sm:$0x3] %vm329, 0.0
        %334 = vst.msk [vmem:[#allocation2 + $0x30] sm:$0xff] %vm326, 0.0
        %335 = vst.msk [vmem:[#allocation2 + $0x38] sm:$0xff] %vm326, 0.0
        %336 = vst.msk [vmem:[#allocation2 + $0x40] sm:$0x3] %vm329, 0.0
        %337 = vst.msk [vmem:[#allocation2 + $0x48] sm:$0xff] %vm326, 0.0
        %338 = vst.msk [vmem:[#allocation2 + $0x50] sm:$0xff] %vm326, 0.0
        %339 = vst.msk [vmem:[#allocation2 + $0x58] sm:$0x3] %vm329, 0.0
        %340 = vst.msk [vmem:[#allocation2 + $0x60] sm:$0xff] %vm326, 0.0
        %341 = vst.msk [vmem:[#allocation2 + $0x68] sm:$0xff] %vm326, 0.0
        %342 = vst.msk [vmem:[#allocation2 + $0x70] sm:$0x3] %vm329, 0.0
        %343 = vst.msk [vmem:[#allocation2 + $0x78] sm:$0xff] %vm326, 0.0
        %344 = vst.msk [vmem:[#allocation2 + $0x80] sm:$0xff] %vm326, 0.0
        %345 = vst.msk [vmem:[#allocation2 + $0x88] sm:$0x3] %vm329, 0.0
        %346 = vst.msk [vmem:[#allocation2 + $0x90] sm:$0xff] %vm326, 0.0
        %347 = vst.msk [vmem:[#allocation2 + $0x98] sm:$0xff] %vm326, 0.0
        %348 = vst.msk [vmem:[#allocation2 + $0xa0] sm:$0x3] %vm329, 0.0
        %349 = vst.msk [vmem:[#allocation2 + $0xa8] sm:$0xff] %vm326, 0.0
        %350 = vst.msk [vmem:[#allocation2 + $0xb0] sm:$0xff] %vm326, 0.0
        %351 = vst.msk [vmem:[#allocation2 + $0xb8] sm:$0x3] %vm329, 0.0
        %352 = vst.msk [vmem:[#allocation2 + $0xc0] sm:$0xff] %vm326, 0.0
        %353 = vst.msk [vmem:[#allocation2 + $0xc8] sm:$0xff] %vm326, 0.0
        %354 = vst.msk [vmem:[#allocation2 + $0xd0] sm:$0x3] %vm329, 0.0
        %355 = vst.msk [vmem:[#allocation2 + $0xd8] sm:$0xff] %vm326, 0.0
        %356 = vst.msk [vmem:[#allocation2 + $0xe0] sm:$0xff] %vm326, 0.0
        %357 = vst.msk [vmem:[#allocation2 + $0xe8] sm:$0x3] %vm329, 0.0
        %358 = vst.msk [vmem:[#allocation2 + $0xf0] sm:$0xff] %vm326, 0.0
        %359 = vst.msk [vmem:[#allocation2 + $0xf8] sm:$0xff] %vm326, 0.0
        %360 = vst.msk [vmem:[#allocation2 + $0x100] sm:$0x3] %vm329, 0.0
        %361 = vst.msk [vmem:[#allocation2 + $0x108] sm:$0xff] %vm326, 0.0
        %362 = vst.msk [vmem:[#allocation2 + $0x110] sm:$0xff] %vm326, 0.0
        %363 = vst.msk [vmem:[#allocation2 + $0x118] sm:$0x3] %vm329, 0.0
        %364 = vst.msk [vmem:[#allocation2 + $0x120] sm:$0xff] %vm326, 0.0
        %365 = vst.msk [vmem:[#allocation2 + $0x128] sm:$0xff] %vm326, 0.0
        %366 = vst.msk [vmem:[#allocation2 + $0x130] sm:$0x3] %vm329, 0.0
        %367 = vst.msk [vmem:[#allocation2 + $0x138] sm:$0xff] %vm326, 0.0
        %368 = vst.msk [vmem:[#allocation2 + $0x140] sm:$0xff] %vm326, 0.0
        %369 = vst.msk [vmem:[#allocation2 + $0x148] sm:$0x3] %vm329, 0.0
        %370 = vst.msk [vmem:[#allocation2 + $0x150] sm:$0xff] %vm326, 0.0
        %371 = vst.msk [vmem:[#allocation2 + $0x158] sm:$0xff] %vm326, 0.0
        %372 = vst.msk [vmem:[#allocation2 + $0x160] sm:$0x3] %vm329, 0.0
        %373 = vst.msk [vmem:[#allocation2 + $0x168] sm:$0xff] %vm326, 0.0
        %374 = vst.msk [vmem:[#allocation2 + $0x170] sm:$0xff] %vm326, 0.0
        %375 = vst.msk [vmem:[#allocation2 + $0x178] sm:$0x3] %vm329, 0.0
        %376 = vst.msk [vmem:[#allocation2 + $0x180] sm:$0xff] %vm326, 0.0
        %377 = vst.msk [vmem:[#allocation2 + $0x188] sm:$0xff] %vm326, 0.0
        %378 = vst.msk [vmem:[#allocation2 + $0x190] sm:$0x3] %vm329, 0.0
        %379 = vst.msk [vmem:[#allocation2 + $0x198] sm:$0xff] %vm326, 0.0
        %380 = vst.msk [vmem:[#allocation2 + $0x1a0] sm:$0xff] %vm326, 0.0
        %381 = vst.msk [vmem:[#allocation2 + $0x1a8] sm:$0x3] %vm329, 0.0
        %v382 = vld [vmem:[%s287] sm:$0xff]
        %v383 = vld [vmem:[%s287 + $0x8] sm:$0xff]
        %v384 = vld [vmem:[%s287 + $0x10] sm:$0xff]
        %v385 = vld [vmem:[%s287 + $0x18] sm:$0xff]
        %v386 = vld [vmem:[%s287 + $0x20] sm:$0xff]
        %v387 = vld [vmem:[%s287 + $0x28] sm:$0xff]
        %v388 = vld [vmem:[%s287 + $0x30] sm:$0xff]
        %v389 = vld [vmem:[%s287 + $0x38] sm:$0xff]
        %v390 = vld [vmem:[%s287 + $0x40] sm:$0xff]
        %v391 = vld [vmem:[%s287 + $0x48] sm:$0xff]
        %v392 = vld [vmem:[%s287 + $0x50] sm:$0xff]
        %v393 = vld [vmem:[%s287 + $0x58] sm:$0xff]
        %v394 = vld [vmem:[%s287 + $0x60] sm:$0xff]
        %v395 = vld [vmem:[%s287 + $0x68] sm:$0xff]
        %v396 = vld [vmem:[%s287 + $0x70] sm:$0xff]
        %v397 = vld [vmem:[%s287 + $0x78] sm:$0xff]
        %v398 = vld [vmem:[%s287 + $0x80] sm:$0xff]
        %v399 = vld [vmem:[%s287 + $0x88] sm:$0xff]
        %v400 = vld [vmem:[%s287 + $0x90] sm:$0xff]
        %v401 = vld [vmem:[%s287 + $0x98] sm:$0xff]
        %v402 = vld [vmem:[%s287 + $0xa0] sm:$0xff]
        %v403 = vld [vmem:[%s287 + $0xa8] sm:$0xff]
        %v404 = vld [vmem:[%s287 + $0xb0] sm:$0xff]
        %v405 = vld [vmem:[%s287 + $0xb8] sm:$0xff]
        %v406 = vld [vmem:[%s287 + $0xc0] sm:$0xff]
        %v407 = vld [vmem:[%s287 + $0xc8] sm:$0xff]
        %v408 = vld [vmem:[%s287 + $0xd0] sm:$0xff]
        %v409 = vld [vmem:[%s287 + $0xd8] sm:$0xff]
        %v410 = vld [vmem:[%s287 + $0xe0] sm:$0xff]
        %v411 = vld [vmem:[%s287 + $0xe8] sm:$0xff]
        %v412 = vld [vmem:[%s287 + $0xf0] sm:$0xff]
        %v413 = vld [vmem:[%s287 + $0xf8] sm:$0xff]
        %s414 = scalar_lea.vmem [#allocation2], 24
        %415 = vst.msk [vmem:[%s414 + $0x1] sm:$0xff] %vm326, %v382
        %416 = vst.msk [vmem:[%s414 + $0x9] sm:$0xff] %vm326, %v383
        %417 = vst.msk [vmem:[%s414 + $0x19] sm:$0xff] %vm326, %v384
        %418 = vst.msk [vmem:[%s414 + $0x21] sm:$0xff] %vm326, %v385
        %419 = vst.msk [vmem:[%s414 + $0x31] sm:$0xff] %vm326, %v386
        %420 = vst.msk [vmem:[%s414 + $0x39] sm:$0xff] %vm326, %v387
        %421 = vst.msk [vmem:[%s414 + $0x49] sm:$0xff] %vm326, %v388
        %422 = vst.msk [vmem:[%s414 + $0x51] sm:$0xff] %vm326, %v389
        %423 = vst.msk [vmem:[%s414 + $0x61] sm:$0xff] %vm326, %v390
        %424 = vst.msk [vmem:[%s414 + $0x69] sm:$0xff] %vm326, %v391
        %425 = vst.msk [vmem:[%s414 + $0x79] sm:$0xff] %vm326, %v392
        %426 = vst.msk [vmem:[%s414 + $0x81] sm:$0xff] %vm326, %v393
        %427 = vst.msk [vmem:[%s414 + $0x91] sm:$0xff] %vm326, %v394
        %428 = vst.msk [vmem:[%s414 + $0x99] sm:$0xff] %vm326, %v395
        %429 = vst.msk [vmem:[%s414 + $0xa9] sm:$0xff] %vm326, %v396
        %430 = vst.msk [vmem:[%s414 + $0xb1] sm:$0xff] %vm326, %v397
        %431 = vst.msk [vmem:[%s414 + $0xc1] sm:$0xff] %vm326, %v398
        %432 = vst.msk [vmem:[%s414 + $0xc9] sm:$0xff] %vm326, %v399
        %433 = vst.msk [vmem:[%s414 + $0xd9] sm:$0xff] %vm326, %v400
        %434 = vst.msk [vmem:[%s414 + $0xe1] sm:$0xff] %vm326, %v401
        %435 = vst.msk [vmem:[%s414 + $0xf1] sm:$0xff] %vm326, %v402
        %436 = vst.msk [vmem:[%s414 + $0xf9] sm:$0xff] %vm326, %v403
        %437 = vst.msk [vmem:[%s414 + $0x109] sm:$0xff] %vm326, %v404
        %438 = vst.msk [vmem:[%s414 + $0x111] sm:$0xff] %vm326, %v405
        %439 = vst.msk [vmem:[%s414 + $0x121] sm:$0xff] %vm326, %v406
        %440 = vst.msk [vmem:[%s414 + $0x129] sm:$0xff] %vm326, %v407
        %441 = vst.msk [vmem:[%s414 + $0x139] sm:$0xff] %vm326, %v408
        %442 = vst.msk [vmem:[%s414 + $0x141] sm:$0xff] %vm326, %v409
        %443 = vst.msk [vmem:[%s414 + $0x151] sm:$0xff] %vm326, %v410
        %444 = vst.msk [vmem:[%s414 + $0x159] sm:$0xff] %vm326, %v411
        %445 = vst.msk [vmem:[%s414 + $0x169] sm:$0xff] %vm326, %v412
        %446 = vst.msk [vmem:[%s414 + $0x171] sm:$0xff] %vm326, %v413
        %v447 = vld [vmem:[#allocation2] sm:$0xff]
        %v448 = vld [vmem:[#allocation2 + $0x8] sm:$0xff]
        %v449 = vld [vmem:[#allocation2 + $0x18] sm:$0xff]
        %v450 = vld [vmem:[#allocation2 + $0x20] sm:$0xff]
        %v451 = vld [vmem:[#allocation2 + $0x30] sm:$0xff]
        %v452 = vld [vmem:[#allocation2 + $0x38] sm:$0xff]
        %v453 = vld [vmem:[#allocation2 + $0x48] sm:$0xff]
        %v454 = vld [vmem:[#allocation2 + $0x50] sm:$0xff]
        %v455 = vld [vmem:[#allocation2 + $0x60] sm:$0xff]
        %v456 = vld [vmem:[#allocation2 + $0x68] sm:$0xff]
        %v457 = vld [vmem:[#allocation2 + $0x78] sm:$0xff]
        %v458 = vld [vmem:[#allocation2 + $0x80] sm:$0xff]
        %v459 = vld [vmem:[#allocation2 + $0x90] sm:$0xff]
        %v460 = vld [vmem:[#allocation2 + $0x98] sm:$0xff]
        %v461 = vld [vmem:[#allocation2 + $0xa8] sm:$0xff]
        %v462 = vld [vmem:[#allocation2 + $0xb0] sm:$0xff]
        %v463 = vld [vmem:[#allocation2 + $0xc0] sm:$0xff]
        %v464 = vld [vmem:[#allocation2 + $0xc8] sm:$0xff]
        %v465 = vld [vmem:[#allocation2 + $0xd8] sm:$0xff]
        %v466 = vld [vmem:[#allocation2 + $0xe0] sm:$0xff]
        %v467 = vld [vmem:[#allocation2 + $0xf0] sm:$0xff]
        %v468 = vld [vmem:[#allocation2 + $0xf8] sm:$0xff]
        %v469 = vld [vmem:[#allocation2 + $0x108] sm:$0xff]
        %v470 = vld [vmem:[#allocation2 + $0x110] sm:$0xff]
        %v471 = vld [vmem:[#allocation2 + $0x120] sm:$0xff]
        %v472 = vld [vmem:[#allocation2 + $0x128] sm:$0xff]
        %v473 = vld [vmem:[#allocation2 + $0x138] sm:$0xff]
        %v474 = vld [vmem:[#allocation2 + $0x140] sm:$0xff]
        %v475 = vld [vmem:[#allocation2 + $0x150] sm:$0xff]
        %v476 = vld [vmem:[#allocation2 + $0x158] sm:$0xff]
        %v477 = vld [vmem:[#allocation2 + $0x168] sm:$0xff]
        %v478 = vld [vmem:[#allocation2 + $0x170] sm:$0xff]
        %479 = vst.msk [vmem:[#allocation3] sm:$0xff] %vm326, %v447
        %480 = vst.msk [vmem:[#allocation3 + $0x18] sm:$0xff] %vm326, %v448
        %481 = vst.msk [vmem:[#allocation3 + $0x30] sm:$0xff] %vm326, %v449
        %482 = vst.msk [vmem:[#allocation3 + $0x48] sm:$0xff] %vm326, %v450
        %483 = vst.msk [vmem:[#allocation3 + $0x60] sm:$0xff] %vm326, %v451
        %484 = vst.msk [vmem:[#allocation3 + $0x78] sm:$0xff] %vm326, %v452
        %485 = vst.msk [vmem:[#allocation3 + $0x90] sm:$0xff] %vm326, %v453
        %486 = vst.msk [vmem:[#allocation3 + $0xa8] sm:$0xff] %vm326, %v454
        %487 = vst.msk [vmem:[#allocation3 + $0xc0] sm:$0xff] %vm326, %v455
        %488 = vst.msk [vmem:[#allocation3 + $0xd8] sm:$0xff] %vm326, %v456
        %489 = vst.msk [vmem:[#allocation3 + $0xf0] sm:$0xff] %vm326, %v457
        %490 = vst.msk [vmem:[#allocation3 + $0x108] sm:$0xff] %vm326, %v458
        %491 = vst.msk [vmem:[#allocation3 + $0x120] sm:$0xff] %vm326, %v459
        %492 = vst.msk [vmem:[#allocation3 + $0x138] sm:$0xff] %vm326, %v460
        %493 = vst.msk [vmem:[#allocation3 + $0x150] sm:$0xff] %vm326, %v461
        %494 = vst.msk [vmem:[#allocation3 + $0x168] sm:$0xff] %vm326, %v462
        %495 = vst.msk [vmem:[#allocation3 + $0x180] sm:$0xff] %vm326, %v463
        %496 = vst.msk [vmem:[#allocation3 + $0x198] sm:$0xff] %vm326, %v464
        %497 = vst.msk [vmem:[#allocation3 + $0x1b0] sm:$0xff] %vm326, %v465
        %498 = vst.msk [vmem:[#allocation3 + $0x1c8] sm:$0xff] %vm326, %v466
        %499 = vst.msk [vmem:[#allocation3 + $0x1e0] sm:$0xff] %vm326, %v467
        %500 = vst.msk [vmem:[#allocation3 + $0x1f8] sm:$0xff] %vm326, %v468
        %501 = vst.msk [vmem:[#allocation3 + $0x210] sm:$0xff] %vm326, %v469
        %502 = vst.msk [vmem:[#allocation3 + $0x228] sm:$0xff] %vm326, %v470
        %503 = vst.msk [vmem:[#allocation3 + $0x240] sm:$0xff] %vm326, %v471
        %504 = vst.msk [vmem:[#allocation3 + $0x258] sm:$0xff] %vm326, %v472
        %505 = vst.msk [vmem:[#allocation3 + $0x270] sm:$0xff] %vm326, %v473
        %506 = vst.msk [vmem:[#allocation3 + $0x288] sm:$0xff] %vm326, %v474
        %507 = vst.msk [vmem:[#allocation3 + $0x2a0] sm:$0xff] %vm326, %v475
        %508 = vst.msk [vmem:[#allocation3 + $0x2b8] sm:$0xff] %vm326, %v476
        %509 = vst.msk [vmem:[#allocation3 + $0x2d0] sm:$0xff] %vm326, %v477
        %510 = vst.msk [vmem:[#allocation3 + $0x2e8] sm:$0xff] %vm326, %v478
        %v511 = vld [vmem:[#allocation2 + $0x1] sm:$0xff]
        %v512 = vld [vmem:[#allocation2 + $0x9] sm:$0xff]
        %v513 = vld [vmem:[#allocation2 + $0x19] sm:$0xff]
        %v514 = vld [vmem:[#allocation2 + $0x21] sm:$0xff]
        %v515 = vld [vmem:[#allocation2 + $0x31] sm:$0xff]
        %v516 = vld [vmem:[#allocation2 + $0x39] sm:$0xff]
        %v517 = vld [vmem:[#allocation2 + $0x49] sm:$0xff]
        %v518 = vld [vmem:[#allocation2 + $0x51] sm:$0xff]
        %v519 = vld [vmem:[#allocation2 + $0x61] sm:$0xff]
        %v520 = vld [vmem:[#allocation2 + $0x69] sm:$0xff]
        %v521 = vld [vmem:[#allocation2 + $0x79] sm:$0xff]
        %v522 = vld [vmem:[#allocation2 + $0x81] sm:$0xff]
        %v523 = vld [vmem:[#allocation2 + $0x91] sm:$0xff]
        %v524 = vld [vmem:[#allocation2 + $0x99] sm:$0xff]
        %v525 = vld [vmem:[#allocation2 + $0xa9] sm:$0xff]
        %v526 = vld [vmem:[#allocation2 + $0xb1] sm:$0xff]
        %v527 = vld [vmem:[#allocation2 + $0xc1] sm:$0xff]
        %v528 = vld [vmem:[#allocation2 + $0xc9] sm:$0xff]
        %v529 = vld [vmem:[#allocation2 + $0xd9] sm:$0xff]
        %v530 = vld [vmem:[#allocation2 + $0xe1] sm:$0xff]
        %v531 = vld [vmem:[#allocation2 + $0xf1] sm:$0xff]
        %v532 = vld [vmem:[#allocation2 + $0xf9] sm:$0xff]
        %v533 = vld [vmem:[#allocation2 + $0x109] sm:$0xff]
        %v534 = vld [vmem:[#allocation2 + $0x111] sm:$0xff]
        %v535 = vld [vmem:[#allocation2 + $0x121] sm:$0xff]
        %v536 = vld [vmem:[#allocation2 + $0x129] sm:$0xff]
        %v537 = vld [vmem:[#allocation2 + $0x139] sm:$0xff]
        %v538 = vld [vmem:[#allocation2 + $0x141] sm:$0xff]
        %v539 = vld [vmem:[#allocation2 + $0x151] sm:$0xff]
        %v540 = vld [vmem:[#allocation2 + $0x159] sm:$0xff]
        %v541 = vld [vmem:[#allocation2 + $0x169] sm:$0xff]
        %v542 = vld [vmem:[#allocation2 + $0x171] sm:$0xff]
        %575 = vrot.lane.b32.xlu0 %v511, 32
        %v576 = vpop.permute.xlu0 %575
        %577 = vrot.lane.b32.xlu0 %v512, 32
        %v578 = vpop.permute.xlu0 %577
        %579 = vrot.lane.b32.xlu0 %v513, 32
        %v580 = vpop.permute.xlu0 %579
        %581 = vrot.lane.b32.xlu0 %v514, 32
        %v582 = vpop.permute.xlu0 %581
        %583 = vrot.lane.b32.xlu0 %v515, 32
        %v584 = vpop.permute.xlu0 %583
        %585 = vrot.lane.b32.xlu0 %v516, 32
        %v586 = vpop.permute.xlu0 %585
        %587 = vrot.lane.b32.xlu0 %v517, 32
        %v588 = vpop.permute.xlu0 %587
        %589 = vrot.lane.b32.xlu0 %v518, 32
        %v590 = vpop.permute.xlu0 %589
        %591 = vrot.lane.b32.xlu0 %v519, 32
        %v592 = vpop.permute.xlu0 %591
        %593 = vrot.lane.b32.xlu0 %v520, 32
        %v594 = vpop.permute.xlu0 %593
        %595 = vrot.lane.b32.xlu0 %v521, 32
        %v596 = vpop.permute.xlu0 %595
        %597 = vrot.lane.b32.xlu0 %v522, 32
        %v598 = vpop.permute.xlu0 %597
        %599 = vrot.lane.b32.xlu0 %v523, 32
        %v600 = vpop.permute.xlu0 %599
        %601 = vrot.lane.b32.xlu0 %v524, 32
        %v602 = vpop.permute.xlu0 %601
        %603 = vrot.lane.b32.xlu0 %v525, 32
        %v604 = vpop.permute.xlu0 %603
        %605 = vrot.lane.b32.xlu0 %v526, 32
        %v606 = vpop.permute.xlu0 %605
        %607 = vrot.lane.b32.xlu0 %v527, 32
        %v608 = vpop.permute.xlu0 %607
        %609 = vrot.lane.b32.xlu0 %v528, 32
        %v610 = vpop.permute.xlu0 %609
        %611 = vrot.lane.b32.xlu0 %v529, 32
        %v612 = vpop.permute.xlu0 %611
        %613 = vrot.lane.b32.xlu0 %v530, 32
        %v614 = vpop.permute.xlu0 %613
        %615 = vrot.lane.b32.xlu0 %v531, 32
        %v616 = vpop.permute.xlu0 %615
        %617 = vrot.lane.b32.xlu0 %v532, 32
        %v618 = vpop.permute.xlu0 %617
        %619 = vrot.lane.b32.xlu0 %v533, 32
        %v620 = vpop.permute.xlu0 %619
        %621 = vrot.lane.b32.xlu0 %v534, 32
        %v622 = vpop.permute.xlu0 %621
        %623 = vrot.lane.b32.xlu0 %v535, 32
        %v624 = vpop.permute.xlu0 %623
        %625 = vrot.lane.b32.xlu0 %v536, 32
        %v626 = vpop.permute.xlu0 %625
        %627 = vrot.lane.b32.xlu0 %v537, 32
        %v628 = vpop.permute.xlu0 %627
        %629 = vrot.lane.b32.xlu0 %v538, 32
        %v630 = vpop.permute.xlu0 %629
        %631 = vrot.lane.b32.xlu0 %v539, 32
        %v632 = vpop.permute.xlu0 %631
        %633 = vrot.lane.b32.xlu0 %v540, 32
        %v634 = vpop.permute.xlu0 %633
        %635 = vrot.lane.b32.xlu0 %v541, 32
        %v636 = vpop.permute.xlu0 %635
        %637 = vrot.lane.b32.xlu0 %v542, 32
        %v638 = vpop.permute.xlu0 %637
        %vm671 = vcmask 523520
        %672 = vst.msk [vmem:[#allocation3] sm:$0xff] %vm671, %v576
        %673 = vst.msk [vmem:[#allocation3 + $0x18] sm:$0xff] %vm671, %v578
        %674 = vst.msk [vmem:[#allocation3 + $0x30] sm:$0xff] %vm671, %v580
        %675 = vst.msk [vmem:[#allocation3 + $0x48] sm:$0xff] %vm671, %v582
        %676 = vst.msk [vmem:[#allocation3 + $0x60] sm:$0xff] %vm671, %v584
        %677 = vst.msk [vmem:[#allocation3 + $0x78] sm:$0xff] %vm671, %v586
        %678 = vst.msk [vmem:[#allocation3 + $0x90] sm:$0xff] %vm671, %v588
        %679 = vst.msk [vmem:[#allocation3 + $0xa8] sm:$0xff] %vm671, %v590
        %680 = vst.msk [vmem:[#allocation3 + $0xc0] sm:$0xff] %vm671, %v592
        %681 = vst.msk [vmem:[#allocation3 + $0xd8] sm:$0xff] %vm671, %v594
        %682 = vst.msk [vmem:[#allocation3 + $0xf0] sm:$0xff] %vm671, %v596
        %683 = vst.msk [vmem:[#allocation3 + $0x108] sm:$0xff] %vm671, %v598
        %684 = vst.msk [vmem:[#allocation3 + $0x120] sm:$0xff] %vm671, %v600
        %685 = vst.msk [vmem:[#allocation3 + $0x138] sm:$0xff] %vm671, %v602
        %686 = vst.msk [vmem:[#allocation3 + $0x150] sm:$0xff] %vm671, %v604
        %687 = vst.msk [vmem:[#allocation3 + $0x168] sm:$0xff] %vm671, %v606
        %688 = vst.msk [vmem:[#allocation3 + $0x180] sm:$0xff] %vm671, %v608
        %689 = vst.msk [vmem:[#allocation3 + $0x198] sm:$0xff] %vm671, %v610
        %690 = vst.msk [vmem:[#allocation3 + $0x1b0] sm:$0xff] %vm671, %v612
        %691 = vst.msk [vmem:[#allocation3 + $0x1c8] sm:$0xff] %vm671, %v614
        %692 = vst.msk [vmem:[#allocation3 + $0x1e0] sm:$0xff] %vm671, %v616
        %693 = vst.msk [vmem:[#allocation3 + $0x1f8] sm:$0xff] %vm671, %v618
        %694 = vst.msk [vmem:[#allocation3 + $0x210] sm:$0xff] %vm671, %v620
        %695 = vst.msk [vmem:[#allocation3 + $0x228] sm:$0xff] %vm671, %v622
        %696 = vst.msk [vmem:[#allocation3 + $0x240] sm:$0xff] %vm671, %v624
        %697 = vst.msk [vmem:[#allocation3 + $0x258] sm:$0xff] %vm671, %v626
        %698 = vst.msk [vmem:[#allocation3 + $0x270] sm:$0xff] %vm671, %v628
        %699 = vst.msk [vmem:[#allocation3 + $0x288] sm:$0xff] %vm671, %v630
        %700 = vst.msk [vmem:[#allocation3 + $0x2a0] sm:$0xff] %vm671, %v632
        %701 = vst.msk [vmem:[#allocation3 + $0x2b8] sm:$0xff] %vm671, %v634
        %702 = vst.msk [vmem:[#allocation3 + $0x2d0] sm:$0xff] %vm671, %v636
        %703 = vst.msk [vmem:[#allocation3 + $0x2e8] sm:$0xff] %vm671, %v638
        %v704 = vld [vmem:[#allocation2 + $0x2] sm:$0xff]
        %v705 = vld [vmem:[#allocation2 + $0xa] sm:$0xff]
        %v706 = vld [vmem:[#allocation2 + $0x1a] sm:$0xff]
        %v707 = vld [vmem:[#allocation2 + $0x22] sm:$0xff]
        %v708 = vld [vmem:[#allocation2 + $0x32] sm:$0xff]
        %v709 = vld [vmem:[#allocation2 + $0x3a] sm:$0xff]
        %v710 = vld [vmem:[#allocation2 + $0x4a] sm:$0xff]
        %v711 = vld [vmem:[#allocation2 + $0x52] sm:$0xff]
        %v712 = vld [vmem:[#allocation2 + $0x62] sm:$0xff]
        %v713 = vld [vmem:[#allocation2 + $0x6a] sm:$0xff]
        %v714 = vld [vmem:[#allocation2 + $0x7a] sm:$0xff]
        %v715 = vld [vmem:[#allocation2 + $0x82] sm:$0xff]
        %v716 = vld [vmem:[#allocation2 + $0x92] sm:$0xff]
        %v717 = vld [vmem:[#allocation2 + $0x9a] sm:$0xff]
        %v718 = vld [vmem:[#allocation2 + $0xaa] sm:$0xff]
        %v719 = vld [vmem:[#allocation2 + $0xb2] sm:$0xff]
        %v720 = vld [vmem:[#allocation2 + $0xc2] sm:$0xff]
        %v721 = vld [vmem:[#allocation2 + $0xca] sm:$0xff]
        %v722 = vld [vmem:[#allocation2 + $0xda] sm:$0xff]
        %v723 = vld [vmem:[#allocation2 + $0xe2] sm:$0xff]
        %v724 = vld [vmem:[#allocation2 + $0xf2] sm:$0xff]
        %v725 = vld [vmem:[#allocation2 + $0xfa] sm:$0xff]
        %v726 = vld [vmem:[#allocation2 + $0x10a] sm:$0xff]
        %v727 = vld [vmem:[#allocation2 + $0x112] sm:$0xff]
        %v728 = vld [vmem:[#allocation2 + $0x122] sm:$0xff]
        %v729 = vld [vmem:[#allocation2 + $0x12a] sm:$0xff]
        %v730 = vld [vmem:[#allocation2 + $0x13a] sm:$0xff]
        %v731 = vld [vmem:[#allocation2 + $0x142] sm:$0xff]
        %v732 = vld [vmem:[#allocation2 + $0x152] sm:$0xff]
        %v733 = vld [vmem:[#allocation2 + $0x15a] sm:$0xff]
        %v734 = vld [vmem:[#allocation2 + $0x16a] sm:$0xff]
        %v735 = vld [vmem:[#allocation2 + $0x172] sm:$0xff]
        %768 = vrot.lane.b32.xlu0 %v704, 64
        %v769 = vpop.permute.xlu0 %768
        %770 = vrot.lane.b32.xlu0 %v705, 64
        %v771 = vpop.permute.xlu0 %770
        %772 = vrot.lane.b32.xlu0 %v706, 64
        %v773 = vpop.permute.xlu0 %772
        %774 = vrot.lane.b32.xlu0 %v707, 64
        %v775 = vpop.permute.xlu0 %774
        %776 = vrot.lane.b32.xlu0 %v708, 64
        %v777 = vpop.permute.xlu0 %776
        %778 = vrot.lane.b32.xlu0 %v709, 64
        %v779 = vpop.permute.xlu0 %778
        %780 = vrot.lane.b32.xlu0 %v710, 64
        %v781 = vpop.permute.xlu0 %780
        %782 = vrot.lane.b32.xlu0 %v711, 64
        %v783 = vpop.permute.xlu0 %782
        %784 = vrot.lane.b32.xlu0 %v712, 64
        %v785 = vpop.permute.xlu0 %784
        %786 = vrot.lane.b32.xlu0 %v713, 64
        %v787 = vpop.permute.xlu0 %786
        %788 = vrot.lane.b32.xlu0 %v714, 64
        %v789 = vpop.permute.xlu0 %788
        %790 = vrot.lane.b32.xlu0 %v715, 64
        %v791 = vpop.permute.xlu0 %790
        %792 = vrot.lane.b32.xlu0 %v716, 64
        %v793 = vpop.permute.xlu0 %792
        %794 = vrot.lane.b32.xlu0 %v717, 64
        %v795 = vpop.permute.xlu0 %794
        %796 = vrot.lane.b32.xlu0 %v718, 64
        %v797 = vpop.permute.xlu0 %796
        %798 = vrot.lane.b32.xlu0 %v719, 64
        %v799 = vpop.permute.xlu0 %798
        %800 = vrot.lane.b32.xlu0 %v720, 64
        %v801 = vpop.permute.xlu0 %800
        %802 = vrot.lane.b32.xlu0 %v721, 64
        %v803 = vpop.permute.xlu0 %802
        %804 = vrot.lane.b32.xlu0 %v722, 64
        %v805 = vpop.permute.xlu0 %804
        %806 = vrot.lane.b32.xlu0 %v723, 64
        %v807 = vpop.permute.xlu0 %806
        %808 = vrot.lane.b32.xlu0 %v724, 64
        %v809 = vpop.permute.xlu0 %808
        %810 = vrot.lane.b32.xlu0 %v725, 64
        %v811 = vpop.permute.xlu0 %810
        %812 = vrot.lane.b32.xlu0 %v726, 64
        %v813 = vpop.permute.xlu0 %812
        %814 = vrot.lane.b32.xlu0 %v727, 64
        %v815 = vpop.permute.xlu0 %814
        %816 = vrot.lane.b32.xlu0 %v728, 64
        %v817 = vpop.permute.xlu0 %816
        %818 = vrot.lane.b32.xlu0 %v729, 64
        %v819 = vpop.permute.xlu0 %818
        %820 = vrot.lane.b32.xlu0 %v730, 64
        %v821 = vpop.permute.xlu0 %820
        %822 = vrot.lane.b32.xlu0 %v731, 64
        %v823 = vpop.permute.xlu0 %822
        %824 = vrot.lane.b32.xlu0 %v732, 64
        %v825 = vpop.permute.xlu0 %824
        %826 = vrot.lane.b32.xlu0 %v733, 64
        %v827 = vpop.permute.xlu0 %826
        %828 = vrot.lane.b32.xlu0 %v734, 64
        %v829 = vpop.permute.xlu0 %828
        %830 = vrot.lane.b32.xlu0 %v735, 64
        %v831 = vpop.permute.xlu0 %830
        %vm864 = vcmask 785920
        %865 = vst.msk [vmem:[#allocation3] sm:$0xff] %vm864, %v769
        %866 = vst.msk [vmem:[#allocation3 + $0x18] sm:$0xff] %vm864, %v771
        %867 = vst.msk [vmem:[#allocation3 + $0x30] sm:$0xff] %vm864, %v773
        %868 = vst.msk [vmem:[#allocation3 + $0x48] sm:$0xff] %vm864, %v775
        %869 = vst.msk [vmem:[#allocation3 + $0x60] sm:$0xff] %vm864, %v777
        %870 = vst.msk [vmem:[#allocation3 + $0x78] sm:$0xff] %vm864, %v779
        %871 = vst.msk [vmem:[#allocation3 + $0x90] sm:$0xff] %vm864, %v781
        %872 = vst.msk [vmem:[#allocation3 + $0xa8] sm:$0xff] %vm864, %v783
        %873 = vst.msk [vmem:[#allocation3 + $0xc0] sm:$0xff] %vm864, %v785
        %874 = vst.msk [vmem:[#allocation3 + $0xd8] sm:$0xff] %vm864, %v787
        %875 = vst.msk [vmem:[#allocation3 + $0xf0] sm:$0xff] %vm864, %v789
        %876 = vst.msk [vmem:[#allocation3 + $0x108] sm:$0xff] %vm864, %v791
        %877 = vst.msk [vmem:[#allocation3 + $0x120] sm:$0xff] %vm864, %v793
        %878 = vst.msk [vmem:[#allocation3 + $0x138] sm:$0xff] %vm864, %v795
        %879 = vst.msk [vmem:[#allocation3 + $0x150] sm:$0xff] %vm864, %v797
        %880 = vst.msk [vmem:[#allocation3 + $0x168] sm:$0xff] %vm864, %v799
        %881 = vst.msk [vmem:[#allocation3 + $0x180] sm:$0xff] %vm864, %v801
        %882 = vst.msk [vmem:[#allocation3 + $0x198] sm:$0xff] %vm864, %v803
        %883 = vst.msk [vmem:[#allocation3 + $0x1b0] sm:$0xff] %vm864, %v805
        %884 = vst.msk [vmem:[#allocation3 + $0x1c8] sm:$0xff] %vm864, %v807
        %885 = vst.msk [vmem:[#allocation3 + $0x1e0] sm:$0xff] %vm864, %v809
        %886 = vst.msk [vmem:[#allocation3 + $0x1f8] sm:$0xff] %vm864, %v811
        %887 = vst.msk [vmem:[#allocation3 + $0x210] sm:$0xff] %vm864, %v813
        %888 = vst.msk [vmem:[#allocation3 + $0x228] sm:$0xff] %vm864, %v815
        %889 = vst.msk [vmem:[#allocation3 + $0x240] sm:$0xff] %vm864, %v817
        %890 = vst.msk [vmem:[#allocation3 + $0x258] sm:$0xff] %vm864, %v819
        %891 = vst.msk [vmem:[#allocation3 + $0x270] sm:$0xff] %vm864, %v821
        %892 = vst.msk [vmem:[#allocation3 + $0x288] sm:$0xff] %vm864, %v823
        %893 = vst.msk [vmem:[#allocation3 + $0x2a0] sm:$0xff] %vm864, %v825
        %894 = vst.msk [vmem:[#allocation3 + $0x2b8] sm:$0xff] %vm864, %v827
        %895 = vst.msk [vmem:[#allocation3 + $0x2d0] sm:$0xff] %vm864, %v829
        %896 = vst.msk [vmem:[#allocation3 + $0x2e8] sm:$0xff] %vm864, %v831
        %v897 = vld [vmem:[%s414] sm:$0xff]
        %v898 = vld [vmem:[%s414 + $0x8] sm:$0xff]
        %v899 = vld [vmem:[%s414 + $0x18] sm:$0xff]
        %v900 = vld [vmem:[%s414 + $0x20] sm:$0xff]
        %v901 = vld [vmem:[%s414 + $0x30] sm:$0xff]
        %v902 = vld [vmem:[%s414 + $0x38] sm:$0xff]
        %v903 = vld [vmem:[%s414 + $0x48] sm:$0xff]
        %v904 = vld [vmem:[%s414 + $0x50] sm:$0xff]
        %v905 = vld [vmem:[%s414 + $0x60] sm:$0xff]
        %v906 = vld [vmem:[%s414 + $0x68] sm:$0xff]
        %v907 = vld [vmem:[%s414 + $0x78] sm:$0xff]
        %v908 = vld [vmem:[%s414 + $0x80] sm:$0xff]
        %v909 = vld [vmem:[%s414 + $0x90] sm:$0xff]
        %v910 = vld [vmem:[%s414 + $0x98] sm:$0xff]
        %v911 = vld [vmem:[%s414 + $0xa8] sm:$0xff]
        %v912 = vld [vmem:[%s414 + $0xb0] sm:$0xff]
        %v913 = vld [vmem:[%s414 + $0xc0] sm:$0xff]
        %v914 = vld [vmem:[%s414 + $0xc8] sm:$0xff]
        %v915 = vld [vmem:[%s414 + $0xd8] sm:$0xff]
        %v916 = vld [vmem:[%s414 + $0xe0] sm:$0xff]
        %v917 = vld [vmem:[%s414 + $0xf0] sm:$0xff]
        %v918 = vld [vmem:[%s414 + $0xf8] sm:$0xff]
        %v919 = vld [vmem:[%s414 + $0x108] sm:$0xff]
        %v920 = vld [vmem:[%s414 + $0x110] sm:$0xff]
        %v921 = vld [vmem:[%s414 + $0x120] sm:$0xff]
        %v922 = vld [vmem:[%s414 + $0x128] sm:$0xff]
        %v923 = vld [vmem:[%s414 + $0x138] sm:$0xff]
        %v924 = vld [vmem:[%s414 + $0x140] sm:$0xff]
        %v925 = vld [vmem:[%s414 + $0x150] sm:$0xff]
        %v926 = vld [vmem:[%s414 + $0x158] sm:$0xff]
        %v927 = vld [vmem:[%s414 + $0x168] sm:$0xff]
        %v928 = vld [vmem:[%s414 + $0x170] sm:$0xff]
        %961 = vrot.lane.b32.xlu0 %v897, 96
        %v962 = vpop.permute.xlu0 %961
        %963 = vrot.lane.b32.xlu0 %v898, 96
        %v964 = vpop.permute.xlu0 %963
        %965 = vrot.lane.b32.xlu0 %v899, 96
        %v966 = vpop.permute.xlu0 %965
        %967 = vrot.lane.b32.xlu0 %v900, 96
        %v968 = vpop.permute.xlu0 %967
        %969 = vrot.lane.b32.xlu0 %v901, 96
        %v970 = vpop.permute.xlu0 %969
        %971 = vrot.lane.b32.xlu0 %v902, 96
        %v972 = vpop.permute.xlu0 %971
        %973 = vrot.lane.b32.xlu0 %v903, 96
        %v974 = vpop.permute.xlu0 %973
        %975 = vrot.lane.b32.xlu0 %v904, 96
        %v976 = vpop.permute.xlu0 %975
        %977 = vrot.lane.b32.xlu0 %v905, 96
        %v978 = vpop.permute.xlu0 %977
        %979 = vrot.lane.b32.xlu0 %v906, 96
        %v980 = vpop.permute.xlu0 %979
        %981 = vrot.lane.b32.xlu0 %v907, 96
        %v982 = vpop.permute.xlu0 %981
        %983 = vrot.lane.b32.xlu0 %v908, 96
        %v984 = vpop.permute.xlu0 %983
        %985 = vrot.lane.b32.xlu0 %v909, 96
        %v986 = vpop.permute.xlu0 %985
        %987 = vrot.lane.b32.xlu0 %v910, 96
        %v988 = vpop.permute.xlu0 %987
        %989 = vrot.lane.b32.xlu0 %v911, 96
        %v990 = vpop.permute.xlu0 %989
        %991 = vrot.lane.b32.xlu0 %v912, 96
        %v992 = vpop.permute.xlu0 %991
        %993 = vrot.lane.b32.xlu0 %v913, 96
        %v994 = vpop.permute.xlu0 %993
        %995 = vrot.lane.b32.xlu0 %v914, 96
        %v996 = vpop.permute.xlu0 %995
        %997 = vrot.lane.b32.xlu0 %v915, 96
        %v998 = vpop.permute.xlu0 %997
        %999 = vrot.lane.b32.xlu0 %v916, 96
        %v1000 = vpop.permute.xlu0 %999
        %1001 = vrot.lane.b32.xlu0 %v917, 96
        %v1002 = vpop.permute.xlu0 %1001
        %1003 = vrot.lane.b32.xlu0 %v918, 96
        %v1004 = vpop.permute.xlu0 %1003
        %1005 = vrot.lane.b32.xlu0 %v919, 96
        %v1006 = vpop.permute.xlu0 %1005
        %1007 = vrot.lane.b32.xlu0 %v920, 96
        %v1008 = vpop.permute.xlu0 %1007
        %1009 = vrot.lane.b32.xlu0 %v921, 96
        %v1010 = vpop.permute.xlu0 %1009
        %1011 = vrot.lane.b32.xlu0 %v922, 96
        %v1012 = vpop.permute.xlu0 %1011
        %1013 = vrot.lane.b32.xlu0 %v923, 96
        %v1014 = vpop.permute.xlu0 %1013
        %1015 = vrot.lane.b32.xlu0 %v924, 96
        %v1016 = vpop.permute.xlu0 %1015
        %1017 = vrot.lane.b32.xlu0 %v925, 96
        %v1018 = vpop.permute.xlu0 %1017
        %1019 = vrot.lane.b32.xlu0 %v926, 96
        %v1020 = vpop.permute.xlu0 %1019
        %1021 = vrot.lane.b32.xlu0 %v927, 96
        %v1022 = vpop.permute.xlu0 %1021
        %1023 = vrot.lane.b32.xlu0 %v928, 96
        %v1024 = vpop.permute.xlu0 %1023
        %vm1057 = vcmask 1048320
        %1058 = vst.msk [vmem:[#allocation3] sm:$0xff] %vm1057, %v962
        %1059 = vst.msk [vmem:[#allocation3 + $0x18] sm:$0xff] %vm1057, %v964
        %1060 = vst.msk [vmem:[#allocation3 + $0x30] sm:$0xff] %vm1057, %v966
        %1061 = vst.msk [vmem:[#allocation3 + $0x48] sm:$0xff] %vm1057, %v968
        %1062 = vst.msk [vmem:[#allocation3 + $0x60] sm:$0xff] %vm1057, %v970
        %1063 = vst.msk [vmem:[#allocation3 + $0x78] sm:$0xff] %vm1057, %v972
        %1064 = vst.msk [vmem:[#allocation3 + $0x90] sm:$0xff] %vm1057, %v974
        %1065 = vst.msk [vmem:[#allocation3 + $0xa8] sm:$0xff] %vm1057, %v976
        %1066 = vst.msk [vmem:[#allocation3 + $0xc0] sm:$0xff] %vm1057, %v978
        %1067 = vst.msk [vmem:[#allocation3 + $0xd8] sm:$0xff] %vm1057, %v980
        %1068 = vst.msk [vmem:[#allocation3 + $0xf0] sm:$0xff] %vm1057, %v982
        %1069 = vst.msk [vmem:[#allocation3 + $0x108] sm:$0xff] %vm1057, %v984
        %1070 = vst.msk [vmem:[#allocation3 + $0x120] sm:$0xff] %vm1057, %v986
        %1071 = vst.msk [vmem:[#allocation3 + $0x138] sm:$0xff] %vm1057, %v988
        %1072 = vst.msk [vmem:[#allocation3 + $0x150] sm:$0xff] %vm1057, %v990
        %1073 = vst.msk [vmem:[#allocation3 + $0x168] sm:$0xff] %vm1057, %v992
        %1074 = vst.msk [vmem:[#allocation3 + $0x180] sm:$0xff] %vm1057, %v994
        %1075 = vst.msk [vmem:[#allocation3 + $0x198] sm:$0xff] %vm1057, %v996
        %1076 = vst.msk [vmem:[#allocation3 + $0x1b0] sm:$0xff] %vm1057, %v998
        %1077 = vst.msk [vmem:[#allocation3 + $0x1c8] sm:$0xff] %vm1057, %v1000
        %1078 = vst.msk [vmem:[#allocation3 + $0x1e0] sm:$0xff] %vm1057, %v1002
        %1079 = vst.msk [vmem:[#allocation3 + $0x1f8] sm:$0xff] %vm1057, %v1004
        %1080 = vst.msk [vmem:[#allocation3 + $0x210] sm:$0xff] %vm1057, %v1006
        %1081 = vst.msk [vmem:[#allocation3 + $0x228] sm:$0xff] %vm1057, %v1008
        %1082 = vst.msk [vmem:[#allocation3 + $0x240] sm:$0xff] %vm1057, %v1010
        %1083 = vst.msk [vmem:[#allocation3 + $0x258] sm:$0xff] %vm1057, %v1012
        %1084 = vst.msk [vmem:[#allocation3 + $0x270] sm:$0xff] %vm1057, %v1014
        %1085 = vst.msk [vmem:[#allocation3 + $0x288] sm:$0xff] %vm1057, %v1016
        %1086 = vst.msk [vmem:[#allocation3 + $0x2a0] sm:$0xff] %vm1057, %v1018
        %1087 = vst.msk [vmem:[#allocation3 + $0x2b8] sm:$0xff] %vm1057, %v1020
        %1088 = vst.msk [vmem:[#allocation3 + $0x2d0] sm:$0xff] %vm1057, %v1022
        %1089 = vst.msk [vmem:[#allocation3 + $0x2e8] sm:$0xff] %vm1057, %v1024
        %v1090 = vld [vmem:[%s414 + $0x1] sm:$0xff]
        %v1091 = vld [vmem:[%s414 + $0x9] sm:$0xff]
        %v1092 = vld [vmem:[%s414 + $0x19] sm:$0xff]
        %v1093 = vld [vmem:[%s414 + $0x21] sm:$0xff]
        %v1094 = vld [vmem:[%s414 + $0x31] sm:$0xff]
        %v1095 = vld [vmem:[%s414 + $0x39] sm:$0xff]
        %v1096 = vld [vmem:[%s414 + $0x49] sm:$0xff]
        %v1097 = vld [vmem:[%s414 + $0x51] sm:$0xff]
        %v1098 = vld [vmem:[%s414 + $0x61] sm:$0xff]
        %v1099 = vld [vmem:[%s414 + $0x69] sm:$0xff]
        %v1100 = vld [vmem:[%s414 + $0x79] sm:$0xff]
        %v1101 = vld [vmem:[%s414 + $0x81] sm:$0xff]
        %v1102 = vld [vmem:[%s414 + $0x91] sm:$0xff]
        %v1103 = vld [vmem:[%s414 + $0x99] sm:$0xff]
        %v1104 = vld [vmem:[%s414 + $0xa9] sm:$0xff]
        %v1105 = vld [vmem:[%s414 + $0xb1] sm:$0xff]
        %v1106 = vld [vmem:[%s414 + $0xc1] sm:$0xff]
        %v1107 = vld [vmem:[%s414 + $0xc9] sm:$0xff]
        %v1108 = vld [vmem:[%s414 + $0xd9] sm:$0xff]
        %v1109 = vld [vmem:[%s414 + $0xe1] sm:$0xff]
        %v1110 = vld [vmem:[%s414 + $0xf1] sm:$0xff]
        %v1111 = vld [vmem:[%s414 + $0xf9] sm:$0xff]
        %v1112 = vld [vmem:[%s414 + $0x109] sm:$0xff]
        %v1113 = vld [vmem:[%s414 + $0x111] sm:$0xff]
        %v1114 = vld [vmem:[%s414 + $0x121] sm:$0xff]
        %v1115 = vld [vmem:[%s414 + $0x129] sm:$0xff]
        %v1116 = vld [vmem:[%s414 + $0x139] sm:$0xff]
        %v1117 = vld [vmem:[%s414 + $0x141] sm:$0xff]
        %v1118 = vld [vmem:[%s414 + $0x151] sm:$0xff]
        %v1119 = vld [vmem:[%s414 + $0x159] sm:$0xff]
        %v1120 = vld [vmem:[%s414 + $0x169] sm:$0xff]
        %v1121 = vld [vmem:[%s414 + $0x171] sm:$0xff]
        %1122 = vst.msk [vmem:[#allocation3 + $0x8] sm:$0xff] %vm326, %v1090
        %1123 = vst.msk [vmem:[#allocation3 + $0x20] sm:$0xff] %vm326, %v1091
        %1124 = vst.msk [vmem:[#allocation3 + $0x38] sm:$0xff] %vm326, %v1092
        %1125 = vst.msk [vmem:[#allocation3 + $0x50] sm:$0xff] %vm326, %v1093
        %1126 = vst.msk [vmem:[#allocation3 + $0x68] sm:$0xff] %vm326, %v1094
        %1127 = vst.msk [vmem:[#allocation3 + $0x80] sm:$0xff] %vm326, %v1095
        %1128 = vst.msk [vmem:[#allocation3 + $0x98] sm:$0xff] %vm326, %v1096
        %1129 = vst.msk [vmem:[#allocation3 + $0xb0] sm:$0xff] %vm326, %v1097
        %1130 = vst.msk [vmem:[#allocation3 + $0xc8] sm:$0xff] %vm326, %v1098
        %1131 = vst.msk [vmem:[#allocation3 + $0xe0] sm:$0xff] %vm326, %v1099
        %1132 = vst.msk [vmem:[#allocation3 + $0xf8] sm:$0xff] %vm326, %v1100
        %1133 = vst.msk [vmem:[#allocation3 + $0x110] sm:$0xff] %vm326, %v1101
        %1134 = vst.msk [vmem:[#allocation3 + $0x128] sm:$0xff] %vm326, %v1102
        %1135 = vst.msk [vmem:[#allocation3 + $0x140] sm:$0xff] %vm326, %v1103
        %1136 = vst.msk [vmem:[#allocation3 + $0x158] sm:$0xff] %vm326, %v1104
        %1137 = vst.msk [vmem:[#allocation3 + $0x170] sm:$0xff] %vm326, %v1105
        %1138 = vst.msk [vmem:[#allocation3 + $0x188] sm:$0xff] %vm326, %v1106
        %1139 = vst.msk [vmem:[#allocation3 + $0x1a0] sm:$0xff] %vm326, %v1107
        %1140 = vst.msk [vmem:[#allocation3 + $0x1b8] sm:$0xff] %vm326, %v1108
        %1141 = vst.msk [vmem:[#allocation3 + $0x1d0] sm:$0xff] %vm326, %v1109
        %1142 = vst.msk [vmem:[#allocation3 + $0x1e8] sm:$0xff] %vm326, %v1110
        %1143 = vst.msk [vmem:[#allocation3 + $0x200] sm:$0xff] %vm326, %v1111
        %1144 = vst.msk [vmem:[#allocation3 + $0x218] sm:$0xff] %vm326, %v1112
        %1145 = vst.msk [vmem:[#allocation3 + $0x230] sm:$0xff] %vm326, %v1113
        %1146 = vst.msk [vmem:[#allocation3 + $0x248] sm:$0xff] %vm326, %v1114
        %1147 = vst.msk [vmem:[#allocation3 + $0x260] sm:$0xff] %vm326, %v1115
        %1148 = vst.msk [vmem:[#allocation3 + $0x278] sm:$0xff] %vm326, %v1116
        %1149 = vst.msk [vmem:[#allocation3 + $0x290] sm:$0xff] %vm326, %v1117
        %1150 = vst.msk [vmem:[#allocation3 + $0x2a8] sm:$0xff] %vm326, %v1118
        %1151 = vst.msk [vmem:[#allocation3 + $0x2c0] sm:$0xff] %vm326, %v1119
        %1152 = vst.msk [vmem:[#allocation3 + $0x2d8] sm:$0xff] %vm326, %v1120
        %1153 = vst.msk [vmem:[#allocation3 + $0x2f0] sm:$0xff] %vm326, %v1121
        %v1154 = vld [vmem:[%s414 + $0x2] sm:$0xff]
        %v1155 = vld [vmem:[%s414 + $0xa] sm:$0xff]
        %v1156 = vld [vmem:[%s414 + $0x1a] sm:$0xff]
        %v1157 = vld [vmem:[%s414 + $0x22] sm:$0xff]
        %v1158 = vld [vmem:[%s414 + $0x32] sm:$0xff]
        %v1159 = vld [vmem:[%s414 + $0x3a] sm:$0xff]
        %v1160 = vld [vmem:[%s414 + $0x4a] sm:$0xff]
        %v1161 = vld [vmem:[%s414 + $0x52] sm:$0xff]
        %v1162 = vld [vmem:[%s414 + $0x62] sm:$0xff]
        %v1163 = vld [vmem:[%s414 + $0x6a] sm:$0xff]
        %v1164 = vld [vmem:[%s414 + $0x7a] sm:$0xff]
        %v1165 = vld [vmem:[%s414 + $0x82] sm:$0xff]
        %v1166 = vld [vmem:[%s414 + $0x92] sm:$0xff]
        %v1167 = vld [vmem:[%s414 + $0x9a] sm:$0xff]
        %v1168 = vld [vmem:[%s414 + $0xaa] sm:$0xff]
        %v1169 = vld [vmem:[%s414 + $0xb2] sm:$0xff]
        %v1170 = vld [vmem:[%s414 + $0xc2] sm:$0xff]
        %v1171 = vld [vmem:[%s414 + $0xca] sm:$0xff]
        %v1172 = vld [vmem:[%s414 + $0xda] sm:$0xff]
        %v1173 = vld [vmem:[%s414 + $0xe2] sm:$0xff]
        %v1174 = vld [vmem:[%s414 + $0xf2] sm:$0xff]
        %v1175 = vld [vmem:[%s414 + $0xfa] sm:$0xff]
        %v1176 = vld [vmem:[%s414 + $0x10a] sm:$0xff]
        %v1177 = vld [vmem:[%s414 + $0x112] sm:$0xff]
        %v1178 = vld [vmem:[%s414 + $0x122] sm:$0xff]
        %v1179 = vld [vmem:[%s414 + $0x12a] sm:$0xff]
        %v1180 = vld [vmem:[%s414 + $0x13a] sm:$0xff]
        %v1181 = vld [vmem:[%s414 + $0x142] sm:$0xff]
        %v1182 = vld [vmem:[%s414 + $0x152] sm:$0xff]
        %v1183 = vld [vmem:[%s414 + $0x15a] sm:$0xff]
        %v1184 = vld [vmem:[%s414 + $0x16a] sm:$0xff]
        %v1185 = vld [vmem:[%s414 + $0x172] sm:$0xff]
        %1218 = vrot.lane.b32.xlu0 %v1154, 32
        %v1219 = vpop.permute.xlu0 %1218
        %1220 = vrot.lane.b32.xlu0 %v1155, 32
        %v1221 = vpop.permute.xlu0 %1220
        %1222 = vrot.lane.b32.xlu0 %v1156, 32
        %v1223 = vpop.permute.xlu0 %1222
        %1224 = vrot.lane.b32.xlu0 %v1157, 32
        %v1225 = vpop.permute.xlu0 %1224
        %1226 = vrot.lane.b32.xlu0 %v1158, 32
        %v1227 = vpop.permute.xlu0 %1226
        %1228 = vrot.lane.b32.xlu0 %v1159, 32
        %v1229 = vpop.permute.xlu0 %1228
        %1230 = vrot.lane.b32.xlu0 %v1160, 32
        %v1231 = vpop.permute.xlu0 %1230
        %1232 = vrot.lane.b32.xlu0 %v1161, 32
        %v1233 = vpop.permute.xlu0 %1232
        %1234 = vrot.lane.b32.xlu0 %v1162, 32
        %v1235 = vpop.permute.xlu0 %1234
        %1236 = vrot.lane.b32.xlu0 %v1163, 32
        %v1237 = vpop.permute.xlu0 %1236
        %1238 = vrot.lane.b32.xlu0 %v1164, 32
        %v1239 = vpop.permute.xlu0 %1238
        %1240 = vrot.lane.b32.xlu0 %v1165, 32
        %v1241 = vpop.permute.xlu0 %1240
        %1242 = vrot.lane.b32.xlu0 %v1166, 32
        %v1243 = vpop.permute.xlu0 %1242
        %1244 = vrot.lane.b32.xlu0 %v1167, 32
        %v1245 = vpop.permute.xlu0 %1244
        %1246 = vrot.lane.b32.xlu0 %v1168, 32
        %v1247 = vpop.permute.xlu0 %1246
        %1248 = vrot.lane.b32.xlu0 %v1169, 32
        %v1249 = vpop.permute.xlu0 %1248
        %1250 = vrot.lane.b32.xlu0 %v1170, 32
        %v1251 = vpop.permute.xlu0 %1250
        %1252 = vrot.lane.b32.xlu0 %v1171, 32
        %v1253 = vpop.permute.xlu0 %1252
        %1254 = vrot.lane.b32.xlu0 %v1172, 32
        %v1255 = vpop.permute.xlu0 %1254
        %1256 = vrot.lane.b32.xlu0 %v1173, 32
        %v1257 = vpop.permute.xlu0 %1256
        %1258 = vrot.lane.b32.xlu0 %v1174, 32
        %v1259 = vpop.permute.xlu0 %1258
        %1260 = vrot.lane.b32.xlu0 %v1175, 32
        %v1261 = vpop.permute.xlu0 %1260
        %1262 = vrot.lane.b32.xlu0 %v1176, 32
        %v1263 = vpop.permute.xlu0 %1262
        %1264 = vrot.lane.b32.xlu0 %v1177, 32
        %v1265 = vpop.permute.xlu0 %1264
        %1266 = vrot.lane.b32.xlu0 %v1178, 32
        %v1267 = vpop.permute.xlu0 %1266
        %1268 = vrot.lane.b32.xlu0 %v1179, 32
        %v1269 = vpop.permute.xlu0 %1268
        %1270 = vrot.lane.b32.xlu0 %v1180, 32
        %v1271 = vpop.permute.xlu0 %1270
        %1272 = vrot.lane.b32.xlu0 %v1181, 32
        %v1273 = vpop.permute.xlu0 %1272
        %1274 = vrot.lane.b32.xlu0 %v1182, 32
        %v1275 = vpop.permute.xlu0 %1274
        %1276 = vrot.lane.b32.xlu0 %v1183, 32
        %v1277 = vpop.permute.xlu0 %1276
        %1278 = vrot.lane.b32.xlu0 %v1184, 32
        %v1279 = vpop.permute.xlu0 %1278
        %1280 = vrot.lane.b32.xlu0 %v1185, 32
        %v1281 = vpop.permute.xlu0 %1280
        %1314 = vst.msk [vmem:[#allocation3 + $0x8] sm:$0xff] %vm671, %v1219
        %1315 = vst.msk [vmem:[#allocation3 + $0x20] sm:$0xff] %vm671, %v1221
        %1316 = vst.msk [vmem:[#allocation3 + $0x38] sm:$0xff] %vm671, %v1223
        %1317 = vst.msk [vmem:[#allocation3 + $0x50] sm:$0xff] %vm671, %v1225
        %1318 = vst.msk [vmem:[#allocation3 + $0x68] sm:$0xff] %vm671, %v1227
        %1319 = vst.msk [vmem:[#allocation3 + $0x80] sm:$0xff] %vm671, %v1229
        %1320 = vst.msk [vmem:[#allocation3 + $0x98] sm:$0xff] %vm671, %v1231
        %1321 = vst.msk [vmem:[#allocation3 + $0xb0] sm:$0xff] %vm671, %v1233
        %1322 = vst.msk [vmem:[#allocation3 + $0xc8] sm:$0xff] %vm671, %v1235
        %1323 = vst.msk [vmem:[#allocation3 + $0xe0] sm:$0xff] %vm671, %v1237
        %1324 = vst.msk [vmem:[#allocation3 + $0xf8] sm:$0xff] %vm671, %v1239
        %1325 = vst.msk [vmem:[#allocation3 + $0x110] sm:$0xff] %vm671, %v1241
        %1326 = vst.msk [vmem:[#allocation3 + $0x128] sm:$0xff] %vm671, %v1243
        %1327 = vst.msk [vmem:[#allocation3 + $0x140] sm:$0xff] %vm671, %v1245
        %1328 = vst.msk [vmem:[#allocation3 + $0x158] sm:$0xff] %vm671, %v1247
        %1329 = vst.msk [vmem:[#allocation3 + $0x170] sm:$0xff] %vm671, %v1249
        %1330 = vst.msk [vmem:[#allocation3 + $0x188] sm:$0xff] %vm671, %v1251
        %1331 = vst.msk [vmem:[#allocation3 + $0x1a0] sm:$0xff] %vm671, %v1253
        %1332 = vst.msk [vmem:[#allocation3 + $0x1b8] sm:$0xff] %vm671, %v1255
        %1333 = vst.msk [vmem:[#allocation3 + $0x1d0] sm:$0xff] %vm671, %v1257
        %1334 = vst.msk [vmem:[#allocation3 + $0x1e8] sm:$0xff] %vm671, %v1259
        %1335 = vst.msk [vmem:[#allocation3 + $0x200] sm:$0xff] %vm671, %v1261
        %1336 = vst.msk [vmem:[#allocation3 + $0x218] sm:$0xff] %vm671, %v1263
        %1337 = vst.msk [vmem:[#allocation3 + $0x230] sm:$0xff] %vm671, %v1265
        %1338 = vst.msk [vmem:[#allocation3 + $0x248] sm:$0xff] %vm671, %v1267
        %1339 = vst.msk [vmem:[#allocation3 + $0x260] sm:$0xff] %vm671, %v1269
        %1340 = vst.msk [vmem:[#allocation3 + $0x278] sm:$0xff] %vm671, %v1271
        %1341 = vst.msk [vmem:[#allocation3 + $0x290] sm:$0xff] %vm671, %v1273
        %1342 = vst.msk [vmem:[#allocation3 + $0x2a8] sm:$0xff] %vm671, %v1275
        %1343 = vst.msk [vmem:[#allocation3 + $0x2c0] sm:$0xff] %vm671, %v1277
        %1344 = vst.msk [vmem:[#allocation3 + $0x2d8] sm:$0xff] %vm671, %v1279
        %1345 = vst.msk [vmem:[#allocation3 + $0x2f0] sm:$0xff] %vm671, %v1281
        %s1346 = scalar_lea.vmem [#allocation2], 48
        %v1347 = vld [vmem:[%s1346] sm:$0xff]
        %v1348 = vld [vmem:[%s1346 + $0x8] sm:$0xff]
        %v1349 = vld [vmem:[%s1346 + $0x18] sm:$0xff]
        %v1350 = vld [vmem:[%s1346 + $0x20] sm:$0xff]
        %v1351 = vld [vmem:[%s1346 + $0x30] sm:$0xff]
        %v1352 = vld [vmem:[%s1346 + $0x38] sm:$0xff]
        %v1353 = vld [vmem:[%s1346 + $0x48] sm:$0xff]
        %v1354 = vld [vmem:[%s1346 + $0x50] sm:$0xff]
        %v1355 = vld [vmem:[%s1346 + $0x60] sm:$0xff]
        %v1356 = vld [vmem:[%s1346 + $0x68] sm:$0xff]
        %v1357 = vld [vmem:[%s1346 + $0x78] sm:$0xff]
        %v1358 = vld [vmem:[%s1346 + $0x80] sm:$0xff]
        %v1359 = vld [vmem:[%s1346 + $0x90] sm:$0xff]
        %v1360 = vld [vmem:[%s1346 + $0x98] sm:$0xff]
        %v1361 = vld [vmem:[%s1346 + $0xa8] sm:$0xff]
        %v1362 = vld [vmem:[%s1346 + $0xb0] sm:$0xff]
        %v1363 = vld [vmem:[%s1346 + $0xc0] sm:$0xff]
        %v1364 = vld [vmem:[%s1346 + $0xc8] sm:$0xff]
        %v1365 = vld [vmem:[%s1346 + $0xd8] sm:$0xff]
        %v1366 = vld [vmem:[%s1346 + $0xe0] sm:$0xff]
        %v1367 = vld [vmem:[%s1346 + $0xf0] sm:$0xff]
        %v1368 = vld [vmem:[%s1346 + $0xf8] sm:$0xff]
        %v1369 = vld [vmem:[%s1346 + $0x108] sm:$0xff]
        %v1370 = vld [vmem:[%s1346 + $0x110] sm:$0xff]
        %v1371 = vld [vmem:[%s1346 + $0x120] sm:$0xff]
        %v1372 = vld [vmem:[%s1346 + $0x128] sm:$0xff]
        %v1373 = vld [vmem:[%s1346 + $0x138] sm:$0xff]
        %v1374 = vld [vmem:[%s1346 + $0x140] sm:$0xff]
        %v1375 = vld [vmem:[%s1346 + $0x150] sm:$0xff]
        %v1376 = vld [vmem:[%s1346 + $0x158] sm:$0xff]
        %v1377 = vld [vmem:[%s1346 + $0x168] sm:$0xff]
        %v1378 = vld [vmem:[%s1346 + $0x170] sm:$0xff]
        %1411 = vrot.lane.b32.xlu0 %v1347, 64
        %v1412 = vpop.permute.xlu0 %1411
        %1413 = vrot.lane.b32.xlu0 %v1348, 64
        %v1414 = vpop.permute.xlu0 %1413
        %1415 = vrot.lane.b32.xlu0 %v1349, 64
        %v1416 = vpop.permute.xlu0 %1415
        %1417 = vrot.lane.b32.xlu0 %v1350, 64
        %v1418 = vpop.permute.xlu0 %1417
        %1419 = vrot.lane.b32.xlu0 %v1351, 64
        %v1420 = vpop.permute.xlu0 %1419
        %1421 = vrot.lane.b32.xlu0 %v1352, 64
        %v1422 = vpop.permute.xlu0 %1421
        %1423 = vrot.lane.b32.xlu0 %v1353, 64
        %v1424 = vpop.permute.xlu0 %1423
        %1425 = vrot.lane.b32.xlu0 %v1354, 64
        %v1426 = vpop.permute.xlu0 %1425
        %1427 = vrot.lane.b32.xlu0 %v1355, 64
        %v1428 = vpop.permute.xlu0 %1427
        %1429 = vrot.lane.b32.xlu0 %v1356, 64
        %v1430 = vpop.permute.xlu0 %1429
        %1431 = vrot.lane.b32.xlu0 %v1357, 64
        %v1432 = vpop.permute.xlu0 %1431
        %1433 = vrot.lane.b32.xlu0 %v1358, 64
        %v1434 = vpop.permute.xlu0 %1433
        %1435 = vrot.lane.b32.xlu0 %v1359, 64
        %v1436 = vpop.permute.xlu0 %1435
        %1437 = vrot.lane.b32.xlu0 %v1360, 64
        %v1438 = vpop.permute.xlu0 %1437
        %1439 = vrot.lane.b32.xlu0 %v1361, 64
        %v1440 = vpop.permute.xlu0 %1439
        %1441 = vrot.lane.b32.xlu0 %v1362, 64
        %v1442 = vpop.permute.xlu0 %1441
        %1443 = vrot.lane.b32.xlu0 %v1363, 64
        %v1444 = vpop.permute.xlu0 %1443
        %1445 = vrot.lane.b32.xlu0 %v1364, 64
        %v1446 = vpop.permute.xlu0 %1445
        %1447 = vrot.lane.b32.xlu0 %v1365, 64
        %v1448 = vpop.permute.xlu0 %1447
        %1449 = vrot.lane.b32.xlu0 %v1366, 64
        %v1450 = vpop.permute.xlu0 %1449
        %1451 = vrot.lane.b32.xlu0 %v1367, 64
        %v1452 = vpop.permute.xlu0 %1451
        %1453 = vrot.lane.b32.xlu0 %v1368, 64
        %v1454 = vpop.permute.xlu0 %1453
        %1455 = vrot.lane.b32.xlu0 %v1369, 64
        %v1456 = vpop.permute.xlu0 %1455
        %1457 = vrot.lane.b32.xlu0 %v1370, 64
        %v1458 = vpop.permute.xlu0 %1457
        %1459 = vrot.lane.b32.xlu0 %v1371, 64
        %v1460 = vpop.permute.xlu0 %1459
        %1461 = vrot.lane.b32.xlu0 %v1372, 64
        %v1462 = vpop.permute.xlu0 %1461
        %1463 = vrot.lane.b32.xlu0 %v1373, 64
        %v1464 = vpop.permute.xlu0 %1463
        %1465 = vrot.lane.b32.xlu0 %v1374, 64
        %v1466 = vpop.permute.xlu0 %1465
        %1467 = vrot.lane.b32.xlu0 %v1375, 64
        %v1468 = vpop.permute.xlu0 %1467
        %1469 = vrot.lane.b32.xlu0 %v1376, 64
        %v1470 = vpop.permute.xlu0 %1469
        %1471 = vrot.lane.b32.xlu0 %v1377, 64
        %v1472 = vpop.permute.xlu0 %1471
        %1473 = vrot.lane.b32.xlu0 %v1378, 64
        %v1474 = vpop.permute.xlu0 %1473
        %1507 = vst.msk [vmem:[#allocation3 + $0x8] sm:$0xff] %vm864, %v1412
        %1508 = vst.msk [vmem:[#allocation3 + $0x20] sm:$0xff] %vm864, %v1414
        %1509 = vst.msk [vmem:[#allocation3 + $0x38] sm:$0xff] %vm864, %v1416
        %1510 = vst.msk [vmem:[#allocation3 + $0x50] sm:$0xff] %vm864, %v1418
        %1511 = vst.msk [vmem:[#allocation3 + $0x68] sm:$0xff] %vm864, %v1420
        %1512 = vst.msk [vmem:[#allocation3 + $0x80] sm:$0xff] %vm864, %v1422
        %1513 = vst.msk [vmem:[#allocation3 + $0x98] sm:$0xff] %vm864, %v1424
        %1514 = vst.msk [vmem:[#allocation3 + $0xb0] sm:$0xff] %vm864, %v1426
        %1515 = vst.msk [vmem:[#allocation3 + $0xc8] sm:$0xff] %vm864, %v1428
        %1516 = vst.msk [vmem:[#allocation3 + $0xe0] sm:$0xff] %vm864, %v1430
        %1517 = vst.msk [vmem:[#allocation3 + $0xf8] sm:$0xff] %vm864, %v1432
        %1518 = vst.msk [vmem:[#allocation3 + $0x110] sm:$0xff] %vm864, %v1434
        %1519 = vst.msk [vmem:[#allocation3 + $0x128] sm:$0xff] %vm864, %v1436
        %1520 = vst.msk [vmem:[#allocation3 + $0x140] sm:$0xff] %vm864, %v1438
        %1521 = vst.msk [vmem:[#allocation3 + $0x158] sm:$0xff] %vm864, %v1440
        %1522 = vst.msk [vmem:[#allocation3 + $0x170] sm:$0xff] %vm864, %v1442
        %1523 = vst.msk [vmem:[#allocation3 + $0x188] sm:$0xff] %vm864, %v1444
        %1524 = vst.msk [vmem:[#allocation3 + $0x1a0] sm:$0xff] %vm864, %v1446
        %1525 = vst.msk [vmem:[#allocation3 + $0x1b8] sm:$0xff] %vm864, %v1448
        %1526 = vst.msk [vmem:[#allocation3 + $0x1d0] sm:$0xff] %vm864, %v1450
        %1527 = vst.msk [vmem:[#allocation3 + $0x1e8] sm:$0xff] %vm864, %v1452
        %1528 = vst.msk [vmem:[#allocation3 + $0x200] sm:$0xff] %vm864, %v1454
        %1529 = vst.msk [vmem:[#allocation3 + $0x218] sm:$0xff] %vm864, %v1456
        %1530 = vst.msk [vmem:[#allocation3 + $0x230] sm:$0xff] %vm864, %v1458
        %1531 = vst.msk [vmem:[#allocation3 + $0x248] sm:$0xff] %vm864, %v1460
        %1532 = vst.msk [vmem:[#allocation3 + $0x260] sm:$0xff] %vm864, %v1462
        %1533 = vst.msk [vmem:[#allocation3 + $0x278] sm:$0xff] %vm864, %v1464
        %1534 = vst.msk [vmem:[#allocation3 + $0x290] sm:$0xff] %vm864, %v1466
        %1535 = vst.msk [vmem:[#allocation3 + $0x2a8] sm:$0xff] %vm864, %v1468
        %1536 = vst.msk [vmem:[#allocation3 + $0x2c0] sm:$0xff] %vm864, %v1470
        %1537 = vst.msk [vmem:[#allocation3 + $0x2d8] sm:$0xff] %vm864, %v1472
        %1538 = vst.msk [vmem:[#allocation3 + $0x2f0] sm:$0xff] %vm864, %v1474
        %v1539 = vld [vmem:[%s1346 + $0x1] sm:$0xff]
        %v1540 = vld [vmem:[%s1346 + $0x9] sm:$0xff]
        %v1541 = vld [vmem:[%s1346 + $0x19] sm:$0xff]
        %v1542 = vld [vmem:[%s1346 + $0x21] sm:$0xff]
        %v1543 = vld [vmem:[%s1346 + $0x31] sm:$0xff]
        %v1544 = vld [vmem:[%s1346 + $0x39] sm:$0xff]
        %v1545 = vld [vmem:[%s1346 + $0x49] sm:$0xff]
        %v1546 = vld [vmem:[%s1346 + $0x51] sm:$0xff]
        %v1547 = vld [vmem:[%s1346 + $0x61] sm:$0xff]
        %v1548 = vld [vmem:[%s1346 + $0x69] sm:$0xff]
        %v1549 = vld [vmem:[%s1346 + $0x79] sm:$0xff]
        %v1550 = vld [vmem:[%s1346 + $0x81] sm:$0xff]
        %v1551 = vld [vmem:[%s1346 + $0x91] sm:$0xff]
        %v1552 = vld [vmem:[%s1346 + $0x99] sm:$0xff]
        %v1553 = vld [vmem:[%s1346 + $0xa9] sm:$0xff]
        %v1554 = vld [vmem:[%s1346 + $0xb1] sm:$0xff]
        %v1555 = vld [vmem:[%s1346 + $0xc1] sm:$0xff]
        %v1556 = vld [vmem:[%s1346 + $0xc9] sm:$0xff]
        %v1557 = vld [vmem:[%s1346 + $0xd9] sm:$0xff]
        %v1558 = vld [vmem:[%s1346 + $0xe1] sm:$0xff]
        %v1559 = vld [vmem:[%s1346 + $0xf1] sm:$0xff]
        %v1560 = vld [vmem:[%s1346 + $0xf9] sm:$0xff]
        %v1561 = vld [vmem:[%s1346 + $0x109] sm:$0xff]
        %v1562 = vld [vmem:[%s1346 + $0x111] sm:$0xff]
        %v1563 = vld [vmem:[%s1346 + $0x121] sm:$0xff]
        %v1564 = vld [vmem:[%s1346 + $0x129] sm:$0xff]
        %v1565 = vld [vmem:[%s1346 + $0x139] sm:$0xff]
        %v1566 = vld [vmem:[%s1346 + $0x141] sm:$0xff]
        %v1567 = vld [vmem:[%s1346 + $0x151] sm:$0xff]
        %v1568 = vld [vmem:[%s1346 + $0x159] sm:$0xff]
        %v1569 = vld [vmem:[%s1346 + $0x169] sm:$0xff]
        %v1570 = vld [vmem:[%s1346 + $0x171] sm:$0xff]
        %1603 = vrot.lane.b32.xlu0 %v1539, 96
        %v1604 = vpop.permute.xlu0 %1603
        %1605 = vrot.lane.b32.xlu0 %v1540, 96
        %v1606 = vpop.permute.xlu0 %1605
        %1607 = vrot.lane.b32.xlu0 %v1541, 96
        %v1608 = vpop.permute.xlu0 %1607
        %1609 = vrot.lane.b32.xlu0 %v1542, 96
        %v1610 = vpop.permute.xlu0 %1609
        %1611 = vrot.lane.b32.xlu0 %v1543, 96
        %v1612 = vpop.permute.xlu0 %1611
        %1613 = vrot.lane.b32.xlu0 %v1544, 96
        %v1614 = vpop.permute.xlu0 %1613
        %1615 = vrot.lane.b32.xlu0 %v1545, 96
        %v1616 = vpop.permute.xlu0 %1615
        %1617 = vrot.lane.b32.xlu0 %v1546, 96
        %v1618 = vpop.permute.xlu0 %1617
        %1619 = vrot.lane.b32.xlu0 %v1547, 96
        %v1620 = vpop.permute.xlu0 %1619
        %1621 = vrot.lane.b32.xlu0 %v1548, 96
        %v1622 = vpop.permute.xlu0 %1621
        %1623 = vrot.lane.b32.xlu0 %v1549, 96
        %v1624 = vpop.permute.xlu0 %1623
        %1625 = vrot.lane.b32.xlu0 %v1550, 96
        %v1626 = vpop.permute.xlu0 %1625
        %1627 = vrot.lane.b32.xlu0 %v1551, 96
        %v1628 = vpop.permute.xlu0 %1627
        %1629 = vrot.lane.b32.xlu0 %v1552, 96
        %v1630 = vpop.permute.xlu0 %1629
        %1631 = vrot.lane.b32.xlu0 %v1553, 96
        %v1632 = vpop.permute.xlu0 %1631
        %1633 = vrot.lane.b32.xlu0 %v1554, 96
        %v1634 = vpop.permute.xlu0 %1633
        %1635 = vrot.lane.b32.xlu0 %v1555, 96
        %v1636 = vpop.permute.xlu0 %1635
        %1637 = vrot.lane.b32.xlu0 %v1556, 96
        %v1638 = vpop.permute.xlu0 %1637
        %1639 = vrot.lane.b32.xlu0 %v1557, 96
        %v1640 = vpop.permute.xlu0 %1639
        %1641 = vrot.lane.b32.xlu0 %v1558, 96
        %v1642 = vpop.permute.xlu0 %1641
        %1643 = vrot.lane.b32.xlu0 %v1559, 96
        %v1644 = vpop.permute.xlu0 %1643
        %1645 = vrot.lane.b32.xlu0 %v1560, 96
        %v1646 = vpop.permute.xlu0 %1645
        %1647 = vrot.lane.b32.xlu0 %v1561, 96
        %v1648 = vpop.permute.xlu0 %1647
        %1649 = vrot.lane.b32.xlu0 %v1562, 96
        %v1650 = vpop.permute.xlu0 %1649
        %1651 = vrot.lane.b32.xlu0 %v1563, 96
        %v1652 = vpop.permute.xlu0 %1651
        %1653 = vrot.lane.b32.xlu0 %v1564, 96
        %v1654 = vpop.permute.xlu0 %1653
        %1655 = vrot.lane.b32.xlu0 %v1565, 96
        %v1656 = vpop.permute.xlu0 %1655
        %1657 = vrot.lane.b32.xlu0 %v1566, 96
        %v1658 = vpop.permute.xlu0 %1657
        %1659 = vrot.lane.b32.xlu0 %v1567, 96
        %v1660 = vpop.permute.xlu0 %1659
        %1661 = vrot.lane.b32.xlu0 %v1568, 96
        %v1662 = vpop.permute.xlu0 %1661
        %1663 = vrot.lane.b32.xlu0 %v1569, 96
        %v1664 = vpop.permute.xlu0 %1663
        %1665 = vrot.lane.b32.xlu0 %v1570, 96
        %v1666 = vpop.permute.xlu0 %1665
        %1699 = vst.msk [vmem:[#allocation3 + $0x8] sm:$0xff] %vm1057, %v1604
        %1700 = vst.msk [vmem:[#allocation3 + $0x20] sm:$0xff] %vm1057, %v1606
        %1701 = vst.msk [vmem:[#allocation3 + $0x38] sm:$0xff] %vm1057, %v1608
        %1702 = vst.msk [vmem:[#allocation3 + $0x50] sm:$0xff] %vm1057, %v1610
        %1703 = vst.msk [vmem:[#allocation3 + $0x68] sm:$0xff] %vm1057, %v1612
        %1704 = vst.msk [vmem:[#allocation3 + $0x80] sm:$0xff] %vm1057, %v1614
        %1705 = vst.msk [vmem:[#allocation3 + $0x98] sm:$0xff] %vm1057, %v1616
        %1706 = vst.msk [vmem:[#allocation3 + $0xb0] sm:$0xff] %vm1057, %v1618
        %1707 = vst.msk [vmem:[#allocation3 + $0xc8] sm:$0xff] %vm1057, %v1620
        %1708 = vst.msk [vmem:[#allocation3 + $0xe0] sm:$0xff] %vm1057, %v1622
        %1709 = vst.msk [vmem:[#allocation3 + $0xf8] sm:$0xff] %vm1057, %v1624
        %1710 = vst.msk [vmem:[#allocation3 + $0x110] sm:$0xff] %vm1057, %v1626
        %1711 = vst.msk [vmem:[#allocation3 + $0x128] sm:$0xff] %vm1057, %v1628
        %1712 = vst.msk [vmem:[#allocation3 + $0x140] sm:$0xff] %vm1057, %v1630
        %1713 = vst.msk [vmem:[#allocation3 + $0x158] sm:$0xff] %vm1057, %v1632
        %1714 = vst.msk [vmem:[#allocation3 + $0x170] sm:$0xff] %vm1057, %v1634
        %1715 = vst.msk [vmem:[#allocation3 + $0x188] sm:$0xff] %vm1057, %v1636
        %1716 = vst.msk [vmem:[#allocation3 + $0x1a0] sm:$0xff] %vm1057, %v1638
        %1717 = vst.msk [vmem:[#allocation3 + $0x1b8] sm:$0xff] %vm1057, %v1640
        %1718 = vst.msk [vmem:[#allocation3 + $0x1d0] sm:$0xff] %vm1057, %v1642
        %1719 = vst.msk [vmem:[#allocation3 + $0x1e8] sm:$0xff] %vm1057, %v1644
        %1720 = vst.msk [vmem:[#allocation3 + $0x200] sm:$0xff] %vm1057, %v1646
        %1721 = vst.msk [vmem:[#allocation3 + $0x218] sm:$0xff] %vm1057, %v1648
        %1722 = vst.msk [vmem:[#allocation3 + $0x230] sm:$0xff] %vm1057, %v1650
        %1723 = vst.msk [vmem:[#allocation3 + $0x248] sm:$0xff] %vm1057, %v1652
        %1724 = vst.msk [vmem:[#allocation3 + $0x260] sm:$0xff] %vm1057, %v1654
        %1725 = vst.msk [vmem:[#allocation3 + $0x278] sm:$0xff] %vm1057, %v1656
        %1726 = vst.msk [vmem:[#allocation3 + $0x290] sm:$0xff] %vm1057, %v1658
        %1727 = vst.msk [vmem:[#allocation3 + $0x2a8] sm:$0xff] %vm1057, %v1660
        %1728 = vst.msk [vmem:[#allocation3 + $0x2c0] sm:$0xff] %vm1057, %v1662
        %1729 = vst.msk [vmem:[#allocation3 + $0x2d8] sm:$0xff] %vm1057, %v1664
        %1730 = vst.msk [vmem:[#allocation3 + $0x2f0] sm:$0xff] %vm1057, %v1666
        %v1731 = vld [vmem:[%s1346 + $0x2] sm:$0xff]
        %v1732 = vld [vmem:[%s1346 + $0xa] sm:$0xff]
        %v1733 = vld [vmem:[%s1346 + $0x1a] sm:$0xff]
        %v1734 = vld [vmem:[%s1346 + $0x22] sm:$0xff]
        %v1735 = vld [vmem:[%s1346 + $0x32] sm:$0xff]
        %v1736 = vld [vmem:[%s1346 + $0x3a] sm:$0xff]
        %v1737 = vld [vmem:[%s1346 + $0x4a] sm:$0xff]
        %v1738 = vld [vmem:[%s1346 + $0x52] sm:$0xff]
        %v1739 = vld [vmem:[%s1346 + $0x62] sm:$0xff]
        %v1740 = vld [vmem:[%s1346 + $0x6a] sm:$0xff]
        %v1741 = vld [vmem:[%s1346 + $0x7a] sm:$0xff]
        %v1742 = vld [vmem:[%s1346 + $0x82] sm:$0xff]
        %v1743 = vld [vmem:[%s1346 + $0x92] sm:$0xff]
        %v1744 = vld [vmem:[%s1346 + $0x9a] sm:$0xff]
        %v1745 = vld [vmem:[%s1346 + $0xaa] sm:$0xff]
        %v1746 = vld [vmem:[%s1346 + $0xb2] sm:$0xff]
        %v1747 = vld [vmem:[%s1346 + $0xc2] sm:$0xff]
        %v1748 = vld [vmem:[%s1346 + $0xca] sm:$0xff]
        %v1749 = vld [vmem:[%s1346 + $0xda] sm:$0xff]
        %v1750 = vld [vmem:[%s1346 + $0xe2] sm:$0xff]
        %v1751 = vld [vmem:[%s1346 + $0xf2] sm:$0xff]
        %v1752 = vld [vmem:[%s1346 + $0xfa] sm:$0xff]
        %v1753 = vld [vmem:[%s1346 + $0x10a] sm:$0xff]
        %v1754 = vld [vmem:[%s1346 + $0x112] sm:$0xff]
        %v1755 = vld [vmem:[%s1346 + $0x122] sm:$0xff]
        %v1756 = vld [vmem:[%s1346 + $0x12a] sm:$0xff]
        %v1757 = vld [vmem:[%s1346 + $0x13a] sm:$0xff]
        %v1758 = vld [vmem:[%s1346 + $0x142] sm:$0xff]
        %v1759 = vld [vmem:[%s1346 + $0x152] sm:$0xff]
        %v1760 = vld [vmem:[%s1346 + $0x15a] sm:$0xff]
        %v1761 = vld [vmem:[%s1346 + $0x16a] sm:$0xff]
        %v1762 = vld [vmem:[%s1346 + $0x172] sm:$0xff]
        %1763 = vst.msk [vmem:[#allocation3 + $0x10] sm:$0xff] %vm326, %v1731
        %1764 = vst.msk [vmem:[#allocation3 + $0x28] sm:$0xff] %vm326, %v1732
        %1765 = vst.msk [vmem:[#allocation3 + $0x40] sm:$0xff] %vm326, %v1733
        %1766 = vst.msk [vmem:[#allocation3 + $0x58] sm:$0xff] %vm326, %v1734
        %1767 = vst.msk [vmem:[#allocation3 + $0x70] sm:$0xff] %vm326, %v1735
        %1768 = vst.msk [vmem:[#allocation3 + $0x88] sm:$0xff] %vm326, %v1736
        %1769 = vst.msk [vmem:[#allocation3 + $0xa0] sm:$0xff] %vm326, %v1737
        %1770 = vst.msk [vmem:[#allocation3 + $0xb8] sm:$0xff] %vm326, %v1738
        %1771 = vst.msk [vmem:[#allocation3 + $0xd0] sm:$0xff] %vm326, %v1739
        %1772 = vst.msk [vmem:[#allocation3 + $0xe8] sm:$0xff] %vm326, %v1740
        %1773 = vst.msk [vmem:[#allocation3 + $0x100] sm:$0xff] %vm326, %v1741
        %1774 = vst.msk [vmem:[#allocation3 + $0x118] sm:$0xff] %vm326, %v1742
        %1775 = vst.msk [vmem:[#allocation3 + $0x130] sm:$0xff] %vm326, %v1743
        %1776 = vst.msk [vmem:[#allocation3 + $0x148] sm:$0xff] %vm326, %v1744
        %1777 = vst.msk [vmem:[#allocation3 + $0x160] sm:$0xff] %vm326, %v1745
        %1778 = vst.msk [vmem:[#allocation3 + $0x178] sm:$0xff] %vm326, %v1746
        %1779 = vst.msk [vmem:[#allocation3 + $0x190] sm:$0xff] %vm326, %v1747
        %1780 = vst.msk [vmem:[#allocation3 + $0x1a8] sm:$0xff] %vm326, %v1748
        %1781 = vst.msk [vmem:[#allocation3 + $0x1c0] sm:$0xff] %vm326, %v1749
        %1782 = vst.msk [vmem:[#allocation3 + $0x1d8] sm:$0xff] %vm326, %v1750
        %1783 = vst.msk [vmem:[#allocation3 + $0x1f0] sm:$0xff] %vm326, %v1751
        %1784 = vst.msk [vmem:[#allocation3 + $0x208] sm:$0xff] %vm326, %v1752
        %1785 = vst.msk [vmem:[#allocation3 + $0x220] sm:$0xff] %vm326, %v1753
        %1786 = vst.msk [vmem:[#allocation3 + $0x238] sm:$0xff] %vm326, %v1754
        %1787 = vst.msk [vmem:[#allocation3 + $0x250] sm:$0xff] %vm326, %v1755
        %1788 = vst.msk [vmem:[#allocation3 + $0x268] sm:$0xff] %vm326, %v1756
        %1789 = vst.msk [vmem:[#allocation3 + $0x280] sm:$0xff] %vm326, %v1757
        %1790 = vst.msk [vmem:[#allocation3 + $0x298] sm:$0xff] %vm326, %v1758
        %1791 = vst.msk [vmem:[#allocation3 + $0x2b0] sm:$0xff] %vm326, %v1759
        %1792 = vst.msk [vmem:[#allocation3 + $0x2c8] sm:$0xff] %vm326, %v1760
        %1793 = vst.msk [vmem:[#allocation3 + $0x2e0] sm:$0xff] %vm326, %v1761
        %1794 = vst.msk [vmem:[#allocation3 + $0x2f8] sm:$0xff] %vm326, %v1762
        %v1795 = vld [vmem:[#allocation3] sm:$0xff]
        %v1796 = vld [vmem:[#allocation3 + $0x8] sm:$0xff]
        %v1797 = vld [vmem:[#allocation3 + $0x10] sm:$0xff]
        %v1798 = vld [vmem:[#allocation3 + $0x18] sm:$0xff]
        %v1799 = vld [vmem:[#allocation3 + $0x20] sm:$0xff]
        %v1800 = vld [vmem:[#allocation3 + $0x28] sm:$0xff]
        %v1801 = vld [vmem:[#allocation3 + $0x30] sm:$0xff]
        %v1802 = vld [vmem:[#allocation3 + $0x38] sm:$0xff]
        %v1803 = vld [vmem:[#allocation3 + $0x40] sm:$0xff]
        %v1804 = vld [vmem:[#allocation3 + $0x48] sm:$0xff]
        %v1805 = vld [vmem:[#allocation3 + $0x50] sm:$0xff]
        %v1806 = vld [vmem:[#allocation3 + $0x58] sm:$0xff]
        %v1807 = vld [vmem:[#allocation3 + $0x60] sm:$0xff]
        %v1808 = vld [vmem:[#allocation3 + $0x68] sm:$0xff]
        %v1809 = vld [vmem:[#allocation3 + $0x70] sm:$0xff]
        %v1810 = vld [vmem:[#allocation3 + $0x78] sm:$0xff]
        %v1811 = vld [vmem:[#allocation3 + $0x80] sm:$0xff]
        %v1812 = vld [vmem:[#allocation3 + $0x88] sm:$0xff]
        %v1813 = vld [vmem:[#allocation3 + $0x90] sm:$0xff]
        %v1814 = vld [vmem:[#allocation3 + $0x98] sm:$0xff]
        %v1815 = vld [vmem:[#allocation3 + $0xa0] sm:$0xff]
        %v1816 = vld [vmem:[#allocation3 + $0xa8] sm:$0xff]
        %v1817 = vld [vmem:[#allocation3 + $0xb0] sm:$0xff]
        %v1818 = vld [vmem:[#allocation3 + $0xb8] sm:$0xff]
        %v1819 = vld [vmem:[#allocation3 + $0xc0] sm:$0xff]
        %v1820 = vld [vmem:[#allocation3 + $0xc8] sm:$0xff]
        %v1821 = vld [vmem:[#allocation3 + $0xd0] sm:$0xff]
        %v1822 = vld [vmem:[#allocation3 + $0xd8] sm:$0xff]
        %v1823 = vld [vmem:[#allocation3 + $0xe0] sm:$0xff]
        %v1824 = vld [vmem:[#allocation3 + $0xe8] sm:$0xff]
        %v1825 = vld [vmem:[#allocation3 + $0xf0] sm:$0xff]
        %v1826 = vld [vmem:[#allocation3 + $0xf8] sm:$0xff]
        %v1827 = vld [vmem:[#allocation3 + $0x100] sm:$0xff]
        %v1828 = vld [vmem:[#allocation3 + $0x108] sm:$0xff]
        %v1829 = vld [vmem:[#allocation3 + $0x110] sm:$0xff]
        %v1830 = vld [vmem:[#allocation3 + $0x118] sm:$0xff]
        %v1831 = vld [vmem:[#allocation3 + $0x120] sm:$0xff]
        %v1832 = vld [vmem:[#allocation3 + $0x128] sm:$0xff]
        %v1833 = vld [vmem:[#allocation3 + $0x130] sm:$0xff]
        %v1834 = vld [vmem:[#allocation3 + $0x138] sm:$0xff]
        %v1835 = vld [vmem:[#allocation3 + $0x140] sm:$0xff]
        %v1836 = vld [vmem:[#allocation3 + $0x148] sm:$0xff]
        %v1837 = vld [vmem:[#allocation3 + $0x150] sm:$0xff]
        %v1838 = vld [vmem:[#allocation3 + $0x158] sm:$0xff]
        %v1839 = vld [vmem:[#allocation3 + $0x160] sm:$0xff]
        %v1840 = vld [vmem:[#allocation3 + $0x168] sm:$0xff]
        %v1841 = vld [vmem:[#allocation3 + $0x170] sm:$0xff]
        %v1842 = vld [vmem:[#allocation3 + $0x178] sm:$0xff]
        %v1843 = vld [vmem:[#allocation3 + $0x180] sm:$0xff]
        %v1844 = vld [vmem:[#allocation3 + $0x188] sm:$0xff]
        %v1845 = vld [vmem:[#allocation3 + $0x190] sm:$0xff]
        %v1846 = vld [vmem:[#allocation3 + $0x198] sm:$0xff]
        %v1847 = vld [vmem:[#allocation3 + $0x1a0] sm:$0xff]
        %v1848 = vld [vmem:[#allocation3 + $0x1a8] sm:$0xff]
        %v1849 = vld [vmem:[#allocation3 + $0x1b0] sm:$0xff]
        %v1850 = vld [vmem:[#allocation3 + $0x1b8] sm:$0xff]
        %v1851 = vld [vmem:[#allocation3 + $0x1c0] sm:$0xff]
        %v1852 = vld [vmem:[#allocation3 + $0x1c8] sm:$0xff]
        %v1853 = vld [vmem:[#allocation3 + $0x1d0] sm:$0xff]
        %v1854 = vld [vmem:[#allocation3 + $0x1d8] sm:$0xff]
        %v1855 = vld [vmem:[#allocation3 + $0x1e0] sm:$0xff]
        %v1856 = vld [vmem:[#allocation3 + $0x1e8] sm:$0xff]
        %v1857 = vld [vmem:[#allocation3 + $0x1f0] sm:$0xff]
        %v1858 = vld [vmem:[#allocation3 + $0x1f8] sm:$0xff]
        %v1859 = vld [vmem:[#allocation3 + $0x200] sm:$0xff]
        %v1860 = vld [vmem:[#allocation3 + $0x208] sm:$0xff]
        %v1861 = vld [vmem:[#allocation3 + $0x210] sm:$0xff]
        %v1862 = vld [vmem:[#allocation3 + $0x218] sm:$0xff]
        %v1863 = vld [vmem:[#allocation3 + $0x220] sm:$0xff]
        %v1864 = vld [vmem:[#allocation3 + $0x228] sm:$0xff]
        %v1865 = vld [vmem:[#allocation3 + $0x230] sm:$0xff]
        %v1866 = vld [vmem:[#allocation3 + $0x238] sm:$0xff]
        %v1867 = vld [vmem:[#allocation3 + $0x240] sm:$0xff]
        %v1868 = vld [vmem:[#allocation3 + $0x248] sm:$0xff]
        %v1869 = vld [vmem:[#allocation3 + $0x250] sm:$0xff]
        %v1870 = vld [vmem:[#allocation3 + $0x258] sm:$0xff]
        %v1871 = vld [vmem:[#allocation3 + $0x260] sm:$0xff]
        %v1872 = vld [vmem:[#allocation3 + $0x268] sm:$0xff]
        %v1873 = vld [vmem:[#allocation3 + $0x270] sm:$0xff]
        %v1874 = vld [vmem:[#allocation3 + $0x278] sm:$0xff]
        %v1875 = vld [vmem:[#allocation3 + $0x280] sm:$0xff]
        %v1876 = vld [vmem:[#allocation3 + $0x288] sm:$0xff]
        %v1877 = vld [vmem:[#allocation3 + $0x290] sm:$0xff]
        %v1878 = vld [vmem:[#allocation3 + $0x298] sm:$0xff]
        %v1879 = vld [vmem:[#allocation3 + $0x2a0] sm:$0xff]
        %v1880 = vld [vmem:[#allocation3 + $0x2a8] sm:$0xff]
        %v1881 = vld [vmem:[#allocation3 + $0x2b0] sm:$0xff]
        %v1882 = vld [vmem:[#allocation3 + $0x2b8] sm:$0xff]
        %v1883 = vld [vmem:[#allocation3 + $0x2c0] sm:$0xff]
        %v1884 = vld [vmem:[#allocation3 + $0x2c8] sm:$0xff]
        %v1885 = vld [vmem:[#allocation3 + $0x2d0] sm:$0xff]
        %v1886 = vld [vmem:[#allocation3 + $0x2d8] sm:$0xff]
        %v1887 = vld [vmem:[#allocation3 + $0x2e0] sm:$0xff]
        %v1888 = vld [vmem:[#allocation3 + $0x2e8] sm:$0xff]
        %v1889 = vld [vmem:[#allocation3 + $0x2f0] sm:$0xff]
        %v1890 = vld [vmem:[#allocation3 + $0x2f8] sm:$0xff]
        %v1891 = vld [vmem:[%s1] sm:$0xff]
        %v1892 = vld [vmem:[%s1 + $0x8] sm:$0xff]
        %v1893 = vld [vmem:[%s1 + $0x10] sm:$0xff]
        %v1894 = vld [vmem:[%s1 + $0x18] sm:$0xff]
        %v1895 = vld [vmem:[%s1 + $0x20] sm:$0xff]
        %v1896 = vld [vmem:[%s1 + $0x28] sm:$0xff]
        %v1897 = vld [vmem:[%s1 + $0x30] sm:$0xff]
        %v1898 = vld [vmem:[%s1 + $0x38] sm:$0xff]
        %v1899 = vld [vmem:[%s1 + $0x40] sm:$0xff]
        %v1900 = vld [vmem:[%s1 + $0x48] sm:$0xff]
        %v1901 = vld [vmem:[%s1 + $0x50] sm:$0xff]
        %v1902 = vld [vmem:[%s1 + $0x58] sm:$0xff]
        %v1903 = vld [vmem:[%s1 + $0x60] sm:$0xff]
        %v1904 = vld [vmem:[%s1 + $0x68] sm:$0xff]
        %v1905 = vld [vmem:[%s1 + $0x70] sm:$0xff]
        %v1906 = vld [vmem:[%s1 + $0x78] sm:$0xff]
        %v1907 = vld [vmem:[%s1 + $0x80] sm:$0xff]
        %v1908 = vld [vmem:[%s1 + $0x88] sm:$0xff]
        %v1909 = vld [vmem:[%s1 + $0x90] sm:$0xff]
        %v1910 = vld [vmem:[%s1 + $0x98] sm:$0xff]
        %v1911 = vld [vmem:[%s1 + $0xa0] sm:$0xff]
        %v1912 = vld [vmem:[%s1 + $0xa8] sm:$0xff]
        %v1913 = vld [vmem:[%s1 + $0xb0] sm:$0xff]
        %v1914 = vld [vmem:[%s1 + $0xb8] sm:$0xff]
        %v1915 = vld [vmem:[%s1 + $0xc0] sm:$0xff]
        %v1916 = vld [vmem:[%s1 + $0xc8] sm:$0xff]
        %v1917 = vld [vmem:[%s1 + $0xd0] sm:$0xff]
        %v1918 = vld [vmem:[%s1 + $0xd8] sm:$0xff]
        %v1919 = vld [vmem:[%s1 + $0xe0] sm:$0xff]
        %v1920 = vld [vmem:[%s1 + $0xe8] sm:$0xff]
        %v1921 = vld [vmem:[%s1 + $0xf0] sm:$0xff]
        %v1922 = vld [vmem:[%s1 + $0xf8] sm:$0xff]
        %v1923 = vld [vmem:[%s1 + $0x100] sm:$0xff]
        %v1924 = vld [vmem:[%s1 + $0x108] sm:$0xff]
        %v1925 = vld [vmem:[%s1 + $0x110] sm:$0xff]
        %v1926 = vld [vmem:[%s1 + $0x118] sm:$0xff]
        %v1927 = vld [vmem:[%s2] sm:$0x1]
        %v1929 = vlaneseq
        %v1930 = vshrl.u32 %v1929, 7
        %v1931 = vsub.s32 0, %v1930
        %v1932 = vrot.slane %v1927, %v1931
        %v1935 = vsel %vm326, %v1797, 0
        %v1938 = vsel %vm326, %v1800, 0
        %v1941 = vsel %vm326, %v1803, 0
        %v1944 = vsel %vm326, %v1806, 0
        %v1947 = vsel %vm326, %v1809, 0
        %v1950 = vsel %vm326, %v1812, 0
        %v1953 = vsel %vm326, %v1815, 0
        %v1956 = vsel %vm326, %v1818, 0
        %v1959 = vsel %vm326, %v1821, 0
        %v1962 = vsel %vm326, %v1824, 0
        %v1965 = vsel %vm326, %v1827, 0
        %v1968 = vsel %vm326, %v1830, 0
        %v1971 = vsel %vm326, %v1833, 0
        %v1974 = vsel %vm326, %v1836, 0
        %v1977 = vsel %vm326, %v1839, 0
        %v1980 = vsel %vm326, %v1842, 0
        %v1983 = vsel %vm326, %v1845, 0
        %v1986 = vsel %vm326, %v1848, 0
        %v1989 = vsel %vm326, %v1851, 0
        %v1992 = vsel %vm326, %v1854, 0
        %v1995 = vsel %vm326, %v1857, 0
        %v1998 = vsel %vm326, %v1860, 0
        %v2001 = vsel %vm326, %v1863, 0
        %v2004 = vsel %vm326, %v1866, 0
        %v2007 = vsel %vm326, %v1869, 0
        %v2010 = vsel %vm326, %v1872, 0
        %v2013 = vsel %vm326, %v1875, 0
        %v2016 = vsel %vm326, %v1878, 0
        %v2019 = vsel %vm326, %v1881, 0
        %v2022 = vsel %vm326, %v1884, 0
        %v2025 = vsel %vm326, %v1887, 0
        %v2028 = vsel %vm326, %v1890, 0
        %2030 = vmatprep.subr.mxu0 0.0
        %2031 = vmatpush1.msra.mxu0 %v1891
        %2032 = vmatprep.subr.mxu0 0.0
        %2033 = vmatpush1.msra.mxu0 %v1892
        %2034 = vmatprep.subr.mxu0 0.0
        %2035 = vmatpush1.msra.mxu0 %v1893
        %2036 = vmatprep.subr.mxu0 0.0
        %2037 = vmatpush1.msra.mxu0 %v1894
        %2038 = vmatprep.subr.mxu0 0.0
        %2039 = vmatpush1.msra.mxu0 %v1895
        %2040 = vmatprep.subr.mxu0 0.0
        %2041 = vmatpush1.msra.mxu0 %v1896
        %2042 = vmatprep.subr.mxu0 0.0
        %2043 = vmatpush1.msra.mxu0 %v1897
        %2044 = vmatprep.subr.mxu0 0.0
        %2045 = vmatpush1.msra.mxu0 %v1898
        %2046 = vmatprep.subr.mxu0 0.0
        %2047 = vmatpush1.msra.mxu0 %v1899
        %2048 = vmatprep.subr.mxu0 0.0
        %2049 = vmatpush1.msra.mxu0 %v1900
        %2050 = vmatprep.subr.mxu0 0.0
        %2051 = vmatpush1.msra.mxu0 %v1901
        %2052 = vmatprep.subr.mxu0 0.0
        %2053 = vmatpush1.msra.mxu0 %v1902
        %2054 = vmatprep.subr.mxu0 0.0
        %2055 = vmatpush1.msra.mxu0 %v1903
        %2056 = vmatprep.subr.mxu0 0.0
        %2057 = vmatpush1.msra.mxu0 %v1904
        %2058 = vmatprep.subr.mxu0 0.0
        %2059 = vmatpush1.msra.mxu0 %v1905
        %2060 = vmatprep.subr.mxu0 0.0
        %2061 = vmatpush1.msra.mxu0 %v1906
        %2062 = vmatprep.subr.mxu0 0.0
        %2063 = vmatpush1.msra.mxu0 %v1907
        %2064 = vmatprep.subr.mxu0 0.0
        %2065 = vmatpush1.msra.mxu0 %v1908
        %2066 = vmatprep.subr.mxu0 0.0
        %2067 = vmatpush1.msra.mxu0 %v1909
        %2068 = vmatprep.subr.mxu0 0.0
        %2069 = vmatpush1.msra.mxu0 %v1910
        %2070 = vmatprep.subr.mxu0 0.0
        %2071 = vmatpush1.msra.mxu0 %v1911
        %2072 = vmatprep.subr.mxu0 0.0
        %2073 = vmatpush1.msra.mxu0 %v1912
        %2074 = vmatprep.subr.mxu0 0.0
        %2075 = vmatpush1.msra.mxu0 %v1913
        %2076 = vmatprep.subr.mxu0 0.0
        %2077 = vmatpush1.msra.mxu0 %v1914
        %2078 = vmatprep.subr.mxu0 0.0
        %2079 = vmatpush1.msra.mxu0 %v1915
        %2080 = vmatprep.subr.mxu0 0.0
        %2081 = vmatpush1.msra.mxu0 %v1916
        %2082 = vmatprep.subr.mxu0 0.0
        %2083 = vmatpush1.msra.mxu0 %v1917
        %2084 = vmatprep.subr.mxu0 0.0
        %2085 = vmatpush1.msra.mxu0 %v1918
        %2086 = vmatprep.subr.mxu0 0.0
        %2087 = vmatpush1.msra.mxu0 %v1919
        %2088 = vmatprep.subr.mxu0 0.0
        %2089 = vmatpush1.msra.mxu0 %v1920
        %2090 = vmatprep.subr.mxu0 0.0
        %2091 = vmatpush1.msra.mxu0 %v1921
        %2092 = vmatprep.subr.mxu0 0.0
        %2093 = vmatpush1.msra.mxu0 %v1922
        %2094 = vmatprep.mubr.f32.mxu0 %v1796
        %2095 = vmatmul.mubr.f32.gmra.mrb[0].mxu0 %v1795
        %v2096 = vpop.f32.mrb[0].mxu0
        %v2097 = vadd.f32 %v1932, %v2096
        %v2098 = vpop.f32.mrb[0].mxu0
        %2099 = vmatprep.mubr.f32.mxu0 %v1799
        %2100 = vmatmul.mubr.f32.gmra.mrb[0].mxu0 %v1798
        %v2101 = vpop.f32.mrb[0].mxu0
        %v2102 = vadd.f32 %v1932, %v2101
        %v2103 = vpop.f32.mrb[0].mxu0
        %2104 = vmatprep.mubr.f32.mxu0 %v1802
        %2105 = vmatmul.mubr.f32.gmra.mrb[0].mxu0 %v1801
        %v2106 = vpop.f32.mrb[0].mxu0
        %v2107 = vadd.f32 %v1932, %v2106
        %v2108 = vpop.f32.mrb[0].mxu0
        %2109 = vmatprep.mubr.f32.mxu0 %v1805
        %2110 = vmatmul.mubr.f32.gmra.mrb[0].mxu0 %v1804
        %v2111 = vpop.f32.mrb[0].mxu0
        %v2112 = vadd.f32 %v1932, %v2111
        %v2113 = vpop.f32.mrb[0].mxu0
        %2114 = vmatprep.mubr.f32.mxu0 %v1808
        %2115 = vmatmul.mubr.f32.gmra.mrb[0].mxu0 %v1807
        %v2116 = vpop.f32.mrb[0].mxu0
        %v2117 = vadd.f32 %v1932, %v2116
        %v2118 = vpop.f32.mrb[0].mxu0
        %2119 = vmatprep.mubr.f32.mxu0 %v1811
        %2120 = vmatmul.mubr.f32.gmra.mrb[0].mxu0 %v1810
        %v2121 = vpop.f32.mrb[0].mxu0
        %v2122 = vadd.f32 %v1932, %v2121
        %v2123 = vpop.f32.mrb[0].mxu0
        %2124 = vmatprep.mubr.f32.mxu0 %v1814
        %2125 = vmatmul.mubr.f32.gmra.mrb[0].mxu0 %v1813
        %v2126 = vpop.f32.mrb[0].mxu0
        %v2127 = vadd.f32 %v1932, %v2126
        %v2128 = vpop.f32.mrb[0].mxu0
        %2129 = vmatprep.mubr.f32.mxu0 %v1817
        %2130 = vmatmul.mubr.f32.gmra.mrb[0].mxu0 %v1816
        %v2131 = vpop.f32.mrb[0].mxu0
        %v2132 = vadd.f32 %v1932, %v2131
        %v2133 = vpop.f32.mrb[0].mxu0
        %2134 = vmatprep.mubr.f32.mxu0 %v1820
        %2135 = vmatmul.mubr.f32.gmra.mrb[0].mxu0 %v1819
        %v2136 = vpop.f32.mrb[0].mxu0
        %v2137 = vadd.f32 %v1932, %v2136
        %v2138 = vpop.f32.mrb[0].mxu0
        %2139 = vmatprep.mubr.f32.mxu0 %v1823
        %2140 = vmatmul.mubr.f32.gmra.mrb[0].mxu0 %v1822
        %v2141 = vpop.f32.mrb[0].mxu0
        %v2142 = vadd.f32 %v1932, %v2141
        %v2143 = vpop.f32.mrb[0].mxu0
        %2144 = vmatprep.mubr.f32.mxu0 %v1826
        %2145 = vmatmul.mubr.f32.gmra.mrb[0].mxu0 %v1825
        %v2146 = vpop.f32.mrb[0].mxu0
        %v2147 = vadd.f32 %v1932, %v2146
        %v2148 = vpop.f32.mrb[0].mxu0
        %2149 = vmatprep.mubr.f32.mxu0 %v1829
        %2150 = vmatmul.mubr.f32.gmra.mrb[0].mxu0 %v1828
        %v2151 = vpop.f32.mrb[0].mxu0
        %v2152 = vadd.f32 %v1932, %v2151
        %v2153 = vpop.f32.mrb[0].mxu0
        %2154 = vmatprep.mubr.f32.mxu0 %v1832
        %2155 = vmatmul.mubr.f32.gmra.mrb[0].mxu0 %v1831
        %v2156 = vpop.f32.mrb[0].mxu0
        %v2157 = vadd.f32 %v1932, %v2156
        %v2158 = vpop.f32.mrb[0].mxu0
        %2159 = vmatprep.mubr.f32.mxu0 %v1835
        %2160 = vmatmul.mubr.f32.gmra.mrb[0].mxu0 %v1834
        %v2161 = vpop.f32.mrb[0].mxu0
        %v2162 = vadd.f32 %v1932, %v2161
        %v2163 = vpop.f32.mrb[0].mxu0
        %2164 = vmatprep.mubr.f32.mxu0 %v1838
        %2165 = vmatmul.mubr.f32.gmra.mrb[0].mxu0 %v1837
        %v2166 = vpop.f32.mrb[0].mxu0
        %v2167 = vadd.f32 %v1932, %v2166
        %v2168 = vpop.f32.mrb[0].mxu0
        %2169 = vmatprep.mubr.f32.mxu0 %v1841
        %2170 = vmatmul.mubr.f32.gmra.mrb[0].mxu0 %v1840
        %v2171 = vpop.f32.mrb[0].mxu0
        %v2172 = vadd.f32 %v1932, %v2171
        %v2173 = vpop.f32.mrb[0].mxu0
        %2174 = vmatprep.mubr.f32.mxu0 %v1844
        %2175 = vmatmul.mubr.f32.gmra.mrb[0].mxu0 %v1843
        %v2176 = vpop.f32.mrb[0].mxu0
        %v2177 = vadd.f32 %v1932, %v2176
        %v2178 = vpop.f32.mrb[0].mxu0
        %2179 = vmatprep.mubr.f32.mxu0 %v1847
        %2180 = vmatmul.mubr.f32.gmra.mrb[0].mxu0 %v1846
        %v2181 = vpop.f32.mrb[0].mxu0
        %v2182 = vadd.f32 %v1932, %v2181
        %v2183 = vpop.f32.mrb[0].mxu0
        %2184 = vmatprep.mubr.f32.mxu0 %v1850
        %2185 = vmatmul.mubr.f32.gmra.mrb[0].mxu0 %v1849
        %v2186 = vpop.f32.mrb[0].mxu0
        %v2187 = vadd.f32 %v1932, %v2186
        %v2188 = vpop.f32.mrb[0].mxu0
        %2189 = vmatprep.mubr.f32.mxu0 %v1853
        %2190 = vmatmul.mubr.f32.gmra.mrb[0].mxu0 %v1852
        %v2191 = vpop.f32.mrb[0].mxu0
        %v2192 = vadd.f32 %v1932, %v2191
        %v2193 = vpop.f32.mrb[0].mxu0
        %2194 = vmatprep.mubr.f32.mxu0 %v1856
        %2195 = vmatmul.mubr.f32.gmra.mrb[0].mxu0 %v1855
        %v2196 = vpop.f32.mrb[0].mxu0
        %v2197 = vadd.f32 %v1932, %v2196
        %v2198 = vpop.f32.mrb[0].mxu0
        %2199 = vmatprep.mubr.f32.mxu0 %v1859
        %2200 = vmatmul.mubr.f32.gmra.mrb[0].mxu0 %v1858
        %v2201 = vpop.f32.mrb[0].mxu0
        %v2202 = vadd.f32 %v1932, %v2201
        %v2203 = vpop.f32.mrb[0].mxu0
        %2204 = vmatprep.mubr.f32.mxu0 %v1862
        %2205 = vmatmul.mubr.f32.gmra.mrb[0].mxu0 %v1861
        %v2206 = vpop.f32.mrb[0].mxu0
        %v2207 = vadd.f32 %v1932, %v2206
        %v2208 = vpop.f32.mrb[0].mxu0
        %2209 = vmatprep.mubr.f32.mxu0 %v1865
        %2210 = vmatmul.mubr.f32.gmra.mrb[0].mxu0 %v1864
        %v2211 = vpop.f32.mrb[0].mxu0
        %v2212 = vadd.f32 %v1932, %v2211
        %v2213 = vpop.f32.mrb[0].mxu0
        %2214 = vmatprep.mubr.f32.mxu0 %v1868
        %2215 = vmatmul.mubr.f32.gmra.mrb[0].mxu0 %v1867
        %v2216 = vpop.f32.mrb[0].mxu0
        %v2217 = vadd.f32 %v1932, %v2216
        %v2218 = vpop.f32.mrb[0].mxu0
        %2219 = vmatprep.mubr.f32.mxu0 %v1871
        %2220 = vmatmul.mubr.f32.gmra.mrb[0].mxu0 %v1870
        %v2221 = vpop.f32.mrb[0].mxu0
        %v2222 = vadd.f32 %v1932, %v2221
        %v2223 = vpop.f32.mrb[0].mxu0
        %2224 = vmatprep.mubr.f32.mxu0 %v1874
        %2225 = vmatmul.mubr.f32.gmra.mrb[0].mxu0 %v1873
        %v2226 = vpop.f32.mrb[0].mxu0
        %v2227 = vadd.f32 %v1932, %v2226
        %v2228 = vpop.f32.mrb[0].mxu0
        %2229 = vmatprep.mubr.f32.mxu0 %v1877
        %2230 = vmatmul.mubr.f32.gmra.mrb[0].mxu0 %v1876
        %v2231 = vpop.f32.mrb[0].mxu0
        %v2232 = vadd.f32 %v1932, %v2231
        %v2233 = vpop.f32.mrb[0].mxu0
        %2234 = vmatprep.mubr.f32.mxu0 %v1880
        %2235 = vmatmul.mubr.f32.gmra.mrb[0].mxu0 %v1879
        %v2236 = vpop.f32.mrb[0].mxu0
        %v2237 = vadd.f32 %v1932, %v2236
        %v2238 = vpop.f32.mrb[0].mxu0
        %2239 = vmatprep.mubr.f32.mxu0 %v1883
        %2240 = vmatmul.mubr.f32.gmra.mrb[0].mxu0 %v1882
        %v2241 = vpop.f32.mrb[0].mxu0
        %v2242 = vadd.f32 %v1932, %v2241
        %v2243 = vpop.f32.mrb[0].mxu0
        %2244 = vmatprep.mubr.f32.mxu0 %v1886
        %2245 = vmatmul.mubr.f32.gmra.mrb[0].mxu0 %v1885
        %v2246 = vpop.f32.mrb[0].mxu0
        %v2247 = vadd.f32 %v1932, %v2246
        %v2248 = vpop.f32.mrb[0].mxu0
        %2249 = vmatprep.mubr.f32.mxu0 %v1889
        %2250 = vmatmul.mubr.f32.gmra.mrb[0].mxu0 %v1888
        %v2251 = vpop.f32.mrb[0].mxu0
        %v2252 = vadd.f32 %v1932, %v2251
        %v2253 = vpop.f32.mrb[0].mxu0
        %2254 = vdwg.mxu0
        %2255 = vmatprep.subr.mxu0 0.0
        %2256 = vmatpush1.msra.mxu0 %v1923
        %2257 = vmatprep.subr.mxu0 0.0
        %2258 = vmatpush1.msra.mxu0 %v1924
        %2259 = vmatprep.subr.mxu0 0.0
        %2260 = vmatpush1.msra.mxu0 %v1925
        %2261 = vmatprep.subr.mxu0 0.0
        %2262 = vmatpush1.msra.mxu0 %v1926
        %2263 = vmatprep.subr.mxu0 0.0
        %2264 = vmatpush1.msra.mxu0 0.0
        %2265 = vmatprep.subr.mxu0 0.0
        %2266 = vmatpush1.msra.mxu0 0.0
        %2267 = vmatprep.subr.mxu0 0.0
        %2268 = vmatpush1.msra.mxu0 0.0
        %2269 = vmatprep.subr.mxu0 0.0
        %2270 = vmatpush1.msra.mxu0 0.0
        %2271 = vmatprep.subr.mxu0 0.0
        %2272 = vmatpush1.msra.mxu0 0.0
        %2273 = vmatprep.subr.mxu0 0.0
        %2274 = vmatpush1.msra.mxu0 0.0
        %2275 = vmatprep.subr.mxu0 0.0
        %2276 = vmatpush1.msra.mxu0 0.0
        %2277 = vmatprep.subr.mxu0 0.0
        %2278 = vmatpush1.msra.mxu0 0.0
        %2279 = vmatprep.subr.mxu0 0.0
        %2280 = vmatpush1.msra.mxu0 0.0
        %2281 = vmatprep.subr.mxu0 0.0
        %2282 = vmatpush1.msra.mxu0 0.0
        %2283 = vmatprep.subr.mxu0 0.0
        %2284 = vmatpush1.msra.mxu0 0.0
        %2285 = vmatprep.subr.mxu0 0.0
        %2286 = vmatpush1.msra.mxu0 0.0
        %2287 = vmatprep.subr.mxu0 0.0
        %2288 = vmatpush1.msra.mxu0 0.0
        %2289 = vmatprep.subr.mxu0 0.0
        %2290 = vmatpush1.msra.mxu0 0.0
        %2291 = vmatprep.subr.mxu0 0.0
        %2292 = vmatpush1.msra.mxu0 0.0
        %2293 = vmatprep.subr.mxu0 0.0
        %2294 = vmatpush1.msra.mxu0 0.0
        %2295 = vmatprep.subr.mxu0 0.0
        %2296 = vmatpush1.msra.mxu0 0.0
        %2297 = vmatprep.subr.mxu0 0.0
        %2298 = vmatpush1.msra.mxu0 0.0
        %2299 = vmatprep.subr.mxu0 0.0
        %2300 = vmatpush1.msra.mxu0 0.0
        %2301 = vmatprep.subr.mxu0 0.0
        %2302 = vmatpush1.msra.mxu0 0.0
        %2303 = vmatprep.subr.mxu0 0.0
        %2304 = vmatpush1.msra.mxu0 0.0
        %2305 = vmatprep.subr.mxu0 0.0
        %2306 = vmatpush1.msra.mxu0 0.0
        %2307 = vmatprep.subr.mxu0 0.0
        %2308 = vmatpush1.msra.mxu0 0.0
        %2309 = vmatprep.subr.mxu0 0.0
        %2310 = vmatpush1.msra.mxu0 0.0
        %2311 = vmatprep.subr.mxu0 0.0
        %2312 = vmatpush1.msra.mxu0 0.0
        %2313 = vmatprep.subr.mxu0 0.0
        %2314 = vmatpush1.msra.mxu0 0.0
        %2315 = vmatprep.subr.mxu0 0.0
        %2316 = vmatpush1.msra.mxu0 0.0
        %2317 = vmatprep.subr.mxu0 0.0
        %2318 = vmatpush1.msra.mxu0 0.0
        %2319 = vmatprep.mubr.f32.mxu0 0.0
        %2320 = vmatmul.mubr.f32.gmra.mrb[0].mxu0 %v1935
        %v2321 = vpop.f32.mrb[0].mxu0
        %v2322 = vadd.f32 %v2097, %v2321
        %v2323 = vpop.f32.mrb[0].mxu0
        %2324 = vmatprep.mubr.f32.mxu0 0.0
        %2325 = vmatmul.mubr.f32.gmra.mrb[0].mxu0 %v1938
        %v2326 = vpop.f32.mrb[0].mxu0
        %v2327 = vadd.f32 %v2102, %v2326
        %v2328 = vpop.f32.mrb[0].mxu0
        %2329 = vmatprep.mubr.f32.mxu0 0.0
        %2330 = vmatmul.mubr.f32.gmra.mrb[0].mxu0 %v1941
        %v2331 = vpop.f32.mrb[0].mxu0
        %v2332 = vadd.f32 %v2107, %v2331
        %v2333 = vpop.f32.mrb[0].mxu0
        %2334 = vmatprep.mubr.f32.mxu0 0.0
        %2335 = vmatmul.mubr.f32.gmra.mrb[0].mxu0 %v1944
        %v2336 = vpop.f32.mrb[0].mxu0
        %v2337 = vadd.f32 %v2112, %v2336
        %v2338 = vpop.f32.mrb[0].mxu0
        %2339 = vmatprep.mubr.f32.mxu0 0.0
        %2340 = vmatmul.mubr.f32.gmra.mrb[0].mxu0 %v1947
        %v2341 = vpop.f32.mrb[0].mxu0
        %v2342 = vadd.f32 %v2117, %v2341
        %v2343 = vpop.f32.mrb[0].mxu0
        %2344 = vmatprep.mubr.f32.mxu0 0.0
        %2345 = vmatmul.mubr.f32.gmra.mrb[0].mxu0 %v1950
        %v2346 = vpop.f32.mrb[0].mxu0
        %v2347 = vadd.f32 %v2122, %v2346
        %v2348 = vpop.f32.mrb[0].mxu0
        %2349 = vmatprep.mubr.f32.mxu0 0.0
        %2350 = vmatmul.mubr.f32.gmra.mrb[0].mxu0 %v1953
        %v2351 = vpop.f32.mrb[0].mxu0
        %v2352 = vadd.f32 %v2127, %v2351
        %v2353 = vpop.f32.mrb[0].mxu0
        %2354 = vmatprep.mubr.f32.mxu0 0.0
        %2355 = vmatmul.mubr.f32.gmra.mrb[0].mxu0 %v1956
        %v2356 = vpop.f32.mrb[0].mxu0
        %v2357 = vadd.f32 %v2132, %v2356
        %v2358 = vpop.f32.mrb[0].mxu0
        %2359 = vmatprep.mubr.f32.mxu0 0.0
        %2360 = vmatmul.mubr.f32.gmra.mrb[0].mxu0 %v1959
        %v2361 = vpop.f32.mrb[0].mxu0
        %v2362 = vadd.f32 %v2137, %v2361
        %v2363 = vpop.f32.mrb[0].mxu0
        %2364 = vmatprep.mubr.f32.mxu0 0.0
        %2365 = vmatmul.mubr.f32.gmra.mrb[0].mxu0 %v1962
        %v2366 = vpop.f32.mrb[0].mxu0
        %v2367 = vadd.f32 %v2142, %v2366
        %v2368 = vpop.f32.mrb[0].mxu0
        %2369 = vmatprep.mubr.f32.mxu0 0.0
        %2370 = vmatmul.mubr.f32.gmra.mrb[0].mxu0 %v1965
        %v2371 = vpop.f32.mrb[0].mxu0
        %v2372 = vadd.f32 %v2147, %v2371
        %v2373 = vpop.f32.mrb[0].mxu0
        %2374 = vmatprep.mubr.f32.mxu0 0.0
        %2375 = vmatmul.mubr.f32.gmra.mrb[0].mxu0 %v1968
        %v2376 = vpop.f32.mrb[0].mxu0
        %v2377 = vadd.f32 %v2152, %v2376
        %v2378 = vpop.f32.mrb[0].mxu0
        %2379 = vmatprep.mubr.f32.mxu0 0.0
        %2380 = vmatmul.mubr.f32.gmra.mrb[0].mxu0 %v1971
        %v2381 = vpop.f32.mrb[0].mxu0
        %v2382 = vadd.f32 %v2157, %v2381
        %v2383 = vpop.f32.mrb[0].mxu0
        %2384 = vmatprep.mubr.f32.mxu0 0.0
        %2385 = vmatmul.mubr.f32.gmra.mrb[0].mxu0 %v1974
        %v2386 = vpop.f32.mrb[0].mxu0
        %v2387 = vadd.f32 %v2162, %v2386
        %v2388 = vpop.f32.mrb[0].mxu0
        %2389 = vmatprep.mubr.f32.mxu0 0.0
        %2390 = vmatmul.mubr.f32.gmra.mrb[0].mxu0 %v1977
        %v2391 = vpop.f32.mrb[0].mxu0
        %v2392 = vadd.f32 %v2167, %v2391
        %v2393 = vpop.f32.mrb[0].mxu0
        %2394 = vmatprep.mubr.f32.mxu0 0.0
        %2395 = vmatmul.mubr.f32.gmra.mrb[0].mxu0 %v1980
        %v2396 = vpop.f32.mrb[0].mxu0
        %v2397 = vadd.f32 %v2172, %v2396
        %v2398 = vpop.f32.mrb[0].mxu0
        %2399 = vmatprep.mubr.f32.mxu0 0.0
        %2400 = vmatmul.mubr.f32.gmra.mrb[0].mxu0 %v1983
        %v2401 = vpop.f32.mrb[0].mxu0
        %v2402 = vadd.f32 %v2177, %v2401
        %v2403 = vpop.f32.mrb[0].mxu0
        %2404 = vmatprep.mubr.f32.mxu0 0.0
        %2405 = vmatmul.mubr.f32.gmra.mrb[0].mxu0 %v1986
        %v2406 = vpop.f32.mrb[0].mxu0
        %v2407 = vadd.f32 %v2182, %v2406
        %v2408 = vpop.f32.mrb[0].mxu0
        %2409 = vmatprep.mubr.f32.mxu0 0.0
        %2410 = vmatmul.mubr.f32.gmra.mrb[0].mxu0 %v1989
        %v2411 = vpop.f32.mrb[0].mxu0
        %v2412 = vadd.f32 %v2187, %v2411
        %v2413 = vpop.f32.mrb[0].mxu0
        %2414 = vmatprep.mubr.f32.mxu0 0.0
        %2415 = vmatmul.mubr.f32.gmra.mrb[0].mxu0 %v1992
        %v2416 = vpop.f32.mrb[0].mxu0
        %v2417 = vadd.f32 %v2192, %v2416
        %v2418 = vpop.f32.mrb[0].mxu0
        %2419 = vmatprep.mubr.f32.mxu0 0.0
        %2420 = vmatmul.mubr.f32.gmra.mrb[0].mxu0 %v1995
        %v2421 = vpop.f32.mrb[0].mxu0
        %v2422 = vadd.f32 %v2197, %v2421
        %v2423 = vpop.f32.mrb[0].mxu0
        %2424 = vmatprep.mubr.f32.mxu0 0.0
        %2425 = vmatmul.mubr.f32.gmra.mrb[0].mxu0 %v1998
        %v2426 = vpop.f32.mrb[0].mxu0
        %v2427 = vadd.f32 %v2202, %v2426
        %v2428 = vpop.f32.mrb[0].mxu0
        %2429 = vmatprep.mubr.f32.mxu0 0.0
        %2430 = vmatmul.mubr.f32.gmra.mrb[0].mxu0 %v2001
        %v2431 = vpop.f32.mrb[0].mxu0
        %v2432 = vadd.f32 %v2207, %v2431
        %v2433 = vpop.f32.mrb[0].mxu0
        %2434 = vmatprep.mubr.f32.mxu0 0.0
        %2435 = vmatmul.mubr.f32.gmra.mrb[0].mxu0 %v2004
        %v2436 = vpop.f32.mrb[0].mxu0
        %v2437 = vadd.f32 %v2212, %v2436
        %v2438 = vpop.f32.mrb[0].mxu0
        %2439 = vmatprep.mubr.f32.mxu0 0.0
        %2440 = vmatmul.mubr.f32.gmra.mrb[0].mxu0 %v2007
        %v2441 = vpop.f32.mrb[0].mxu0
        %v2442 = vadd.f32 %v2217, %v2441
        %v2443 = vpop.f32.mrb[0].mxu0
        %2444 = vmatprep.mubr.f32.mxu0 0.0
        %2445 = vmatmul.mubr.f32.gmra.mrb[0].mxu0 %v2010
        %v2446 = vpop.f32.mrb[0].mxu0
        %v2447 = vadd.f32 %v2222, %v2446
        %v2448 = vpop.f32.mrb[0].mxu0
        %2449 = vmatprep.mubr.f32.mxu0 0.0
        %2450 = vmatmul.mubr.f32.gmra.mrb[0].mxu0 %v2013
        %v2451 = vpop.f32.mrb[0].mxu0
        %v2452 = vadd.f32 %v2227, %v2451
        %v2453 = vpop.f32.mrb[0].mxu0
        %2454 = vmatprep.mubr.f32.mxu0 0.0
        %2455 = vmatmul.mubr.f32.gmra.mrb[0].mxu0 %v2016
        %v2456 = vpop.f32.mrb[0].mxu0
        %v2457 = vadd.f32 %v2232, %v2456
        %v2458 = vpop.f32.mrb[0].mxu0
        %2459 = vmatprep.mubr.f32.mxu0 0.0
        %2460 = vmatmul.mubr.f32.gmra.mrb[0].mxu0 %v2019
        %v2461 = vpop.f32.mrb[0].mxu0
        %v2462 = vadd.f32 %v2237, %v2461
        %v2463 = vpop.f32.mrb[0].mxu0
        %2464 = vmatprep.mubr.f32.mxu0 0.0
        %2465 = vmatmul.mubr.f32.gmra.mrb[0].mxu0 %v2022
        %v2466 = vpop.f32.mrb[0].mxu0
        %v2467 = vadd.f32 %v2242, %v2466
        %v2468 = vpop.f32.mrb[0].mxu0
        %2469 = vmatprep.mubr.f32.mxu0 0.0
        %2470 = vmatmul.mubr.f32.gmra.mrb[0].mxu0 %v2025
        %v2471 = vpop.f32.mrb[0].mxu0
        %v2472 = vadd.f32 %v2247, %v2471
        %v2473 = vpop.f32.mrb[0].mxu0
        %2474 = vmatprep.mubr.f32.mxu0 0.0
        %2475 = vmatmul.mubr.f32.gmra.mrb[0].mxu0 %v2028
        %v2476 = vpop.f32.mrb[0].mxu0
        %v2477 = vadd.f32 %v2252, %v2476
        %v2478 = vpop.f32.mrb[0].mxu0
        %2479 = vdwg.mxu0
        %v2480 = vmax.f32 %v2322, 0.0
        %v2481 = vmax.f32 %v2327, 0.0
        %v2482 = vmax.f32 %v2332, 0.0
        %v2483 = vmax.f32 %v2337, 0.0
        %v2484 = vmax.f32 %v2342, 0.0
        %v2485 = vmax.f32 %v2347, 0.0
        %v2486 = vmax.f32 %v2352, 0.0
        %v2487 = vmax.f32 %v2357, 0.0
        %v2488 = vmax.f32 %v2362, 0.0
        %v2489 = vmax.f32 %v2367, 0.0
        %v2490 = vmax.f32 %v2372, 0.0
        %v2491 = vmax.f32 %v2377, 0.0
        %v2492 = vmax.f32 %v2382, 0.0
        %v2493 = vmax.f32 %v2387, 0.0
        %v2494 = vmax.f32 %v2392, 0.0
        %v2495 = vmax.f32 %v2397, 0.0
        %v2496 = vmax.f32 %v2402, 0.0
        %v2497 = vmax.f32 %v2407, 0.0
        %v2498 = vmax.f32 %v2412, 0.0
        %v2499 = vmax.f32 %v2417, 0.0
        %v2500 = vmax.f32 %v2422, 0.0
        %v2501 = vmax.f32 %v2427, 0.0
        %v2502 = vmax.f32 %v2432, 0.0
        %v2503 = vmax.f32 %v2437, 0.0
        %v2504 = vmax.f32 %v2442, 0.0
        %v2505 = vmax.f32 %v2447, 0.0
        %v2506 = vmax.f32 %v2452, 0.0
        %v2507 = vmax.f32 %v2457, 0.0
        %v2508 = vmax.f32 %v2462, 0.0
        %v2509 = vmax.f32 %v2467, 0.0
        %v2510 = vmax.f32 %v2472, 0.0
        %v2511 = vmax.f32 %v2477, 0.0
        %2512 = vst.msk [vmem:[#allocation4] sm:$0xff] %vm326, 0.0
        %2513 = vst.msk [vmem:[#allocation4 + $0x8] sm:$0xff] %vm326, 0.0
        %2514 = vst.msk [vmem:[#allocation4 + $0x10] sm:$0x3] %vm329, 0.0
        %2515 = vst.msk [vmem:[#allocation4 + $0x18] sm:$0xff] %vm326, 0.0
        %2516 = vst.msk [vmem:[#allocation4 + $0x20] sm:$0xff] %vm326, 0.0
        %2517 = vst.msk [vmem:[#allocation4 + $0x28] sm:$0x3] %vm329, 0.0
        %2518 = vst.msk [vmem:[#allocation4 + $0x30] sm:$0xff] %vm326, 0.0
        %2519 = vst.msk [vmem:[#allocation4 + $0x38] sm:$0xff] %vm326, 0.0
        %2520 = vst.msk [vmem:[#allocation4 + $0x40] sm:$0x3] %vm329, 0.0
        %2521 = vst.msk [vmem:[#allocation4 + $0x48] sm:$0xff] %vm326, 0.0
        %2522 = vst.msk [vmem:[#allocation4 + $0x50] sm:$0xff] %vm326, 0.0
        %2523 = vst.msk [vmem:[#allocation4 + $0x58] sm:$0x3] %vm329, 0.0
        %2524 = vst.msk [vmem:[#allocation4 + $0x60] sm:$0xff] %vm326, 0.0
        %2525 = vst.msk [vmem:[#allocation4 + $0x68] sm:$0xff] %vm326, 0.0
        %2526 = vst.msk [vmem:[#allocation4 + $0x70] sm:$0x3] %vm329, 0.0
        %2527 = vst.msk [vmem:[#allocation4 + $0x78] sm:$0xff] %vm326, 0.0
        %2528 = vst.msk [vmem:[#allocation4 + $0x80] sm:$0xff] %vm326, 0.0
        %2529 = vst.msk [vmem:[#allocation4 + $0x88] sm:$0x3] %vm329, 0.0
        %2530 = vst.msk [vmem:[#allocation4 + $0x90] sm:$0xff] %vm326, 0.0
        %2531 = vst.msk [vmem:[#allocation4 + $0x98] sm:$0xff] %vm326, 0.0
        %2532 = vst.msk [vmem:[#allocation4 + $0xa0] sm:$0x3] %vm329, 0.0
        %2533 = vst.msk [vmem:[#allocation4 + $0xa8] sm:$0xff] %vm326, 0.0
        %2534 = vst.msk [vmem:[#allocation4 + $0xb0] sm:$0xff] %vm326, 0.0
        %2535 = vst.msk [vmem:[#allocation4 + $0xb8] sm:$0x3] %vm329, 0.0
        %2536 = vst.msk [vmem:[#allocation4 + $0xc0] sm:$0xff] %vm326, 0.0
        %2537 = vst.msk [vmem:[#allocation4 + $0xc8] sm:$0xff] %vm326, 0.0
        %2538 = vst.msk [vmem:[#allocation4 + $0xd0] sm:$0x3] %vm329, 0.0
        %2539 = vst.msk [vmem:[#allocation4 + $0xd8] sm:$0xff] %vm326, 0.0
        %2540 = vst.msk [vmem:[#allocation4 + $0xe0] sm:$0xff] %vm326, 0.0
        %2541 = vst.msk [vmem:[#allocation4 + $0xe8] sm:$0x3] %vm329, 0.0
        %2542 = vst.msk [vmem:[#allocation4 + $0xf0] sm:$0xff] %vm326, 0.0
        %2543 = vst.msk [vmem:[#allocation4 + $0xf8] sm:$0xff] %vm326, 0.0
        %2544 = vst.msk [vmem:[#allocation4 + $0x100] sm:$0x3] %vm329, 0.0
        %2545 = vst.msk [vmem:[#allocation4 + $0x108] sm:$0xff] %vm326, 0.0
        %2546 = vst.msk [vmem:[#allocation4 + $0x110] sm:$0xff] %vm326, 0.0
        %2547 = vst.msk [vmem:[#allocation4 + $0x118] sm:$0x3] %vm329, 0.0
        %2548 = vst.msk [vmem:[#allocation4 + $0x120] sm:$0xff] %vm326, 0.0
        %2549 = vst.msk [vmem:[#allocation4 + $0x128] sm:$0xff] %vm326, 0.0
        %2550 = vst.msk [vmem:[#allocation4 + $0x130] sm:$0x3] %vm329, 0.0
        %2551 = vst.msk [vmem:[#allocation4 + $0x138] sm:$0xff] %vm326, 0.0
        %2552 = vst.msk [vmem:[#allocation4 + $0x140] sm:$0xff] %vm326, 0.0
        %2553 = vst.msk [vmem:[#allocation4 + $0x148] sm:$0x3] %vm329, 0.0
        %2554 = vst.msk [vmem:[#allocation4 + $0x150] sm:$0xff] %vm326, 0.0
        %2555 = vst.msk [vmem:[#allocation4 + $0x158] sm:$0xff] %vm326, 0.0
        %2556 = vst.msk [vmem:[#allocation4 + $0x160] sm:$0x3] %vm329, 0.0
        %2557 = vst.msk [vmem:[#allocation4 + $0x168] sm:$0xff] %vm326, 0.0
        %2558 = vst.msk [vmem:[#allocation4 + $0x170] sm:$0xff] %vm326, 0.0
        %2559 = vst.msk [vmem:[#allocation4 + $0x178] sm:$0x3] %vm329, 0.0
        %2560 = vst.msk [vmem:[#allocation4 + $0x180] sm:$0xff] %vm326, 0.0
        %2561 = vst.msk [vmem:[#allocation4 + $0x188] sm:$0xff] %vm326, 0.0
        %2562 = vst.msk [vmem:[#allocation4 + $0x190] sm:$0x3] %vm329, 0.0
        %2563 = vst.msk [vmem:[#allocation4 + $0x198] sm:$0xff] %vm326, 0.0
        %2564 = vst.msk [vmem:[#allocation4 + $0x1a0] sm:$0xff] %vm326, 0.0
        %2565 = vst.msk [vmem:[#allocation4 + $0x1a8] sm:$0x3] %vm329, 0.0
        %s2566 = scalar_lea.vmem [#allocation4], 24
        %2567 = vst.msk [vmem:[%s2566 + $0x1] sm:$0xff] %vm326, %v2480
        %2568 = vst.msk [vmem:[%s2566 + $0x9] sm:$0xff] %vm326, %v2481
        %2569 = vst.msk [vmem:[%s2566 + $0x19] sm:$0xff] %vm326, %v2482
        %2570 = vst.msk [vmem:[%s2566 + $0x21] sm:$0xff] %vm326, %v2483
        %2571 = vst.msk [vmem:[%s2566 + $0x31] sm:$0xff] %vm326, %v2484
        %2572 = vst.msk [vmem:[%s2566 + $0x39] sm:$0xff] %vm326, %v2485
        %2573 = vst.msk [vmem:[%s2566 + $0x49] sm:$0xff] %vm326, %v2486
        %2574 = vst.msk [vmem:[%s2566 + $0x51] sm:$0xff] %vm326, %v2487
        %2575 = vst.msk [vmem:[%s2566 + $0x61] sm:$0xff] %vm326, %v2488
        %2576 = vst.msk [vmem:[%s2566 + $0x69] sm:$0xff] %vm326, %v2489
        %2577 = vst.msk [vmem:[%s2566 + $0x79] sm:$0xff] %vm326, %v2490
        %2578 = vst.msk [vmem:[%s2566 + $0x81] sm:$0xff] %vm326, %v2491
        %2579 = vst.msk [vmem:[%s2566 + $0x91] sm:$0xff] %vm326, %v2492
        %2580 = vst.msk [vmem:[%s2566 + $0x99] sm:$0xff] %vm326, %v2493
        %2581 = vst.msk [vmem:[%s2566 + $0xa9] sm:$0xff] %vm326, %v2494
        %2582 = vst.msk [vmem:[%s2566 + $0xb1] sm:$0xff] %vm326, %v2495
        %2583 = vst.msk [vmem:[%s2566 + $0xc1] sm:$0xff] %vm326, %v2496
        %2584 = vst.msk [vmem:[%s2566 + $0xc9] sm:$0xff] %vm326, %v2497
        %2585 = vst.msk [vmem:[%s2566 + $0xd9] sm:$0xff] %vm326, %v2498
        %2586 = vst.msk [vmem:[%s2566 + $0xe1] sm:$0xff] %vm326, %v2499
        %2587 = vst.msk [vmem:[%s2566 + $0xf1] sm:$0xff] %vm326, %v2500
        %2588 = vst.msk [vmem:[%s2566 + $0xf9] sm:$0xff] %vm326, %v2501
        %2589 = vst.msk [vmem:[%s2566 + $0x109] sm:$0xff] %vm326, %v2502
        %2590 = vst.msk [vmem:[%s2566 + $0x111] sm:$0xff] %vm326, %v2503
        %2591 = vst.msk [vmem:[%s2566 + $0x121] sm:$0xff] %vm326, %v2504
        %2592 = vst.msk [vmem:[%s2566 + $0x129] sm:$0xff] %vm326, %v2505
        %2593 = vst.msk [vmem:[%s2566 + $0x139] sm:$0xff] %vm326, %v2506
        %2594 = vst.msk [vmem:[%s2566 + $0x141] sm:$0xff] %vm326, %v2507
        %2595 = vst.msk [vmem:[%s2566 + $0x151] sm:$0xff] %vm326, %v2508
        %2596 = vst.msk [vmem:[%s2566 + $0x159] sm:$0xff] %vm326, %v2509
        %2597 = vst.msk [vmem:[%s2566 + $0x169] sm:$0xff] %vm326, %v2510
        %2598 = vst.msk [vmem:[%s2566 + $0x171] sm:$0xff] %vm326, %v2511
        %v2599 = vld [vmem:[#allocation4] sm:$0xff]
        %v2600 = vld [vmem:[#allocation4 + $0x8] sm:$0xff]
        %v2601 = vld [vmem:[#allocation4 + $0x18] sm:$0xff]
        %v2602 = vld [vmem:[#allocation4 + $0x20] sm:$0xff]
        %v2603 = vld [vmem:[#allocation4 + $0x30] sm:$0xff]
        %v2604 = vld [vmem:[#allocation4 + $0x38] sm:$0xff]
        %v2605 = vld [vmem:[#allocation4 + $0x48] sm:$0xff]
        %v2606 = vld [vmem:[#allocation4 + $0x50] sm:$0xff]
        %v2607 = vld [vmem:[#allocation4 + $0x60] sm:$0xff]
        %v2608 = vld [vmem:[#allocation4 + $0x68] sm:$0xff]
        %v2609 = vld [vmem:[#allocation4 + $0x78] sm:$0xff]
        %v2610 = vld [vmem:[#allocation4 + $0x80] sm:$0xff]
        %v2611 = vld [vmem:[#allocation4 + $0x90] sm:$0xff]
        %v2612 = vld [vmem:[#allocation4 + $0x98] sm:$0xff]
        %v2613 = vld [vmem:[#allocation4 + $0xa8] sm:$0xff]
        %v2614 = vld [vmem:[#allocation4 + $0xb0] sm:$0xff]
        %v2615 = vld [vmem:[#allocation4 + $0xc0] sm:$0xff]
        %v2616 = vld [vmem:[#allocation4 + $0xc8] sm:$0xff]
        %v2617 = vld [vmem:[#allocation4 + $0xd8] sm:$0xff]
        %v2618 = vld [vmem:[#allocation4 + $0xe0] sm:$0xff]
        %v2619 = vld [vmem:[#allocation4 + $0xf0] sm:$0xff]
        %v2620 = vld [vmem:[#allocation4 + $0xf8] sm:$0xff]
        %v2621 = vld [vmem:[#allocation4 + $0x108] sm:$0xff]
        %v2622 = vld [vmem:[#allocation4 + $0x110] sm:$0xff]
        %v2623 = vld [vmem:[#allocation4 + $0x120] sm:$0xff]
        %v2624 = vld [vmem:[#allocation4 + $0x128] sm:$0xff]
        %v2625 = vld [vmem:[#allocation4 + $0x138] sm:$0xff]
        %v2626 = vld [vmem:[#allocation4 + $0x140] sm:$0xff]
        %v2627 = vld [vmem:[#allocation4 + $0x150] sm:$0xff]
        %v2628 = vld [vmem:[#allocation4 + $0x158] sm:$0xff]
        %v2629 = vld [vmem:[#allocation4 + $0x168] sm:$0xff]
        %v2630 = vld [vmem:[#allocation4 + $0x170] sm:$0xff]
        %2631 = vst.msk [vmem:[#allocation5] sm:$0xff] %vm326, %v2599
        %2632 = vst.msk [vmem:[#allocation5 + $0x18] sm:$0xff] %vm326, %v2600
        %2633 = vst.msk [vmem:[#allocation5 + $0x30] sm:$0xff] %vm326, %v2601
        %2634 = vst.msk [vmem:[#allocation5 + $0x48] sm:$0xff] %vm326, %v2602
        %2635 = vst.msk [vmem:[#allocation5 + $0x60] sm:$0xff] %vm326, %v2603
        %2636 = vst.msk [vmem:[#allocation5 + $0x78] sm:$0xff] %vm326, %v2604
        %2637 = vst.msk [vmem:[#allocation5 + $0x90] sm:$0xff] %vm326, %v2605
        %2638 = vst.msk [vmem:[#allocation5 + $0xa8] sm:$0xff] %vm326, %v2606
        %2639 = vst.msk [vmem:[#allocation5 + $0xc0] sm:$0xff] %vm326, %v2607
        %2640 = vst.msk [vmem:[#allocation5 + $0xd8] sm:$0xff] %vm326, %v2608
        %2641 = vst.msk [vmem:[#allocation5 + $0xf0] sm:$0xff] %vm326, %v2609
        %2642 = vst.msk [vmem:[#allocation5 + $0x108] sm:$0xff] %vm326, %v2610
        %2643 = vst.msk [vmem:[#allocation5 + $0x120] sm:$0xff] %vm326, %v2611
        %2644 = vst.msk [vmem:[#allocation5 + $0x138] sm:$0xff] %vm326, %v2612
        %2645 = vst.msk [vmem:[#allocation5 + $0x150] sm:$0xff] %vm326, %v2613
        %2646 = vst.msk [vmem:[#allocation5 + $0x168] sm:$0xff] %vm326, %v2614
        %2647 = vst.msk [vmem:[#allocation5 + $0x180] sm:$0xff] %vm326, %v2615
        %2648 = vst.msk [vmem:[#allocation5 + $0x198] sm:$0xff] %vm326, %v2616
        %2649 = vst.msk [vmem:[#allocation5 + $0x1b0] sm:$0xff] %vm326, %v2617
        %2650 = vst.msk [vmem:[#allocation5 + $0x1c8] sm:$0xff] %vm326, %v2618
        %2651 = vst.msk [vmem:[#allocation5 + $0x1e0] sm:$0xff] %vm326, %v2619
        %2652 = vst.msk [vmem:[#allocation5 + $0x1f8] sm:$0xff] %vm326, %v2620
        %2653 = vst.msk [vmem:[#allocation5 + $0x210] sm:$0xff] %vm326, %v2621
        %2654 = vst.msk [vmem:[#allocation5 + $0x228] sm:$0xff] %vm326, %v2622
        %2655 = vst.msk [vmem:[#allocation5 + $0x240] sm:$0xff] %vm326, %v2623
        %2656 = vst.msk [vmem:[#allocation5 + $0x258] sm:$0xff] %vm326, %v2624
        %2657 = vst.msk [vmem:[#allocation5 + $0x270] sm:$0xff] %vm326, %v2625
        %2658 = vst.msk [vmem:[#allocation5 + $0x288] sm:$0xff] %vm326, %v2626
        %2659 = vst.msk [vmem:[#allocation5 + $0x2a0] sm:$0xff] %vm326, %v2627
        %2660 = vst.msk [vmem:[#allocation5 + $0x2b8] sm:$0xff] %vm326, %v2628
        %2661 = vst.msk [vmem:[#allocation5 + $0x2d0] sm:$0xff] %vm326, %v2629
        %2662 = vst.msk [vmem:[#allocation5 + $0x2e8] sm:$0xff] %vm326, %v2630
        %v2663 = vld [vmem:[#allocation4 + $0x1] sm:$0xff]
        %v2664 = vld [vmem:[#allocation4 + $0x9] sm:$0xff]
        %v2665 = vld [vmem:[#allocation4 + $0x19] sm:$0xff]
        %v2666 = vld [vmem:[#allocation4 + $0x21] sm:$0xff]
        %v2667 = vld [vmem:[#allocation4 + $0x31] sm:$0xff]
        %v2668 = vld [vmem:[#allocation4 + $0x39] sm:$0xff]
        %v2669 = vld [vmem:[#allocation4 + $0x49] sm:$0xff]
        %v2670 = vld [vmem:[#allocation4 + $0x51] sm:$0xff]
        %v2671 = vld [vmem:[#allocation4 + $0x61] sm:$0xff]
        %v2672 = vld [vmem:[#allocation4 + $0x69] sm:$0xff]
        %v2673 = vld [vmem:[#allocation4 + $0x79] sm:$0xff]
        %v2674 = vld [vmem:[#allocation4 + $0x81] sm:$0xff]
        %v2675 = vld [vmem:[#allocation4 + $0x91] sm:$0xff]
        %v2676 = vld [vmem:[#allocation4 + $0x99] sm:$0xff]
        %v2677 = vld [vmem:[#allocation4 + $0xa9] sm:$0xff]
        %v2678 = vld [vmem:[#allocation4 + $0xb1] sm:$0xff]
        %v2679 = vld [vmem:[#allocation4 + $0xc1] sm:$0xff]
        %v2680 = vld [vmem:[#allocation4 + $0xc9] sm:$0xff]
        %v2681 = vld [vmem:[#allocation4 + $0xd9] sm:$0xff]
        %v2682 = vld [vmem:[#allocation4 + $0xe1] sm:$0xff]
        %v2683 = vld [vmem:[#allocation4 + $0xf1] sm:$0xff]
        %v2684 = vld [vmem:[#allocation4 + $0xf9] sm:$0xff]
        %v2685 = vld [vmem:[#allocation4 + $0x109] sm:$0xff]
        %v2686 = vld [vmem:[#allocation4 + $0x111] sm:$0xff]
        %v2687 = vld [vmem:[#allocation4 + $0x121] sm:$0xff]
        %v2688 = vld [vmem:[#allocation4 + $0x129] sm:$0xff]
        %v2689 = vld [vmem:[#allocation4 + $0x139] sm:$0xff]
        %v2690 = vld [vmem:[#allocation4 + $0x141] sm:$0xff]
        %v2691 = vld [vmem:[#allocation4 + $0x151] sm:$0xff]
        %v2692 = vld [vmem:[#allocation4 + $0x159] sm:$0xff]
        %v2693 = vld [vmem:[#allocation4 + $0x169] sm:$0xff]
        %v2694 = vld [vmem:[#allocation4 + $0x171] sm:$0xff]
        %2727 = vrot.lane.b32.xlu0 %v2663, 32
        %v2728 = vpop.permute.xlu0 %2727
        %2729 = vrot.lane.b32.xlu0 %v2664, 32
        %v2730 = vpop.permute.xlu0 %2729
        %2731 = vrot.lane.b32.xlu0 %v2665, 32
        %v2732 = vpop.permute.xlu0 %2731
        %2733 = vrot.lane.b32.xlu0 %v2666, 32
        %v2734 = vpop.permute.xlu0 %2733
        %2735 = vrot.lane.b32.xlu0 %v2667, 32
        %v2736 = vpop.permute.xlu0 %2735
        %2737 = vrot.lane.b32.xlu0 %v2668, 32
        %v2738 = vpop.permute.xlu0 %2737
        %2739 = vrot.lane.b32.xlu0 %v2669, 32
        %v2740 = vpop.permute.xlu0 %2739
        %2741 = vrot.lane.b32.xlu0 %v2670, 32
        %v2742 = vpop.permute.xlu0 %2741
        %2743 = vrot.lane.b32.xlu0 %v2671, 32
        %v2744 = vpop.permute.xlu0 %2743
        %2745 = vrot.lane.b32.xlu0 %v2672, 32
        %v2746 = vpop.permute.xlu0 %2745
        %2747 = vrot.lane.b32.xlu0 %v2673, 32
        %v2748 = vpop.permute.xlu0 %2747
        %2749 = vrot.lane.b32.xlu0 %v2674, 32
        %v2750 = vpop.permute.xlu0 %2749
        %2751 = vrot.lane.b32.xlu0 %v2675, 32
        %v2752 = vpop.permute.xlu0 %2751
        %2753 = vrot.lane.b32.xlu0 %v2676, 32
        %v2754 = vpop.permute.xlu0 %2753
        %2755 = vrot.lane.b32.xlu0 %v2677, 32
        %v2756 = vpop.permute.xlu0 %2755
        %2757 = vrot.lane.b32.xlu0 %v2678, 32
        %v2758 = vpop.permute.xlu0 %2757
        %2759 = vrot.lane.b32.xlu0 %v2679, 32
        %v2760 = vpop.permute.xlu0 %2759
        %2761 = vrot.lane.b32.xlu0 %v2680, 32
        %v2762 = vpop.permute.xlu0 %2761
        %2763 = vrot.lane.b32.xlu0 %v2681, 32
        %v2764 = vpop.permute.xlu0 %2763
        %2765 = vrot.lane.b32.xlu0 %v2682, 32
        %v2766 = vpop.permute.xlu0 %2765
        %2767 = vrot.lane.b32.xlu0 %v2683, 32
        %v2768 = vpop.permute.xlu0 %2767
        %2769 = vrot.lane.b32.xlu0 %v2684, 32
        %v2770 = vpop.permute.xlu0 %2769
        %2771 = vrot.lane.b32.xlu0 %v2685, 32
        %v2772 = vpop.permute.xlu0 %2771
        %2773 = vrot.lane.b32.xlu0 %v2686, 32
        %v2774 = vpop.permute.xlu0 %2773
        %2775 = vrot.lane.b32.xlu0 %v2687, 32
        %v2776 = vpop.permute.xlu0 %2775
        %2777 = vrot.lane.b32.xlu0 %v2688, 32
        %v2778 = vpop.permute.xlu0 %2777
        %2779 = vrot.lane.b32.xlu0 %v2689, 32
        %v2780 = vpop.permute.xlu0 %2779
        %2781 = vrot.lane.b32.xlu0 %v2690, 32
        %v2782 = vpop.permute.xlu0 %2781
        %2783 = vrot.lane.b32.xlu0 %v2691, 32
        %v2784 = vpop.permute.xlu0 %2783
        %2785 = vrot.lane.b32.xlu0 %v2692, 32
        %v2786 = vpop.permute.xlu0 %2785
        %2787 = vrot.lane.b32.xlu0 %v2693, 32
        %v2788 = vpop.permute.xlu0 %2787
        %2789 = vrot.lane.b32.xlu0 %v2694, 32
        %v2790 = vpop.permute.xlu0 %2789
        %2823 = vst.msk [vmem:[#allocation5] sm:$0xff] %vm671, %v2728
        %2824 = vst.msk [vmem:[#allocation5 + $0x18] sm:$0xff] %vm671, %v2730
        %2825 = vst.msk [vmem:[#allocation5 + $0x30] sm:$0xff] %vm671, %v2732
        %2826 = vst.msk [vmem:[#allocation5 + $0x48] sm:$0xff] %vm671, %v2734
        %2827 = vst.msk [vmem:[#allocation5 + $0x60] sm:$0xff] %vm671, %v2736
        %2828 = vst.msk [vmem:[#allocation5 + $0x78] sm:$0xff] %vm671, %v2738
        %2829 = vst.msk [vmem:[#allocation5 + $0x90] sm:$0xff] %vm671, %v2740
        %2830 = vst.msk [vmem:[#allocation5 + $0xa8] sm:$0xff] %vm671, %v2742
        %2831 = vst.msk [vmem:[#allocation5 + $0xc0] sm:$0xff] %vm671, %v2744
        %2832 = vst.msk [vmem:[#allocation5 + $0xd8] sm:$0xff] %vm671, %v2746
        %2833 = vst.msk [vmem:[#allocation5 + $0xf0] sm:$0xff] %vm671, %v2748
        %2834 = vst.msk [vmem:[#allocation5 + $0x108] sm:$0xff] %vm671, %v2750
        %2835 = vst.msk [vmem:[#allocation5 + $0x120] sm:$0xff] %vm671, %v2752
        %2836 = vst.msk [vmem:[#allocation5 + $0x138] sm:$0xff] %vm671, %v2754
        %2837 = vst.msk [vmem:[#allocation5 + $0x150] sm:$0xff] %vm671, %v2756
        %2838 = vst.msk [vmem:[#allocation5 + $0x168] sm:$0xff] %vm671, %v2758
        %2839 = vst.msk [vmem:[#allocation5 + $0x180] sm:$0xff] %vm671, %v2760
        %2840 = vst.msk [vmem:[#allocation5 + $0x198] sm:$0xff] %vm671, %v2762
        %2841 = vst.msk [vmem:[#allocation5 + $0x1b0] sm:$0xff] %vm671, %v2764
        %2842 = vst.msk [vmem:[#allocation5 + $0x1c8] sm:$0xff] %vm671, %v2766
        %2843 = vst.msk [vmem:[#allocation5 + $0x1e0] sm:$0xff] %vm671, %v2768
        %2844 = vst.msk [vmem:[#allocation5 + $0x1f8] sm:$0xff] %vm671, %v2770
        %2845 = vst.msk [vmem:[#allocation5 + $0x210] sm:$0xff] %vm671, %v2772
        %2846 = vst.msk [vmem:[#allocation5 + $0x228] sm:$0xff] %vm671, %v2774
        %2847 = vst.msk [vmem:[#allocation5 + $0x240] sm:$0xff] %vm671, %v2776
        %2848 = vst.msk [vmem:[#allocation5 + $0x258] sm:$0xff] %vm671, %v2778
        %2849 = vst.msk [vmem:[#allocation5 + $0x270] sm:$0xff] %vm671, %v2780
        %2850 = vst.msk [vmem:[#allocation5 + $0x288] sm:$0xff] %vm671, %v2782
        %2851 = vst.msk [vmem:[#allocation5 + $0x2a0] sm:$0xff] %vm671, %v2784
        %2852 = vst.msk [vmem:[#allocation5 + $0x2b8] sm:$0xff] %vm671, %v2786
        %2853 = vst.msk [vmem:[#allocation5 + $0x2d0] sm:$0xff] %vm671, %v2788
        %2854 = vst.msk [vmem:[#allocation5 + $0x2e8] sm:$0xff] %vm671, %v2790
        %v2855 = vld [vmem:[#allocation4 + $0x2] sm:$0xff]
        %v2856 = vld [vmem:[#allocation4 + $0xa] sm:$0xff]
        %v2857 = vld [vmem:[#allocation4 + $0x1a] sm:$0xff]
        %v2858 = vld [vmem:[#allocation4 + $0x22] sm:$0xff]
        %v2859 = vld [vmem:[#allocation4 + $0x32] sm:$0xff]
        %v2860 = vld [vmem:[#allocation4 + $0x3a] sm:$0xff]
        %v2861 = vld [vmem:[#allocation4 + $0x4a] sm:$0xff]
        %v2862 = vld [vmem:[#allocation4 + $0x52] sm:$0xff]
        %v2863 = vld [vmem:[#allocation4 + $0x62] sm:$0xff]
        %v2864 = vld [vmem:[#allocation4 + $0x6a] sm:$0xff]
        %v2865 = vld [vmem:[#allocation4 + $0x7a] sm:$0xff]
        %v2866 = vld [vmem:[#allocation4 + $0x82] sm:$0xff]
        %v2867 = vld [vmem:[#allocation4 + $0x92] sm:$0xff]
        %v2868 = vld [vmem:[#allocation4 + $0x9a] sm:$0xff]
        %v2869 = vld [vmem:[#allocation4 + $0xaa] sm:$0xff]
        %v2870 = vld [vmem:[#allocation4 + $0xb2] sm:$0xff]
        %v2871 = vld [vmem:[#allocation4 + $0xc2] sm:$0xff]
        %v2872 = vld [vmem:[#allocation4 + $0xca] sm:$0xff]
        %v2873 = vld [vmem:[#allocation4 + $0xda] sm:$0xff]
        %v2874 = vld [vmem:[#allocation4 + $0xe2] sm:$0xff]
        %v2875 = vld [vmem:[#allocation4 + $0xf2] sm:$0xff]
        %v2876 = vld [vmem:[#allocation4 + $0xfa] sm:$0xff]
        %v2877 = vld [vmem:[#allocation4 + $0x10a] sm:$0xff]
        %v2878 = vld [vmem:[#allocation4 + $0x112] sm:$0xff]
        %v2879 = vld [vmem:[#allocation4 + $0x122] sm:$0xff]
        %v2880 = vld [vmem:[#allocation4 + $0x12a] sm:$0xff]
        %v2881 = vld [vmem:[#allocation4 + $0x13a] sm:$0xff]
        %v2882 = vld [vmem:[#allocation4 + $0x142] sm:$0xff]
        %v2883 = vld [vmem:[#allocation4 + $0x152] sm:$0xff]
        %v2884 = vld [vmem:[#allocation4 + $0x15a] sm:$0xff]
        %v2885 = vld [vmem:[#allocation4 + $0x16a] sm:$0xff]
        %v2886 = vld [vmem:[#allocation4 + $0x172] sm:$0xff]
        %2919 = vrot.lane.b32.xlu0 %v2855, 64
        %v2920 = vpop.permute.xlu0 %2919
        %2921 = vrot.lane.b32.xlu0 %v2856, 64
        %v2922 = vpop.permute.xlu0 %2921
        %2923 = vrot.lane.b32.xlu0 %v2857, 64
        %v2924 = vpop.permute.xlu0 %2923
        %2925 = vrot.lane.b32.xlu0 %v2858, 64
        %v2926 = vpop.permute.xlu0 %2925
        %2927 = vrot.lane.b32.xlu0 %v2859, 64
        %v2928 = vpop.permute.xlu0 %2927
        %2929 = vrot.lane.b32.xlu0 %v2860, 64
        %v2930 = vpop.permute.xlu0 %2929
        %2931 = vrot.lane.b32.xlu0 %v2861, 64
        %v2932 = vpop.permute.xlu0 %2931
        %2933 = vrot.lane.b32.xlu0 %v2862, 64
        %v2934 = vpop.permute.xlu0 %2933
        %2935 = vrot.lane.b32.xlu0 %v2863, 64
        %v2936 = vpop.permute.xlu0 %2935
        %2937 = vrot.lane.b32.xlu0 %v2864, 64
        %v2938 = vpop.permute.xlu0 %2937
        %2939 = vrot.lane.b32.xlu0 %v2865, 64
        %v2940 = vpop.permute.xlu0 %2939
        %2941 = vrot.lane.b32.xlu0 %v2866, 64
        %v2942 = vpop.permute.xlu0 %2941
        %2943 = vrot.lane.b32.xlu0 %v2867, 64
        %v2944 = vpop.permute.xlu0 %2943
        %2945 = vrot.lane.b32.xlu0 %v2868, 64
        %v2946 = vpop.permute.xlu0 %2945
        %2947 = vrot.lane.b32.xlu0 %v2869, 64
        %v2948 = vpop.permute.xlu0 %2947
        %2949 = vrot.lane.b32.xlu0 %v2870, 64
        %v2950 = vpop.permute.xlu0 %2949
        %2951 = vrot.lane.b32.xlu0 %v2871, 64
        %v2952 = vpop.permute.xlu0 %2951
        %2953 = vrot.lane.b32.xlu0 %v2872, 64
        %v2954 = vpop.permute.xlu0 %2953
        %2955 = vrot.lane.b32.xlu0 %v2873, 64
        %v2956 = vpop.permute.xlu0 %2955
        %2957 = vrot.lane.b32.xlu0 %v2874, 64
        %v2958 = vpop.permute.xlu0 %2957
        %2959 = vrot.lane.b32.xlu0 %v2875, 64
        %v2960 = vpop.permute.xlu0 %2959
        %2961 = vrot.lane.b32.xlu0 %v2876, 64
        %v2962 = vpop.permute.xlu0 %2961
        %2963 = vrot.lane.b32.xlu0 %v2877, 64
        %v2964 = vpop.permute.xlu0 %2963
        %2965 = vrot.lane.b32.xlu0 %v2878, 64
        %v2966 = vpop.permute.xlu0 %2965
        %2967 = vrot.lane.b32.xlu0 %v2879, 64
        %v2968 = vpop.permute.xlu0 %2967
        %2969 = vrot.lane.b32.xlu0 %v2880, 64
        %v2970 = vpop.permute.xlu0 %2969
        %2971 = vrot.lane.b32.xlu0 %v2881, 64
        %v2972 = vpop.permute.xlu0 %2971
        %2973 = vrot.lane.b32.xlu0 %v2882, 64
        %v2974 = vpop.permute.xlu0 %2973
        %2975 = vrot.lane.b32.xlu0 %v2883, 64
        %v2976 = vpop.permute.xlu0 %2975
        %2977 = vrot.lane.b32.xlu0 %v2884, 64
        %v2978 = vpop.permute.xlu0 %2977
        %2979 = vrot.lane.b32.xlu0 %v2885, 64
        %v2980 = vpop.permute.xlu0 %2979
        %2981 = vrot.lane.b32.xlu0 %v2886, 64
        %v2982 = vpop.permute.xlu0 %2981
        %3015 = vst.msk [vmem:[#allocation5] sm:$0xff] %vm864, %v2920
        %3016 = vst.msk [vmem:[#allocation5 + $0x18] sm:$0xff] %vm864, %v2922
        %3017 = vst.msk [vmem:[#allocation5 + $0x30] sm:$0xff] %vm864, %v2924
        %3018 = vst.msk [vmem:[#allocation5 + $0x48] sm:$0xff] %vm864, %v2926
        %3019 = vst.msk [vmem:[#allocation5 + $0x60] sm:$0xff] %vm864, %v2928
        %3020 = vst.msk [vmem:[#allocation5 + $0x78] sm:$0xff] %vm864, %v2930
        %3021 = vst.msk [vmem:[#allocation5 + $0x90] sm:$0xff] %vm864, %v2932
        %3022 = vst.msk [vmem:[#allocation5 + $0xa8] sm:$0xff] %vm864, %v2934
        %3023 = vst.msk [vmem:[#allocation5 + $0xc0] sm:$0xff] %vm864, %v2936
        %3024 = vst.msk [vmem:[#allocation5 + $0xd8] sm:$0xff] %vm864, %v2938
        %3025 = vst.msk [vmem:[#allocation5 + $0xf0] sm:$0xff] %vm864, %v2940
        %3026 = vst.msk [vmem:[#allocation5 + $0x108] sm:$0xff] %vm864, %v2942
        %3027 = vst.msk [vmem:[#allocation5 + $0x120] sm:$0xff] %vm864, %v2944
        %3028 = vst.msk [vmem:[#allocation5 + $0x138] sm:$0xff] %vm864, %v2946
        %3029 = vst.msk [vmem:[#allocation5 + $0x150] sm:$0xff] %vm864, %v2948
        %3030 = vst.msk [vmem:[#allocation5 + $0x168] sm:$0xff] %vm864, %v2950
        %3031 = vst.msk [vmem:[#allocation5 + $0x180] sm:$0xff] %vm864, %v2952
        %3032 = vst.msk [vmem:[#allocation5 + $0x198] sm:$0xff] %vm864, %v2954
        %3033 = vst.msk [vmem:[#allocation5 + $0x1b0] sm:$0xff] %vm864, %v2956
        %3034 = vst.msk [vmem:[#allocation5 + $0x1c8] sm:$0xff] %vm864, %v2958
        %3035 = vst.msk [vmem:[#allocation5 + $0x1e0] sm:$0xff] %vm864, %v2960
        %3036 = vst.msk [vmem:[#allocation5 + $0x1f8] sm:$0xff] %vm864, %v2962
        %3037 = vst.msk [vmem:[#allocation5 + $0x210] sm:$0xff] %vm864, %v2964
        %3038 = vst.msk [vmem:[#allocation5 + $0x228] sm:$0xff] %vm864, %v2966
        %3039 = vst.msk [vmem:[#allocation5 + $0x240] sm:$0xff] %vm864, %v2968
        %3040 = vst.msk [vmem:[#allocation5 + $0x258] sm:$0xff] %vm864, %v2970
        %3041 = vst.msk [vmem:[#allocation5 + $0x270] sm:$0xff] %vm864, %v2972
        %3042 = vst.msk [vmem:[#allocation5 + $0x288] sm:$0xff] %vm864, %v2974
        %3043 = vst.msk [vmem:[#allocation5 + $0x2a0] sm:$0xff] %vm864, %v2976
        %3044 = vst.msk [vmem:[#allocation5 + $0x2b8] sm:$0xff] %vm864, %v2978
        %3045 = vst.msk [vmem:[#allocation5 + $0x2d0] sm:$0xff] %vm864, %v2980
        %3046 = vst.msk [vmem:[#allocation5 + $0x2e8] sm:$0xff] %vm864, %v2982
        %v3047 = vld [vmem:[%s2566] sm:$0xff]
        %v3048 = vld [vmem:[%s2566 + $0x8] sm:$0xff]
        %v3049 = vld [vmem:[%s2566 + $0x18] sm:$0xff]
        %v3050 = vld [vmem:[%s2566 + $0x20] sm:$0xff]
        %v3051 = vld [vmem:[%s2566 + $0x30] sm:$0xff]
        %v3052 = vld [vmem:[%s2566 + $0x38] sm:$0xff]
        %v3053 = vld [vmem:[%s2566 + $0x48] sm:$0xff]
        %v3054 = vld [vmem:[%s2566 + $0x50] sm:$0xff]
        %v3055 = vld [vmem:[%s2566 + $0x60] sm:$0xff]
        %v3056 = vld [vmem:[%s2566 + $0x68] sm:$0xff]
        %v3057 = vld [vmem:[%s2566 + $0x78] sm:$0xff]
        %v3058 = vld [vmem:[%s2566 + $0x80] sm:$0xff]
        %v3059 = vld [vmem:[%s2566 + $0x90] sm:$0xff]
        %v3060 = vld [vmem:[%s2566 + $0x98] sm:$0xff]
        %v3061 = vld [vmem:[%s2566 + $0xa8] sm:$0xff]
        %v3062 = vld [vmem:[%s2566 + $0xb0] sm:$0xff]
        %v3063 = vld [vmem:[%s2566 + $0xc0] sm:$0xff]
        %v3064 = vld [vmem:[%s2566 + $0xc8] sm:$0xff]
        %v3065 = vld [vmem:[%s2566 + $0xd8] sm:$0xff]
        %v3066 = vld [vmem:[%s2566 + $0xe0] sm:$0xff]
        %v3067 = vld [vmem:[%s2566 + $0xf0] sm:$0xff]
        %v3068 = vld [vmem:[%s2566 + $0xf8] sm:$0xff]
        %v3069 = vld [vmem:[%s2566 + $0x108] sm:$0xff]
        %v3070 = vld [vmem:[%s2566 + $0x110] sm:$0xff]
        %v3071 = vld [vmem:[%s2566 + $0x120] sm:$0xff]
        %v3072 = vld [vmem:[%s2566 + $0x128] sm:$0xff]
        %v3073 = vld [vmem:[%s2566 + $0x138] sm:$0xff]
        %v3074 = vld [vmem:[%s2566 + $0x140] sm:$0xff]
        %v3075 = vld [vmem:[%s2566 + $0x150] sm:$0xff]
        %v3076 = vld [vmem:[%s2566 + $0x158] sm:$0xff]
        %v3077 = vld [vmem:[%s2566 + $0x168] sm:$0xff]
        %v3078 = vld [vmem:[%s2566 + $0x170] sm:$0xff]
        %3111 = vrot.lane.b32.xlu0 %v3047, 96
        %v3112 = vpop.permute.xlu0 %3111
        %3113 = vrot.lane.b32.xlu0 %v3048, 96
        %v3114 = vpop.permute.xlu0 %3113
        %3115 = vrot.lane.b32.xlu0 %v3049, 96
        %v3116 = vpop.permute.xlu0 %3115
        %3117 = vrot.lane.b32.xlu0 %v3050, 96
        %v3118 = vpop.permute.xlu0 %3117
        %3119 = vrot.lane.b32.xlu0 %v3051, 96
        %v3120 = vpop.permute.xlu0 %3119
        %3121 = vrot.lane.b32.xlu0 %v3052, 96
        %v3122 = vpop.permute.xlu0 %3121
        %3123 = vrot.lane.b32.xlu0 %v3053, 96
        %v3124 = vpop.permute.xlu0 %3123
        %3125 = vrot.lane.b32.xlu0 %v3054, 96
        %v3126 = vpop.permute.xlu0 %3125
        %3127 = vrot.lane.b32.xlu0 %v3055, 96
        %v3128 = vpop.permute.xlu0 %3127
        %3129 = vrot.lane.b32.xlu0 %v3056, 96
        %v3130 = vpop.permute.xlu0 %3129
        %3131 = vrot.lane.b32.xlu0 %v3057, 96
        %v3132 = vpop.permute.xlu0 %3131
        %3133 = vrot.lane.b32.xlu0 %v3058, 96
        %v3134 = vpop.permute.xlu0 %3133
        %3135 = vrot.lane.b32.xlu0 %v3059, 96
        %v3136 = vpop.permute.xlu0 %3135
        %3137 = vrot.lane.b32.xlu0 %v3060, 96
        %v3138 = vpop.permute.xlu0 %3137
        %3139 = vrot.lane.b32.xlu0 %v3061, 96
        %v3140 = vpop.permute.xlu0 %3139
        %3141 = vrot.lane.b32.xlu0 %v3062, 96
        %v3142 = vpop.permute.xlu0 %3141
        %3143 = vrot.lane.b32.xlu0 %v3063, 96
        %v3144 = vpop.permute.xlu0 %3143
        %3145 = vrot.lane.b32.xlu0 %v3064, 96
        %v3146 = vpop.permute.xlu0 %3145
        %3147 = vrot.lane.b32.xlu0 %v3065, 96
        %v3148 = vpop.permute.xlu0 %3147
        %3149 = vrot.lane.b32.xlu0 %v3066, 96
        %v3150 = vpop.permute.xlu0 %3149
        %3151 = vrot.lane.b32.xlu0 %v3067, 96
        %v3152 = vpop.permute.xlu0 %3151
        %3153 = vrot.lane.b32.xlu0 %v3068, 96
        %v3154 = vpop.permute.xlu0 %3153
        %3155 = vrot.lane.b32.xlu0 %v3069, 96
        %v3156 = vpop.permute.xlu0 %3155
        %3157 = vrot.lane.b32.xlu0 %v3070, 96
        %v3158 = vpop.permute.xlu0 %3157
        %3159 = vrot.lane.b32.xlu0 %v3071, 96
        %v3160 = vpop.permute.xlu0 %3159
        %3161 = vrot.lane.b32.xlu0 %v3072, 96
        %v3162 = vpop.permute.xlu0 %3161
        %3163 = vrot.lane.b32.xlu0 %v3073, 96
        %v3164 = vpop.permute.xlu0 %3163
        %3165 = vrot.lane.b32.xlu0 %v3074, 96
        %v3166 = vpop.permute.xlu0 %3165
        %3167 = vrot.lane.b32.xlu0 %v3075, 96
        %v3168 = vpop.permute.xlu0 %3167
        %3169 = vrot.lane.b32.xlu0 %v3076, 96
        %v3170 = vpop.permute.xlu0 %3169
        %3171 = vrot.lane.b32.xlu0 %v3077, 96
        %v3172 = vpop.permute.xlu0 %3171
        %3173 = vrot.lane.b32.xlu0 %v3078, 96
        %v3174 = vpop.permute.xlu0 %3173
        %3207 = vst.msk [vmem:[#allocation5] sm:$0xff] %vm1057, %v3112
        %3208 = vst.msk [vmem:[#allocation5 + $0x18] sm:$0xff] %vm1057, %v3114
        %3209 = vst.msk [vmem:[#allocation5 + $0x30] sm:$0xff] %vm1057, %v3116
        %3210 = vst.msk [vmem:[#allocation5 + $0x48] sm:$0xff] %vm1057, %v3118
        %3211 = vst.msk [vmem:[#allocation5 + $0x60] sm:$0xff] %vm1057, %v3120
        %3212 = vst.msk [vmem:[#allocation5 + $0x78] sm:$0xff] %vm1057, %v3122
        %3213 = vst.msk [vmem:[#allocation5 + $0x90] sm:$0xff] %vm1057, %v3124
        %3214 = vst.msk [vmem:[#allocation5 + $0xa8] sm:$0xff] %vm1057, %v3126
        %3215 = vst.msk [vmem:[#allocation5 + $0xc0] sm:$0xff] %vm1057, %v3128
        %3216 = vst.msk [vmem:[#allocation5 + $0xd8] sm:$0xff] %vm1057, %v3130
        %3217 = vst.msk [vmem:[#allocation5 + $0xf0] sm:$0xff] %vm1057, %v3132
        %3218 = vst.msk [vmem:[#allocation5 + $0x108] sm:$0xff] %vm1057, %v3134
        %3219 = vst.msk [vmem:[#allocation5 + $0x120] sm:$0xff] %vm1057, %v3136
        %3220 = vst.msk [vmem:[#allocation5 + $0x138] sm:$0xff] %vm1057, %v3138
        %3221 = vst.msk [vmem:[#allocation5 + $0x150] sm:$0xff] %vm1057, %v3140
        %3222 = vst.msk [vmem:[#allocation5 + $0x168] sm:$0xff] %vm1057, %v3142
        %3223 = vst.msk [vmem:[#allocation5 + $0x180] sm:$0xff] %vm1057, %v3144
        %3224 = vst.msk [vmem:[#allocation5 + $0x198] sm:$0xff] %vm1057, %v3146
        %3225 = vst.msk [vmem:[#allocation5 + $0x1b0] sm:$0xff] %vm1057, %v3148
        %3226 = vst.msk [vmem:[#allocation5 + $0x1c8] sm:$0xff] %vm1057, %v3150
        %3227 = vst.msk [vmem:[#allocation5 + $0x1e0] sm:$0xff] %vm1057, %v3152
        %3228 = vst.msk [vmem:[#allocation5 + $0x1f8] sm:$0xff] %vm1057, %v3154
        %3229 = vst.msk [vmem:[#allocation5 + $0x210] sm:$0xff] %vm1057, %v3156
        %3230 = vst.msk [vmem:[#allocation5 + $0x228] sm:$0xff] %vm1057, %v3158
        %3231 = vst.msk [vmem:[#allocation5 + $0x240] sm:$0xff] %vm1057, %v3160
        %3232 = vst.msk [vmem:[#allocation5 + $0x258] sm:$0xff] %vm1057, %v3162
        %3233 = vst.msk [vmem:[#allocation5 + $0x270] sm:$0xff] %vm1057, %v3164
        %3234 = vst.msk [vmem:[#allocation5 + $0x288] sm:$0xff] %vm1057, %v3166
        %3235 = vst.msk [vmem:[#allocation5 + $0x2a0] sm:$0xff] %vm1057, %v3168
        %3236 = vst.msk [vmem:[#allocation5 + $0x2b8] sm:$0xff] %vm1057, %v3170
        %3237 = vst.msk [vmem:[#allocation5 + $0x2d0] sm:$0xff] %vm1057, %v3172
        %3238 = vst.msk [vmem:[#allocation5 + $0x2e8] sm:$0xff] %vm1057, %v3174
        %v3239 = vld [vmem:[%s2566 + $0x1] sm:$0xff]
        %v3240 = vld [vmem:[%s2566 + $0x9] sm:$0xff]
        %v3241 = vld [vmem:[%s2566 + $0x19] sm:$0xff]
        %v3242 = vld [vmem:[%s2566 + $0x21] sm:$0xff]
        %v3243 = vld [vmem:[%s2566 + $0x31] sm:$0xff]
        %v3244 = vld [vmem:[%s2566 + $0x39] sm:$0xff]
        %v3245 = vld [vmem:[%s2566 + $0x49] sm:$0xff]
        %v3246 = vld [vmem:[%s2566 + $0x51] sm:$0xff]
        %v3247 = vld [vmem:[%s2566 + $0x61] sm:$0xff]
        %v3248 = vld [vmem:[%s2566 + $0x69] sm:$0xff]
        %v3249 = vld [vmem:[%s2566 + $0x79] sm:$0xff]
        %v3250 = vld [vmem:[%s2566 + $0x81] sm:$0xff]
        %v3251 = vld [vmem:[%s2566 + $0x91] sm:$0xff]
        %v3252 = vld [vmem:[%s2566 + $0x99] sm:$0xff]
        %v3253 = vld [vmem:[%s2566 + $0xa9] sm:$0xff]
        %v3254 = vld [vmem:[%s2566 + $0xb1] sm:$0xff]
        %v3255 = vld [vmem:[%s2566 + $0xc1] sm:$0xff]
        %v3256 = vld [vmem:[%s2566 + $0xc9] sm:$0xff]
        %v3257 = vld [vmem:[%s2566 + $0xd9] sm:$0xff]
        %v3258 = vld [vmem:[%s2566 + $0xe1] sm:$0xff]
        %v3259 = vld [vmem:[%s2566 + $0xf1] sm:$0xff]
        %v3260 = vld [vmem:[%s2566 + $0xf9] sm:$0xff]
        %v3261 = vld [vmem:[%s2566 + $0x109] sm:$0xff]
        %v3262 = vld [vmem:[%s2566 + $0x111] sm:$0xff]
        %v3263 = vld [vmem:[%s2566 + $0x121] sm:$0xff]
        %v3264 = vld [vmem:[%s2566 + $0x129] sm:$0xff]
        %v3265 = vld [vmem:[%s2566 + $0x139] sm:$0xff]
        %v3266 = vld [vmem:[%s2566 + $0x141] sm:$0xff]
        %v3267 = vld [vmem:[%s2566 + $0x151] sm:$0xff]
        %v3268 = vld [vmem:[%s2566 + $0x159] sm:$0xff]
        %v3269 = vld [vmem:[%s2566 + $0x169] sm:$0xff]
        %v3270 = vld [vmem:[%s2566 + $0x171] sm:$0xff]
        %3271 = vst.msk [vmem:[#allocation5 + $0x8] sm:$0xff] %vm326, %v3239
        %3272 = vst.msk [vmem:[#allocation5 + $0x20] sm:$0xff] %vm326, %v3240
        %3273 = vst.msk [vmem:[#allocation5 + $0x38] sm:$0xff] %vm326, %v3241
        %3274 = vst.msk [vmem:[#allocation5 + $0x50] sm:$0xff] %vm326, %v3242
        %3275 = vst.msk [vmem:[#allocation5 + $0x68] sm:$0xff] %vm326, %v3243
        %3276 = vst.msk [vmem:[#allocation5 + $0x80] sm:$0xff] %vm326, %v3244
        %3277 = vst.msk [vmem:[#allocation5 + $0x98] sm:$0xff] %vm326, %v3245
        %3278 = vst.msk [vmem:[#allocation5 + $0xb0] sm:$0xff] %vm326, %v3246
        %3279 = vst.msk [vmem:[#allocation5 + $0xc8] sm:$0xff] %vm326, %v3247
        %3280 = vst.msk [vmem:[#allocation5 + $0xe0] sm:$0xff] %vm326, %v3248
        %3281 = vst.msk [vmem:[#allocation5 + $0xf8] sm:$0xff] %vm326, %v3249
        %3282 = vst.msk [vmem:[#allocation5 + $0x110] sm:$0xff] %vm326, %v3250
        %3283 = vst.msk [vmem:[#allocation5 + $0x128] sm:$0xff] %vm326, %v3251
        %3284 = vst.msk [vmem:[#allocation5 + $0x140] sm:$0xff] %vm326, %v3252
        %3285 = vst.msk [vmem:[#allocation5 + $0x158] sm:$0xff] %vm326, %v3253
        %3286 = vst.msk [vmem:[#allocation5 + $0x170] sm:$0xff] %vm326, %v3254
        %3287 = vst.msk [vmem:[#allocation5 + $0x188] sm:$0xff] %vm326, %v3255
        %3288 = vst.msk [vmem:[#allocation5 + $0x1a0] sm:$0xff] %vm326, %v3256
        %3289 = vst.msk [vmem:[#allocation5 + $0x1b8] sm:$0xff] %vm326, %v3257
        %3290 = vst.msk [vmem:[#allocation5 + $0x1d0] sm:$0xff] %vm326, %v3258
        %3291 = vst.msk [vmem:[#allocation5 + $0x1e8] sm:$0xff] %vm326, %v3259
        %3292 = vst.msk [vmem:[#allocation5 + $0x200] sm:$0xff] %vm326, %v3260
        %3293 = vst.msk [vmem:[#allocation5 + $0x218] sm:$0xff] %vm326, %v3261
        %3294 = vst.msk [vmem:[#allocation5 + $0x230] sm:$0xff] %vm326, %v3262
        %3295 = vst.msk [vmem:[#allocation5 + $0x248] sm:$0xff] %vm326, %v3263
        %3296 = vst.msk [vmem:[#allocation5 + $0x260] sm:$0xff] %vm326, %v3264
        %3297 = vst.msk [vmem:[#allocation5 + $0x278] sm:$0xff] %vm326, %v3265
        %3298 = vst.msk [vmem:[#allocation5 + $0x290] sm:$0xff] %vm326, %v3266
        %3299 = vst.msk [vmem:[#allocation5 + $0x2a8] sm:$0xff] %vm326, %v3267
        %3300 = vst.msk [vmem:[#allocation5 + $0x2c0] sm:$0xff] %vm326, %v3268
        %3301 = vst.msk [vmem:[#allocation5 + $0x2d8] sm:$0xff] %vm326, %v3269
        %3302 = vst.msk [vmem:[#allocation5 + $0x2f0] sm:$0xff] %vm326, %v3270
        %v3303 = vld [vmem:[%s2566 + $0x2] sm:$0xff]
        %v3304 = vld [vmem:[%s2566 + $0xa] sm:$0xff]
        %v3305 = vld [vmem:[%s2566 + $0x1a] sm:$0xff]
        %v3306 = vld [vmem:[%s2566 + $0x22] sm:$0xff]
        %v3307 = vld [vmem:[%s2566 + $0x32] sm:$0xff]
        %v3308 = vld [vmem:[%s2566 + $0x3a] sm:$0xff]
        %v3309 = vld [vmem:[%s2566 + $0x4a] sm:$0xff]
        %v3310 = vld [vmem:[%s2566 + $0x52] sm:$0xff]
        %v3311 = vld [vmem:[%s2566 + $0x62] sm:$0xff]
        %v3312 = vld [vmem:[%s2566 + $0x6a] sm:$0xff]
        %v3313 = vld [vmem:[%s2566 + $0x7a] sm:$0xff]
        %v3314 = vld [vmem:[%s2566 + $0x82] sm:$0xff]
        %v3315 = vld [vmem:[%s2566 + $0x92] sm:$0xff]
        %v3316 = vld [vmem:[%s2566 + $0x9a] sm:$0xff]
        %v3317 = vld [vmem:[%s2566 + $0xaa] sm:$0xff]
        %v3318 = vld [vmem:[%s2566 + $0xb2] sm:$0xff]
        %v3319 = vld [vmem:[%s2566 + $0xc2] sm:$0xff]
        %v3320 = vld [vmem:[%s2566 + $0xca] sm:$0xff]
        %v3321 = vld [vmem:[%s2566 + $0xda] sm:$0xff]
        %v3322 = vld [vmem:[%s2566 + $0xe2] sm:$0xff]
        %v3323 = vld [vmem:[%s2566 + $0xf2] sm:$0xff]
        %v3324 = vld [vmem:[%s2566 + $0xfa] sm:$0xff]
        %v3325 = vld [vmem:[%s2566 + $0x10a] sm:$0xff]
        %v3326 = vld [vmem:[%s2566 + $0x112] sm:$0xff]
        %v3327 = vld [vmem:[%s2566 + $0x122] sm:$0xff]
        %v3328 = vld [vmem:[%s2566 + $0x12a] sm:$0xff]
        %v3329 = vld [vmem:[%s2566 + $0x13a] sm:$0xff]
        %v3330 = vld [vmem:[%s2566 + $0x142] sm:$0xff]
        %v3331 = vld [vmem:[%s2566 + $0x152] sm:$0xff]
        %v3332 = vld [vmem:[%s2566 + $0x15a] sm:$0xff]
        %v3333 = vld [vmem:[%s2566 + $0x16a] sm:$0xff]
        %v3334 = vld [vmem:[%s2566 + $0x172] sm:$0xff]
        %3367 = vrot.lane.b32.xlu0 %v3303, 32
        %v3368 = vpop.permute.xlu0 %3367
        %3369 = vrot.lane.b32.xlu0 %v3304, 32
        %v3370 = vpop.permute.xlu0 %3369
        %3371 = vrot.lane.b32.xlu0 %v3305, 32
        %v3372 = vpop.permute.xlu0 %3371
        %3373 = vrot.lane.b32.xlu0 %v3306, 32
        %v3374 = vpop.permute.xlu0 %3373
        %3375 = vrot.lane.b32.xlu0 %v3307, 32
        %v3376 = vpop.permute.xlu0 %3375
        %3377 = vrot.lane.b32.xlu0 %v3308, 32
        %v3378 = vpop.permute.xlu0 %3377
        %3379 = vrot.lane.b32.xlu0 %v3309, 32
        %v3380 = vpop.permute.xlu0 %3379
        %3381 = vrot.lane.b32.xlu0 %v3310, 32
        %v3382 = vpop.permute.xlu0 %3381
        %3383 = vrot.lane.b32.xlu0 %v3311, 32
        %v3384 = vpop.permute.xlu0 %3383
        %3385 = vrot.lane.b32.xlu0 %v3312, 32
        %v3386 = vpop.permute.xlu0 %3385
        %3387 = vrot.lane.b32.xlu0 %v3313, 32
        %v3388 = vpop.permute.xlu0 %3387
        %3389 = vrot.lane.b32.xlu0 %v3314, 32
        %v3390 = vpop.permute.xlu0 %3389
        %3391 = vrot.lane.b32.xlu0 %v3315, 32
        %v3392 = vpop.permute.xlu0 %3391
        %3393 = vrot.lane.b32.xlu0 %v3316, 32
        %v3394 = vpop.permute.xlu0 %3393
        %3395 = vrot.lane.b32.xlu0 %v3317, 32
        %v3396 = vpop.permute.xlu0 %3395
        %3397 = vrot.lane.b32.xlu0 %v3318, 32
        %v3398 = vpop.permute.xlu0 %3397
        %3399 = vrot.lane.b32.xlu0 %v3319, 32
        %v3400 = vpop.permute.xlu0 %3399
        %3401 = vrot.lane.b32.xlu0 %v3320, 32
        %v3402 = vpop.permute.xlu0 %3401
        %3403 = vrot.lane.b32.xlu0 %v3321, 32
        %v3404 = vpop.permute.xlu0 %3403
        %3405 = vrot.lane.b32.xlu0 %v3322, 32
        %v3406 = vpop.permute.xlu0 %3405
        %3407 = vrot.lane.b32.xlu0 %v3323, 32
        %v3408 = vpop.permute.xlu0 %3407
        %3409 = vrot.lane.b32.xlu0 %v3324, 32
        %v3410 = vpop.permute.xlu0 %3409
        %3411 = vrot.lane.b32.xlu0 %v3325, 32
        %v3412 = vpop.permute.xlu0 %3411
        %3413 = vrot.lane.b32.xlu0 %v3326, 32
        %v3414 = vpop.permute.xlu0 %3413
        %3415 = vrot.lane.b32.xlu0 %v3327, 32
        %v3416 = vpop.permute.xlu0 %3415
        %3417 = vrot.lane.b32.xlu0 %v3328, 32
        %v3418 = vpop.permute.xlu0 %3417
        %3419 = vrot.lane.b32.xlu0 %v3329, 32
        %v3420 = vpop.permute.xlu0 %3419
        %3421 = vrot.lane.b32.xlu0 %v3330, 32
        %v3422 = vpop.permute.xlu0 %3421
        %3423 = vrot.lane.b32.xlu0 %v3331, 32
        %v3424 = vpop.permute.xlu0 %3423
        %3425 = vrot.lane.b32.xlu0 %v3332, 32
        %v3426 = vpop.permute.xlu0 %3425
        %3427 = vrot.lane.b32.xlu0 %v3333, 32
        %v3428 = vpop.permute.xlu0 %3427
        %3429 = vrot.lane.b32.xlu0 %v3334, 32
        %v3430 = vpop.permute.xlu0 %3429
        %3463 = vst.msk [vmem:[#allocation5 + $0x8] sm:$0xff] %vm671, %v3368
        %3464 = vst.msk [vmem:[#allocation5 + $0x20] sm:$0xff] %vm671, %v3370
        %3465 = vst.msk [vmem:[#allocation5 + $0x38] sm:$0xff] %vm671, %v3372
        %3466 = vst.msk [vmem:[#allocation5 + $0x50] sm:$0xff] %vm671, %v3374
        %3467 = vst.msk [vmem:[#allocation5 + $0x68] sm:$0xff] %vm671, %v3376
        %3468 = vst.msk [vmem:[#allocation5 + $0x80] sm:$0xff] %vm671, %v3378
        %3469 = vst.msk [vmem:[#allocation5 + $0x98] sm:$0xff] %vm671, %v3380
        %3470 = vst.msk [vmem:[#allocation5 + $0xb0] sm:$0xff] %vm671, %v3382
        %3471 = vst.msk [vmem:[#allocation5 + $0xc8] sm:$0xff] %vm671, %v3384
        %3472 = vst.msk [vmem:[#allocation5 + $0xe0] sm:$0xff] %vm671, %v3386
        %3473 = vst.msk [vmem:[#allocation5 + $0xf8] sm:$0xff] %vm671, %v3388
        %3474 = vst.msk [vmem:[#allocation5 + $0x110] sm:$0xff] %vm671, %v3390
        %3475 = vst.msk [vmem:[#allocation5 + $0x128] sm:$0xff] %vm671, %v3392
        %3476 = vst.msk [vmem:[#allocation5 + $0x140] sm:$0xff] %vm671, %v3394
        %3477 = vst.msk [vmem:[#allocation5 + $0x158] sm:$0xff] %vm671, %v3396
        %3478 = vst.msk [vmem:[#allocation5 + $0x170] sm:$0xff] %vm671, %v3398
        %3479 = vst.msk [vmem:[#allocation5 + $0x188] sm:$0xff] %vm671, %v3400
        %3480 = vst.msk [vmem:[#allocation5 + $0x1a0] sm:$0xff] %vm671, %v3402
        %3481 = vst.msk [vmem:[#allocation5 + $0x1b8] sm:$0xff] %vm671, %v3404
        %3482 = vst.msk [vmem:[#allocation5 + $0x1d0] sm:$0xff] %vm671, %v3406
        %3483 = vst.msk [vmem:[#allocation5 + $0x1e8] sm:$0xff] %vm671, %v3408
        %3484 = vst.msk [vmem:[#allocation5 + $0x200] sm:$0xff] %vm671, %v3410
        %3485 = vst.msk [vmem:[#allocation5 + $0x218] sm:$0xff] %vm671, %v3412
        %3486 = vst.msk [vmem:[#allocation5 + $0x230] sm:$0xff] %vm671, %v3414
        %3487 = vst.msk [vmem:[#allocation5 + $0x248] sm:$0xff] %vm671, %v3416
        %3488 = vst.msk [vmem:[#allocation5 + $0x260] sm:$0xff] %vm671, %v3418
        %3489 = vst.msk [vmem:[#allocation5 + $0x278] sm:$0xff] %vm671, %v3420
        %3490 = vst.msk [vmem:[#allocation5 + $0x290] sm:$0xff] %vm671, %v3422
        %3491 = vst.msk [vmem:[#allocation5 + $0x2a8] sm:$0xff] %vm671, %v3424
        %3492 = vst.msk [vmem:[#allocation5 + $0x2c0] sm:$0xff] %vm671, %v3426
        %3493 = vst.msk [vmem:[#allocation5 + $0x2d8] sm:$0xff] %vm671, %v3428
        %3494 = vst.msk [vmem:[#allocation5 + $0x2f0] sm:$0xff] %vm671, %v3430
        %s3495 = scalar_lea.vmem [#allocation4], 48
        %v3496 = vld [vmem:[%s3495] sm:$0xff]
        %v3497 = vld [vmem:[%s3495 + $0x8] sm:$0xff]
        %v3498 = vld [vmem:[%s3495 + $0x18] sm:$0xff]
        %v3499 = vld [vmem:[%s3495 + $0x20] sm:$0xff]
        %v3500 = vld [vmem:[%s3495 + $0x30] sm:$0xff]
        %v3501 = vld [vmem:[%s3495 + $0x38] sm:$0xff]
        %v3502 = vld [vmem:[%s3495 + $0x48] sm:$0xff]
        %v3503 = vld [vmem:[%s3495 + $0x50] sm:$0xff]
        %v3504 = vld [vmem:[%s3495 + $0x60] sm:$0xff]
        %v3505 = vld [vmem:[%s3495 + $0x68] sm:$0xff]
        %v3506 = vld [vmem:[%s3495 + $0x78] sm:$0xff]
        %v3507 = vld [vmem:[%s3495 + $0x80] sm:$0xff]
        %v3508 = vld [vmem:[%s3495 + $0x90] sm:$0xff]
        %v3509 = vld [vmem:[%s3495 + $0x98] sm:$0xff]
        %v3510 = vld [vmem:[%s3495 + $0xa8] sm:$0xff]
        %v3511 = vld [vmem:[%s3495 + $0xb0] sm:$0xff]
        %v3512 = vld [vmem:[%s3495 + $0xc0] sm:$0xff]
        %v3513 = vld [vmem:[%s3495 + $0xc8] sm:$0xff]
        %v3514 = vld [vmem:[%s3495 + $0xd8] sm:$0xff]
        %v3515 = vld [vmem:[%s3495 + $0xe0] sm:$0xff]
        %v3516 = vld [vmem:[%s3495 + $0xf0] sm:$0xff]
        %v3517 = vld [vmem:[%s3495 + $0xf8] sm:$0xff]
        %v3518 = vld [vmem:[%s3495 + $0x108] sm:$0xff]
        %v3519 = vld [vmem:[%s3495 + $0x110] sm:$0xff]
        %v3520 = vld [vmem:[%s3495 + $0x120] sm:$0xff]
        %v3521 = vld [vmem:[%s3495 + $0x128] sm:$0xff]
        %v3522 = vld [vmem:[%s3495 + $0x138] sm:$0xff]
        %v3523 = vld [vmem:[%s3495 + $0x140] sm:$0xff]
        %v3524 = vld [vmem:[%s3495 + $0x150] sm:$0xff]
        %v3525 = vld [vmem:[%s3495 + $0x158] sm:$0xff]
        %v3526 = vld [vmem:[%s3495 + $0x168] sm:$0xff]
        %v3527 = vld [vmem:[%s3495 + $0x170] sm:$0xff]
        %3560 = vrot.lane.b32.xlu0 %v3496, 64
        %v3561 = vpop.permute.xlu0 %3560
        %3562 = vrot.lane.b32.xlu0 %v3497, 64
        %v3563 = vpop.permute.xlu0 %3562
        %3564 = vrot.lane.b32.xlu0 %v3498, 64
        %v3565 = vpop.permute.xlu0 %3564
        %3566 = vrot.lane.b32.xlu0 %v3499, 64
        %v3567 = vpop.permute.xlu0 %3566
        %3568 = vrot.lane.b32.xlu0 %v3500, 64
        %v3569 = vpop.permute.xlu0 %3568
        %3570 = vrot.lane.b32.xlu0 %v3501, 64
        %v3571 = vpop.permute.xlu0 %3570
        %3572 = vrot.lane.b32.xlu0 %v3502, 64
        %v3573 = vpop.permute.xlu0 %3572
        %3574 = vrot.lane.b32.xlu0 %v3503, 64
        %v3575 = vpop.permute.xlu0 %3574
        %3576 = vrot.lane.b32.xlu0 %v3504, 64
        %v3577 = vpop.permute.xlu0 %3576
        %3578 = vrot.lane.b32.xlu0 %v3505, 64
        %v3579 = vpop.permute.xlu0 %3578
        %3580 = vrot.lane.b32.xlu0 %v3506, 64
        %v3581 = vpop.permute.xlu0 %3580
        %3582 = vrot.lane.b32.xlu0 %v3507, 64
        %v3583 = vpop.permute.xlu0 %3582
        %3584 = vrot.lane.b32.xlu0 %v3508, 64
        %v3585 = vpop.permute.xlu0 %3584
        %3586 = vrot.lane.b32.xlu0 %v3509, 64
        %v3587 = vpop.permute.xlu0 %3586
        %3588 = vrot.lane.b32.xlu0 %v3510, 64
        %v3589 = vpop.permute.xlu0 %3588
        %3590 = vrot.lane.b32.xlu0 %v3511, 64
        %v3591 = vpop.permute.xlu0 %3590
        %3592 = vrot.lane.b32.xlu0 %v3512, 64
        %v3593 = vpop.permute.xlu0 %3592
        %3594 = vrot.lane.b32.xlu0 %v3513, 64
        %v3595 = vpop.permute.xlu0 %3594
        %3596 = vrot.lane.b32.xlu0 %v3514, 64
        %v3597 = vpop.permute.xlu0 %3596
        %3598 = vrot.lane.b32.xlu0 %v3515, 64
        %v3599 = vpop.permute.xlu0 %3598
        %3600 = vrot.lane.b32.xlu0 %v3516, 64
        %v3601 = vpop.permute.xlu0 %3600
        %3602 = vrot.lane.b32.xlu0 %v3517, 64
        %v3603 = vpop.permute.xlu0 %3602
        %3604 = vrot.lane.b32.xlu0 %v3518, 64
        %v3605 = vpop.permute.xlu0 %3604
        %3606 = vrot.lane.b32.xlu0 %v3519, 64
        %v3607 = vpop.permute.xlu0 %3606
        %3608 = vrot.lane.b32.xlu0 %v3520, 64
        %v3609 = vpop.permute.xlu0 %3608
        %3610 = vrot.lane.b32.xlu0 %v3521, 64
        %v3611 = vpop.permute.xlu0 %3610
        %3612 = vrot.lane.b32.xlu0 %v3522, 64
        %v3613 = vpop.permute.xlu0 %3612
        %3614 = vrot.lane.b32.xlu0 %v3523, 64
        %v3615 = vpop.permute.xlu0 %3614
        %3616 = vrot.lane.b32.xlu0 %v3524, 64
        %v3617 = vpop.permute.xlu0 %3616
        %3618 = vrot.lane.b32.xlu0 %v3525, 64
        %v3619 = vpop.permute.xlu0 %3618
        %3620 = vrot.lane.b32.xlu0 %v3526, 64
        %v3621 = vpop.permute.xlu0 %3620
        %3622 = vrot.lane.b32.xlu0 %v3527, 64
        %v3623 = vpop.permute.xlu0 %3622
        %3656 = vst.msk [vmem:[#allocation5 + $0x8] sm:$0xff] %vm864, %v3561
        %3657 = vst.msk [vmem:[#allocation5 + $0x20] sm:$0xff] %vm864, %v3563
        %3658 = vst.msk [vmem:[#allocation5 + $0x38] sm:$0xff] %vm864, %v3565
        %3659 = vst.msk [vmem:[#allocation5 + $0x50] sm:$0xff] %vm864, %v3567
        %3660 = vst.msk [vmem:[#allocation5 + $0x68] sm:$0xff] %vm864, %v3569
        %3661 = vst.msk [vmem:[#allocation5 + $0x80] sm:$0xff] %vm864, %v3571
        %3662 = vst.msk [vmem:[#allocation5 + $0x98] sm:$0xff] %vm864, %v3573
        %3663 = vst.msk [vmem:[#allocation5 + $0xb0] sm:$0xff] %vm864, %v3575
        %3664 = vst.msk [vmem:[#allocation5 + $0xc8] sm:$0xff] %vm864, %v3577
        %3665 = vst.msk [vmem:[#allocation5 + $0xe0] sm:$0xff] %vm864, %v3579
        %3666 = vst.msk [vmem:[#allocation5 + $0xf8] sm:$0xff] %vm864, %v3581
        %3667 = vst.msk [vmem:[#allocation5 + $0x110] sm:$0xff] %vm864, %v3583
        %3668 = vst.msk [vmem:[#allocation5 + $0x128] sm:$0xff] %vm864, %v3585
        %3669 = vst.msk [vmem:[#allocation5 + $0x140] sm:$0xff] %vm864, %v3587
        %3670 = vst.msk [vmem:[#allocation5 + $0x158] sm:$0xff] %vm864, %v3589
        %3671 = vst.msk [vmem:[#allocation5 + $0x170] sm:$0xff] %vm864, %v3591
        %3672 = vst.msk [vmem:[#allocation5 + $0x188] sm:$0xff] %vm864, %v3593
        %3673 = vst.msk [vmem:[#allocation5 + $0x1a0] sm:$0xff] %vm864, %v3595
        %3674 = vst.msk [vmem:[#allocation5 + $0x1b8] sm:$0xff] %vm864, %v3597
        %3675 = vst.msk [vmem:[#allocation5 + $0x1d0] sm:$0xff] %vm864, %v3599
        %3676 = vst.msk [vmem:[#allocation5 + $0x1e8] sm:$0xff] %vm864, %v3601
        %3677 = vst.msk [vmem:[#allocation5 + $0x200] sm:$0xff] %vm864, %v3603
        %3678 = vst.msk [vmem:[#allocation5 + $0x218] sm:$0xff] %vm864, %v3605
        %3679 = vst.msk [vmem:[#allocation5 + $0x230] sm:$0xff] %vm864, %v3607
        %3680 = vst.msk [vmem:[#allocation5 + $0x248] sm:$0xff] %vm864, %v3609
        %3681 = vst.msk [vmem:[#allocation5 + $0x260] sm:$0xff] %vm864, %v3611
        %3682 = vst.msk [vmem:[#allocation5 + $0x278] sm:$0xff] %vm864, %v3613
        %3683 = vst.msk [vmem:[#allocation5 + $0x290] sm:$0xff] %vm864, %v3615
        %3684 = vst.msk [vmem:[#allocation5 + $0x2a8] sm:$0xff] %vm864, %v3617
        %3685 = vst.msk [vmem:[#allocation5 + $0x2c0] sm:$0xff] %vm864, %v3619
        %3686 = vst.msk [vmem:[#allocation5 + $0x2d8] sm:$0xff] %vm864, %v3621
        %3687 = vst.msk [vmem:[#allocation5 + $0x2f0] sm:$0xff] %vm864, %v3623
        %v3688 = vld [vmem:[%s3495 + $0x1] sm:$0xff]
        %v3689 = vld [vmem:[%s3495 + $0x9] sm:$0xff]
        %v3690 = vld [vmem:[%s3495 + $0x19] sm:$0xff]
        %v3691 = vld [vmem:[%s3495 + $0x21] sm:$0xff]
        %v3692 = vld [vmem:[%s3495 + $0x31] sm:$0xff]
        %v3693 = vld [vmem:[%s3495 + $0x39] sm:$0xff]
        %v3694 = vld [vmem:[%s3495 + $0x49] sm:$0xff]
        %v3695 = vld [vmem:[%s3495 + $0x51] sm:$0xff]
        %v3696 = vld [vmem:[%s3495 + $0x61] sm:$0xff]
        %v3697 = vld [vmem:[%s3495 + $0x69] sm:$0xff]
        %v3698 = vld [vmem:[%s3495 + $0x79] sm:$0xff]
        %v3699 = vld [vmem:[%s3495 + $0x81] sm:$0xff]
        %v3700 = vld [vmem:[%s3495 + $0x91] sm:$0xff]
        %v3701 = vld [vmem:[%s3495 + $0x99] sm:$0xff]
        %v3702 = vld [vmem:[%s3495 + $0xa9] sm:$0xff]
        %v3703 = vld [vmem:[%s3495 + $0xb1] sm:$0xff]
        %v3704 = vld [vmem:[%s3495 + $0xc1] sm:$0xff]
        %v3705 = vld [vmem:[%s3495 + $0xc9] sm:$0xff]
        %v3706 = vld [vmem:[%s3495 + $0xd9] sm:$0xff]
        %v3707 = vld [vmem:[%s3495 + $0xe1] sm:$0xff]
        %v3708 = vld [vmem:[%s3495 + $0xf1] sm:$0xff]
        %v3709 = vld [vmem:[%s3495 + $0xf9] sm:$0xff]
        %v3710 = vld [vmem:[%s3495 + $0x109] sm:$0xff]
        %v3711 = vld [vmem:[%s3495 + $0x111] sm:$0xff]
        %v3712 = vld [vmem:[%s3495 + $0x121] sm:$0xff]
        %v3713 = vld [vmem:[%s3495 + $0x129] sm:$0xff]
        %v3714 = vld [vmem:[%s3495 + $0x139] sm:$0xff]
        %v3715 = vld [vmem:[%s3495 + $0x141] sm:$0xff]
        %v3716 = vld [vmem:[%s3495 + $0x151] sm:$0xff]
        %v3717 = vld [vmem:[%s3495 + $0x159] sm:$0xff]
        %v3718 = vld [vmem:[%s3495 + $0x169] sm:$0xff]
        %v3719 = vld [vmem:[%s3495 + $0x171] sm:$0xff]
        %3752 = vrot.lane.b32.xlu0 %v3688, 96
        %v3753 = vpop.permute.xlu0 %3752
        %3754 = vrot.lane.b32.xlu0 %v3689, 96
        %v3755 = vpop.permute.xlu0 %3754
        %3756 = vrot.lane.b32.xlu0 %v3690, 96
        %v3757 = vpop.permute.xlu0 %3756
        %3758 = vrot.lane.b32.xlu0 %v3691, 96
        %v3759 = vpop.permute.xlu0 %3758
        %3760 = vrot.lane.b32.xlu0 %v3692, 96
        %v3761 = vpop.permute.xlu0 %3760
        %3762 = vrot.lane.b32.xlu0 %v3693, 96
        %v3763 = vpop.permute.xlu0 %3762
        %3764 = vrot.lane.b32.xlu0 %v3694, 96
        %v3765 = vpop.permute.xlu0 %3764
        %3766 = vrot.lane.b32.xlu0 %v3695, 96
        %v3767 = vpop.permute.xlu0 %3766
        %3768 = vrot.lane.b32.xlu0 %v3696, 96
        %v3769 = vpop.permute.xlu0 %3768
        %3770 = vrot.lane.b32.xlu0 %v3697, 96
        %v3771 = vpop.permute.xlu0 %3770
        %3772 = vrot.lane.b32.xlu0 %v3698, 96
        %v3773 = vpop.permute.xlu0 %3772
        %3774 = vrot.lane.b32.xlu0 %v3699, 96
        %v3775 = vpop.permute.xlu0 %3774
        %3776 = vrot.lane.b32.xlu0 %v3700, 96
        %v3777 = vpop.permute.xlu0 %3776
        %3778 = vrot.lane.b32.xlu0 %v3701, 96
        %v3779 = vpop.permute.xlu0 %3778
        %3780 = vrot.lane.b32.xlu0 %v3702, 96
        %v3781 = vpop.permute.xlu0 %3780
        %3782 = vrot.lane.b32.xlu0 %v3703, 96
        %v3783 = vpop.permute.xlu0 %3782
        %3784 = vrot.lane.b32.xlu0 %v3704, 96
        %v3785 = vpop.permute.xlu0 %3784
        %3786 = vrot.lane.b32.xlu0 %v3705, 96
        %v3787 = vpop.permute.xlu0 %3786
        %3788 = vrot.lane.b32.xlu0 %v3706, 96
        %v3789 = vpop.permute.xlu0 %3788
        %3790 = vrot.lane.b32.xlu0 %v3707, 96
        %v3791 = vpop.permute.xlu0 %3790
        %3792 = vrot.lane.b32.xlu0 %v3708, 96
        %v3793 = vpop.permute.xlu0 %3792
        %3794 = vrot.lane.b32.xlu0 %v3709, 96
        %v3795 = vpop.permute.xlu0 %3794
        %3796 = vrot.lane.b32.xlu0 %v3710, 96
        %v3797 = vpop.permute.xlu0 %3796
        %3798 = vrot.lane.b32.xlu0 %v3711, 96
        %v3799 = vpop.permute.xlu0 %3798
        %3800 = vrot.lane.b32.xlu0 %v3712, 96
        %v3801 = vpop.permute.xlu0 %3800
        %3802 = vrot.lane.b32.xlu0 %v3713, 96
        %v3803 = vpop.permute.xlu0 %3802
        %3804 = vrot.lane.b32.xlu0 %v3714, 96
        %v3805 = vpop.permute.xlu0 %3804
        %3806 = vrot.lane.b32.xlu0 %v3715, 96
        %v3807 = vpop.permute.xlu0 %3806
        %3808 = vrot.lane.b32.xlu0 %v3716, 96
        %v3809 = vpop.permute.xlu0 %3808
        %3810 = vrot.lane.b32.xlu0 %v3717, 96
        %v3811 = vpop.permute.xlu0 %3810
        %3812 = vrot.lane.b32.xlu0 %v3718, 96
        %v3813 = vpop.permute.xlu0 %3812
        %3814 = vrot.lane.b32.xlu0 %v3719, 96
        %v3815 = vpop.permute.xlu0 %3814
        %3848 = vst.msk [vmem:[#allocation5 + $0x8] sm:$0xff] %vm1057, %v3753
        %3849 = vst.msk [vmem:[#allocation5 + $0x20] sm:$0xff] %vm1057, %v3755
        %3850 = vst.msk [vmem:[#allocation5 + $0x38] sm:$0xff] %vm1057, %v3757
        %3851 = vst.msk [vmem:[#allocation5 + $0x50] sm:$0xff] %vm1057, %v3759
        %3852 = vst.msk [vmem:[#allocation5 + $0x68] sm:$0xff] %vm1057, %v3761
        %3853 = vst.msk [vmem:[#allocation5 + $0x80] sm:$0xff] %vm1057, %v3763
        %3854 = vst.msk [vmem:[#allocation5 + $0x98] sm:$0xff] %vm1057, %v3765
        %3855 = vst.msk [vmem:[#allocation5 + $0xb0] sm:$0xff] %vm1057, %v3767
        %3856 = vst.msk [vmem:[#allocation5 + $0xc8] sm:$0xff] %vm1057, %v3769
        %3857 = vst.msk [vmem:[#allocation5 + $0xe0] sm:$0xff] %vm1057, %v3771
        %3858 = vst.msk [vmem:[#allocation5 + $0xf8] sm:$0xff] %vm1057, %v3773
        %3859 = vst.msk [vmem:[#allocation5 + $0x110] sm:$0xff] %vm1057, %v3775
        %3860 = vst.msk [vmem:[#allocation5 + $0x128] sm:$0xff] %vm1057, %v3777
        %3861 = vst.msk [vmem:[#allocation5 + $0x140] sm:$0xff] %vm1057, %v3779
        %3862 = vst.msk [vmem:[#allocation5 + $0x158] sm:$0xff] %vm1057, %v3781
        %3863 = vst.msk [vmem:[#allocation5 + $0x170] sm:$0xff] %vm1057, %v3783
        %3864 = vst.msk [vmem:[#allocation5 + $0x188] sm:$0xff] %vm1057, %v3785
        %3865 = vst.msk [vmem:[#allocation5 + $0x1a0] sm:$0xff] %vm1057, %v3787
        %3866 = vst.msk [vmem:[#allocation5 + $0x1b8] sm:$0xff] %vm1057, %v3789
        %3867 = vst.msk [vmem:[#allocation5 + $0x1d0] sm:$0xff] %vm1057, %v3791
        %3868 = vst.msk [vmem:[#allocation5 + $0x1e8] sm:$0xff] %vm1057, %v3793
        %3869 = vst.msk [vmem:[#allocation5 + $0x200] sm:$0xff] %vm1057, %v3795
        %3870 = vst.msk [vmem:[#allocation5 + $0x218] sm:$0xff] %vm1057, %v3797
        %3871 = vst.msk [vmem:[#allocation5 + $0x230] sm:$0xff] %vm1057, %v3799
        %3872 = vst.msk [vmem:[#allocation5 + $0x248] sm:$0xff] %vm1057, %v3801
        %3873 = vst.msk [vmem:[#allocation5 + $0x260] sm:$0xff] %vm1057, %v3803
        %3874 = vst.msk [vmem:[#allocation5 + $0x278] sm:$0xff] %vm1057, %v3805
        %3875 = vst.msk [vmem:[#allocation5 + $0x290] sm:$0xff] %vm1057, %v3807
        %3876 = vst.msk [vmem:[#allocation5 + $0x2a8] sm:$0xff] %vm1057, %v3809
        %3877 = vst.msk [vmem:[#allocation5 + $0x2c0] sm:$0xff] %vm1057, %v3811
        %3878 = vst.msk [vmem:[#allocation5 + $0x2d8] sm:$0xff] %vm1057, %v3813
        %3879 = vst.msk [vmem:[#allocation5 + $0x2f0] sm:$0xff] %vm1057, %v3815
        %v3880 = vld [vmem:[%s3495 + $0x2] sm:$0xff]
        %v3881 = vld [vmem:[%s3495 + $0xa] sm:$0xff]
        %v3882 = vld [vmem:[%s3495 + $0x1a] sm:$0xff]
        %v3883 = vld [vmem:[%s3495 + $0x22] sm:$0xff]
        %v3884 = vld [vmem:[%s3495 + $0x32] sm:$0xff]
        %v3885 = vld [vmem:[%s3495 + $0x3a] sm:$0xff]
        %v3886 = vld [vmem:[%s3495 + $0x4a] sm:$0xff]
        %v3887 = vld [vmem:[%s3495 + $0x52] sm:$0xff]
        %v3888 = vld [vmem:[%s3495 + $0x62] sm:$0xff]
        %v3889 = vld [vmem:[%s3495 + $0x6a] sm:$0xff]
        %v3890 = vld [vmem:[%s3495 + $0x7a] sm:$0xff]
        %v3891 = vld [vmem:[%s3495 + $0x82] sm:$0xff]
        %v3892 = vld [vmem:[%s3495 + $0x92] sm:$0xff]
        %v3893 = vld [vmem:[%s3495 + $0x9a] sm:$0xff]
        %v3894 = vld [vmem:[%s3495 + $0xaa] sm:$0xff]
        %v3895 = vld [vmem:[%s3495 + $0xb2] sm:$0xff]
        %v3896 = vld [vmem:[%s3495 + $0xc2] sm:$0xff]
        %v3897 = vld [vmem:[%s3495 + $0xca] sm:$0xff]
        %v3898 = vld [vmem:[%s3495 + $0xda] sm:$0xff]
        %v3899 = vld [vmem:[%s3495 + $0xe2] sm:$0xff]
        %v3900 = vld [vmem:[%s3495 + $0xf2] sm:$0xff]
        %v3901 = vld [vmem:[%s3495 + $0xfa] sm:$0xff]
        %v3902 = vld [vmem:[%s3495 + $0x10a] sm:$0xff]
        %v3903 = vld [vmem:[%s3495 + $0x112] sm:$0xff]
        %v3904 = vld [vmem:[%s3495 + $0x122] sm:$0xff]
        %v3905 = vld [vmem:[%s3495 + $0x12a] sm:$0xff]
        %v3906 = vld [vmem:[%s3495 + $0x13a] sm:$0xff]
        %v3907 = vld [vmem:[%s3495 + $0x142] sm:$0xff]
        %v3908 = vld [vmem:[%s3495 + $0x152] sm:$0xff]
        %v3909 = vld [vmem:[%s3495 + $0x15a] sm:$0xff]
        %v3910 = vld [vmem:[%s3495 + $0x16a] sm:$0xff]
        %v3911 = vld [vmem:[%s3495 + $0x172] sm:$0xff]
        %3912 = vst.msk [vmem:[#allocation5 + $0x10] sm:$0xff] %vm326, %v3880
        %3913 = vst.msk [vmem:[#allocation5 + $0x28] sm:$0xff] %vm326, %v3881
        %3914 = vst.msk [vmem:[#allocation5 + $0x40] sm:$0xff] %vm326, %v3882
        %3915 = vst.msk [vmem:[#allocation5 + $0x58] sm:$0xff] %vm326, %v3883
        %3916 = vst.msk [vmem:[#allocation5 + $0x70] sm:$0xff] %vm326, %v3884
        %3917 = vst.msk [vmem:[#allocation5 + $0x88] sm:$0xff] %vm326, %v3885
        %3918 = vst.msk [vmem:[#allocation5 + $0xa0] sm:$0xff] %vm326, %v3886
        %3919 = vst.msk [vmem:[#allocation5 + $0xb8] sm:$0xff] %vm326, %v3887
        %3920 = vst.msk [vmem:[#allocation5 + $0xd0] sm:$0xff] %vm326, %v3888
        %3921 = vst.msk [vmem:[#allocation5 + $0xe8] sm:$0xff] %vm326, %v3889
        %3922 = vst.msk [vmem:[#allocation5 + $0x100] sm:$0xff] %vm326, %v3890
        %3923 = vst.msk [vmem:[#allocation5 + $0x118] sm:$0xff] %vm326, %v3891
        %3924 = vst.msk [vmem:[#allocation5 + $0x130] sm:$0xff] %vm326, %v3892
        %3925 = vst.msk [vmem:[#allocation5 + $0x148] sm:$0xff] %vm326, %v3893
        %3926 = vst.msk [vmem:[#allocation5 + $0x160] sm:$0xff] %vm326, %v3894
        %3927 = vst.msk [vmem:[#allocation5 + $0x178] sm:$0xff] %vm326, %v3895
        %3928 = vst.msk [vmem:[#allocation5 + $0x190] sm:$0xff] %vm326, %v3896
        %3929 = vst.msk [vmem:[#allocation5 + $0x1a8] sm:$0xff] %vm326, %v3897
        %3930 = vst.msk [vmem:[#allocation5 + $0x1c0] sm:$0xff] %vm326, %v3898
        %3931 = vst.msk [vmem:[#allocation5 + $0x1d8] sm:$0xff] %vm326, %v3899
        %3932 = vst.msk [vmem:[#allocation5 + $0x1f0] sm:$0xff] %vm326, %v3900
        %3933 = vst.msk [vmem:[#allocation5 + $0x208] sm:$0xff] %vm326, %v3901
        %3934 = vst.msk [vmem:[#allocation5 + $0x220] sm:$0xff] %vm326, %v3902
        %3935 = vst.msk [vmem:[#allocation5 + $0x238] sm:$0xff] %vm326, %v3903
        %3936 = vst.msk [vmem:[#allocation5 + $0x250] sm:$0xff] %vm326, %v3904
        %3937 = vst.msk [vmem:[#allocation5 + $0x268] sm:$0xff] %vm326, %v3905
        %3938 = vst.msk [vmem:[#allocation5 + $0x280] sm:$0xff] %vm326, %v3906
        %3939 = vst.msk [vmem:[#allocation5 + $0x298] sm:$0xff] %vm326, %v3907
        %3940 = vst.msk [vmem:[#allocation5 + $0x2b0] sm:$0xff] %vm326, %v3908
        %3941 = vst.msk [vmem:[#allocation5 + $0x2c8] sm:$0xff] %vm326, %v3909
        %3942 = vst.msk [vmem:[#allocation5 + $0x2e0] sm:$0xff] %vm326, %v3910
        %3943 = vst.msk [vmem:[#allocation5 + $0x2f8] sm:$0xff] %vm326, %v3911
        %v3944 = vld [vmem:[#allocation5] sm:$0xff]
        %v3945 = vld [vmem:[#allocation5 + $0x8] sm:$0xff]
        %v3946 = vld [vmem:[#allocation5 + $0x10] sm:$0xff]
        %v3947 = vld [vmem:[#allocation5 + $0x18] sm:$0xff]
        %v3948 = vld [vmem:[#allocation5 + $0x20] sm:$0xff]
        %v3949 = vld [vmem:[#allocation5 + $0x28] sm:$0xff]
        %v3950 = vld [vmem:[#allocation5 + $0x30] sm:$0xff]
        %v3951 = vld [vmem:[#allocation5 + $0x38] sm:$0xff]
        %v3952 = vld [vmem:[#allocation5 + $0x40] sm:$0xff]
        %v3953 = vld [vmem:[#allocation5 + $0x48] sm:$0xff]
        %v3954 = vld [vmem:[#allocation5 + $0x50] sm:$0xff]
        %v3955 = vld [vmem:[#allocation5 + $0x58] sm:$0xff]
        %v3956 = vld [vmem:[#allocation5 + $0x60] sm:$0xff]
        %v3957 = vld [vmem:[#allocation5 + $0x68] sm:$0xff]
        %v3958 = vld [vmem:[#allocation5 + $0x70] sm:$0xff]
        %v3959 = vld [vmem:[#allocation5 + $0x78] sm:$0xff]
        %v3960 = vld [vmem:[#allocation5 + $0x80] sm:$0xff]
        %v3961 = vld [vmem:[#allocation5 + $0x88] sm:$0xff]
        %v3962 = vld [vmem:[#allocation5 + $0x90] sm:$0xff]
        %v3963 = vld [vmem:[#allocation5 + $0x98] sm:$0xff]
        %v3964 = vld [vmem:[#allocation5 + $0xa0] sm:$0xff]
        %v3965 = vld [vmem:[#allocation5 + $0xa8] sm:$0xff]
        %v3966 = vld [vmem:[#allocation5 + $0xb0] sm:$0xff]
        %v3967 = vld [vmem:[#allocation5 + $0xb8] sm:$0xff]
        %v3968 = vld [vmem:[#allocation5 + $0xc0] sm:$0xff]
        %v3969 = vld [vmem:[#allocation5 + $0xc8] sm:$0xff]
        %v3970 = vld [vmem:[#allocation5 + $0xd0] sm:$0xff]
        %v3971 = vld [vmem:[#allocation5 + $0xd8] sm:$0xff]
        %v3972 = vld [vmem:[#allocation5 + $0xe0] sm:$0xff]
        %v3973 = vld [vmem:[#allocation5 + $0xe8] sm:$0xff]
        %v3974 = vld [vmem:[#allocation5 + $0xf0] sm:$0xff]
        %v3975 = vld [vmem:[#allocation5 + $0xf8] sm:$0xff]
        %v3976 = vld [vmem:[#allocation5 + $0x100] sm:$0xff]
        %v3977 = vld [vmem:[#allocation5 + $0x108] sm:$0xff]
        %v3978 = vld [vmem:[#allocation5 + $0x110] sm:$0xff]
        %v3979 = vld [vmem:[#allocation5 + $0x118] sm:$0xff]
        %v3980 = vld [vmem:[#allocation5 + $0x120] sm:$0xff]
        %v3981 = vld [vmem:[#allocation5 + $0x128] sm:$0xff]
        %v3982 = vld [vmem:[#allocation5 + $0x130] sm:$0xff]
        %v3983 = vld [vmem:[#allocation5 + $0x138] sm:$0xff]
        %v3984 = vld [vmem:[#allocation5 + $0x140] sm:$0xff]
        %v3985 = vld [vmem:[#allocation5 + $0x148] sm:$0xff]
        %v3986 = vld [vmem:[#allocation5 + $0x150] sm:$0xff]
        %v3987 = vld [vmem:[#allocation5 + $0x158] sm:$0xff]
        %v3988 = vld [vmem:[#allocation5 + $0x160] sm:$0xff]
        %v3989 = vld [vmem:[#allocation5 + $0x168] sm:$0xff]
        %v3990 = vld [vmem:[#allocation5 + $0x170] sm:$0xff]
        %v3991 = vld [vmem:[#allocation5 + $0x178] sm:$0xff]
        %v3992 = vld [vmem:[#allocation5 + $0x180] sm:$0xff]
        %v3993 = vld [vmem:[#allocation5 + $0x188] sm:$0xff]
        %v3994 = vld [vmem:[#allocation5 + $0x190] sm:$0xff]
        %v3995 = vld [vmem:[#allocation5 + $0x198] sm:$0xff]
        %v3996 = vld [vmem:[#allocation5 + $0x1a0] sm:$0xff]
        %v3997 = vld [vmem:[#allocation5 + $0x1a8] sm:$0xff]
        %v3998 = vld [vmem:[#allocation5 + $0x1b0] sm:$0xff]
        %v3999 = vld [vmem:[#allocation5 + $0x1b8] sm:$0xff]
        %v4000 = vld [vmem:[#allocation5 + $0x1c0] sm:$0xff]
        %v4001 = vld [vmem:[#allocation5 + $0x1c8] sm:$0xff]
        %v4002 = vld [vmem:[#allocation5 + $0x1d0] sm:$0xff]
        %v4003 = vld [vmem:[#allocation5 + $0x1d8] sm:$0xff]
        %v4004 = vld [vmem:[#allocation5 + $0x1e0] sm:$0xff]
        %v4005 = vld [vmem:[#allocation5 + $0x1e8] sm:$0xff]
        %v4006 = vld [vmem:[#allocation5 + $0x1f0] sm:$0xff]
        %v4007 = vld [vmem:[#allocation5 + $0x1f8] sm:$0xff]
        %v4008 = vld [vmem:[#allocation5 + $0x200] sm:$0xff]
        %v4009 = vld [vmem:[#allocation5 + $0x208] sm:$0xff]
        %v4010 = vld [vmem:[#allocation5 + $0x210] sm:$0xff]
        %v4011 = vld [vmem:[#allocation5 + $0x218] sm:$0xff]
        %v4012 = vld [vmem:[#allocation5 + $0x220] sm:$0xff]
        %v4013 = vld [vmem:[#allocation5 + $0x228] sm:$0xff]
        %v4014 = vld [vmem:[#allocation5 + $0x230] sm:$0xff]
        %v4015 = vld [vmem:[#allocation5 + $0x238] sm:$0xff]
        %v4016 = vld [vmem:[#allocation5 + $0x240] sm:$0xff]
        %v4017 = vld [vmem:[#allocation5 + $0x248] sm:$0xff]
        %v4018 = vld [vmem:[#allocation5 + $0x250] sm:$0xff]
        %v4019 = vld [vmem:[#allocation5 + $0x258] sm:$0xff]
        %v4020 = vld [vmem:[#allocation5 + $0x260] sm:$0xff]
        %v4021 = vld [vmem:[#allocation5 + $0x268] sm:$0xff]
        %v4022 = vld [vmem:[#allocation5 + $0x270] sm:$0xff]
        %v4023 = vld [vmem:[#allocation5 + $0x278] sm:$0xff]
        %v4024 = vld [vmem:[#allocation5 + $0x280] sm:$0xff]
        %v4025 = vld [vmem:[#allocation5 + $0x288] sm:$0xff]
        %v4026 = vld [vmem:[#allocation5 + $0x290] sm:$0xff]
        %v4027 = vld [vmem:[#allocation5 + $0x298] sm:$0xff]
        %v4028 = vld [vmem:[#allocation5 + $0x2a0] sm:$0xff]
        %v4029 = vld [vmem:[#allocation5 + $0x2a8] sm:$0xff]
        %v4030 = vld [vmem:[#allocation5 + $0x2b0] sm:$0xff]
        %v4031 = vld [vmem:[#allocation5 + $0x2b8] sm:$0xff]
        %v4032 = vld [vmem:[#allocation5 + $0x2c0] sm:$0xff]
        %v4033 = vld [vmem:[#allocation5 + $0x2c8] sm:$0xff]
        %v4034 = vld [vmem:[#allocation5 + $0x2d0] sm:$0xff]
        %v4035 = vld [vmem:[#allocation5 + $0x2d8] sm:$0xff]
        %v4036 = vld [vmem:[#allocation5 + $0x2e0] sm:$0xff]
        %v4037 = vld [vmem:[#allocation5 + $0x2e8] sm:$0xff]
        %v4038 = vld [vmem:[#allocation5 + $0x2f0] sm:$0xff]
        %v4039 = vld [vmem:[#allocation5 + $0x2f8] sm:$0xff]
        %v4040 = vld [vmem:[#allocation10] sm:$0xff]
        %v4041 = vld [vmem:[#allocation10 + $0x8] sm:$0xff]
        %v4042 = vld [vmem:[#allocation10 + $0x10] sm:$0xff]
        %v4043 = vld [vmem:[#allocation10 + $0x18] sm:$0xff]
        %v4044 = vld [vmem:[#allocation10 + $0x20] sm:$0xff]
        %v4045 = vld [vmem:[#allocation10 + $0x28] sm:$0xff]
        %v4046 = vld [vmem:[#allocation10 + $0x30] sm:$0xff]
        %v4047 = vld [vmem:[#allocation10 + $0x38] sm:$0xff]
        %v4048 = vld [vmem:[#allocation10 + $0x40] sm:$0xff]
        %v4049 = vld [vmem:[#allocation10 + $0x48] sm:$0xff]
        %v4050 = vld [vmem:[#allocation10 + $0x50] sm:$0xff]
        %v4051 = vld [vmem:[#allocation10 + $0x58] sm:$0xff]
        %v4052 = vld [vmem:[#allocation10 + $0x60] sm:$0xff]
        %v4053 = vld [vmem:[#allocation10 + $0x68] sm:$0xff]
        %v4054 = vld [vmem:[#allocation10 + $0x70] sm:$0xff]
        %v4055 = vld [vmem:[#allocation10 + $0x78] sm:$0xff]
        %v4056 = vld [vmem:[#allocation10 + $0x80] sm:$0xff]
        %v4057 = vld [vmem:[#allocation10 + $0x88] sm:$0xff]
        %v4058 = vld [vmem:[#allocation10 + $0x90] sm:$0xff]
        %v4059 = vld [vmem:[#allocation10 + $0x98] sm:$0xff]
        %v4060 = vld [vmem:[#allocation10 + $0xa0] sm:$0xff]
        %v4061 = vld [vmem:[#allocation10 + $0xa8] sm:$0xff]
        %v4062 = vld [vmem:[#allocation10 + $0xb0] sm:$0xff]
        %v4063 = vld [vmem:[#allocation10 + $0xb8] sm:$0xff]
        %v4064 = vld [vmem:[#allocation10 + $0xc0] sm:$0xff]
        %v4065 = vld [vmem:[#allocation10 + $0xc8] sm:$0xff]
        %v4066 = vld [vmem:[#allocation10 + $0xd0] sm:$0xff]
        %v4067 = vld [vmem:[#allocation10 + $0xd8] sm:$0xff]
        %v4068 = vld [vmem:[#allocation10 + $0xe0] sm:$0xff]
        %v4069 = vld [vmem:[#allocation10 + $0xe8] sm:$0xff]
        %v4070 = vld [vmem:[#allocation10 + $0xf0] sm:$0xff]
        %v4071 = vld [vmem:[#allocation10 + $0xf8] sm:$0xff]
        %v4072 = vld [vmem:[#allocation10 + $0x100] sm:$0xff]
        %v4073 = vld [vmem:[#allocation10 + $0x108] sm:$0xff]
        %v4074 = vld [vmem:[#allocation10 + $0x110] sm:$0xff]
        %v4075 = vld [vmem:[#allocation10 + $0x118] sm:$0xff]
        %v4076 = vld [vmem:[#allocation10 + $0x120] sm:$0xff]
        %v4077 = vld [vmem:[#allocation10 + $0x128] sm:$0xff]
        %v4078 = vld [vmem:[#allocation10 + $0x130] sm:$0xff]
        %v4079 = vld [vmem:[#allocation10 + $0x138] sm:$0xff]
        %v4080 = vld [vmem:[#allocation10 + $0x140] sm:$0xff]
        %v4081 = vld [vmem:[#allocation10 + $0x148] sm:$0xff]
        %v4082 = vld [vmem:[#allocation10 + $0x150] sm:$0xff]
        %v4083 = vld [vmem:[#allocation10 + $0x158] sm:$0xff]
        %v4084 = vld [vmem:[#allocation10 + $0x160] sm:$0xff]
        %v4085 = vld [vmem:[#allocation10 + $0x168] sm:$0xff]
        %v4086 = vld [vmem:[#allocation10 + $0x170] sm:$0xff]
        %v4087 = vld [vmem:[#allocation10 + $0x178] sm:$0xff]
        %v4088 = vld [vmem:[#allocation10 + $0x180] sm:$0xff]
        %v4089 = vld [vmem:[#allocation10 + $0x188] sm:$0xff]
        %v4090 = vld [vmem:[#allocation10 + $0x190] sm:$0xff]
        %v4091 = vld [vmem:[#allocation10 + $0x198] sm:$0xff]
        %v4092 = vld [vmem:[#allocation10 + $0x1a0] sm:$0xff]
        %v4093 = vld [vmem:[#allocation10 + $0x1a8] sm:$0xff]
        %v4094 = vld [vmem:[#allocation10 + $0x1b0] sm:$0xff]
        %v4095 = vld [vmem:[#allocation10 + $0x1b8] sm:$0xff]
        %v4096 = vld [vmem:[#allocation10 + $0x1c0] sm:$0xff]
        %v4097 = vld [vmem:[#allocation10 + $0x1c8] sm:$0xff]
        %v4098 = vld [vmem:[#allocation10 + $0x1d0] sm:$0xff]
        %v4099 = vld [vmem:[#allocation10 + $0x1d8] sm:$0xff]
        %v4100 = vld [vmem:[#allocation10 + $0x1e0] sm:$0xff]
        %v4101 = vld [vmem:[#allocation10 + $0x1e8] sm:$0xff]
        %v4102 = vld [vmem:[#allocation10 + $0x1f0] sm:$0xff]
        %v4103 = vld [vmem:[#allocation10 + $0x1f8] sm:$0xff]
        %v4104 = vld [vmem:[#allocation10 + $0x200] sm:$0xff]
        %v4105 = vld [vmem:[#allocation10 + $0x208] sm:$0xff]
        %v4106 = vld [vmem:[#allocation10 + $0x210] sm:$0xff]
        %v4107 = vld [vmem:[#allocation10 + $0x218] sm:$0xff]
        %v4108 = vld [vmem:[#allocation10 + $0x220] sm:$0xff]
        %v4109 = vld [vmem:[#allocation10 + $0x228] sm:$0xff]
        %v4110 = vld [vmem:[#allocation10 + $0x230] sm:$0xff]
        %v4111 = vld [vmem:[#allocation10 + $0x238] sm:$0xff]
        %v4112 = vld [vmem:[%s4] sm:$0x3]
        %v4114 = vlaneseq
        %v4115 = vshrl.u32 %v4114, 7
        %v4116 = vsub.s32 0, %v4115
        %v4117 = vrot.slane %v4112, %v4116
        %v4118 = vlaneseq
        %v4119 = vshrl.u32 %v4118, 7
        %v4120 = vsub.s32 1, %v4119
        %v4121 = vrot.slane %v4112, %v4120
        %v4125 = vsel %vm326, %v3946, 0
        %v4128 = vsel %vm326, %v3949, 0
        %v4131 = vsel %vm326, %v3952, 0
        %v4134 = vsel %vm326, %v3955, 0
        %v4137 = vsel %vm326, %v3958, 0
        %v4140 = vsel %vm326, %v3961, 0
        %v4143 = vsel %vm326, %v3964, 0
        %v4146 = vsel %vm326, %v3967, 0
        %v4149 = vsel %vm326, %v3970, 0
        %v4152 = vsel %vm326, %v3973, 0
        %v4155 = vsel %vm326, %v3976, 0
        %v4158 = vsel %vm326, %v3979, 0
        %v4161 = vsel %vm326, %v3982, 0
        %v4164 = vsel %vm326, %v3985, 0
        %v4167 = vsel %vm326, %v3988, 0
        %v4170 = vsel %vm326, %v3991, 0
        %v4173 = vsel %vm326, %v3994, 0
        %v4176 = vsel %vm326, %v3997, 0
        %v4179 = vsel %vm326, %v4000, 0
        %v4182 = vsel %vm326, %v4003, 0
        %v4185 = vsel %vm326, %v4006, 0
        %v4188 = vsel %vm326, %v4009, 0
        %v4191 = vsel %vm326, %v4012, 0
        %v4194 = vsel %vm326, %v4015, 0
        %v4197 = vsel %vm326, %v4018, 0
        %v4200 = vsel %vm326, %v4021, 0
        %v4203 = vsel %vm326, %v4024, 0
        %v4206 = vsel %vm326, %v4027, 0
        %v4209 = vsel %vm326, %v4030, 0
        %v4212 = vsel %vm326, %v4033, 0
        %v4215 = vsel %vm326, %v4036, 0
        %v4218 = vsel %vm326, %v4039, 0
        %4220 = vmatprep.subr.mxu0 %v4041
        %4221 = vmatpush1.msra.mxu0 %v4040
        %4222 = vmatprep.subr.mxu0 %v4043
        %4223 = vmatpush1.msra.mxu0 %v4042
        %4224 = vmatprep.subr.mxu0 %v4045
        %4225 = vmatpush1.msra.mxu0 %v4044
        %4226 = vmatprep.subr.mxu0 %v4047
        %4227 = vmatpush1.msra.mxu0 %v4046
        %4228 = vmatprep.subr.mxu0 %v4049
        %4229 = vmatpush1.msra.mxu0 %v4048
        %4230 = vmatprep.subr.mxu0 %v4051
        %4231 = vmatpush1.msra.mxu0 %v4050
        %4232 = vmatprep.subr.mxu0 %v4053
        %4233 = vmatpush1.msra.mxu0 %v4052
        %4234 = vmatprep.subr.mxu0 %v4055
        %4235 = vmatpush1.msra.mxu0 %v4054
        %4236 = vmatprep.subr.mxu0 %v4057
        %4237 = vmatpush1.msra.mxu0 %v4056
        %4238 = vmatprep.subr.mxu0 %v4059
        %4239 = vmatpush1.msra.mxu0 %v4058
        %4240 = vmatprep.subr.mxu0 %v4061
        %4241 = vmatpush1.msra.mxu0 %v4060
        %4242 = vmatprep.subr.mxu0 %v4063
        %4243 = vmatpush1.msra.mxu0 %v4062
        %4244 = vmatprep.subr.mxu0 %v4065
        %4245 = vmatpush1.msra.mxu0 %v4064
        %4246 = vmatprep.subr.mxu0 %v4067
        %4247 = vmatpush1.msra.mxu0 %v4066
        %4248 = vmatprep.subr.mxu0 %v4069
        %4249 = vmatpush1.msra.mxu0 %v4068
        %4250 = vmatprep.subr.mxu0 %v4071
        %4251 = vmatpush1.msra.mxu0 %v4070
        %4252 = vmatprep.subr.mxu0 %v4073
        %4253 = vmatpush1.msra.mxu0 %v4072
        %4254 = vmatprep.subr.mxu0 %v4075
        %4255 = vmatpush1.msra.mxu0 %v4074
        %4256 = vmatprep.subr.mxu0 %v4077
        %4257 = vmatpush1.msra.mxu0 %v4076
        %4258 = vmatprep.subr.mxu0 %v4079
        %4259 = vmatpush1.msra.mxu0 %v4078
        %4260 = vmatprep.subr.mxu0 %v4081
        %4261 = vmatpush1.msra.mxu0 %v4080
        %4262 = vmatprep.subr.mxu0 %v4083
        %4263 = vmatpush1.msra.mxu0 %v4082
        %4264 = vmatprep.subr.mxu0 %v4085
        %4265 = vmatpush1.msra.mxu0 %v4084
        %4266 = vmatprep.subr.mxu0 %v4087
        %4267 = vmatpush1.msra.mxu0 %v4086
        %4268 = vmatprep.subr.mxu0 %v4089
        %4269 = vmatpush1.msra.mxu0 %v4088
        %4270 = vmatprep.subr.mxu0 %v4091
        %4271 = vmatpush1.msra.mxu0 %v4090
        %4272 = vmatprep.subr.mxu0 %v4093
        %4273 = vmatpush1.msra.mxu0 %v4092
        %4274 = vmatprep.subr.mxu0 %v4095
        %4275 = vmatpush1.msra.mxu0 %v4094
        %4276 = vmatprep.subr.mxu0 %v4097
        %4277 = vmatpush1.msra.mxu0 %v4096
        %4278 = vmatprep.subr.mxu0 %v4099
        %4279 = vmatpush1.msra.mxu0 %v4098
        %4280 = vmatprep.subr.mxu0 %v4101
        %4281 = vmatpush1.msra.mxu0 %v4100
        %4282 = vmatprep.subr.mxu0 %v4103
        %4283 = vmatpush1.msra.mxu0 %v4102
        %4284 = vmatprep.mubr.f32.mxu0 %v3945
        %4285 = vmatmul.mubr.f32.gmra.mrb[0].mxu0 %v3944
        %v4286 = vpop.f32.mrb[0].mxu0
        %v4287 = vadd.f32 %v4117, %v4286
        %v4288 = vpop.f32.mrb[0].mxu0
        %v4289 = vadd.f32 %v4121, %v4288
        %4290 = vmatprep.mubr.f32.mxu0 %v3948
        %4291 = vmatmul.mubr.f32.gmra.mrb[0].mxu0 %v3947
        %v4292 = vpop.f32.mrb[0].mxu0
        %v4293 = vadd.f32 %v4117, %v4292
        %v4294 = vpop.f32.mrb[0].mxu0
        %v4295 = vadd.f32 %v4121, %v4294
        %4296 = vmatprep.mubr.f32.mxu0 %v3951
        %4297 = vmatmul.mubr.f32.gmra.mrb[0].mxu0 %v3950
        %v4298 = vpop.f32.mrb[0].mxu0
        %v4299 = vadd.f32 %v4117, %v4298
        %v4300 = vpop.f32.mrb[0].mxu0
        %v4301 = vadd.f32 %v4121, %v4300
        %4302 = vmatprep.mubr.f32.mxu0 %v3954
        %4303 = vmatmul.mubr.f32.gmra.mrb[0].mxu0 %v3953
        %v4304 = vpop.f32.mrb[0].mxu0
        %v4305 = vadd.f32 %v4117, %v4304
        %v4306 = vpop.f32.mrb[0].mxu0
        %v4307 = vadd.f32 %v4121, %v4306
        %4308 = vmatprep.mubr.f32.mxu0 %v3957
        %4309 = vmatmul.mubr.f32.gmra.mrb[0].mxu0 %v3956
        %v4310 = vpop.f32.mrb[0].mxu0
        %v4311 = vadd.f32 %v4117, %v4310
        %v4312 = vpop.f32.mrb[0].mxu0
        %v4313 = vadd.f32 %v4121, %v4312
        %4314 = vmatprep.mubr.f32.mxu0 %v3960
        %4315 = vmatmul.mubr.f32.gmra.mrb[0].mxu0 %v3959
        %v4316 = vpop.f32.mrb[0].mxu0
        %v4317 = vadd.f32 %v4117, %v4316
        %v4318 = vpop.f32.mrb[0].mxu0
        %v4319 = vadd.f32 %v4121, %v4318
        %4320 = vmatprep.mubr.f32.mxu0 %v3963
        %4321 = vmatmul.mubr.f32.gmra.mrb[0].mxu0 %v3962
        %v4322 = vpop.f32.mrb[0].mxu0
        %v4323 = vadd.f32 %v4117, %v4322
        %v4324 = vpop.f32.mrb[0].mxu0
        %v4325 = vadd.f32 %v4121, %v4324
        %4326 = vmatprep.mubr.f32.mxu0 %v3966
        %4327 = vmatmul.mubr.f32.gmra.mrb[0].mxu0 %v3965
        %v4328 = vpop.f32.mrb[0].mxu0
        %v4329 = vadd.f32 %v4117, %v4328
        %v4330 = vpop.f32.mrb[0].mxu0
        %v4331 = vadd.f32 %v4121, %v4330
        %4332 = vmatprep.mubr.f32.mxu0 %v3969
        %4333 = vmatmul.mubr.f32.gmra.mrb[0].mxu0 %v3968
        %v4334 = vpop.f32.mrb[0].mxu0
        %v4335 = vadd.f32 %v4117, %v4334
        %v4336 = vpop.f32.mrb[0].mxu0
        %v4337 = vadd.f32 %v4121, %v4336
        %4338 = vmatprep.mubr.f32.mxu0 %v3972
        %4339 = vmatmul.mubr.f32.gmra.mrb[0].mxu0 %v3971
        %v4340 = vpop.f32.mrb[0].mxu0
        %v4341 = vadd.f32 %v4117, %v4340
        %v4342 = vpop.f32.mrb[0].mxu0
        %v4343 = vadd.f32 %v4121, %v4342
        %4344 = vmatprep.mubr.f32.mxu0 %v3975
        %4345 = vmatmul.mubr.f32.gmra.mrb[0].mxu0 %v3974
        %v4346 = vpop.f32.mrb[0].mxu0
        %v4347 = vadd.f32 %v4117, %v4346
        %v4348 = vpop.f32.mrb[0].mxu0
        %v4349 = vadd.f32 %v4121, %v4348
        %4350 = vmatprep.mubr.f32.mxu0 %v3978
        %4351 = vmatmul.mubr.f32.gmra.mrb[0].mxu0 %v3977
        %v4352 = vpop.f32.mrb[0].mxu0
        %v4353 = vadd.f32 %v4117, %v4352
        %v4354 = vpop.f32.mrb[0].mxu0
        %v4355 = vadd.f32 %v4121, %v4354
        %4356 = vmatprep.mubr.f32.mxu0 %v3981
        %4357 = vmatmul.mubr.f32.gmra.mrb[0].mxu0 %v3980
        %v4358 = vpop.f32.mrb[0].mxu0
        %v4359 = vadd.f32 %v4117, %v4358
        %v4360 = vpop.f32.mrb[0].mxu0
        %v4361 = vadd.f32 %v4121, %v4360
        %4362 = vmatprep.mubr.f32.mxu0 %v3984
        %4363 = vmatmul.mubr.f32.gmra.mrb[0].mxu0 %v3983
        %v4364 = vpop.f32.mrb[0].mxu0
        %v4365 = vadd.f32 %v4117, %v4364
        %v4366 = vpop.f32.mrb[0].mxu0
        %v4367 = vadd.f32 %v4121, %v4366
        %4368 = vmatprep.mubr.f32.mxu0 %v3987
        %4369 = vmatmul.mubr.f32.gmra.mrb[0].mxu0 %v3986
        %v4370 = vpop.f32.mrb[0].mxu0
        %v4371 = vadd.f32 %v4117, %v4370
        %v4372 = vpop.f32.mrb[0].mxu0
        %v4373 = vadd.f32 %v4121, %v4372
        %4374 = vmatprep.mubr.f32.mxu0 %v3990
        %4375 = vmatmul.mubr.f32.gmra.mrb[0].mxu0 %v3989
        %v4376 = vpop.f32.mrb[0].mxu0
        %v4377 = vadd.f32 %v4117, %v4376
        %v4378 = vpop.f32.mrb[0].mxu0
        %v4379 = vadd.f32 %v4121, %v4378
        %4380 = vmatprep.mubr.f32.mxu0 %v3993
        %4381 = vmatmul.mubr.f32.gmra.mrb[0].mxu0 %v3992
        %v4382 = vpop.f32.mrb[0].mxu0
        %v4383 = vadd.f32 %v4117, %v4382
        %v4384 = vpop.f32.mrb[0].mxu0
        %v4385 = vadd.f32 %v4121, %v4384
        %4386 = vmatprep.mubr.f32.mxu0 %v3996
        %4387 = vmatmul.mubr.f32.gmra.mrb[0].mxu0 %v3995
        %v4388 = vpop.f32.mrb[0].mxu0
        %v4389 = vadd.f32 %v4117, %v4388
        %v4390 = vpop.f32.mrb[0].mxu0
        %v4391 = vadd.f32 %v4121, %v4390
        %4392 = vmatprep.mubr.f32.mxu0 %v3999
        %4393 = vmatmul.mubr.f32.gmra.mrb[0].mxu0 %v3998
        %v4394 = vpop.f32.mrb[0].mxu0
        %v4395 = vadd.f32 %v4117, %v4394
        %v4396 = vpop.f32.mrb[0].mxu0
        %v4397 = vadd.f32 %v4121, %v4396
        %4398 = vmatprep.mubr.f32.mxu0 %v4002
        %4399 = vmatmul.mubr.f32.gmra.mrb[0].mxu0 %v4001
        %v4400 = vpop.f32.mrb[0].mxu0
        %v4401 = vadd.f32 %v4117, %v4400
        %v4402 = vpop.f32.mrb[0].mxu0
        %v4403 = vadd.f32 %v4121, %v4402
        %4404 = vmatprep.mubr.f32.mxu0 %v4005
        %4405 = vmatmul.mubr.f32.gmra.mrb[0].mxu0 %v4004
        %v4406 = vpop.f32.mrb[0].mxu0
        %v4407 = vadd.f32 %v4117, %v4406
        %v4408 = vpop.f32.mrb[0].mxu0
        %v4409 = vadd.f32 %v4121, %v4408
        %4410 = vmatprep.mubr.f32.mxu0 %v4008
        %4411 = vmatmul.mubr.f32.gmra.mrb[0].mxu0 %v4007
        %v4412 = vpop.f32.mrb[0].mxu0
        %v4413 = vadd.f32 %v4117, %v4412
        %v4414 = vpop.f32.mrb[0].mxu0
        %v4415 = vadd.f32 %v4121, %v4414
        %4416 = vmatprep.mubr.f32.mxu0 %v4011
        %4417 = vmatmul.mubr.f32.gmra.mrb[0].mxu0 %v4010
        %v4418 = vpop.f32.mrb[0].mxu0
        %v4419 = vadd.f32 %v4117, %v4418
        %v4420 = vpop.f32.mrb[0].mxu0
        %v4421 = vadd.f32 %v4121, %v4420
        %4422 = vmatprep.mubr.f32.mxu0 %v4014
        %4423 = vmatmul.mubr.f32.gmra.mrb[0].mxu0 %v4013
        %v4424 = vpop.f32.mrb[0].mxu0
        %v4425 = vadd.f32 %v4117, %v4424
        %v4426 = vpop.f32.mrb[0].mxu0
        %v4427 = vadd.f32 %v4121, %v4426
        %4428 = vmatprep.mubr.f32.mxu0 %v4017
        %4429 = vmatmul.mubr.f32.gmra.mrb[0].mxu0 %v4016
        %v4430 = vpop.f32.mrb[0].mxu0
        %v4431 = vadd.f32 %v4117, %v4430
        %v4432 = vpop.f32.mrb[0].mxu0
        %v4433 = vadd.f32 %v4121, %v4432
        %4434 = vmatprep.mubr.f32.mxu0 %v4020
        %4435 = vmatmul.mubr.f32.gmra.mrb[0].mxu0 %v4019
        %v4436 = vpop.f32.mrb[0].mxu0
        %v4437 = vadd.f32 %v4117, %v4436
        %v4438 = vpop.f32.mrb[0].mxu0
        %v4439 = vadd.f32 %v4121, %v4438
        %4440 = vmatprep.mubr.f32.mxu0 %v4023
        %4441 = vmatmul.mubr.f32.gmra.mrb[0].mxu0 %v4022
        %v4442 = vpop.f32.mrb[0].mxu0
        %v4443 = vadd.f32 %v4117, %v4442
        %v4444 = vpop.f32.mrb[0].mxu0
        %v4445 = vadd.f32 %v4121, %v4444
        %4446 = vmatprep.mubr.f32.mxu0 %v4026
        %4447 = vmatmul.mubr.f32.gmra.mrb[0].mxu0 %v4025
        %v4448 = vpop.f32.mrb[0].mxu0
        %v4449 = vadd.f32 %v4117, %v4448
        %v4450 = vpop.f32.mrb[0].mxu0
        %v4451 = vadd.f32 %v4121, %v4450
        %4452 = vmatprep.mubr.f32.mxu0 %v4029
        %4453 = vmatmul.mubr.f32.gmra.mrb[0].mxu0 %v4028
        %v4454 = vpop.f32.mrb[0].mxu0
        %v4455 = vadd.f32 %v4117, %v4454
        %v4456 = vpop.f32.mrb[0].mxu0
        %v4457 = vadd.f32 %v4121, %v4456
        %4458 = vmatprep.mubr.f32.mxu0 %v4032
        %4459 = vmatmul.mubr.f32.gmra.mrb[0].mxu0 %v4031
        %v4460 = vpop.f32.mrb[0].mxu0
        %v4461 = vadd.f32 %v4117, %v4460
        %v4462 = vpop.f32.mrb[0].mxu0
        %v4463 = vadd.f32 %v4121, %v4462
        %4464 = vmatprep.mubr.f32.mxu0 %v4035
        %4465 = vmatmul.mubr.f32.gmra.mrb[0].mxu0 %v4034
        %v4466 = vpop.f32.mrb[0].mxu0
        %v4467 = vadd.f32 %v4117, %v4466
        %v4468 = vpop.f32.mrb[0].mxu0
        %v4469 = vadd.f32 %v4121, %v4468
        %4470 = vmatprep.mubr.f32.mxu0 %v4038
        %4471 = vmatmul.mubr.f32.gmra.mrb[0].mxu0 %v4037
        %v4472 = vpop.f32.mrb[0].mxu0
        %v4473 = vadd.f32 %v4117, %v4472
        %v4474 = vpop.f32.mrb[0].mxu0
        %v4475 = vadd.f32 %v4121, %v4474
        %4476 = vdwg.mxu0
        %4477 = vmatprep.subr.mxu0 %v4105
        %4478 = vmatpush1.msra.mxu0 %v4104
        %4479 = vmatprep.subr.mxu0 %v4107
        %4480 = vmatpush1.msra.mxu0 %v4106
        %4481 = vmatprep.subr.mxu0 %v4109
        %4482 = vmatpush1.msra.mxu0 %v4108
        %4483 = vmatprep.subr.mxu0 %v4111
        %4484 = vmatpush1.msra.mxu0 %v4110
        %4485 = vmatprep.subr.mxu0 0.0
        %4486 = vmatpush1.msra.mxu0 0.0
        %4487 = vmatprep.subr.mxu0 0.0
        %4488 = vmatpush1.msra.mxu0 0.0
        %4489 = vmatprep.subr.mxu0 0.0
        %4490 = vmatpush1.msra.mxu0 0.0
        %4491 = vmatprep.subr.mxu0 0.0
        %4492 = vmatpush1.msra.mxu0 0.0
        %4493 = vmatprep.subr.mxu0 0.0
        %4494 = vmatpush1.msra.mxu0 0.0
        %4495 = vmatprep.subr.mxu0 0.0
        %4496 = vmatpush1.msra.mxu0 0.0
        %4497 = vmatprep.subr.mxu0 0.0
        %4498 = vmatpush1.msra.mxu0 0.0
        %4499 = vmatprep.subr.mxu0 0.0
        %4500 = vmatpush1.msra.mxu0 0.0
        %4501 = vmatprep.subr.mxu0 0.0
        %4502 = vmatpush1.msra.mxu0 0.0
        %4503 = vmatprep.subr.mxu0 0.0
        %4504 = vmatpush1.msra.mxu0 0.0
        %4505 = vmatprep.subr.mxu0 0.0
        %4506 = vmatpush1.msra.mxu0 0.0
        %4507 = vmatprep.subr.mxu0 0.0
        %4508 = vmatpush1.msra.mxu0 0.0
        %4509 = vmatprep.subr.mxu0 0.0
        %4510 = vmatpush1.msra.mxu0 0.0
        %4511 = vmatprep.subr.mxu0 0.0
        %4512 = vmatpush1.msra.mxu0 0.0
        %4513 = vmatprep.subr.mxu0 0.0
        %4514 = vmatpush1.msra.mxu0 0.0
        %4515 = vmatprep.subr.mxu0 0.0
        %4516 = vmatpush1.msra.mxu0 0.0
        %4517 = vmatprep.subr.mxu0 0.0
        %4518 = vmatpush1.msra.mxu0 0.0
        %4519 = vmatprep.subr.mxu0 0.0
        %4520 = vmatpush1.msra.mxu0 0.0
        %4521 = vmatprep.subr.mxu0 0.0
        %4522 = vmatpush1.msra.mxu0 0.0
        %4523 = vmatprep.subr.mxu0 0.0
        %4524 = vmatpush1.msra.mxu0 0.0
        %4525 = vmatprep.subr.mxu0 0.0
        %4526 = vmatpush1.msra.mxu0 0.0
        %4527 = vmatprep.subr.mxu0 0.0
        %4528 = vmatpush1.msra.mxu0 0.0
        %4529 = vmatprep.subr.mxu0 0.0
        %4530 = vmatpush1.msra.mxu0 0.0
        %4531 = vmatprep.subr.mxu0 0.0
        %4532 = vmatpush1.msra.mxu0 0.0
        %4533 = vmatprep.subr.mxu0 0.0
        %4534 = vmatpush1.msra.mxu0 0.0
        %4535 = vmatprep.subr.mxu0 0.0
        %4536 = vmatpush1.msra.mxu0 0.0
        %4537 = vmatprep.subr.mxu0 0.0
        %4538 = vmatpush1.msra.mxu0 0.0
        %4539 = vmatprep.subr.mxu0 0.0
        %4540 = vmatpush1.msra.mxu0 0.0
        %4541 = vmatprep.mubr.f32.mxu0 0.0
        %4542 = vmatmul.mubr.f32.gmra.mrb[0].mxu0 %v4125
        %v4543 = vpop.f32.mrb[0].mxu0
        %v4544 = vadd.f32 %v4287, %v4543
        %v4545 = vpop.f32.mrb[0].mxu0
        %v4546 = vadd.f32 %v4289, %v4545
        %4547 = vmatprep.mubr.f32.mxu0 0.0
        %4548 = vmatmul.mubr.f32.gmra.mrb[0].mxu0 %v4128
        %v4549 = vpop.f32.mrb[0].mxu0
        %v4550 = vadd.f32 %v4293, %v4549
        %v4551 = vpop.f32.mrb[0].mxu0
        %v4552 = vadd.f32 %v4295, %v4551
        %4553 = vmatprep.mubr.f32.mxu0 0.0
        %4554 = vmatmul.mubr.f32.gmra.mrb[0].mxu0 %v4131
        %v4555 = vpop.f32.mrb[0].mxu0
        %v4556 = vadd.f32 %v4299, %v4555
        %v4557 = vpop.f32.mrb[0].mxu0
        %v4558 = vadd.f32 %v4301, %v4557
        %4559 = vmatprep.mubr.f32.mxu0 0.0
        %4560 = vmatmul.mubr.f32.gmra.mrb[0].mxu0 %v4134
        %v4561 = vpop.f32.mrb[0].mxu0
        %v4562 = vadd.f32 %v4305, %v4561
        %v4563 = vpop.f32.mrb[0].mxu0
        %v4564 = vadd.f32 %v4307, %v4563
        %4565 = vmatprep.mubr.f32.mxu0 0.0
        %4566 = vmatmul.mubr.f32.gmra.mrb[0].mxu0 %v4137
        %v4567 = vpop.f32.mrb[0].mxu0
        %v4568 = vadd.f32 %v4311, %v4567
        %v4569 = vpop.f32.mrb[0].mxu0
        %v4570 = vadd.f32 %v4313, %v4569
        %4571 = vmatprep.mubr.f32.mxu0 0.0
        %4572 = vmatmul.mubr.f32.gmra.mrb[0].mxu0 %v4140
        %v4573 = vpop.f32.mrb[0].mxu0
        %v4574 = vadd.f32 %v4317, %v4573
        %v4575 = vpop.f32.mrb[0].mxu0
        %v4576 = vadd.f32 %v4319, %v4575
        %4577 = vmatprep.mubr.f32.mxu0 0.0
        %4578 = vmatmul.mubr.f32.gmra.mrb[0].mxu0 %v4143
        %v4579 = vpop.f32.mrb[0].mxu0
        %v4580 = vadd.f32 %v4323, %v4579
        %v4581 = vpop.f32.mrb[0].mxu0
        %v4582 = vadd.f32 %v4325, %v4581
        %4583 = vmatprep.mubr.f32.mxu0 0.0
        %4584 = vmatmul.mubr.f32.gmra.mrb[0].mxu0 %v4146
        %v4585 = vpop.f32.mrb[0].mxu0
        %v4586 = vadd.f32 %v4329, %v4585
        %v4587 = vpop.f32.mrb[0].mxu0
        %v4588 = vadd.f32 %v4331, %v4587
        %4589 = vmatprep.mubr.f32.mxu0 0.0
        %4590 = vmatmul.mubr.f32.gmra.mrb[0].mxu0 %v4149
        %v4591 = vpop.f32.mrb[0].mxu0
        %v4592 = vadd.f32 %v4335, %v4591
        %v4593 = vpop.f32.mrb[0].mxu0
        %v4594 = vadd.f32 %v4337, %v4593
        %4595 = vmatprep.mubr.f32.mxu0 0.0
        %4596 = vmatmul.mubr.f32.gmra.mrb[0].mxu0 %v4152
        %v4597 = vpop.f32.mrb[0].mxu0
        %v4598 = vadd.f32 %v4341, %v4597
        %v4599 = vpop.f32.mrb[0].mxu0
        %v4600 = vadd.f32 %v4343, %v4599
        %4601 = vmatprep.mubr.f32.mxu0 0.0
        %4602 = vmatmul.mubr.f32.gmra.mrb[0].mxu0 %v4155
        %v4603 = vpop.f32.mrb[0].mxu0
        %v4604 = vadd.f32 %v4347, %v4603
        %v4605 = vpop.f32.mrb[0].mxu0
        %v4606 = vadd.f32 %v4349, %v4605
        %4607 = vmatprep.mubr.f32.mxu0 0.0
        %4608 = vmatmul.mubr.f32.gmra.mrb[0].mxu0 %v4158
        %v4609 = vpop.f32.mrb[0].mxu0
        %v4610 = vadd.f32 %v4353, %v4609
        %v4611 = vpop.f32.mrb[0].mxu0
        %v4612 = vadd.f32 %v4355, %v4611
        %4613 = vmatprep.mubr.f32.mxu0 0.0
        %4614 = vmatmul.mubr.f32.gmra.mrb[0].mxu0 %v4161
        %v4615 = vpop.f32.mrb[0].mxu0
        %v4616 = vadd.f32 %v4359, %v4615
        %v4617 = vpop.f32.mrb[0].mxu0
        %v4618 = vadd.f32 %v4361, %v4617
        %4619 = vmatprep.mubr.f32.mxu0 0.0
        %4620 = vmatmul.mubr.f32.gmra.mrb[0].mxu0 %v4164
        %v4621 = vpop.f32.mrb[0].mxu0
        %v4622 = vadd.f32 %v4365, %v4621
        %v4623 = vpop.f32.mrb[0].mxu0
        %v4624 = vadd.f32 %v4367, %v4623
        %4625 = vmatprep.mubr.f32.mxu0 0.0
        %4626 = vmatmul.mubr.f32.gmra.mrb[0].mxu0 %v4167
        %v4627 = vpop.f32.mrb[0].mxu0
        %v4628 = vadd.f32 %v4371, %v4627
        %v4629 = vpop.f32.mrb[0].mxu0
        %v4630 = vadd.f32 %v4373, %v4629
        %4631 = vmatprep.mubr.f32.mxu0 0.0
        %4632 = vmatmul.mubr.f32.gmra.mrb[0].mxu0 %v4170
        %v4633 = vpop.f32.mrb[0].mxu0
        %v4634 = vadd.f32 %v4377, %v4633
        %v4635 = vpop.f32.mrb[0].mxu0
        %v4636 = vadd.f32 %v4379, %v4635
        %4637 = vmatprep.mubr.f32.mxu0 0.0
        %4638 = vmatmul.mubr.f32.gmra.mrb[0].mxu0 %v4173
        %v4639 = vpop.f32.mrb[0].mxu0
        %v4640 = vadd.f32 %v4383, %v4639
        %v4641 = vpop.f32.mrb[0].mxu0
        %v4642 = vadd.f32 %v4385, %v4641
        %4643 = vmatprep.mubr.f32.mxu0 0.0
        %4644 = vmatmul.mubr.f32.gmra.mrb[0].mxu0 %v4176
        %v4645 = vpop.f32.mrb[0].mxu0
        %v4646 = vadd.f32 %v4389, %v4645
        %v4647 = vpop.f32.mrb[0].mxu0
        %v4648 = vadd.f32 %v4391, %v4647
        %4649 = vmatprep.mubr.f32.mxu0 0.0
        %4650 = vmatmul.mubr.f32.gmra.mrb[0].mxu0 %v4179
        %v4651 = vpop.f32.mrb[0].mxu0
        %v4652 = vadd.f32 %v4395, %v4651
        %v4653 = vpop.f32.mrb[0].mxu0
        %v4654 = vadd.f32 %v4397, %v4653
        %4655 = vmatprep.mubr.f32.mxu0 0.0
        %4656 = vmatmul.mubr.f32.gmra.mrb[0].mxu0 %v4182
        %v4657 = vpop.f32.mrb[0].mxu0
        %v4658 = vadd.f32 %v4401, %v4657
        %v4659 = vpop.f32.mrb[0].mxu0
        %v4660 = vadd.f32 %v4403, %v4659
        %4661 = vmatprep.mubr.f32.mxu0 0.0
        %4662 = vmatmul.mubr.f32.gmra.mrb[0].mxu0 %v4185
        %v4663 = vpop.f32.mrb[0].mxu0
        %v4664 = vadd.f32 %v4407, %v4663
        %v4665 = vpop.f32.mrb[0].mxu0
        %v4666 = vadd.f32 %v4409, %v4665
        %4667 = vmatprep.mubr.f32.mxu0 0.0
        %4668 = vmatmul.mubr.f32.gmra.mrb[0].mxu0 %v4188
        %v4669 = vpop.f32.mrb[0].mxu0
        %v4670 = vadd.f32 %v4413, %v4669
        %v4671 = vpop.f32.mrb[0].mxu0
        %v4672 = vadd.f32 %v4415, %v4671
        %4673 = vmatprep.mubr.f32.mxu0 0.0
        %4674 = vmatmul.mubr.f32.gmra.mrb[0].mxu0 %v4191
        %v4675 = vpop.f32.mrb[0].mxu0
        %v4676 = vadd.f32 %v4419, %v4675
        %v4677 = vpop.f32.mrb[0].mxu0
        %v4678 = vadd.f32 %v4421, %v4677
        %4679 = vmatprep.mubr.f32.mxu0 0.0
        %4680 = vmatmul.mubr.f32.gmra.mrb[0].mxu0 %v4194
        %v4681 = vpop.f32.mrb[0].mxu0
        %v4682 = vadd.f32 %v4425, %v4681
        %v4683 = vpop.f32.mrb[0].mxu0
        %v4684 = vadd.f32 %v4427, %v4683
        %4685 = vmatprep.mubr.f32.mxu0 0.0
        %4686 = vmatmul.mubr.f32.gmra.mrb[0].mxu0 %v4197
        %v4687 = vpop.f32.mrb[0].mxu0
        %v4688 = vadd.f32 %v4431, %v4687
        %v4689 = vpop.f32.mrb[0].mxu0
        %v4690 = vadd.f32 %v4433, %v4689
        %4691 = vmatprep.mubr.f32.mxu0 0.0
        %4692 = vmatmul.mubr.f32.gmra.mrb[0].mxu0 %v4200
        %v4693 = vpop.f32.mrb[0].mxu0
        %v4694 = vadd.f32 %v4437, %v4693
        %v4695 = vpop.f32.mrb[0].mxu0
        %v4696 = vadd.f32 %v4439, %v4695
        %4697 = vmatprep.mubr.f32.mxu0 0.0
        %4698 = vmatmul.mubr.f32.gmra.mrb[0].mxu0 %v4203
        %v4699 = vpop.f32.mrb[0].mxu0
        %v4700 = vadd.f32 %v4443, %v4699
        %v4701 = vpop.f32.mrb[0].mxu0
        %v4702 = vadd.f32 %v4445, %v4701
        %4703 = vmatprep.mubr.f32.mxu0 0.0
        %4704 = vmatmul.mubr.f32.gmra.mrb[0].mxu0 %v4206
        %v4705 = vpop.f32.mrb[0].mxu0
        %v4706 = vadd.f32 %v4449, %v4705
        %v4707 = vpop.f32.mrb[0].mxu0
        %v4708 = vadd.f32 %v4451, %v4707
        %4709 = vmatprep.mubr.f32.mxu0 0.0
        %4710 = vmatmul.mubr.f32.gmra.mrb[0].mxu0 %v4209
        %v4711 = vpop.f32.mrb[0].mxu0
        %v4712 = vadd.f32 %v4455, %v4711
        %v4713 = vpop.f32.mrb[0].mxu0
        %v4714 = vadd.f32 %v4457, %v4713
        %4715 = vmatprep.mubr.f32.mxu0 0.0
        %4716 = vmatmul.mubr.f32.gmra.mrb[0].mxu0 %v4212
        %v4717 = vpop.f32.mrb[0].mxu0
        %v4718 = vadd.f32 %v4461, %v4717
        %v4719 = vpop.f32.mrb[0].mxu0
        %v4720 = vadd.f32 %v4463, %v4719
        %4721 = vmatprep.mubr.f32.mxu0 0.0
        %4722 = vmatmul.mubr.f32.gmra.mrb[0].mxu0 %v4215
        %v4723 = vpop.f32.mrb[0].mxu0
        %v4724 = vadd.f32 %v4467, %v4723
        %v4725 = vpop.f32.mrb[0].mxu0
        %v4726 = vadd.f32 %v4469, %v4725
        %4727 = vmatprep.mubr.f32.mxu0 0.0
        %4728 = vmatmul.mubr.f32.gmra.mrb[0].mxu0 %v4218
        %v4729 = vpop.f32.mrb[0].mxu0
        %v4730 = vadd.f32 %v4473, %v4729
        %v4731 = vpop.f32.mrb[0].mxu0
        %v4732 = vadd.f32 %v4475, %v4731
        %4733 = vdwg.mxu0
        %v4734 = vmax.f32 %v4544, 0.0
        %v4735 = vmax.f32 %v4546, 0.0
        %v4736 = vmax.f32 %v4550, 0.0
        %v4737 = vmax.f32 %v4552, 0.0
        %v4738 = vmax.f32 %v4556, 0.0
        %v4739 = vmax.f32 %v4558, 0.0
        %v4740 = vmax.f32 %v4562, 0.0
        %v4741 = vmax.f32 %v4564, 0.0
        %v4742 = vmax.f32 %v4568, 0.0
        %v4743 = vmax.f32 %v4570, 0.0
        %v4744 = vmax.f32 %v4574, 0.0
        %v4745 = vmax.f32 %v4576, 0.0
        %v4746 = vmax.f32 %v4580, 0.0
        %v4747 = vmax.f32 %v4582, 0.0
        %v4748 = vmax.f32 %v4586, 0.0
        %v4749 = vmax.f32 %v4588, 0.0
        %v4750 = vmax.f32 %v4592, 0.0
        %v4751 = vmax.f32 %v4594, 0.0
        %v4752 = vmax.f32 %v4598, 0.0
        %v4753 = vmax.f32 %v4600, 0.0
        %v4754 = vmax.f32 %v4604, 0.0
        %v4755 = vmax.f32 %v4606, 0.0
        %v4756 = vmax.f32 %v4610, 0.0
        %v4757 = vmax.f32 %v4612, 0.0
        %v4758 = vmax.f32 %v4616, 0.0
        %v4759 = vmax.f32 %v4618, 0.0
        %v4760 = vmax.f32 %v4622, 0.0
        %v4761 = vmax.f32 %v4624, 0.0
        %v4762 = vmax.f32 %v4628, 0.0
        %v4763 = vmax.f32 %v4630, 0.0
        %v4764 = vmax.f32 %v4634, 0.0
        %v4765 = vmax.f32 %v4636, 0.0
        %v4766 = vmax.f32 %v4640, 0.0
        %v4767 = vmax.f32 %v4642, 0.0
        %v4768 = vmax.f32 %v4646, 0.0
        %v4769 = vmax.f32 %v4648, 0.0
        %v4770 = vmax.f32 %v4652, 0.0
        %v4771 = vmax.f32 %v4654, 0.0
        %v4772 = vmax.f32 %v4658, 0.0
        %v4773 = vmax.f32 %v4660, 0.0
        %v4774 = vmax.f32 %v4664, 0.0
        %v4775 = vmax.f32 %v4666, 0.0
        %v4776 = vmax.f32 %v4670, 0.0
        %v4777 = vmax.f32 %v4672, 0.0
        %v4778 = vmax.f32 %v4676, 0.0
        %v4779 = vmax.f32 %v4678, 0.0
        %v4780 = vmax.f32 %v4682, 0.0
        %v4781 = vmax.f32 %v4684, 0.0
        %v4782 = vmax.f32 %v4688, 0.0
        %v4783 = vmax.f32 %v4690, 0.0
        %v4784 = vmax.f32 %v4694, 0.0
        %v4785 = vmax.f32 %v4696, 0.0
        %v4786 = vmax.f32 %v4700, 0.0
        %v4787 = vmax.f32 %v4702, 0.0
        %v4788 = vmax.f32 %v4706, 0.0
        %v4789 = vmax.f32 %v4708, 0.0
        %v4790 = vmax.f32 %v4712, 0.0
        %v4791 = vmax.f32 %v4714, 0.0
        %v4792 = vmax.f32 %v4718, 0.0
        %v4793 = vmax.f32 %v4720, 0.0
        %v4794 = vmax.f32 %v4724, 0.0
        %v4795 = vmax.f32 %v4726, 0.0
        %v4796 = vmax.f32 %v4730, 0.0
        %v4797 = vmax.f32 %v4732, 0.0
        %4798 = vst [vmem:[#allocation6] sm:$0xff] 0.0
        %vm4799 = vcmask 523264
        %4800 = vst.msk [vmem:[#allocation6 + $0x8] sm:$0xff] %vm4799, 0.0
        %4801 = vst [vmem:[#allocation6 + $0x10] sm:$0xff] 0.0
        %4802 = vst.msk [vmem:[#allocation6 + $0x18] sm:$0xff] %vm4799, 0.0
        %4803 = vst [vmem:[#allocation6 + $0x20] sm:$0x3] 0.0
        %vm4804 = vcmask 517120
        %4805 = vst.msk [vmem:[#allocation6 + $0x28] sm:$0x3] %vm4804, 0.0
        %4806 = vst [vmem:[#allocation6 + $0x30] sm:$0xff] 0.0
        %4807 = vst.msk [vmem:[#allocation6 + $0x38] sm:$0xff] %vm4799, 0.0
        %4808 = vst [vmem:[#allocation6 + $0x40] sm:$0xff] 0.0
        %4809 = vst.msk [vmem:[#allocation6 + $0x48] sm:$0xff] %vm4799, 0.0
        %4810 = vst [vmem:[#allocation6 + $0x50] sm:$0x3] 0.0
        %4811 = vst.msk [vmem:[#allocation6 + $0x58] sm:$0x3] %vm4804, 0.0
        %4812 = vst [vmem:[#allocation6 + $0x60] sm:$0xff] 0.0
        %4813 = vst.msk [vmem:[#allocation6 + $0x68] sm:$0xff] %vm4799, 0.0
        %4814 = vst [vmem:[#allocation6 + $0x70] sm:$0xff] 0.0
        %4815 = vst.msk [vmem:[#allocation6 + $0x78] sm:$0xff] %vm4799, 0.0
        %4816 = vst [vmem:[#allocation6 + $0x80] sm:$0x3] 0.0
        %4817 = vst.msk [vmem:[#allocation6 + $0x88] sm:$0x3] %vm4804, 0.0
        %4818 = vst [vmem:[#allocation6 + $0x90] sm:$0xff] 0.0
        %4819 = vst.msk [vmem:[#allocation6 + $0x98] sm:$0xff] %vm4799, 0.0
        %4820 = vst [vmem:[#allocation6 + $0xa0] sm:$0xff] 0.0
        %4821 = vst.msk [vmem:[#allocation6 + $0xa8] sm:$0xff] %vm4799, 0.0
        %4822 = vst [vmem:[#allocation6 + $0xb0] sm:$0x3] 0.0
        %4823 = vst.msk [vmem:[#allocation6 + $0xb8] sm:$0x3] %vm4804, 0.0
        %4824 = vst [vmem:[#allocation6 + $0xc0] sm:$0xff] 0.0
        %4825 = vst.msk [vmem:[#allocation6 + $0xc8] sm:$0xff] %vm4799, 0.0
        %4826 = vst [vmem:[#allocation6 + $0xd0] sm:$0xff] 0.0
        %4827 = vst.msk [vmem:[#allocation6 + $0xd8] sm:$0xff] %vm4799, 0.0
        %4828 = vst [vmem:[#allocation6 + $0xe0] sm:$0x3] 0.0
        %4829 = vst.msk [vmem:[#allocation6 + $0xe8] sm:$0x3] %vm4804, 0.0
        %4830 = vst [vmem:[#allocation6 + $0xf0] sm:$0xff] 0.0
        %4831 = vst.msk [vmem:[#allocation6 + $0xf8] sm:$0xff] %vm4799, 0.0
        %4832 = vst [vmem:[#allocation6 + $0x100] sm:$0xff] 0.0
        %4833 = vst.msk [vmem:[#allocation6 + $0x108] sm:$0xff] %vm4799, 0.0
        %4834 = vst [vmem:[#allocation6 + $0x110] sm:$0x3] 0.0
        %4835 = vst.msk [vmem:[#allocation6 + $0x118] sm:$0x3] %vm4804, 0.0
        %4836 = vst [vmem:[#allocation6 + $0x120] sm:$0xff] 0.0
        %4837 = vst.msk [vmem:[#allocation6 + $0x128] sm:$0xff] %vm4799, 0.0
        %4838 = vst [vmem:[#allocation6 + $0x130] sm:$0xff] 0.0
        %4839 = vst.msk [vmem:[#allocation6 + $0x138] sm:$0xff] %vm4799, 0.0
        %4840 = vst [vmem:[#allocation6 + $0x140] sm:$0x3] 0.0
        %4841 = vst.msk [vmem:[#allocation6 + $0x148] sm:$0x3] %vm4804, 0.0
        %4842 = vst [vmem:[#allocation6 + $0x150] sm:$0xff] 0.0
        %4843 = vst.msk [vmem:[#allocation6 + $0x158] sm:$0xff] %vm4799, 0.0
        %4844 = vst [vmem:[#allocation6 + $0x160] sm:$0xff] 0.0
        %4845 = vst.msk [vmem:[#allocation6 + $0x168] sm:$0xff] %vm4799, 0.0
        %4846 = vst [vmem:[#allocation6 + $0x170] sm:$0x3] 0.0
        %4847 = vst.msk [vmem:[#allocation6 + $0x178] sm:$0x3] %vm4804, 0.0
        %4848 = vst [vmem:[#allocation6 + $0x180] sm:$0xff] 0.0
        %4849 = vst.msk [vmem:[#allocation6 + $0x188] sm:$0xff] %vm4799, 0.0
        %4850 = vst [vmem:[#allocation6 + $0x190] sm:$0xff] 0.0
        %4851 = vst.msk [vmem:[#allocation6 + $0x198] sm:$0xff] %vm4799, 0.0
        %4852 = vst [vmem:[#allocation6 + $0x1a0] sm:$0x3] 0.0
        %4853 = vst.msk [vmem:[#allocation6 + $0x1a8] sm:$0x3] %vm4804, 0.0
        %4854 = vst [vmem:[#allocation6 + $0x1b0] sm:$0xff] 0.0
        %4855 = vst.msk [vmem:[#allocation6 + $0x1b8] sm:$0xff] %vm4799, 0.0
        %4856 = vst [vmem:[#allocation6 + $0x1c0] sm:$0xff] 0.0
        %4857 = vst.msk [vmem:[#allocation6 + $0x1c8] sm:$0xff] %vm4799, 0.0
        %4858 = vst [vmem:[#allocation6 + $0x1d0] sm:$0x3] 0.0
        %4859 = vst.msk [vmem:[#allocation6 + $0x1d8] sm:$0x3] %vm4804, 0.0
        %4860 = vst [vmem:[#allocation6 + $0x1e0] sm:$0xff] 0.0
        %4861 = vst.msk [vmem:[#allocation6 + $0x1e8] sm:$0xff] %vm4799, 0.0
        %4862 = vst [vmem:[#allocation6 + $0x1f0] sm:$0xff] 0.0
        %4863 = vst.msk [vmem:[#allocation6 + $0x1f8] sm:$0xff] %vm4799, 0.0
        %4864 = vst [vmem:[#allocation6 + $0x200] sm:$0x3] 0.0
        %4865 = vst.msk [vmem:[#allocation6 + $0x208] sm:$0x3] %vm4804, 0.0
        %4866 = vst [vmem:[#allocation6 + $0x210] sm:$0xff] 0.0
        %4867 = vst.msk [vmem:[#allocation6 + $0x218] sm:$0xff] %vm4799, 0.0
        %4868 = vst [vmem:[#allocation6 + $0x220] sm:$0xff] 0.0
        %4869 = vst.msk [vmem:[#allocation6 + $0x228] sm:$0xff] %vm4799, 0.0
        %4870 = vst [vmem:[#allocation6 + $0x230] sm:$0x3] 0.0
        %4871 = vst.msk [vmem:[#allocation6 + $0x238] sm:$0x3] %vm4804, 0.0
        %4872 = vst [vmem:[#allocation6 + $0x240] sm:$0xff] 0.0
        %4873 = vst.msk [vmem:[#allocation6 + $0x248] sm:$0xff] %vm4799, 0.0
        %4874 = vst [vmem:[#allocation6 + $0x250] sm:$0xff] 0.0
        %4875 = vst.msk [vmem:[#allocation6 + $0x258] sm:$0xff] %vm4799, 0.0
        %4876 = vst [vmem:[#allocation6 + $0x260] sm:$0x3] 0.0
        %4877 = vst.msk [vmem:[#allocation6 + $0x268] sm:$0x3] %vm4804, 0.0
        %4878 = vst [vmem:[#allocation6 + $0x270] sm:$0xff] 0.0
        %4879 = vst.msk [vmem:[#allocation6 + $0x278] sm:$0xff] %vm4799, 0.0
        %4880 = vst [vmem:[#allocation6 + $0x280] sm:$0xff] 0.0
        %4881 = vst.msk [vmem:[#allocation6 + $0x288] sm:$0xff] %vm4799, 0.0
        %4882 = vst [vmem:[#allocation6 + $0x290] sm:$0x3] 0.0
        %4883 = vst.msk [vmem:[#allocation6 + $0x298] sm:$0x3] %vm4804, 0.0
        %4884 = vst [vmem:[#allocation6 + $0x2a0] sm:$0xff] 0.0
        %4885 = vst.msk [vmem:[#allocation6 + $0x2a8] sm:$0xff] %vm4799, 0.0
        %4886 = vst [vmem:[#allocation6 + $0x2b0] sm:$0xff] 0.0
        %4887 = vst.msk [vmem:[#allocation6 + $0x2b8] sm:$0xff] %vm4799, 0.0
        %4888 = vst [vmem:[#allocation6 + $0x2c0] sm:$0x3] 0.0
        %4889 = vst.msk [vmem:[#allocation6 + $0x2c8] sm:$0x3] %vm4804, 0.0
        %4890 = vst [vmem:[#allocation6 + $0x2d0] sm:$0xff] 0.0
        %4891 = vst.msk [vmem:[#allocation6 + $0x2d8] sm:$0xff] %vm4799, 0.0
        %4892 = vst [vmem:[#allocation6 + $0x2e0] sm:$0xff] 0.0
        %4893 = vst.msk [vmem:[#allocation6 + $0x2e8] sm:$0xff] %vm4799, 0.0
        %4894 = vst [vmem:[#allocation6 + $0x2f0] sm:$0x3] 0.0
        %4895 = vst.msk [vmem:[#allocation6 + $0x2f8] sm:$0x3] %vm4804, 0.0
        %4896 = vst [vmem:[#allocation6 + $0x300] sm:$0xff] 0.0
        %4897 = vst.msk [vmem:[#allocation6 + $0x308] sm:$0xff] %vm4799, 0.0
        %4898 = vst [vmem:[#allocation6 + $0x310] sm:$0xff] 0.0
        %4899 = vst.msk [vmem:[#allocation6 + $0x318] sm:$0xff] %vm4799, 0.0
        %4900 = vst [vmem:[#allocation6 + $0x320] sm:$0x3] 0.0
        %4901 = vst.msk [vmem:[#allocation6 + $0x328] sm:$0x3] %vm4804, 0.0
        %4902 = vst [vmem:[#allocation6 + $0x330] sm:$0xff] 0.0
        %4903 = vst.msk [vmem:[#allocation6 + $0x338] sm:$0xff] %vm4799, 0.0
        %4904 = vst [vmem:[#allocation6 + $0x340] sm:$0xff] 0.0
        %4905 = vst.msk [vmem:[#allocation6 + $0x348] sm:$0xff] %vm4799, 0.0
        %4906 = vst [vmem:[#allocation6 + $0x350] sm:$0x3] 0.0
        %4907 = vst.msk [vmem:[#allocation6 + $0x358] sm:$0x3] %vm4804, 0.0
        %vm4972 = vcmask 1040384
        %v4973 = vrot.slane %v4734, 7
        %v4974 = vrot.slane %v4735, 7
        %v4975 = vrot.slane %v4736, 7
        %v4976 = vsel %vm4972, %v4973, %v4975
        %v4977 = vrot.slane %v4737, 7
        %v4978 = vsel %vm4972, %v4974, %v4977
        %v4979 = vrot.slane %v4738, 7
        %v4980 = vrot.slane %v4739, 7
        %v4981 = vrot.slane %v4740, 7
        %v4982 = vsel %vm4972, %v4979, %v4981
        %v4983 = vrot.slane %v4741, 7
        %v4984 = vsel %vm4972, %v4980, %v4983
        %v4985 = vrot.slane %v4742, 7
        %v4986 = vrot.slane %v4743, 7
        %v4987 = vrot.slane %v4744, 7
        %v4988 = vsel %vm4972, %v4985, %v4987
        %v4989 = vrot.slane %v4745, 7
        %v4990 = vsel %vm4972, %v4986, %v4989
        %v4991 = vrot.slane %v4746, 7
        %v4992 = vrot.slane %v4747, 7
        %v4993 = vrot.slane %v4748, 7
        %v4994 = vsel %vm4972, %v4991, %v4993
        %v4995 = vrot.slane %v4749, 7
        %v4996 = vsel %vm4972, %v4992, %v4995
        %v4997 = vrot.slane %v4750, 7
        %v4998 = vrot.slane %v4751, 7
        %v4999 = vrot.slane %v4752, 7
        %v5000 = vsel %vm4972, %v4997, %v4999
        %v5001 = vrot.slane %v4753, 7
        %v5002 = vsel %vm4972, %v4998, %v5001
        %v5003 = vrot.slane %v4754, 7
        %v5004 = vrot.slane %v4755, 7
        %v5005 = vrot.slane %v4756, 7
        %v5006 = vsel %vm4972, %v5003, %v5005
        %v5007 = vrot.slane %v4757, 7
        %v5008 = vsel %vm4972, %v5004, %v5007
        %v5009 = vrot.slane %v4758, 7
        %v5010 = vrot.slane %v4759, 7
        %v5011 = vrot.slane %v4760, 7
        %v5012 = vsel %vm4972, %v5009, %v5011
        %v5013 = vrot.slane %v4761, 7
        %v5014 = vsel %vm4972, %v5010, %v5013
        %v5015 = vrot.slane %v4762, 7
        %v5016 = vrot.slane %v4763, 7
        %v5017 = vrot.slane %v4764, 7
        %v5018 = vsel %vm4972, %v5015, %v5017
        %v5019 = vrot.slane %v4765, 7
        %v5020 = vsel %vm4972, %v5016, %v5019
        %v5021 = vrot.slane %v4766, 7
        %v5022 = vrot.slane %v4767, 7
        %v5023 = vrot.slane %v4768, 7
        %v5024 = vsel %vm4972, %v5021, %v5023
        %v5025 = vrot.slane %v4769, 7
        %v5026 = vsel %vm4972, %v5022, %v5025
        %v5027 = vrot.slane %v4770, 7
        %v5028 = vrot.slane %v4771, 7
        %v5029 = vrot.slane %v4772, 7
        %v5030 = vsel %vm4972, %v5027, %v5029
        %v5031 = vrot.slane %v4773, 7
        %v5032 = vsel %vm4972, %v5028, %v5031
        %v5033 = vrot.slane %v4774, 7
        %v5034 = vrot.slane %v4775, 7
        %v5035 = vrot.slane %v4776, 7
        %v5036 = vsel %vm4972, %v5033, %v5035
        %v5037 = vrot.slane %v4777, 7
        %v5038 = vsel %vm4972, %v5034, %v5037
        %v5039 = vrot.slane %v4778, 7
        %v5040 = vrot.slane %v4779, 7
        %v5041 = vrot.slane %v4780, 7
        %v5042 = vsel %vm4972, %v5039, %v5041
        %v5043 = vrot.slane %v4781, 7
        %v5044 = vsel %vm4972, %v5040, %v5043
        %v5045 = vrot.slane %v4782, 7
        %v5046 = vrot.slane %v4783, 7
        %v5047 = vrot.slane %v4784, 7
        %v5048 = vsel %vm4972, %v5045, %v5047
        %v5049 = vrot.slane %v4785, 7
        %v5050 = vsel %vm4972, %v5046, %v5049
        %v5051 = vrot.slane %v4786, 7
        %v5052 = vrot.slane %v4787, 7
        %v5053 = vrot.slane %v4788, 7
        %v5054 = vsel %vm4972, %v5051, %v5053
        %v5055 = vrot.slane %v4789, 7
        %v5056 = vsel %vm4972, %v5052, %v5055
        %v5057 = vrot.slane %v4790, 7
        %v5058 = vrot.slane %v4791, 7
        %v5059 = vrot.slane %v4792, 7
        %v5060 = vsel %vm4972, %v5057, %v5059
        %v5061 = vrot.slane %v4793, 7
        %v5062 = vsel %vm4972, %v5058, %v5061
        %v5063 = vrot.slane %v4794, 7
        %v5064 = vrot.slane %v4795, 7
        %v5065 = vrot.slane %v4796, 7
        %v5066 = vsel %vm4972, %v5063, %v5065
        %v5067 = vrot.slane %v4797, 7
        %v5068 = vsel %vm4972, %v5064, %v5067
        %s5165 = scalar_lea.vmem [#allocation6], 48
        %5166 = vst [vmem:[%s5165] sm:$0xfe] %v4973
        %vm5167 = vcmask 523265
        %5168 = vst.msk [vmem:[%s5165 + $0x8] sm:$0xfe] %vm5167, %v4974
        %5169 = vst [vmem:[%s5165 + $0x10] sm:$0xff] %v4976
        %5170 = vst.msk [vmem:[%s5165 + $0x18] sm:$0xff] %vm4799, %v4978
        %5171 = vst [vmem:[%s5165 + $0x20] sm:$0x1] %v4975
        %vm5172 = vcmask 516096
        %5173 = vst.msk [vmem:[%s5165 + $0x28] sm:$0x1] %vm5172, %v4977
        %5174 = vst [vmem:[%s5165 + $0x30] sm:$0xfe] %v4979
        %5175 = vst.msk [vmem:[%s5165 + $0x38] sm:$0xfe] %vm5167, %v4980
        %5176 = vst [vmem:[%s5165 + $0x40] sm:$0xff] %v4982
        %5177 = vst.msk [vmem:[%s5165 + $0x48] sm:$0xff] %vm4799, %v4984
        %5178 = vst [vmem:[%s5165 + $0x50] sm:$0x1] %v4981
        %5179 = vst.msk [vmem:[%s5165 + $0x58] sm:$0x1] %vm5172, %v4983
        %5180 = vst [vmem:[%s5165 + $0x60] sm:$0xfe] %v4985
        %5181 = vst.msk [vmem:[%s5165 + $0x68] sm:$0xfe] %vm5167, %v4986
        %5182 = vst [vmem:[%s5165 + $0x70] sm:$0xff] %v4988
        %5183 = vst.msk [vmem:[%s5165 + $0x78] sm:$0xff] %vm4799, %v4990
        %5184 = vst [vmem:[%s5165 + $0x80] sm:$0x1] %v4987
        %5185 = vst.msk [vmem:[%s5165 + $0x88] sm:$0x1] %vm5172, %v4989
        %5186 = vst [vmem:[%s5165 + $0x90] sm:$0xfe] %v4991
        %5187 = vst.msk [vmem:[%s5165 + $0x98] sm:$0xfe] %vm5167, %v4992
        %5188 = vst [vmem:[%s5165 + $0xa0] sm:$0xff] %v4994
        %5189 = vst.msk [vmem:[%s5165 + $0xa8] sm:$0xff] %vm4799, %v4996
        %5190 = vst [vmem:[%s5165 + $0xb0] sm:$0x1] %v4993
        %5191 = vst.msk [vmem:[%s5165 + $0xb8] sm:$0x1] %vm5172, %v4995
        %5192 = vst [vmem:[%s5165 + $0xc0] sm:$0xfe] %v4997
        %5193 = vst.msk [vmem:[%s5165 + $0xc8] sm:$0xfe] %vm5167, %v4998
        %5194 = vst [vmem:[%s5165 + $0xd0] sm:$0xff] %v5000
        %5195 = vst.msk [vmem:[%s5165 + $0xd8] sm:$0xff] %vm4799, %v5002
        %5196 = vst [vmem:[%s5165 + $0xe0] sm:$0x1] %v4999
        %5197 = vst.msk [vmem:[%s5165 + $0xe8] sm:$0x1] %vm5172, %v5001
        %5198 = vst [vmem:[%s5165 + $0xf0] sm:$0xfe] %v5003
        %5199 = vst.msk [vmem:[%s5165 + $0xf8] sm:$0xfe] %vm5167, %v5004
        %5200 = vst [vmem:[%s5165 + $0x100] sm:$0xff] %v5006
        %5201 = vst.msk [vmem:[%s5165 + $0x108] sm:$0xff] %vm4799, %v5008
        %5202 = vst [vmem:[%s5165 + $0x110] sm:$0x1] %v5005
        %5203 = vst.msk [vmem:[%s5165 + $0x118] sm:$0x1] %vm5172, %v5007
        %5204 = vst [vmem:[%s5165 + $0x120] sm:$0xfe] %v5009
        %5205 = vst.msk [vmem:[%s5165 + $0x128] sm:$0xfe] %vm5167, %v5010
        %5206 = vst [vmem:[%s5165 + $0x130] sm:$0xff] %v5012
        %5207 = vst.msk [vmem:[%s5165 + $0x138] sm:$0xff] %vm4799, %v5014
        %5208 = vst [vmem:[%s5165 + $0x140] sm:$0x1] %v5011
        %5209 = vst.msk [vmem:[%s5165 + $0x148] sm:$0x1] %vm5172, %v5013
        %5210 = vst [vmem:[%s5165 + $0x150] sm:$0xfe] %v5015
        %5211 = vst.msk [vmem:[%s5165 + $0x158] sm:$0xfe] %vm5167, %v5016
        %5212 = vst [vmem:[%s5165 + $0x160] sm:$0xff] %v5018
        %5213 = vst.msk [vmem:[%s5165 + $0x168] sm:$0xff] %vm4799, %v5020
        %5214 = vst [vmem:[%s5165 + $0x170] sm:$0x1] %v5017
        %5215 = vst.msk [vmem:[%s5165 + $0x178] sm:$0x1] %vm5172, %v5019
        %5216 = vst [vmem:[%s5165 + $0x180] sm:$0xfe] %v5021
        %5217 = vst.msk [vmem:[%s5165 + $0x188] sm:$0xfe] %vm5167, %v5022
        %5218 = vst [vmem:[%s5165 + $0x190] sm:$0xff] %v5024
        %5219 = vst.msk [vmem:[%s5165 + $0x198] sm:$0xff] %vm4799, %v5026
        %5220 = vst [vmem:[%s5165 + $0x1a0] sm:$0x1] %v5023
        %5221 = vst.msk [vmem:[%s5165 + $0x1a8] sm:$0x1] %vm5172, %v5025
        %5222 = vst [vmem:[%s5165 + $0x1b0] sm:$0xfe] %v5027
        %5223 = vst.msk [vmem:[%s5165 + $0x1b8] sm:$0xfe] %vm5167, %v5028
        %5224 = vst [vmem:[%s5165 + $0x1c0] sm:$0xff] %v5030
        %5225 = vst.msk [vmem:[%s5165 + $0x1c8] sm:$0xff] %vm4799, %v5032
        %5226 = vst [vmem:[%s5165 + $0x1d0] sm:$0x1] %v5029
        %5227 = vst.msk [vmem:[%s5165 + $0x1d8] sm:$0x1] %vm5172, %v5031
        %5228 = vst [vmem:[%s5165 + $0x1e0] sm:$0xfe] %v5033
        %5229 = vst.msk [vmem:[%s5165 + $0x1e8] sm:$0xfe] %vm5167, %v5034
        %5230 = vst [vmem:[%s5165 + $0x1f0] sm:$0xff] %v5036
        %5231 = vst.msk [vmem:[%s5165 + $0x1f8] sm:$0xff] %vm4799, %v5038
        %5232 = vst [vmem:[%s5165 + $0x200] sm:$0x1] %v5035
        %5233 = vst.msk [vmem:[%s5165 + $0x208] sm:$0x1] %vm5172, %v5037
        %5234 = vst [vmem:[%s5165 + $0x210] sm:$0xfe] %v5039
        %5235 = vst.msk [vmem:[%s5165 + $0x218] sm:$0xfe] %vm5167, %v5040
        %5236 = vst [vmem:[%s5165 + $0x220] sm:$0xff] %v5042
        %5237 = vst.msk [vmem:[%s5165 + $0x228] sm:$0xff] %vm4799, %v5044
        %5238 = vst [vmem:[%s5165 + $0x230] sm:$0x1] %v5041
        %5239 = vst.msk [vmem:[%s5165 + $0x238] sm:$0x1] %vm5172, %v5043
        %5240 = vst [vmem:[%s5165 + $0x240] sm:$0xfe] %v5045
        %5241 = vst.msk [vmem:[%s5165 + $0x248] sm:$0xfe] %vm5167, %v5046
        %5242 = vst [vmem:[%s5165 + $0x250] sm:$0xff] %v5048
        %5243 = vst.msk [vmem:[%s5165 + $0x258] sm:$0xff] %vm4799, %v5050
        %5244 = vst [vmem:[%s5165 + $0x260] sm:$0x1] %v5047
        %5245 = vst.msk [vmem:[%s5165 + $0x268] sm:$0x1] %vm5172, %v5049
        %5246 = vst [vmem:[%s5165 + $0x270] sm:$0xfe] %v5051
        %5247 = vst.msk [vmem:[%s5165 + $0x278] sm:$0xfe] %vm5167, %v5052
        %5248 = vst [vmem:[%s5165 + $0x280] sm:$0xff] %v5054
        %5249 = vst.msk [vmem:[%s5165 + $0x288] sm:$0xff] %vm4799, %v5056
        %5250 = vst [vmem:[%s5165 + $0x290] sm:$0x1] %v5053
        %5251 = vst.msk [vmem:[%s5165 + $0x298] sm:$0x1] %vm5172, %v5055
        %5252 = vst [vmem:[%s5165 + $0x2a0] sm:$0xfe] %v5057
        %5253 = vst.msk [vmem:[%s5165 + $0x2a8] sm:$0xfe] %vm5167, %v5058
        %5254 = vst [vmem:[%s5165 + $0x2b0] sm:$0xff] %v5060
        %5255 = vst.msk [vmem:[%s5165 + $0x2b8] sm:$0xff] %vm4799, %v5062
        %5256 = vst [vmem:[%s5165 + $0x2c0] sm:$0x1] %v5059
        %5257 = vst.msk [vmem:[%s5165 + $0x2c8] sm:$0x1] %vm5172, %v5061
        %5258 = vst [vmem:[%s5165 + $0x2d0] sm:$0xfe] %v5063
        %5259 = vst.msk [vmem:[%s5165 + $0x2d8] sm:$0xfe] %vm5167, %v5064
        %5260 = vst [vmem:[%s5165 + $0x2e0] sm:$0xff] %v5066
        %5261 = vst.msk [vmem:[%s5165 + $0x2e8] sm:$0xff] %vm4799, %v5068
        %5262 = vst [vmem:[%s5165 + $0x2f0] sm:$0x1] %v5065
        %5263 = vst.msk [vmem:[%s5165 + $0x2f8] sm:$0x1] %vm5172, %v5067
        %v5264 = vld [vmem:[#allocation6] sm:$0xff]
        %v5265 = vld [vmem:[#allocation6 + $0x8] sm:$0xff]
        %v5266 = vld [vmem:[#allocation6 + $0x10] sm:$0xff]
        %v5267 = vld [vmem:[#allocation6 + $0x18] sm:$0xff]
        %v5268 = vld [vmem:[#allocation6 + $0x30] sm:$0xff]
        %v5269 = vld [vmem:[#allocation6 + $0x38] sm:$0xff]
        %v5270 = vld [vmem:[#allocation6 + $0x40] sm:$0xff]
        %v5271 = vld [vmem:[#allocation6 + $0x48] sm:$0xff]
        %v5272 = vld [vmem:[#allocation6 + $0x60] sm:$0xff]
        %v5273 = vld [vmem:[#allocation6 + $0x68] sm:$0xff]
        %v5274 = vld [vmem:[#allocation6 + $0x70] sm:$0xff]
        %v5275 = vld [vmem:[#allocation6 + $0x78] sm:$0xff]
        %v5276 = vld [vmem:[#allocation6 + $0x90] sm:$0xff]
        %v5277 = vld [vmem:[#allocation6 + $0x98] sm:$0xff]
        %v5278 = vld [vmem:[#allocation6 + $0xa0] sm:$0xff]
        %v5279 = vld [vmem:[#allocation6 + $0xa8] sm:$0xff]
        %v5280 = vld [vmem:[#allocation6 + $0xc0] sm:$0xff]
        %v5281 = vld [vmem:[#allocation6 + $0xc8] sm:$0xff]
        %v5282 = vld [vmem:[#allocation6 + $0xd0] sm:$0xff]
        %v5283 = vld [vmem:[#allocation6 + $0xd8] sm:$0xff]
        %v5284 = vld [vmem:[#allocation6 + $0xf0] sm:$0xff]
        %v5285 = vld [vmem:[#allocation6 + $0xf8] sm:$0xff]
        %v5286 = vld [vmem:[#allocation6 + $0x100] sm:$0xff]
        %v5287 = vld [vmem:[#allocation6 + $0x108] sm:$0xff]
        %v5288 = vld [vmem:[#allocation6 + $0x120] sm:$0xff]
        %v5289 = vld [vmem:[#allocation6 + $0x128] sm:$0xff]
        %v5290 = vld [vmem:[#allocation6 + $0x130] sm:$0xff]
        %v5291 = vld [vmem:[#allocation6 + $0x138] sm:$0xff]
        %v5292 = vld [vmem:[#allocation6 + $0x150] sm:$0xff]
        %v5293 = vld [vmem:[#allocation6 + $0x158] sm:$0xff]
        %v5294 = vld [vmem:[#allocation6 + $0x160] sm:$0xff]
        %v5295 = vld [vmem:[#allocation6 + $0x168] sm:$0xff]
        %v5296 = vld [vmem:[#allocation6 + $0x180] sm:$0xff]
        %v5297 = vld [vmem:[#allocation6 + $0x188] sm:$0xff]
        %v5298 = vld [vmem:[#allocation6 + $0x190] sm:$0xff]
        %v5299 = vld [vmem:[#allocation6 + $0x198] sm:$0xff]
        %v5300 = vld [vmem:[#allocation6 + $0x1b0] sm:$0xff]
        %v5301 = vld [vmem:[#allocation6 + $0x1b8] sm:$0xff]
        %v5302 = vld [vmem:[#allocation6 + $0x1c0] sm:$0xff]
        %v5303 = vld [vmem:[#allocation6 + $0x1c8] sm:$0xff]
        %v5304 = vld [vmem:[#allocation6 + $0x1e0] sm:$0xff]
        %v5305 = vld [vmem:[#allocation6 + $0x1e8] sm:$0xff]
        %v5306 = vld [vmem:[#allocation6 + $0x1f0] sm:$0xff]
        %v5307 = vld [vmem:[#allocation6 + $0x1f8] sm:$0xff]
        %v5308 = vld [vmem:[#allocation6 + $0x210] sm:$0xff]
        %v5309 = vld [vmem:[#allocation6 + $0x218] sm:$0xff]
        %v5310 = vld [vmem:[#allocation6 + $0x220] sm:$0xff]
        %v5311 = vld [vmem:[#allocation6 + $0x228] sm:$0xff]
        %v5312 = vld [vmem:[#allocation6 + $0x240] sm:$0xff]
        %v5313 = vld [vmem:[#allocation6 + $0x248] sm:$0xff]
        %v5314 = vld [vmem:[#allocation6 + $0x250] sm:$0xff]
        %v5315 = vld [vmem:[#allocation6 + $0x258] sm:$0xff]
        %v5316 = vld [vmem:[#allocation6 + $0x270] sm:$0xff]
        %v5317 = vld [vmem:[#allocation6 + $0x278] sm:$0xff]
        %v5318 = vld [vmem:[#allocation6 + $0x280] sm:$0xff]
        %v5319 = vld [vmem:[#allocation6 + $0x288] sm:$0xff]
        %v5320 = vld [vmem:[#allocation6 + $0x2a0] sm:$0xff]
        %v5321 = vld [vmem:[#allocation6 + $0x2a8] sm:$0xff]
        %v5322 = vld [vmem:[#allocation6 + $0x2b0] sm:$0xff]
        %v5323 = vld [vmem:[#allocation6 + $0x2b8] sm:$0xff]
        %v5324 = vld [vmem:[#allocation6 + $0x2d0] sm:$0xff]
        %v5325 = vld [vmem:[#allocation6 + $0x2d8] sm:$0xff]
        %v5326 = vld [vmem:[#allocation6 + $0x2e0] sm:$0xff]
        %v5327 = vld [vmem:[#allocation6 + $0x2e8] sm:$0xff]
        %v5328 = vld [vmem:[#allocation12] sm:$0xff]
        %v5329 = vld [vmem:[#allocation12 + $0x8] sm:$0xff]
        %v5330 = vld [vmem:[#allocation12 + $0x10] sm:$0xff]
        %v5331 = vld [vmem:[#allocation12 + $0x18] sm:$0xff]
        %v5332 = vld [vmem:[#allocation12 + $0x20] sm:$0xff]
        %v5333 = vld [vmem:[#allocation12 + $0x28] sm:$0xff]
        %v5334 = vld [vmem:[#allocation12 + $0x30] sm:$0xff]
        %v5335 = vld [vmem:[#allocation12 + $0x38] sm:$0xff]
        %v5336 = vld [vmem:[#allocation12 + $0x40] sm:$0xff]
        %v5337 = vld [vmem:[#allocation12 + $0x48] sm:$0xff]
        %v5338 = vld [vmem:[#allocation12 + $0x50] sm:$0xff]
        %v5339 = vld [vmem:[#allocation12 + $0x58] sm:$0xff]
        %v5340 = vld [vmem:[#allocation12 + $0x60] sm:$0xff]
        %v5341 = vld [vmem:[#allocation12 + $0x68] sm:$0xff]
        %v5342 = vld [vmem:[#allocation12 + $0x70] sm:$0xff]
        %v5343 = vld [vmem:[#allocation12 + $0x78] sm:$0xff]
        %v5344 = vld [vmem:[#allocation12 + $0x80] sm:$0xff]
        %v5345 = vld [vmem:[#allocation12 + $0x88] sm:$0xff]
        %v5346 = vld [vmem:[#allocation12 + $0x90] sm:$0xff]
        %v5347 = vld [vmem:[#allocation12 + $0x98] sm:$0xff]
        %v5348 = vld [vmem:[#allocation12 + $0xa0] sm:$0xff]
        %v5349 = vld [vmem:[#allocation12 + $0xa8] sm:$0xff]
        %v5350 = vld [vmem:[#allocation12 + $0xb0] sm:$0xff]
        %v5351 = vld [vmem:[#allocation12 + $0xb8] sm:$0xff]
        %v5352 = vld [vmem:[#allocation6] sm:$0xfe]
        %v5353 = vld [vmem:[#allocation6 + $0x8] sm:$0xfe]
        %v5354 = vld [vmem:[#allocation6 + $0x20] sm:$0x1]
        %v5355 = vld [vmem:[#allocation6 + $0x28] sm:$0x1]
        %v5356 = vld [vmem:[#allocation6 + $0x30] sm:$0xfe]
        %v5357 = vld [vmem:[#allocation6 + $0x38] sm:$0xfe]
        %v5358 = vld [vmem:[#allocation6 + $0x50] sm:$0x1]
        %v5359 = vld [vmem:[#allocation6 + $0x58] sm:$0x1]
        %v5360 = vld [vmem:[#allocation6 + $0x60] sm:$0xfe]
        %v5361 = vld [vmem:[#allocation6 + $0x68] sm:$0xfe]
        %v5362 = vld [vmem:[#allocation6 + $0x80] sm:$0x1]
        %v5363 = vld [vmem:[#allocation6 + $0x88] sm:$0x1]
        %v5364 = vld [vmem:[#allocation6 + $0x90] sm:$0xfe]
        %v5365 = vld [vmem:[#allocation6 + $0x98] sm:$0xfe]
        %v5366 = vld [vmem:[#allocation6 + $0xb0] sm:$0x1]
        %v5367 = vld [vmem:[#allocation6 + $0xb8] sm:$0x1]
        %v5368 = vld [vmem:[#allocation6 + $0xc0] sm:$0xfe]
        %v5369 = vld [vmem:[#allocation6 + $0xc8] sm:$0xfe]
        %v5370 = vld [vmem:[#allocation6 + $0xe0] sm:$0x1]
        %v5371 = vld [vmem:[#allocation6 + $0xe8] sm:$0x1]
        %v5372 = vld [vmem:[#allocation6 + $0xf0] sm:$0xfe]
        %v5373 = vld [vmem:[#allocation6 + $0xf8] sm:$0xfe]
        %v5374 = vld [vmem:[#allocation6 + $0x110] sm:$0x1]
        %v5375 = vld [vmem:[#allocation6 + $0x118] sm:$0x1]
        %v5376 = vld [vmem:[#allocation6 + $0x120] sm:$0xfe]
        %v5377 = vld [vmem:[#allocation6 + $0x128] sm:$0xfe]
        %v5378 = vld [vmem:[#allocation6 + $0x140] sm:$0x1]
        %v5379 = vld [vmem:[#allocation6 + $0x148] sm:$0x1]
        %v5380 = vld [vmem:[#allocation6 + $0x150] sm:$0xfe]
        %v5381 = vld [vmem:[#allocation6 + $0x158] sm:$0xfe]
        %v5382 = vld [vmem:[#allocation6 + $0x170] sm:$0x1]
        %v5383 = vld [vmem:[#allocation6 + $0x178] sm:$0x1]
        %v5384 = vld [vmem:[#allocation6 + $0x180] sm:$0xfe]
        %v5385 = vld [vmem:[#allocation6 + $0x188] sm:$0xfe]
        %v5386 = vld [vmem:[#allocation6 + $0x1a0] sm:$0x1]
        %v5387 = vld [vmem:[#allocation6 + $0x1a8] sm:$0x1]
        %v5388 = vld [vmem:[#allocation6 + $0x1b0] sm:$0xfe]
        %v5389 = vld [vmem:[#allocation6 + $0x1b8] sm:$0xfe]
        %v5390 = vld [vmem:[#allocation6 + $0x1d0] sm:$0x1]
        %v5391 = vld [vmem:[#allocation6 + $0x1d8] sm:$0x1]
        %v5392 = vld [vmem:[#allocation6 + $0x1e0] sm:$0xfe]
        %v5393 = vld [vmem:[#allocation6 + $0x1e8] sm:$0xfe]
        %v5394 = vld [vmem:[#allocation6 + $0x200] sm:$0x1]
        %v5395 = vld [vmem:[#allocation6 + $0x208] sm:$0x1]
        %v5396 = vld [vmem:[#allocation6 + $0x210] sm:$0xfe]
        %v5397 = vld [vmem:[#allocation6 + $0x218] sm:$0xfe]
        %v5398 = vld [vmem:[#allocation6 + $0x230] sm:$0x1]
        %v5399 = vld [vmem:[#allocation6 + $0x238] sm:$0x1]
        %v5400 = vld [vmem:[#allocation6 + $0x240] sm:$0xfe]
        %v5401 = vld [vmem:[#allocation6 + $0x248] sm:$0xfe]
        %v5402 = vld [vmem:[#allocation6 + $0x260] sm:$0x1]
        %v5403 = vld [vmem:[#allocation6 + $0x268] sm:$0x1]
        %v5404 = vld [vmem:[#allocation6 + $0x270] sm:$0xfe]
        %v5405 = vld [vmem:[#allocation6 + $0x278] sm:$0xfe]
        %v5406 = vld [vmem:[#allocation6 + $0x290] sm:$0x1]
        %v5407 = vld [vmem:[#allocation6 + $0x298] sm:$0x1]
        %v5408 = vld [vmem:[#allocation6 + $0x2a0] sm:$0xfe]
        %v5409 = vld [vmem:[#allocation6 + $0x2a8] sm:$0xfe]
        %v5410 = vld [vmem:[#allocation6 + $0x2c0] sm:$0x1]
        %v5411 = vld [vmem:[#allocation6 + $0x2c8] sm:$0x1]
        %v5412 = vld [vmem:[#allocation6 + $0x2d0] sm:$0xfe]
        %v5413 = vld [vmem:[#allocation6 + $0x2d8] sm:$0xfe]
        %v5414 = vld [vmem:[#allocation6 + $0x2f0] sm:$0x1]
        %v5415 = vld [vmem:[#allocation6 + $0x2f8] sm:$0x1]
        %vm5512 = vcmask 1046528
        %v5513 = vrot.slane %v5352, 1
        %v5514 = vrot.slane %v5266, 1
        %v5515 = vsel %vm5512, %v5513, %v5514
        %v5516 = vrot.slane %v5353, 1
        %v5517 = vrot.slane %v5267, 1
        %v5518 = vsel %vm5512, %v5516, %v5517
        %v5519 = vrot.slane %v5354, 1
        %v5520 = vsel %vm5512, %v5514, %v5519
        %v5521 = vrot.slane %v5355, 1
        %v5522 = vsel %vm5512, %v5517, %v5521
        %v5523 = vrot.slane %v5356, 1
        %v5524 = vrot.slane %v5270, 1
        %v5525 = vsel %vm5512, %v5523, %v5524
        %v5526 = vrot.slane %v5357, 1
        %v5527 = vrot.slane %v5271, 1
        %v5528 = vsel %vm5512, %v5526, %v5527
        %v5529 = vrot.slane %v5358, 1
        %v5530 = vsel %vm5512, %v5524, %v5529
        %v5531 = vrot.slane %v5359, 1
        %v5532 = vsel %vm5512, %v5527, %v5531
        %v5533 = vrot.slane %v5360, 1
        %v5534 = vrot.slane %v5274, 1
        %v5535 = vsel %vm5512, %v5533, %v5534
        %v5536 = vrot.slane %v5361, 1
        %v5537 = vrot.slane %v5275, 1
        %v5538 = vsel %vm5512, %v5536, %v5537
        %v5539 = vrot.slane %v5362, 1
        %v5540 = vsel %vm5512, %v5534, %v5539
        %v5541 = vrot.slane %v5363, 1
        %v5542 = vsel %vm5512, %v5537, %v5541
        %v5543 = vrot.slane %v5364, 1
        %v5544 = vrot.slane %v5278, 1
        %v5545 = vsel %vm5512, %v5543, %v5544
        %v5546 = vrot.slane %v5365, 1
        %v5547 = vrot.slane %v5279, 1
        %v5548 = vsel %vm5512, %v5546, %v5547
        %v5549 = vrot.slane %v5366, 1
        %v5550 = vsel %vm5512, %v5544, %v5549
        %v5551 = vrot.slane %v5367, 1
        %v5552 = vsel %vm5512, %v5547, %v5551
        %v5553 = vrot.slane %v5368, 1
        %v5554 = vrot.slane %v5282, 1
        %v5555 = vsel %vm5512, %v5553, %v5554
        %v5556 = vrot.slane %v5369, 1
        %v5557 = vrot.slane %v5283, 1
        %v5558 = vsel %vm5512, %v5556, %v5557
        %v5559 = vrot.slane %v5370, 1
        %v5560 = vsel %vm5512, %v5554, %v5559
        %v5561 = vrot.slane %v5371, 1
        %v5562 = vsel %vm5512, %v5557, %v5561
        %v5563 = vrot.slane %v5372, 1
        %v5564 = vrot.slane %v5286, 1
        %v5565 = vsel %vm5512, %v5563, %v5564
        %v5566 = vrot.slane %v5373, 1
        %v5567 = vrot.slane %v5287, 1
        %v5568 = vsel %vm5512, %v5566, %v5567
        %v5569 = vrot.slane %v5374, 1
        %v5570 = vsel %vm5512, %v5564, %v5569
        %v5571 = vrot.slane %v5375, 1
        %v5572 = vsel %vm5512, %v5567, %v5571
        %v5573 = vrot.slane %v5376, 1
        %v5574 = vrot.slane %v5290, 1
        %v5575 = vsel %vm5512, %v5573, %v5574
        %v5576 = vrot.slane %v5377, 1
        %v5577 = vrot.slane %v5291, 1
        %v5578 = vsel %vm5512, %v5576, %v5577
        %v5579 = vrot.slane %v5378, 1
        %v5580 = vsel %vm5512, %v5574, %v5579
        %v5581 = vrot.slane %v5379, 1
        %v5582 = vsel %vm5512, %v5577, %v5581
        %v5583 = vrot.slane %v5380, 1
        %v5584 = vrot.slane %v5294, 1
        %v5585 = vsel %vm5512, %v5583, %v5584
        %v5586 = vrot.slane %v5381, 1
        %v5587 = vrot.slane %v5295, 1
        %v5588 = vsel %vm5512, %v5586, %v5587
        %v5589 = vrot.slane %v5382, 1
        %v5590 = vsel %vm5512, %v5584, %v5589
        %v5591 = vrot.slane %v5383, 1
        %v5592 = vsel %vm5512, %v5587, %v5591
        %v5593 = vrot.slane %v5384, 1
        %v5594 = vrot.slane %v5298, 1
        %v5595 = vsel %vm5512, %v5593, %v5594
        %v5596 = vrot.slane %v5385, 1
        %v5597 = vrot.slane %v5299, 1
        %v5598 = vsel %vm5512, %v5596, %v5597
        %v5599 = vrot.slane %v5386, 1
        %v5600 = vsel %vm5512, %v5594, %v5599
        %v5601 = vrot.slane %v5387, 1
        %v5602 = vsel %vm5512, %v5597, %v5601
        %v5603 = vrot.slane %v5388, 1
        %v5604 = vrot.slane %v5302, 1
        %v5605 = vsel %vm5512, %v5603, %v5604
        %v5606 = vrot.slane %v5389, 1
        %v5607 = vrot.slane %v5303, 1
        %v5608 = vsel %vm5512, %v5606, %v5607
        %v5609 = vrot.slane %v5390, 1
        %v5610 = vsel %vm5512, %v5604, %v5609
        %v5611 = vrot.slane %v5391, 1
        %v5612 = vsel %vm5512, %v5607, %v5611
        %v5613 = vrot.slane %v5392, 1
        %v5614 = vrot.slane %v5306, 1
        %v5615 = vsel %vm5512, %v5613, %v5614
        %v5616 = vrot.slane %v5393, 1
        %v5617 = vrot.slane %v5307, 1
        %v5618 = vsel %vm5512, %v5616, %v5617
        %v5619 = vrot.slane %v5394, 1
        %v5620 = vsel %vm5512, %v5614, %v5619
        %v5621 = vrot.slane %v5395, 1
        %v5622 = vsel %vm5512, %v5617, %v5621
        %v5623 = vrot.slane %v5396, 1
        %v5624 = vrot.slane %v5310, 1
        %v5625 = vsel %vm5512, %v5623, %v5624
        %v5626 = vrot.slane %v5397, 1
        %v5627 = vrot.slane %v5311, 1
        %v5628 = vsel %vm5512, %v5626, %v5627
        %v5629 = vrot.slane %v5398, 1
        %v5630 = vsel %vm5512, %v5624, %v5629
        %v5631 = vrot.slane %v5399, 1
        %v5632 = vsel %vm5512, %v5627, %v5631
        %v5633 = vrot.slane %v5400, 1
        %v5634 = vrot.slane %v5314, 1
        %v5635 = vsel %vm5512, %v5633, %v5634
        %v5636 = vrot.slane %v5401, 1
        %v5637 = vrot.slane %v5315, 1
        %v5638 = vsel %vm5512, %v5636, %v5637
        %v5639 = vrot.slane %v5402, 1
        %v5640 = vsel %vm5512, %v5634, %v5639
        %v5641 = vrot.slane %v5403, 1
        %v5642 = vsel %vm5512, %v5637, %v5641
        %v5643 = vrot.slane %v5404, 1
        %v5644 = vrot.slane %v5318, 1
        %v5645 = vsel %vm5512, %v5643, %v5644
        %v5646 = vrot.slane %v5405, 1
        %v5647 = vrot.slane %v5319, 1
        %v5648 = vsel %vm5512, %v5646, %v5647
        %v5649 = vrot.slane %v5406, 1
        %v5650 = vsel %vm5512, %v5644, %v5649
        %v5651 = vrot.slane %v5407, 1
        %v5652 = vsel %vm5512, %v5647, %v5651
        %v5653 = vrot.slane %v5408, 1
        %v5654 = vrot.slane %v5322, 1
        %v5655 = vsel %vm5512, %v5653, %v5654
        %v5656 = vrot.slane %v5409, 1
        %v5657 = vrot.slane %v5323, 1
        %v5658 = vsel %vm5512, %v5656, %v5657
        %v5659 = vrot.slane %v5410, 1
        %v5660 = vsel %vm5512, %v5654, %v5659
        %v5661 = vrot.slane %v5411, 1
        %v5662 = vsel %vm5512, %v5657, %v5661
        %v5663 = vrot.slane %v5412, 1
        %v5664 = vrot.slane %v5326, 1
        %v5665 = vsel %vm5512, %v5663, %v5664
        %v5666 = vrot.slane %v5413, 1
        %v5667 = vrot.slane %v5327, 1
        %v5668 = vsel %vm5512, %v5666, %v5667
        %v5669 = vrot.slane %v5414, 1
        %v5670 = vsel %vm5512, %v5664, %v5669
        %v5671 = vrot.slane %v5415, 1
        %v5672 = vsel %vm5512, %v5667, %v5671
        %v5705 = vld [vmem:[#allocation12 + $0xc0] sm:$0xff]
        %v5706 = vld [vmem:[#allocation12 + $0xc8] sm:$0xff]
        %v5707 = vld [vmem:[#allocation12 + $0xd0] sm:$0xff]
        %v5708 = vld [vmem:[#allocation12 + $0xd8] sm:$0xff]
        %v5709 = vld [vmem:[#allocation12 + $0xe0] sm:$0xff]
        %v5710 = vld [vmem:[#allocation12 + $0xe8] sm:$0xff]
        %v5711 = vld [vmem:[#allocation12 + $0xf0] sm:$0xff]
        %v5712 = vld [vmem:[#allocation12 + $0xf8] sm:$0xff]
        %v5713 = vld [vmem:[#allocation12 + $0x100] sm:$0xff]
        %v5714 = vld [vmem:[#allocation12 + $0x108] sm:$0xff]
        %v5715 = vld [vmem:[#allocation12 + $0x110] sm:$0xff]
        %v5716 = vld [vmem:[#allocation12 + $0x118] sm:$0xff]
        %v5717 = vld [vmem:[#allocation12 + $0x120] sm:$0xff]
        %v5718 = vld [vmem:[#allocation12 + $0x128] sm:$0xff]
        %v5719 = vld [vmem:[#allocation12 + $0x130] sm:$0xff]
        %v5720 = vld [vmem:[#allocation12 + $0x138] sm:$0xff]
        %v5721 = vld [vmem:[#allocation12 + $0x140] sm:$0xff]
        %v5722 = vld [vmem:[#allocation12 + $0x148] sm:$0xff]
        %v5723 = vld [vmem:[#allocation12 + $0x150] sm:$0xff]
        %v5724 = vld [vmem:[#allocation12 + $0x158] sm:$0xff]
        %v5725 = vld [vmem:[#allocation12 + $0x160] sm:$0xff]
        %v5726 = vld [vmem:[#allocation12 + $0x168] sm:$0xff]
        %v5727 = vld [vmem:[#allocation12 + $0x170] sm:$0xff]
        %v5728 = vld [vmem:[#allocation12 + $0x178] sm:$0xff]
        %v5729 = vsel %vm4799, %v5518, 0
        %v5731 = vsel %vm4799, %v5522, 0
        %v5733 = vsel %vm4799, %v5528, 0
        %v5735 = vsel %vm4799, %v5532, 0
        %v5737 = vsel %vm4799, %v5538, 0
        %v5739 = vsel %vm4799, %v5542, 0
        %v5741 = vsel %vm4799, %v5548, 0
        %v5743 = vsel %vm4799, %v5552, 0
        %v5745 = vsel %vm4799, %v5558, 0
        %v5747 = vsel %vm4799, %v5562, 0
        %v5749 = vsel %vm4799, %v5568, 0
        %v5751 = vsel %vm4799, %v5572, 0
        %v5753 = vsel %vm4799, %v5578, 0
        %v5755 = vsel %vm4799, %v5582, 0
        %v5757 = vsel %vm4799, %v5588, 0
        %v5759 = vsel %vm4799, %v5592, 0
        %v5761 = vsel %vm4799, %v5598, 0
        %v5763 = vsel %vm4799, %v5602, 0
        %v5765 = vsel %vm4799, %v5608, 0
        %v5767 = vsel %vm4799, %v5612, 0
        %v5769 = vsel %vm4799, %v5618, 0
        %v5771 = vsel %vm4799, %v5622, 0
        %v5773 = vsel %vm4799, %v5628, 0
        %v5775 = vsel %vm4799, %v5632, 0
        %v5777 = vsel %vm4799, %v5638, 0
        %v5779 = vsel %vm4799, %v5642, 0
        %v5781 = vsel %vm4799, %v5648, 0
        %v5783 = vsel %vm4799, %v5652, 0
        %v5785 = vsel %vm4799, %v5658, 0
        %v5787 = vsel %vm4799, %v5662, 0
        %v5789 = vsel %vm4799, %v5668, 0
        %v5791 = vsel %vm4799, %v5672, 0
        %5793 = vmatprep.subr.mxu0 0.0
        %5794 = vmatpush1.msra.mxu0 %v5705
        %5795 = vmatprep.subr.mxu0 0.0
        %5796 = vmatpush1.msra.mxu0 %v5706
        %5797 = vmatprep.subr.mxu0 0.0
        %5798 = vmatpush1.msra.mxu0 %v5707
        %5799 = vmatprep.subr.mxu0 0.0
        %5800 = vmatpush1.msra.mxu0 %v5708
        %5801 = vmatprep.subr.mxu0 0.0
        %5802 = vmatpush1.msra.mxu0 %v5709
        %5803 = vmatprep.subr.mxu0 0.0
        %5804 = vmatpush1.msra.mxu0 %v5710
        %5805 = vmatprep.subr.mxu0 0.0
        %5806 = vmatpush1.msra.mxu0 %v5711
        %5807 = vmatprep.subr.mxu0 0.0
        %5808 = vmatpush1.msra.mxu0 %v5712
        %5809 = vmatprep.subr.mxu0 0.0
        %5810 = vmatpush1.msra.mxu0 %v5713
        %5811 = vmatprep.subr.mxu0 0.0
        %5812 = vmatpush1.msra.mxu0 %v5714
        %5813 = vmatprep.subr.mxu0 0.0
        %5814 = vmatpush1.msra.mxu0 %v5715
        %5815 = vmatprep.subr.mxu0 0.0
        %5816 = vmatpush1.msra.mxu0 %v5716
        %5817 = vmatprep.subr.mxu0 0.0
        %5818 = vmatpush1.msra.mxu0 %v5717
        %5819 = vmatprep.subr.mxu0 0.0
        %5820 = vmatpush1.msra.mxu0 %v5718
        %5821 = vmatprep.subr.mxu0 0.0
        %5822 = vmatpush1.msra.mxu0 %v5719
        %5823 = vmatprep.subr.mxu0 0.0
        %5824 = vmatpush1.msra.mxu0 %v5720
        %5825 = vmatprep.subr.mxu0 0.0
        %5826 = vmatpush1.msra.mxu0 %v5721
        %5827 = vmatprep.subr.mxu0 0.0
        %5828 = vmatpush1.msra.mxu0 %v5722
        %5829 = vmatprep.subr.mxu0 0.0
        %5830 = vmatpush1.msra.mxu0 %v5723
        %5831 = vmatprep.subr.mxu0 0.0
        %5832 = vmatpush1.msra.mxu0 %v5724
        %5833 = vmatprep.subr.mxu0 0.0
        %5834 = vmatpush1.msra.mxu0 %v5725
        %5835 = vmatprep.subr.mxu0 0.0
        %5836 = vmatpush1.msra.mxu0 %v5726
        %5837 = vmatprep.subr.mxu0 0.0
        %5838 = vmatpush1.msra.mxu0 %v5727
        %5839 = vmatprep.subr.mxu0 0.0
        %5840 = vmatpush1.msra.mxu0 %v5728
        %5841 = vmatprep.subr.mxu0 0.0
        %5842 = vmatpush1.msra.mxu0 0.0
        %5843 = vmatprep.subr.mxu0 0.0
        %5844 = vmatpush1.msra.mxu0 0.0
        %5845 = vmatprep.subr.mxu0 0.0
        %5846 = vmatpush1.msra.mxu0 0.0
        %5847 = vmatprep.subr.mxu0 0.0
        %5848 = vmatpush1.msra.mxu0 0.0
        %5849 = vmatprep.subr.mxu0 0.0
        %5850 = vmatpush1.msra.mxu0 0.0
        %5851 = vmatprep.subr.mxu0 0.0
        %5852 = vmatpush1.msra.mxu0 0.0
        %5853 = vmatprep.subr.mxu0 0.0
        %5854 = vmatpush1.msra.mxu0 0.0
        %5855 = vmatprep.subr.mxu0 0.0
        %5856 = vmatpush1.msra.mxu0 0.0
        %5857 = vmatprep.mubr.f32.mxu0 %v5729
        %5858 = vmatmul.mubr.f32.gmra.mrb[0].mxu0 %v5515
        %v5859 = vpop.f32.mrb[0].mxu0
        %v5860 = vadd.f32 0.0, %v5859
        %v5861 = vpop.f32.mrb[0].mxu0
        %5862 = vmatprep.mubr.f32.mxu0 %v5731
        %5863 = vmatmul.mubr.f32.gmra.mrb[0].mxu0 %v5520
        %v5864 = vpop.f32.mrb[0].mxu0
        %v5865 = vadd.f32 0.0, %v5864
        %v5866 = vpop.f32.mrb[0].mxu0
        %5867 = vmatprep.mubr.f32.mxu0 %v5733
        %5868 = vmatmul.mubr.f32.gmra.mrb[0].mxu0 %v5525
        %v5869 = vpop.f32.mrb[0].mxu0
        %v5870 = vadd.f32 0.0, %v5869
        %v5871 = vpop.f32.mrb[0].mxu0
        %5872 = vmatprep.mubr.f32.mxu0 %v5735
        %5873 = vmatmul.mubr.f32.gmra.mrb[0].mxu0 %v5530
        %v5874 = vpop.f32.mrb[0].mxu0
        %v5875 = vadd.f32 0.0, %v5874
        %v5876 = vpop.f32.mrb[0].mxu0
        %5877 = vmatprep.mubr.f32.mxu0 %v5737
        %5878 = vmatmul.mubr.f32.gmra.mrb[0].mxu0 %v5535
        %v5879 = vpop.f32.mrb[0].mxu0
        %v5880 = vadd.f32 0.0, %v5879
        %v5881 = vpop.f32.mrb[0].mxu0
        %5882 = vmatprep.mubr.f32.mxu0 %v5739
        %5883 = vmatmul.mubr.f32.gmra.mrb[0].mxu0 %v5540
        %v5884 = vpop.f32.mrb[0].mxu0
        %v5885 = vadd.f32 0.0, %v5884
        %v5886 = vpop.f32.mrb[0].mxu0
        %5887 = vmatprep.mubr.f32.mxu0 %v5741
        %5888 = vmatmul.mubr.f32.gmra.mrb[0].mxu0 %v5545
        %v5889 = vpop.f32.mrb[0].mxu0
        %v5890 = vadd.f32 0.0, %v5889
        %v5891 = vpop.f32.mrb[0].mxu0
        %5892 = vmatprep.mubr.f32.mxu0 %v5743
        %5893 = vmatmul.mubr.f32.gmra.mrb[0].mxu0 %v5550
        %v5894 = vpop.f32.mrb[0].mxu0
        %v5895 = vadd.f32 0.0, %v5894
        %v5896 = vpop.f32.mrb[0].mxu0
        %5897 = vmatprep.mubr.f32.mxu0 %v5745
        %5898 = vmatmul.mubr.f32.gmra.mrb[0].mxu0 %v5555
        %v5899 = vpop.f32.mrb[0].mxu0
        %v5900 = vadd.f32 0.0, %v5899
        %v5901 = vpop.f32.mrb[0].mxu0
        %5902 = vmatprep.mubr.f32.mxu0 %v5747
        %5903 = vmatmul.mubr.f32.gmra.mrb[0].mxu0 %v5560
        %v5904 = vpop.f32.mrb[0].mxu0
        %v5905 = vadd.f32 0.0, %v5904
        %v5906 = vpop.f32.mrb[0].mxu0
        %5907 = vmatprep.mubr.f32.mxu0 %v5749
        %5908 = vmatmul.mubr.f32.gmra.mrb[0].mxu0 %v5565
        %v5909 = vpop.f32.mrb[0].mxu0
        %v5910 = vadd.f32 0.0, %v5909
        %v5911 = vpop.f32.mrb[0].mxu0
        %5912 = vmatprep.mubr.f32.mxu0 %v5751
        %5913 = vmatmul.mubr.f32.gmra.mrb[0].mxu0 %v5570
        %v5914 = vpop.f32.mrb[0].mxu0
        %v5915 = vadd.f32 0.0, %v5914
        %v5916 = vpop.f32.mrb[0].mxu0
        %5917 = vmatprep.mubr.f32.mxu0 %v5753
        %5918 = vmatmul.mubr.f32.gmra.mrb[0].mxu0 %v5575
        %v5919 = vpop.f32.mrb[0].mxu0
        %v5920 = vadd.f32 0.0, %v5919
        %v5921 = vpop.f32.mrb[0].mxu0
        %5922 = vmatprep.mubr.f32.mxu0 %v5755
        %5923 = vmatmul.mubr.f32.gmra.mrb[0].mxu0 %v5580
        %v5924 = vpop.f32.mrb[0].mxu0
        %v5925 = vadd.f32 0.0, %v5924
        %v5926 = vpop.f32.mrb[0].mxu0
        %5927 = vmatprep.mubr.f32.mxu0 %v5757
        %5928 = vmatmul.mubr.f32.gmra.mrb[0].mxu0 %v5585
        %v5929 = vpop.f32.mrb[0].mxu0
        %v5930 = vadd.f32 0.0, %v5929
        %v5931 = vpop.f32.mrb[0].mxu0
        %5932 = vmatprep.mubr.f32.mxu0 %v5759
        %5933 = vmatmul.mubr.f32.gmra.mrb[0].mxu0 %v5590
        %v5934 = vpop.f32.mrb[0].mxu0
        %v5935 = vadd.f32 0.0, %v5934
        %v5936 = vpop.f32.mrb[0].mxu0
        %5937 = vmatprep.mubr.f32.mxu0 %v5761
        %5938 = vmatmul.mubr.f32.gmra.mrb[0].mxu0 %v5595
        %v5939 = vpop.f32.mrb[0].mxu0
        %v5940 = vadd.f32 0.0, %v5939
        %v5941 = vpop.f32.mrb[0].mxu0
        %5942 = vmatprep.mubr.f32.mxu0 %v5763
        %5943 = vmatmul.mubr.f32.gmra.mrb[0].mxu0 %v5600
        %v5944 = vpop.f32.mrb[0].mxu0
        %v5945 = vadd.f32 0.0, %v5944
        %v5946 = vpop.f32.mrb[0].mxu0
        %5947 = vmatprep.mubr.f32.mxu0 %v5765
        %5948 = vmatmul.mubr.f32.gmra.mrb[0].mxu0 %v5605
        %v5949 = vpop.f32.mrb[0].mxu0
        %v5950 = vadd.f32 0.0, %v5949
        %v5951 = vpop.f32.mrb[0].mxu0
        %5952 = vmatprep.mubr.f32.mxu0 %v5767
        %5953 = vmatmul.mubr.f32.gmra.mrb[0].mxu0 %v5610
        %v5954 = vpop.f32.mrb[0].mxu0
        %v5955 = vadd.f32 0.0, %v5954
        %v5956 = vpop.f32.mrb[0].mxu0
        %5957 = vmatprep.mubr.f32.mxu0 %v5769
        %5958 = vmatmul.mubr.f32.gmra.mrb[0].mxu0 %v5615
        %v5959 = vpop.f32.mrb[0].mxu0
        %v5960 = vadd.f32 0.0, %v5959
        %v5961 = vpop.f32.mrb[0].mxu0
        %5962 = vmatprep.mubr.f32.mxu0 %v5771
        %5963 = vmatmul.mubr.f32.gmra.mrb[0].mxu0 %v5620
        %v5964 = vpop.f32.mrb[0].mxu0
        %v5965 = vadd.f32 0.0, %v5964
        %v5966 = vpop.f32.mrb[0].mxu0
        %5967 = vmatprep.mubr.f32.mxu0 %v5773
        %5968 = vmatmul.mubr.f32.gmra.mrb[0].mxu0 %v5625
        %v5969 = vpop.f32.mrb[0].mxu0
        %v5970 = vadd.f32 0.0, %v5969
        %v5971 = vpop.f32.mrb[0].mxu0
        %5972 = vmatprep.mubr.f32.mxu0 %v5775
        %5973 = vmatmul.mubr.f32.gmra.mrb[0].mxu0 %v5630
        %v5974 = vpop.f32.mrb[0].mxu0
        %v5975 = vadd.f32 0.0, %v5974
        %v5976 = vpop.f32.mrb[0].mxu0
        %5977 = vmatprep.mubr.f32.mxu0 %v5777
        %5978 = vmatmul.mubr.f32.gmra.mrb[0].mxu0 %v5635
        %v5979 = vpop.f32.mrb[0].mxu0
        %v5980 = vadd.f32 0.0, %v5979
        %v5981 = vpop.f32.mrb[0].mxu0
        %5982 = vmatprep.mubr.f32.mxu0 %v5779
        %5983 = vmatmul.mubr.f32.gmra.mrb[0].mxu0 %v5640
        %v5984 = vpop.f32.mrb[0].mxu0
        %v5985 = vadd.f32 0.0, %v5984
        %v5986 = vpop.f32.mrb[0].mxu0
        %5987 = vmatprep.mubr.f32.mxu0 %v5781
        %5988 = vmatmul.mubr.f32.gmra.mrb[0].mxu0 %v5645
        %v5989 = vpop.f32.mrb[0].mxu0
        %v5990 = vadd.f32 0.0, %v5989
        %v5991 = vpop.f32.mrb[0].mxu0
        %5992 = vmatprep.mubr.f32.mxu0 %v5783
        %5993 = vmatmul.mubr.f32.gmra.mrb[0].mxu0 %v5650
        %v5994 = vpop.f32.mrb[0].mxu0
        %v5995 = vadd.f32 0.0, %v5994
        %v5996 = vpop.f32.mrb[0].mxu0
        %5997 = vmatprep.mubr.f32.mxu0 %v5785
        %5998 = vmatmul.mubr.f32.gmra.mrb[0].mxu0 %v5655
        %v5999 = vpop.f32.mrb[0].mxu0
        %v6000 = vadd.f32 0.0, %v5999
        %v6001 = vpop.f32.mrb[0].mxu0
        %6002 = vmatprep.mubr.f32.mxu0 %v5787
        %6003 = vmatmul.mubr.f32.gmra.mrb[0].mxu0 %v5660
        %v6004 = vpop.f32.mrb[0].mxu0
        %v6005 = vadd.f32 0.0, %v6004
        %v6006 = vpop.f32.mrb[0].mxu0
        %6007 = vmatprep.mubr.f32.mxu0 %v5789
        %6008 = vmatmul.mubr.f32.gmra.mrb[0].mxu0 %v5665
        %v6009 = vpop.f32.mrb[0].mxu0
        %v6010 = vadd.f32 0.0, %v6009
        %v6011 = vpop.f32.mrb[0].mxu0
        %6012 = vmatprep.mubr.f32.mxu0 %v5791
        %6013 = vmatmul.mubr.f32.gmra.mrb[0].mxu0 %v5670
        %v6014 = vpop.f32.mrb[0].mxu0
        %v6015 = vadd.f32 0.0, %v6014
        %v6016 = vpop.f32.mrb[0].mxu0
        %6017 = vdwg.mxu0
        %v6019 = vsel %vm4799, %v5265, 0
        %v6021 = vsel %vm4799, %v5267, 0
        %v6024 = vsel %vm4799, %v5269, 0
        %v6026 = vsel %vm4799, %v5271, 0
        %v6029 = vsel %vm4799, %v5273, 0
        %v6031 = vsel %vm4799, %v5275, 0
        %v6034 = vsel %vm4799, %v5277, 0
        %v6036 = vsel %vm4799, %v5279, 0
        %v6039 = vsel %vm4799, %v5281, 0
        %v6041 = vsel %vm4799, %v5283, 0
        %v6044 = vsel %vm4799, %v5285, 0
        %v6046 = vsel %vm4799, %v5287, 0
        %v6049 = vsel %vm4799, %v5289, 0
        %v6051 = vsel %vm4799, %v5291, 0
        %v6054 = vsel %vm4799, %v5293, 0
        %v6056 = vsel %vm4799, %v5295, 0
        %v6059 = vsel %vm4799, %v5297, 0
        %v6061 = vsel %vm4799, %v5299, 0
        %v6064 = vsel %vm4799, %v5301, 0
        %v6066 = vsel %vm4799, %v5303, 0
        %v6069 = vsel %vm4799, %v5305, 0
        %v6071 = vsel %vm4799, %v5307, 0
        %v6074 = vsel %vm4799, %v5309, 0
        %v6076 = vsel %vm4799, %v5311, 0
        %v6079 = vsel %vm4799, %v5313, 0
        %v6081 = vsel %vm4799, %v5315, 0
        %v6084 = vsel %vm4799, %v5317, 0
        %v6086 = vsel %vm4799, %v5319, 0
        %v6089 = vsel %vm4799, %v5321, 0
        %v6091 = vsel %vm4799, %v5323, 0
        %v6094 = vsel %vm4799, %v5325, 0
        %v6096 = vsel %vm4799, %v5327, 0
        %6098 = vmatprep.subr.mxu0 0.0
        %6099 = vmatpush1.msra.mxu0 %v5328
        %6100 = vmatprep.subr.mxu0 0.0
        %6101 = vmatpush1.msra.mxu0 %v5329
        %6102 = vmatprep.subr.mxu0 0.0
        %6103 = vmatpush1.msra.mxu0 %v5330
        %6104 = vmatprep.subr.mxu0 0.0
        %6105 = vmatpush1.msra.mxu0 %v5331
        %6106 = vmatprep.subr.mxu0 0.0
        %6107 = vmatpush1.msra.mxu0 %v5332
        %6108 = vmatprep.subr.mxu0 0.0
        %6109 = vmatpush1.msra.mxu0 %v5333
        %6110 = vmatprep.subr.mxu0 0.0
        %6111 = vmatpush1.msra.mxu0 %v5334
        %6112 = vmatprep.subr.mxu0 0.0
        %6113 = vmatpush1.msra.mxu0 %v5335
        %6114 = vmatprep.subr.mxu0 0.0
        %6115 = vmatpush1.msra.mxu0 %v5336
        %6116 = vmatprep.subr.mxu0 0.0
        %6117 = vmatpush1.msra.mxu0 %v5337
        %6118 = vmatprep.subr.mxu0 0.0
        %6119 = vmatpush1.msra.mxu0 %v5338
        %6120 = vmatprep.subr.mxu0 0.0
        %6121 = vmatpush1.msra.mxu0 %v5339
        %6122 = vmatprep.subr.mxu0 0.0
        %6123 = vmatpush1.msra.mxu0 %v5340
        %6124 = vmatprep.subr.mxu0 0.0
        %6125 = vmatpush1.msra.mxu0 %v5341
        %6126 = vmatprep.subr.mxu0 0.0
        %6127 = vmatpush1.msra.mxu0 %v5342
        %6128 = vmatprep.subr.mxu0 0.0
        %6129 = vmatpush1.msra.mxu0 %v5343
        %6130 = vmatprep.subr.mxu0 0.0
        %6131 = vmatpush1.msra.mxu0 %v5344
        %6132 = vmatprep.subr.mxu0 0.0
        %6133 = vmatpush1.msra.mxu0 %v5345
        %6134 = vmatprep.subr.mxu0 0.0
        %6135 = vmatpush1.msra.mxu0 %v5346
        %6136 = vmatprep.subr.mxu0 0.0
        %6137 = vmatpush1.msra.mxu0 %v5347
        %6138 = vmatprep.subr.mxu0 0.0
        %6139 = vmatpush1.msra.mxu0 %v5348
        %6140 = vmatprep.subr.mxu0 0.0
        %6141 = vmatpush1.msra.mxu0 %v5349
        %6142 = vmatprep.subr.mxu0 0.0
        %6143 = vmatpush1.msra.mxu0 %v5350
        %6144 = vmatprep.subr.mxu0 0.0
        %6145 = vmatpush1.msra.mxu0 %v5351
        %6146 = vmatprep.subr.mxu0 0.0
        %6147 = vmatpush1.msra.mxu0 0.0
        %6148 = vmatprep.subr.mxu0 0.0
        %6149 = vmatpush1.msra.mxu0 0.0
        %6150 = vmatprep.subr.mxu0 0.0
        %6151 = vmatpush1.msra.mxu0 0.0
        %6152 = vmatprep.subr.mxu0 0.0
        %6153 = vmatpush1.msra.mxu0 0.0
        %6154 = vmatprep.subr.mxu0 0.0
        %6155 = vmatpush1.msra.mxu0 0.0
        %6156 = vmatprep.subr.mxu0 0.0
        %6157 = vmatpush1.msra.mxu0 0.0
        %6158 = vmatprep.subr.mxu0 0.0
        %6159 = vmatpush1.msra.mxu0 0.0
        %6160 = vmatprep.subr.mxu0 0.0
        %6161 = vmatpush1.msra.mxu0 0.0
        %6162 = vmatprep.mubr.f32.mxu0 %v6019
        %6163 = vmatmul.mubr.f32.gmra.mrb[0].mxu0 %v5264
        %v6164 = vpop.f32.mrb[0].mxu0
        %v6165 = vadd.f32 %v5860, %v6164
        %v6166 = vpop.f32.mrb[0].mxu0
        %6167 = vmatprep.mubr.f32.mxu0 %v6021
        %6168 = vmatmul.mubr.f32.gmra.mrb[0].mxu0 %v5266
        %v6169 = vpop.f32.mrb[0].mxu0
        %v6170 = vadd.f32 %v5865, %v6169
        %v6171 = vpop.f32.mrb[0].mxu0
        %6172 = vmatprep.mubr.f32.mxu0 %v6024
        %6173 = vmatmul.mubr.f32.gmra.mrb[0].mxu0 %v5268
        %v6174 = vpop.f32.mrb[0].mxu0
        %v6175 = vadd.f32 %v5870, %v6174
        %v6176 = vpop.f32.mrb[0].mxu0
        %6177 = vmatprep.mubr.f32.mxu0 %v6026
        %6178 = vmatmul.mubr.f32.gmra.mrb[0].mxu0 %v5270
        %v6179 = vpop.f32.mrb[0].mxu0
        %v6180 = vadd.f32 %v5875, %v6179
        %v6181 = vpop.f32.mrb[0].mxu0
        %6182 = vmatprep.mubr.f32.mxu0 %v6029
        %6183 = vmatmul.mubr.f32.gmra.mrb[0].mxu0 %v5272
        %v6184 = vpop.f32.mrb[0].mxu0
        %v6185 = vadd.f32 %v5880, %v6184
        %v6186 = vpop.f32.mrb[0].mxu0
        %6187 = vmatprep.mubr.f32.mxu0 %v6031
        %6188 = vmatmul.mubr.f32.gmra.mrb[0].mxu0 %v5274
        %v6189 = vpop.f32.mrb[0].mxu0
        %v6190 = vadd.f32 %v5885, %v6189
        %v6191 = vpop.f32.mrb[0].mxu0
        %6192 = vmatprep.mubr.f32.mxu0 %v6034
        %6193 = vmatmul.mubr.f32.gmra.mrb[0].mxu0 %v5276
        %v6194 = vpop.f32.mrb[0].mxu0
        %v6195 = vadd.f32 %v5890, %v6194
        %v6196 = vpop.f32.mrb[0].mxu0
        %6197 = vmatprep.mubr.f32.mxu0 %v6036
        %6198 = vmatmul.mubr.f32.gmra.mrb[0].mxu0 %v5278
        %v6199 = vpop.f32.mrb[0].mxu0
        %v6200 = vadd.f32 %v5895, %v6199
        %v6201 = vpop.f32.mrb[0].mxu0
        %6202 = vmatprep.mubr.f32.mxu0 %v6039
        %6203 = vmatmul.mubr.f32.gmra.mrb[0].mxu0 %v5280
        %v6204 = vpop.f32.mrb[0].mxu0
        %v6205 = vadd.f32 %v5900, %v6204
        %v6206 = vpop.f32.mrb[0].mxu0
        %6207 = vmatprep.mubr.f32.mxu0 %v6041
        %6208 = vmatmul.mubr.f32.gmra.mrb[0].mxu0 %v5282
        %v6209 = vpop.f32.mrb[0].mxu0
        %v6210 = vadd.f32 %v5905, %v6209
        %v6211 = vpop.f32.mrb[0].mxu0
        %6212 = vmatprep.mubr.f32.mxu0 %v6044
        %6213 = vmatmul.mubr.f32.gmra.mrb[0].mxu0 %v5284
        %v6214 = vpop.f32.mrb[0].mxu0
        %v6215 = vadd.f32 %v5910, %v6214
        %v6216 = vpop.f32.mrb[0].mxu0
        %6217 = vmatprep.mubr.f32.mxu0 %v6046
        %6218 = vmatmul.mubr.f32.gmra.mrb[0].mxu0 %v5286
        %v6219 = vpop.f32.mrb[0].mxu0
        %v6220 = vadd.f32 %v5915, %v6219
        %v6221 = vpop.f32.mrb[0].mxu0
        %6222 = vmatprep.mubr.f32.mxu0 %v6049
        %6223 = vmatmul.mubr.f32.gmra.mrb[0].mxu0 %v5288
        %v6224 = vpop.f32.mrb[0].mxu0
        %v6225 = vadd.f32 %v5920, %v6224
        %v6226 = vpop.f32.mrb[0].mxu0
        %6227 = vmatprep.mubr.f32.mxu0 %v6051
        %6228 = vmatmul.mubr.f32.gmra.mrb[0].mxu0 %v5290
        %v6229 = vpop.f32.mrb[0].mxu0
        %v6230 = vadd.f32 %v5925, %v6229
        %v6231 = vpop.f32.mrb[0].mxu0
        %6232 = vmatprep.mubr.f32.mxu0 %v6054
        %6233 = vmatmul.mubr.f32.gmra.mrb[0].mxu0 %v5292
        %v6234 = vpop.f32.mrb[0].mxu0
        %v6235 = vadd.f32 %v5930, %v6234
        %v6236 = vpop.f32.mrb[0].mxu0
        %6237 = vmatprep.mubr.f32.mxu0 %v6056
        %6238 = vmatmul.mubr.f32.gmra.mrb[0].mxu0 %v5294
        %v6239 = vpop.f32.mrb[0].mxu0
        %v6240 = vadd.f32 %v5935, %v6239
        %v6241 = vpop.f32.mrb[0].mxu0
        %6242 = vmatprep.mubr.f32.mxu0 %v6059
        %6243 = vmatmul.mubr.f32.gmra.mrb[0].mxu0 %v5296
        %v6244 = vpop.f32.mrb[0].mxu0
        %v6245 = vadd.f32 %v5940, %v6244
        %v6246 = vpop.f32.mrb[0].mxu0
        %6247 = vmatprep.mubr.f32.mxu0 %v6061
        %6248 = vmatmul.mubr.f32.gmra.mrb[0].mxu0 %v5298
        %v6249 = vpop.f32.mrb[0].mxu0
        %v6250 = vadd.f32 %v5945, %v6249
        %v6251 = vpop.f32.mrb[0].mxu0
        %6252 = vmatprep.mubr.f32.mxu0 %v6064
        %6253 = vmatmul.mubr.f32.gmra.mrb[0].mxu0 %v5300
        %v6254 = vpop.f32.mrb[0].mxu0
        %v6255 = vadd.f32 %v5950, %v6254
        %v6256 = vpop.f32.mrb[0].mxu0
        %6257 = vmatprep.mubr.f32.mxu0 %v6066
        %6258 = vmatmul.mubr.f32.gmra.mrb[0].mxu0 %v5302
        %v6259 = vpop.f32.mrb[0].mxu0
        %v6260 = vadd.f32 %v5955, %v6259
        %v6261 = vpop.f32.mrb[0].mxu0
        %6262 = vmatprep.mubr.f32.mxu0 %v6069
        %6263 = vmatmul.mubr.f32.gmra.mrb[0].mxu0 %v5304
        %v6264 = vpop.f32.mrb[0].mxu0
        %v6265 = vadd.f32 %v5960, %v6264
        %v6266 = vpop.f32.mrb[0].mxu0
        %6267 = vmatprep.mubr.f32.mxu0 %v6071
        %6268 = vmatmul.mubr.f32.gmra.mrb[0].mxu0 %v5306
        %v6269 = vpop.f32.mrb[0].mxu0
        %v6270 = vadd.f32 %v5965, %v6269
        %v6271 = vpop.f32.mrb[0].mxu0
        %6272 = vmatprep.mubr.f32.mxu0 %v6074
        %6273 = vmatmul.mubr.f32.gmra.mrb[0].mxu0 %v5308
        %v6274 = vpop.f32.mrb[0].mxu0
        %v6275 = vadd.f32 %v5970, %v6274
        %v6276 = vpop.f32.mrb[0].mxu0
        %6277 = vmatprep.mubr.f32.mxu0 %v6076
        %6278 = vmatmul.mubr.f32.gmra.mrb[0].mxu0 %v5310
        %v6279 = vpop.f32.mrb[0].mxu0
        %v6280 = vadd.f32 %v5975, %v6279
        %v6281 = vpop.f32.mrb[0].mxu0
        %6282 = vmatprep.mubr.f32.mxu0 %v6079
        %6283 = vmatmul.mubr.f32.gmra.mrb[0].mxu0 %v5312
        %v6284 = vpop.f32.mrb[0].mxu0
        %v6285 = vadd.f32 %v5980, %v6284
        %v6286 = vpop.f32.mrb[0].mxu0
        %6287 = vmatprep.mubr.f32.mxu0 %v6081
        %6288 = vmatmul.mubr.f32.gmra.mrb[0].mxu0 %v5314
        %v6289 = vpop.f32.mrb[0].mxu0
        %v6290 = vadd.f32 %v5985, %v6289
        %v6291 = vpop.f32.mrb[0].mxu0
        %6292 = vmatprep.mubr.f32.mxu0 %v6084
        %6293 = vmatmul.mubr.f32.gmra.mrb[0].mxu0 %v5316
        %v6294 = vpop.f32.mrb[0].mxu0
        %v6295 = vadd.f32 %v5990, %v6294
        %v6296 = vpop.f32.mrb[0].mxu0
        %6297 = vmatprep.mubr.f32.mxu0 %v6086
        %6298 = vmatmul.mubr.f32.gmra.mrb[0].mxu0 %v5318
        %v6299 = vpop.f32.mrb[0].mxu0
        %v6300 = vadd.f32 %v5995, %v6299
        %v6301 = vpop.f32.mrb[0].mxu0
        %6302 = vmatprep.mubr.f32.mxu0 %v6089
        %6303 = vmatmul.mubr.f32.gmra.mrb[0].mxu0 %v5320
        %v6304 = vpop.f32.mrb[0].mxu0
        %v6305 = vadd.f32 %v6000, %v6304
        %v6306 = vpop.f32.mrb[0].mxu0
        %6307 = vmatprep.mubr.f32.mxu0 %v6091
        %6308 = vmatmul.mubr.f32.gmra.mrb[0].mxu0 %v5322
        %v6309 = vpop.f32.mrb[0].mxu0
        %v6310 = vadd.f32 %v6005, %v6309
        %v6311 = vpop.f32.mrb[0].mxu0
        %6312 = vmatprep.mubr.f32.mxu0 %v6094
        %6313 = vmatmul.mubr.f32.gmra.mrb[0].mxu0 %v5324
        %v6314 = vpop.f32.mrb[0].mxu0
        %v6315 = vadd.f32 %v6010, %v6314
        %v6316 = vpop.f32.mrb[0].mxu0
        %6317 = vmatprep.mubr.f32.mxu0 %v6096
        %6318 = vmatmul.mubr.f32.gmra.mrb[0].mxu0 %v5326
        %v6319 = vpop.f32.mrb[0].mxu0
        %v6320 = vadd.f32 %v6015, %v6319
        %v6321 = vpop.f32.mrb[0].mxu0
        %6322 = vdwg.mxu0
        %v6323 = vld [vmem:[#allocation6] sm:$0xfc]
        %v6324 = vld [vmem:[#allocation6 + $0x8] sm:$0xfc]
        %v6325 = vld [vmem:[#allocation6 + $0x20] sm:$0x3]
        %v6326 = vld [vmem:[#allocation6 + $0x28] sm:$0x3]
        %v6327 = vld [vmem:[#allocation6 + $0x30] sm:$0xfc]
        %v6328 = vld [vmem:[#allocation6 + $0x38] sm:$0xfc]
        %v6329 = vld [vmem:[#allocation6 + $0x50] sm:$0x3]
        %v6330 = vld [vmem:[#allocation6 + $0x58] sm:$0x3]
        %v6331 = vld [vmem:[#allocation6 + $0x60] sm:$0xfc]
        %v6332 = vld [vmem:[#allocation6 + $0x68] sm:$0xfc]
        %v6333 = vld [vmem:[#allocation6 + $0x80] sm:$0x3]
        %v6334 = vld [vmem:[#allocation6 + $0x88] sm:$0x3]
        %v6335 = vld [vmem:[#allocation6 + $0x90] sm:$0xfc]
        %v6336 = vld [vmem:[#allocation6 + $0x98] sm:$0xfc]
        %v6337 = vld [vmem:[#allocation6 + $0xb0] sm:$0x3]
        %v6338 = vld [vmem:[#allocation6 + $0xb8] sm:$0x3]
        %v6339 = vld [vmem:[#allocation6 + $0xc0] sm:$0xfc]
        %v6340 = vld [vmem:[#allocation6 + $0xc8] sm:$0xfc]
        %v6341 = vld [vmem:[#allocation6 + $0xe0] sm:$0x3]
        %v6342 = vld [vmem:[#allocation6 + $0xe8] sm:$0x3]
        %v6343 = vld [vmem:[#allocation6 + $0xf0] sm:$0xfc]
        %v6344 = vld [vmem:[#allocation6 + $0xf8] sm:$0xfc]
        %v6345 = vld [vmem:[#allocation6 + $0x110] sm:$0x3]
        %v6346 = vld [vmem:[#allocation6 + $0x118] sm:$0x3]
        %v6347 = vld [vmem:[#allocation6 + $0x120] sm:$0xfc]
        %v6348 = vld [vmem:[#allocation6 + $0x128] sm:$0xfc]
        %v6349 = vld [vmem:[#allocation6 + $0x140] sm:$0x3]
        %v6350 = vld [vmem:[#allocation6 + $0x148] sm:$0x3]
        %v6351 = vld [vmem:[#allocation6 + $0x150] sm:$0xfc]
        %v6352 = vld [vmem:[#allocation6 + $0x158] sm:$0xfc]
        %v6353 = vld [vmem:[#allocation6 + $0x170] sm:$0x3]
        %v6354 = vld [vmem:[#allocation6 + $0x178] sm:$0x3]
        %v6355 = vld [vmem:[#allocation6 + $0x180] sm:$0xfc]
        %v6356 = vld [vmem:[#allocation6 + $0x188] sm:$0xfc]
        %v6357 = vld [vmem:[#allocation6 + $0x1a0] sm:$0x3]
        %v6358 = vld [vmem:[#allocation6 + $0x1a8] sm:$0x3]
        %v6359 = vld [vmem:[#allocation6 + $0x1b0] sm:$0xfc]
        %v6360 = vld [vmem:[#allocation6 + $0x1b8] sm:$0xfc]
        %v6361 = vld [vmem:[#allocation6 + $0x1d0] sm:$0x3]
        %v6362 = vld [vmem:[#allocation6 + $0x1d8] sm:$0x3]
        %v6363 = vld [vmem:[#allocation6 + $0x1e0] sm:$0xfc]
        %v6364 = vld [vmem:[#allocation6 + $0x1e8] sm:$0xfc]
        %v6365 = vld [vmem:[#allocation6 + $0x200] sm:$0x3]
        %v6366 = vld [vmem:[#allocation6 + $0x208] sm:$0x3]
        %v6367 = vld [vmem:[#allocation6 + $0x210] sm:$0xfc]
        %v6368 = vld [vmem:[#allocation6 + $0x218] sm:$0xfc]
        %v6369 = vld [vmem:[#allocation6 + $0x230] sm:$0x3]
        %v6370 = vld [vmem:[#allocation6 + $0x238] sm:$0x3]
        %v6371 = vld [vmem:[#allocation6 + $0x240] sm:$0xfc]
        %v6372 = vld [vmem:[#allocation6 + $0x248] sm:$0xfc]
        %v6373 = vld [vmem:[#allocation6 + $0x260] sm:$0x3]
        %v6374 = vld [vmem:[#allocation6 + $0x268] sm:$0x3]
        %v6375 = vld [vmem:[#allocation6 + $0x270] sm:$0xfc]
        %v6376 = vld [vmem:[#allocation6 + $0x278] sm:$0xfc]
        %v6377 = vld [vmem:[#allocation6 + $0x290] sm:$0x3]
        %v6378 = vld [vmem:[#allocation6 + $0x298] sm:$0x3]
        %v6379 = vld [vmem:[#allocation6 + $0x2a0] sm:$0xfc]
        %v6380 = vld [vmem:[#allocation6 + $0x2a8] sm:$0xfc]
        %v6381 = vld [vmem:[#allocation6 + $0x2c0] sm:$0x3]
        %v6382 = vld [vmem:[#allocation6 + $0x2c8] sm:$0x3]
        %v6383 = vld [vmem:[#allocation6 + $0x2d0] sm:$0xfc]
        %v6384 = vld [vmem:[#allocation6 + $0x2d8] sm:$0xfc]
        %v6385 = vld [vmem:[#allocation6 + $0x2f0] sm:$0x3]
        %v6386 = vld [vmem:[#allocation6 + $0x2f8] sm:$0x3]
        %vm6451 = vcmask 1045504
        %v6452 = vrot.slane %v6323, 2
        %v6453 = vrot.slane %v5266, 2
        %v6454 = vsel %vm6451, %v6452, %v6453
        %v6455 = vrot.slane %v6324, 2
        %v6456 = vrot.slane %v5267, 2
        %v6457 = vsel %vm6451, %v6455, %v6456
        %v6458 = vrot.slane %v6325, 2
        %v6459 = vsel %vm6451, %v6453, %v6458
        %v6460 = vrot.slane %v6326, 2
        %v6461 = vsel %vm6451, %v6456, %v6460
        %v6462 = vrot.slane %v6327, 2
        %v6463 = vrot.slane %v5270, 2
        %v6464 = vsel %vm6451, %v6462, %v6463
        %v6465 = vrot.slane %v6328, 2
        %v6466 = vrot.slane %v5271, 2
        %v6467 = vsel %vm6451, %v6465, %v6466
        %v6468 = vrot.slane %v6329, 2
        %v6469 = vsel %vm6451, %v6463, %v6468
        %v6470 = vrot.slane %v6330, 2
        %v6471 = vsel %vm6451, %v6466, %v6470
        %v6472 = vrot.slane %v6331, 2
        %v6473 = vrot.slane %v5274, 2
        %v6474 = vsel %vm6451, %v6472, %v6473
        %v6475 = vrot.slane %v6332, 2
        %v6476 = vrot.slane %v5275, 2
        %v6477 = vsel %vm6451, %v6475, %v6476
        %v6478 = vrot.slane %v6333, 2
        %v6479 = vsel %vm6451, %v6473, %v6478
        %v6480 = vrot.slane %v6334, 2
        %v6481 = vsel %vm6451, %v6476, %v6480
        %v6482 = vrot.slane %v6335, 2
        %v6483 = vrot.slane %v5278, 2
        %v6484 = vsel %vm6451, %v6482, %v6483
        %v6485 = vrot.slane %v6336, 2
        %v6486 = vrot.slane %v5279, 2
        %v6487 = vsel %vm6451, %v6485, %v6486
        %v6488 = vrot.slane %v6337, 2
        %v6489 = vsel %vm6451, %v6483, %v6488
        %v6490 = vrot.slane %v6338, 2
        %v6491 = vsel %vm6451, %v6486, %v6490
        %v6492 = vrot.slane %v6339, 2
        %v6493 = vrot.slane %v5282, 2
        %v6494 = vsel %vm6451, %v6492, %v6493
        %v6495 = vrot.slane %v6340, 2
        %v6496 = vrot.slane %v5283, 2
        %v6497 = vsel %vm6451, %v6495, %v6496
        %v6498 = vrot.slane %v6341, 2
        %v6499 = vsel %vm6451, %v6493, %v6498
        %v6500 = vrot.slane %v6342, 2
        %v6501 = vsel %vm6451, %v6496, %v6500
        %v6502 = vrot.slane %v6343, 2
        %v6503 = vrot.slane %v5286, 2
        %v6504 = vsel %vm6451, %v6502, %v6503
        %v6505 = vrot.slane %v6344, 2
        %v6506 = vrot.slane %v5287, 2
        %v6507 = vsel %vm6451, %v6505, %v6506
        %v6508 = vrot.slane %v6345, 2
        %v6509 = vsel %vm6451, %v6503, %v6508
        %v6510 = vrot.slane %v6346, 2
        %v6511 = vsel %vm6451, %v6506, %v6510
        %v6512 = vrot.slane %v6347, 2
        %v6513 = vrot.slane %v5290, 2
        %v6514 = vsel %vm6451, %v6512, %v6513
        %v6515 = vrot.slane %v6348, 2
        %v6516 = vrot.slane %v5291, 2
        %v6517 = vsel %vm6451, %v6515, %v6516
        %v6518 = vrot.slane %v6349, 2
        %v6519 = vsel %vm6451, %v6513, %v6518
        %v6520 = vrot.slane %v6350, 2
        %v6521 = vsel %vm6451, %v6516, %v6520
        %v6522 = vrot.slane %v6351, 2
        %v6523 = vrot.slane %v5294, 2
        %v6524 = vsel %vm6451, %v6522, %v6523
        %v6525 = vrot.slane %v6352, 2
        %v6526 = vrot.slane %v5295, 2
        %v6527 = vsel %vm6451, %v6525, %v6526
        %v6528 = vrot.slane %v6353, 2
        %v6529 = vsel %vm6451, %v6523, %v6528
        %v6530 = vrot.slane %v6354, 2
        %v6531 = vsel %vm6451, %v6526, %v6530
        %v6532 = vrot.slane %v6355, 2
        %v6533 = vrot.slane %v5298, 2
        %v6534 = vsel %vm6451, %v6532, %v6533
        %v6535 = vrot.slane %v6356, 2
        %v6536 = vrot.slane %v5299, 2
        %v6537 = vsel %vm6451, %v6535, %v6536
        %v6538 = vrot.slane %v6357, 2
        %v6539 = vsel %vm6451, %v6533, %v6538
        %v6540 = vrot.slane %v6358, 2
        %v6541 = vsel %vm6451, %v6536, %v6540
        %v6542 = vrot.slane %v6359, 2
        %v6543 = vrot.slane %v5302, 2
        %v6544 = vsel %vm6451, %v6542, %v6543
        %v6545 = vrot.slane %v6360, 2
        %v6546 = vrot.slane %v5303, 2
        %v6547 = vsel %vm6451, %v6545, %v6546
        %v6548 = vrot.slane %v6361, 2
        %v6549 = vsel %vm6451, %v6543, %v6548
        %v6550 = vrot.slane %v6362, 2
        %v6551 = vsel %vm6451, %v6546, %v6550
        %v6552 = vrot.slane %v6363, 2
        %v6553 = vrot.slane %v5306, 2
        %v6554 = vsel %vm6451, %v6552, %v6553
        %v6555 = vrot.slane %v6364, 2
        %v6556 = vrot.slane %v5307, 2
        %v6557 = vsel %vm6451, %v6555, %v6556
        %v6558 = vrot.slane %v6365, 2
        %v6559 = vsel %vm6451, %v6553, %v6558
        %v6560 = vrot.slane %v6366, 2
        %v6561 = vsel %vm6451, %v6556, %v6560
        %v6562 = vrot.slane %v6367, 2
        %v6563 = vrot.slane %v5310, 2
        %v6564 = vsel %vm6451, %v6562, %v6563
        %v6565 = vrot.slane %v6368, 2
        %v6566 = vrot.slane %v5311, 2
        %v6567 = vsel %vm6451, %v6565, %v6566
        %v6568 = vrot.slane %v6369, 2
        %v6569 = vsel %vm6451, %v6563, %v6568
        %v6570 = vrot.slane %v6370, 2
        %v6571 = vsel %vm6451, %v6566, %v6570
        %v6572 = vrot.slane %v6371, 2
        %v6573 = vrot.slane %v5314, 2
        %v6574 = vsel %vm6451, %v6572, %v6573
        %v6575 = vrot.slane %v6372, 2
        %v6576 = vrot.slane %v5315, 2
        %v6577 = vsel %vm6451, %v6575, %v6576
        %v6578 = vrot.slane %v6373, 2
        %v6579 = vsel %vm6451, %v6573, %v6578
        %v6580 = vrot.slane %v6374, 2
        %v6581 = vsel %vm6451, %v6576, %v6580
        %v6582 = vrot.slane %v6375, 2
        %v6583 = vrot.slane %v5318, 2
        %v6584 = vsel %vm6451, %v6582, %v6583
        %v6585 = vrot.slane %v6376, 2
        %v6586 = vrot.slane %v5319, 2
        %v6587 = vsel %vm6451, %v6585, %v6586
        %v6588 = vrot.slane %v6377, 2
        %v6589 = vsel %vm6451, %v6583, %v6588
        %v6590 = vrot.slane %v6378, 2
        %v6591 = vsel %vm6451, %v6586, %v6590
        %v6592 = vrot.slane %v6379, 2
        %v6593 = vrot.slane %v5322, 2
        %v6594 = vsel %vm6451, %v6592, %v6593
        %v6595 = vrot.slane %v6380, 2
        %v6596 = vrot.slane %v5323, 2
        %v6597 = vsel %vm6451, %v6595, %v6596
        %v6598 = vrot.slane %v6381, 2
        %v6599 = vsel %vm6451, %v6593, %v6598
        %v6600 = vrot.slane %v6382, 2
        %v6601 = vsel %vm6451, %v6596, %v6600
        %v6602 = vrot.slane %v6383, 2
        %v6603 = vrot.slane %v5326, 2
        %v6604 = vsel %vm6451, %v6602, %v6603
        %v6605 = vrot.slane %v6384, 2
        %v6606 = vrot.slane %v5327, 2
        %v6607 = vsel %vm6451, %v6605, %v6606
        %v6608 = vrot.slane %v6385, 2
        %v6609 = vsel %vm6451, %v6603, %v6608
        %v6610 = vrot.slane %v6386, 2
        %v6611 = vsel %vm6451, %v6606, %v6610
        %v6644 = vld [vmem:[#allocation12 + $0x180] sm:$0xff]
        %v6645 = vld [vmem:[#allocation12 + $0x188] sm:$0xff]
        %v6646 = vld [vmem:[#allocation12 + $0x190] sm:$0xff]
        %v6647 = vld [vmem:[#allocation12 + $0x198] sm:$0xff]
        %v6648 = vld [vmem:[#allocation12 + $0x1a0] sm:$0xff]
        %v6649 = vld [vmem:[#allocation12 + $0x1a8] sm:$0xff]
        %v6650 = vld [vmem:[#allocation12 + $0x1b0] sm:$0xff]
        %v6651 = vld [vmem:[#allocation12 + $0x1b8] sm:$0xff]
        %v6652 = vld [vmem:[#allocation12 + $0x1c0] sm:$0xff]
        %v6653 = vld [vmem:[#allocation12 + $0x1c8] sm:$0xff]
        %v6654 = vld [vmem:[#allocation12 + $0x1d0] sm:$0xff]
        %v6655 = vld [vmem:[#allocation12 + $0x1d8] sm:$0xff]
        %v6656 = vld [vmem:[#allocation12 + $0x1e0] sm:$0xff]
        %v6657 = vld [vmem:[#allocation12 + $0x1e8] sm:$0xff]
        %v6658 = vld [vmem:[#allocation12 + $0x1f0] sm:$0xff]
        %v6659 = vld [vmem:[#allocation12 + $0x1f8] sm:$0xff]
        %v6660 = vld [vmem:[#allocation12 + $0x200] sm:$0xff]
        %v6661 = vld [vmem:[#allocation12 + $0x208] sm:$0xff]
        %v6662 = vld [vmem:[#allocation12 + $0x210] sm:$0xff]
        %v6663 = vld [vmem:[#allocation12 + $0x218] sm:$0xff]
        %v6664 = vld [vmem:[#allocation12 + $0x220] sm:$0xff]
        %v6665 = vld [vmem:[#allocation12 + $0x228] sm:$0xff]
        %v6666 = vld [vmem:[#allocation12 + $0x230] sm:$0xff]
        %v6667 = vld [vmem:[#allocation12 + $0x238] sm:$0xff]
        %v6668 = vsel %vm4799, %v6457, 0
        %v6670 = vsel %vm4799, %v6461, 0
        %v6672 = vsel %vm4799, %v6467, 0
        %v6674 = vsel %vm4799, %v6471, 0
        %v6676 = vsel %vm4799, %v6477, 0
        %v6678 = vsel %vm4799, %v6481, 0
        %v6680 = vsel %vm4799, %v6487, 0
        %v6682 = vsel %vm4799, %v6491, 0
        %v6684 = vsel %vm4799, %v6497, 0
        %v6686 = vsel %vm4799, %v6501, 0
        %v6688 = vsel %vm4799, %v6507, 0
        %v6690 = vsel %vm4799, %v6511, 0
        %v6692 = vsel %vm4799, %v6517, 0
        %v6694 = vsel %vm4799, %v6521, 0
        %v6696 = vsel %vm4799, %v6527, 0
        %v6698 = vsel %vm4799, %v6531, 0
        %v6700 = vsel %vm4799, %v6537, 0
        %v6702 = vsel %vm4799, %v6541, 0
        %v6704 = vsel %vm4799, %v6547, 0
        %v6706 = vsel %vm4799, %v6551, 0
        %v6708 = vsel %vm4799, %v6557, 0
        %v6710 = vsel %vm4799, %v6561, 0
        %v6712 = vsel %vm4799, %v6567, 0
        %v6714 = vsel %vm4799, %v6571, 0
        %v6716 = vsel %vm4799, %v6577, 0
        %v6718 = vsel %vm4799, %v6581, 0
        %v6720 = vsel %vm4799, %v6587, 0
        %v6722 = vsel %vm4799, %v6591, 0
        %v6724 = vsel %vm4799, %v6597, 0
        %v6726 = vsel %vm4799, %v6601, 0
        %v6728 = vsel %vm4799, %v6607, 0
        %v6730 = vsel %vm4799, %v6611, 0
        %6732 = vmatprep.subr.mxu0 0.0
        %6733 = vmatpush1.msra.mxu0 %v6644
        %6734 = vmatprep.subr.mxu0 0.0
        %6735 = vmatpush1.msra.mxu0 %v6645
        %6736 = vmatprep.subr.mxu0 0.0
        %6737 = vmatpush1.msra.mxu0 %v6646
        %6738 = vmatprep.subr.mxu0 0.0
        %6739 = vmatpush1.msra.mxu0 %v6647
        %6740 = vmatprep.subr.mxu0 0.0
        %6741 = vmatpush1.msra.mxu0 %v6648
        %6742 = vmatprep.subr.mxu0 0.0
        %6743 = vmatpush1.msra.mxu0 %v6649
        %6744 = vmatprep.subr.mxu0 0.0
        %6745 = vmatpush1.msra.mxu0 %v6650
        %6746 = vmatprep.subr.mxu0 0.0
        %6747 = vmatpush1.msra.mxu0 %v6651
        %6748 = vmatprep.subr.mxu0 0.0
        %6749 = vmatpush1.msra.mxu0 %v6652
        %6750 = vmatprep.subr.mxu0 0.0
        %6751 = vmatpush1.msra.mxu0 %v6653
        %6752 = vmatprep.subr.mxu0 0.0
        %6753 = vmatpush1.msra.mxu0 %v6654
        %6754 = vmatprep.subr.mxu0 0.0
        %6755 = vmatpush1.msra.mxu0 %v6655
        %6756 = vmatprep.subr.mxu0 0.0
        %6757 = vmatpush1.msra.mxu0 %v6656
        %6758 = vmatprep.subr.mxu0 0.0
        %6759 = vmatpush1.msra.mxu0 %v6657
        %6760 = vmatprep.subr.mxu0 0.0
        %6761 = vmatpush1.msra.mxu0 %v6658
        %6762 = vmatprep.subr.mxu0 0.0
        %6763 = vmatpush1.msra.mxu0 %v6659
        %6764 = vmatprep.subr.mxu0 0.0
        %6765 = vmatpush1.msra.mxu0 %v6660
        %6766 = vmatprep.subr.mxu0 0.0
        %6767 = vmatpush1.msra.mxu0 %v6661
        %6768 = vmatprep.subr.mxu0 0.0
        %6769 = vmatpush1.msra.mxu0 %v6662
        %6770 = vmatprep.subr.mxu0 0.0
        %6771 = vmatpush1.msra.mxu0 %v6663
        %6772 = vmatprep.subr.mxu0 0.0
        %6773 = vmatpush1.msra.mxu0 %v6664
        %6774 = vmatprep.subr.mxu0 0.0
        %6775 = vmatpush1.msra.mxu0 %v6665
        %6776 = vmatprep.subr.mxu0 0.0
        %6777 = vmatpush1.msra.mxu0 %v6666
        %6778 = vmatprep.subr.mxu0 0.0
        %6779 = vmatpush1.msra.mxu0 %v6667
        %6780 = vmatprep.subr.mxu0 0.0
        %6781 = vmatpush1.msra.mxu0 0.0
        %6782 = vmatprep.subr.mxu0 0.0
        %6783 = vmatpush1.msra.mxu0 0.0
        %6784 = vmatprep.subr.mxu0 0.0
        %6785 = vmatpush1.msra.mxu0 0.0
        %6786 = vmatprep.subr.mxu0 0.0
        %6787 = vmatpush1.msra.mxu0 0.0
        %6788 = vmatprep.subr.mxu0 0.0
        %6789 = vmatpush1.msra.mxu0 0.0
        %6790 = vmatprep.subr.mxu0 0.0
        %6791 = vmatpush1.msra.mxu0 0.0
        %6792 = vmatprep.subr.mxu0 0.0
        %6793 = vmatpush1.msra.mxu0 0.0
        %6794 = vmatprep.subr.mxu0 0.0
        %6795 = vmatpush1.msra.mxu0 0.0
        %6796 = vmatprep.mubr.f32.mxu0 %v6668
        %6797 = vmatmul.mubr.f32.gmra.mrb[0].mxu0 %v6454
        %v6798 = vpop.f32.mrb[0].mxu0
        %v6799 = vadd.f32 0.0, %v6798
        %v6800 = vpop.f32.mrb[0].mxu0
        %6801 = vmatprep.mubr.f32.mxu0 %v6670
        %6802 = vmatmul.mubr.f32.gmra.mrb[0].mxu0 %v6459
        %v6803 = vpop.f32.mrb[0].mxu0
        %v6804 = vadd.f32 0.0, %v6803
        %v6805 = vpop.f32.mrb[0].mxu0
        %6806 = vmatprep.mubr.f32.mxu0 %v6672
        %6807 = vmatmul.mubr.f32.gmra.mrb[0].mxu0 %v6464
        %v6808 = vpop.f32.mrb[0].mxu0
        %v6809 = vadd.f32 0.0, %v6808
        %v6810 = vpop.f32.mrb[0].mxu0
        %6811 = vmatprep.mubr.f32.mxu0 %v6674
        %6812 = vmatmul.mubr.f32.gmra.mrb[0].mxu0 %v6469
        %v6813 = vpop.f32.mrb[0].mxu0
        %v6814 = vadd.f32 0.0, %v6813
        %v6815 = vpop.f32.mrb[0].mxu0
        %6816 = vmatprep.mubr.f32.mxu0 %v6676
        %6817 = vmatmul.mubr.f32.gmra.mrb[0].mxu0 %v6474
        %v6818 = vpop.f32.mrb[0].mxu0
        %v6819 = vadd.f32 0.0, %v6818
        %v6820 = vpop.f32.mrb[0].mxu0
        %6821 = vmatprep.mubr.f32.mxu0 %v6678
        %6822 = vmatmul.mubr.f32.gmra.mrb[0].mxu0 %v6479
        %v6823 = vpop.f32.mrb[0].mxu0
        %v6824 = vadd.f32 0.0, %v6823
        %v6825 = vpop.f32.mrb[0].mxu0
        %6826 = vmatprep.mubr.f32.mxu0 %v6680
        %6827 = vmatmul.mubr.f32.gmra.mrb[0].mxu0 %v6484
        %v6828 = vpop.f32.mrb[0].mxu0
        %v6829 = vadd.f32 0.0, %v6828
        %v6830 = vpop.f32.mrb[0].mxu0
        %6831 = vmatprep.mubr.f32.mxu0 %v6682
        %6832 = vmatmul.mubr.f32.gmra.mrb[0].mxu0 %v6489
        %v6833 = vpop.f32.mrb[0].mxu0
        %v6834 = vadd.f32 0.0, %v6833
        %v6835 = vpop.f32.mrb[0].mxu0
        %6836 = vmatprep.mubr.f32.mxu0 %v6684
        %6837 = vmatmul.mubr.f32.gmra.mrb[0].mxu0 %v6494
        %v6838 = vpop.f32.mrb[0].mxu0
        %v6839 = vadd.f32 0.0, %v6838
        %v6840 = vpop.f32.mrb[0].mxu0
        %6841 = vmatprep.mubr.f32.mxu0 %v6686
        %6842 = vmatmul.mubr.f32.gmra.mrb[0].mxu0 %v6499
        %v6843 = vpop.f32.mrb[0].mxu0
        %v6844 = vadd.f32 0.0, %v6843
        %v6845 = vpop.f32.mrb[0].mxu0
        %6846 = vmatprep.mubr.f32.mxu0 %v6688
        %6847 = vmatmul.mubr.f32.gmra.mrb[0].mxu0 %v6504
        %v6848 = vpop.f32.mrb[0].mxu0
        %v6849 = vadd.f32 0.0, %v6848
        %v6850 = vpop.f32.mrb[0].mxu0
        %6851 = vmatprep.mubr.f32.mxu0 %v6690
        %6852 = vmatmul.mubr.f32.gmra.mrb[0].mxu0 %v6509
        %v6853 = vpop.f32.mrb[0].mxu0
        %v6854 = vadd.f32 0.0, %v6853
        %v6855 = vpop.f32.mrb[0].mxu0
        %6856 = vmatprep.mubr.f32.mxu0 %v6692
        %6857 = vmatmul.mubr.f32.gmra.mrb[0].mxu0 %v6514
        %v6858 = vpop.f32.mrb[0].mxu0
        %v6859 = vadd.f32 0.0, %v6858
        %v6860 = vpop.f32.mrb[0].mxu0
        %6861 = vmatprep.mubr.f32.mxu0 %v6694
        %6862 = vmatmul.mubr.f32.gmra.mrb[0].mxu0 %v6519
        %v6863 = vpop.f32.mrb[0].mxu0
        %v6864 = vadd.f32 0.0, %v6863
        %v6865 = vpop.f32.mrb[0].mxu0
        %6866 = vmatprep.mubr.f32.mxu0 %v6696
        %6867 = vmatmul.mubr.f32.gmra.mrb[0].mxu0 %v6524
        %v6868 = vpop.f32.mrb[0].mxu0
        %v6869 = vadd.f32 0.0, %v6868
        %v6870 = vpop.f32.mrb[0].mxu0
        %6871 = vmatprep.mubr.f32.mxu0 %v6698
        %6872 = vmatmul.mubr.f32.gmra.mrb[0].mxu0 %v6529
        %v6873 = vpop.f32.mrb[0].mxu0
        %v6874 = vadd.f32 0.0, %v6873
        %v6875 = vpop.f32.mrb[0].mxu0
        %6876 = vmatprep.mubr.f32.mxu0 %v6700
        %6877 = vmatmul.mubr.f32.gmra.mrb[0].mxu0 %v6534
        %v6878 = vpop.f32.mrb[0].mxu0
        %v6879 = vadd.f32 0.0, %v6878
        %v6880 = vpop.f32.mrb[0].mxu0
        %6881 = vmatprep.mubr.f32.mxu0 %v6702
        %6882 = vmatmul.mubr.f32.gmra.mrb[0].mxu0 %v6539
        %v6883 = vpop.f32.mrb[0].mxu0
        %v6884 = vadd.f32 0.0, %v6883
        %v6885 = vpop.f32.mrb[0].mxu0
        %6886 = vmatprep.mubr.f32.mxu0 %v6704
        %6887 = vmatmul.mubr.f32.gmra.mrb[0].mxu0 %v6544
        %v6888 = vpop.f32.mrb[0].mxu0
        %v6889 = vadd.f32 0.0, %v6888
        %v6890 = vpop.f32.mrb[0].mxu0
        %6891 = vmatprep.mubr.f32.mxu0 %v6706
        %6892 = vmatmul.mubr.f32.gmra.mrb[0].mxu0 %v6549
        %v6893 = vpop.f32.mrb[0].mxu0
        %v6894 = vadd.f32 0.0, %v6893
        %v6895 = vpop.f32.mrb[0].mxu0
        %6896 = vmatprep.mubr.f32.mxu0 %v6708
        %6897 = vmatmul.mubr.f32.gmra.mrb[0].mxu0 %v6554
        %v6898 = vpop.f32.mrb[0].mxu0
        %v6899 = vadd.f32 0.0, %v6898
        %v6900 = vpop.f32.mrb[0].mxu0
        %6901 = vmatprep.mubr.f32.mxu0 %v6710
        %6902 = vmatmul.mubr.f32.gmra.mrb[0].mxu0 %v6559
        %v6903 = vpop.f32.mrb[0].mxu0
        %v6904 = vadd.f32 0.0, %v6903
        %v6905 = vpop.f32.mrb[0].mxu0
        %6906 = vmatprep.mubr.f32.mxu0 %v6712
        %6907 = vmatmul.mubr.f32.gmra.mrb[0].mxu0 %v6564
        %v6908 = vpop.f32.mrb[0].mxu0
        %v6909 = vadd.f32 0.0, %v6908
        %v6910 = vpop.f32.mrb[0].mxu0
        %6911 = vmatprep.mubr.f32.mxu0 %v6714
        %6912 = vmatmul.mubr.f32.gmra.mrb[0].mxu0 %v6569
        %v6913 = vpop.f32.mrb[0].mxu0
        %v6914 = vadd.f32 0.0, %v6913
        %v6915 = vpop.f32.mrb[0].mxu0
        %6916 = vmatprep.mubr.f32.mxu0 %v6716
        %6917 = vmatmul.mubr.f32.gmra.mrb[0].mxu0 %v6574
        %v6918 = vpop.f32.mrb[0].mxu0
        %v6919 = vadd.f32 0.0, %v6918
        %v6920 = vpop.f32.mrb[0].mxu0
        %6921 = vmatprep.mubr.f32.mxu0 %v6718
        %6922 = vmatmul.mubr.f32.gmra.mrb[0].mxu0 %v6579
        %v6923 = vpop.f32.mrb[0].mxu0
        %v6924 = vadd.f32 0.0, %v6923
        %v6925 = vpop.f32.mrb[0].mxu0
        %6926 = vmatprep.mubr.f32.mxu0 %v6720
        %6927 = vmatmul.mubr.f32.gmra.mrb[0].mxu0 %v6584
        %v6928 = vpop.f32.mrb[0].mxu0
        %v6929 = vadd.f32 0.0, %v6928
        %v6930 = vpop.f32.mrb[0].mxu0
        %6931 = vmatprep.mubr.f32.mxu0 %v6722
        %6932 = vmatmul.mubr.f32.gmra.mrb[0].mxu0 %v6589
        %v6933 = vpop.f32.mrb[0].mxu0
        %v6934 = vadd.f32 0.0, %v6933
        %v6935 = vpop.f32.mrb[0].mxu0
        %6936 = vmatprep.mubr.f32.mxu0 %v6724
        %6937 = vmatmul.mubr.f32.gmra.mrb[0].mxu0 %v6594
        %v6938 = vpop.f32.mrb[0].mxu0
        %v6939 = vadd.f32 0.0, %v6938
        %v6940 = vpop.f32.mrb[0].mxu0
        %6941 = vmatprep.mubr.f32.mxu0 %v6726
        %6942 = vmatmul.mubr.f32.gmra.mrb[0].mxu0 %v6599
        %v6943 = vpop.f32.mrb[0].mxu0
        %v6944 = vadd.f32 0.0, %v6943
        %v6945 = vpop.f32.mrb[0].mxu0
        %6946 = vmatprep.mubr.f32.mxu0 %v6728
        %6947 = vmatmul.mubr.f32.gmra.mrb[0].mxu0 %v6604
        %v6948 = vpop.f32.mrb[0].mxu0
        %v6949 = vadd.f32 0.0, %v6948
        %v6950 = vpop.f32.mrb[0].mxu0
        %6951 = vmatprep.mubr.f32.mxu0 %v6730
        %6952 = vmatmul.mubr.f32.gmra.mrb[0].mxu0 %v6609
        %v6953 = vpop.f32.mrb[0].mxu0
        %v6954 = vadd.f32 0.0, %v6953
        %v6955 = vpop.f32.mrb[0].mxu0
        %6956 = vdwg.mxu0
        %v6957 = vadd.f32 %v6165, %v6799
        %v6958 = vadd.f32 %v6170, %v6804
        %v6959 = vadd.f32 %v6175, %v6809
        %v6960 = vadd.f32 %v6180, %v6814
        %v6961 = vadd.f32 %v6185, %v6819
        %v6962 = vadd.f32 %v6190, %v6824
        %v6963 = vadd.f32 %v6195, %v6829
        %v6964 = vadd.f32 %v6200, %v6834
        %v6965 = vadd.f32 %v6205, %v6839
        %v6966 = vadd.f32 %v6210, %v6844
        %v6967 = vadd.f32 %v6215, %v6849
        %v6968 = vadd.f32 %v6220, %v6854
        %v6969 = vadd.f32 %v6225, %v6859
        %v6970 = vadd.f32 %v6230, %v6864
        %v6971 = vadd.f32 %v6235, %v6869
        %v6972 = vadd.f32 %v6240, %v6874
        %v6973 = vadd.f32 %v6245, %v6879
        %v6974 = vadd.f32 %v6250, %v6884
        %v6975 = vadd.f32 %v6255, %v6889
        %v6976 = vadd.f32 %v6260, %v6894
        %v6977 = vadd.f32 %v6265, %v6899
        %v6978 = vadd.f32 %v6270, %v6904
        %v6979 = vadd.f32 %v6275, %v6909
        %v6980 = vadd.f32 %v6280, %v6914
        %v6981 = vadd.f32 %v6285, %v6919
        %v6982 = vadd.f32 %v6290, %v6924
        %v6983 = vadd.f32 %v6295, %v6929
        %v6984 = vadd.f32 %v6300, %v6934
        %v6985 = vadd.f32 %v6305, %v6939
        %v6986 = vadd.f32 %v6310, %v6944
        %v6987 = vadd.f32 %v6315, %v6949
        %v6988 = vadd.f32 %v6320, %v6954
        %v6989 = vld [vmem:[%s5165] sm:$0xff]
        %v6990 = vld [vmem:[%s5165 + $0x8] sm:$0xff]
        %v6991 = vld [vmem:[%s5165 + $0x10] sm:$0xff]
        %v6992 = vld [vmem:[%s5165 + $0x18] sm:$0xff]
        %v6993 = vld [vmem:[%s5165 + $0x30] sm:$0xff]
        %v6994 = vld [vmem:[%s5165 + $0x38] sm:$0xff]
        %v6995 = vld [vmem:[%s5165 + $0x40] sm:$0xff]
        %v6996 = vld [vmem:[%s5165 + $0x48] sm:$0xff]
        %v6997 = vld [vmem:[%s5165 + $0x60] sm:$0xff]
        %v6998 = vld [vmem:[%s5165 + $0x68] sm:$0xff]
        %v6999 = vld [vmem:[%s5165 + $0x70] sm:$0xff]
        %v7000 = vld [vmem:[%s5165 + $0x78] sm:$0xff]
        %v7001 = vld [vmem:[%s5165 + $0x90] sm:$0xff]
        %v7002 = vld [vmem:[%s5165 + $0x98] sm:$0xff]
        %v7003 = vld [vmem:[%s5165 + $0xa0] sm:$0xff]
        %v7004 = vld [vmem:[%s5165 + $0xa8] sm:$0xff]
        %v7005 = vld [vmem:[%s5165 + $0xc0] sm:$0xff]
        %v7006 = vld [vmem:[%s5165 + $0xc8] sm:$0xff]
        %v7007 = vld [vmem:[%s5165 + $0xd0] sm:$0xff]
        %v7008 = vld [vmem:[%s5165 + $0xd8] sm:$0xff]
        %v7009 = vld [vmem:[%s5165 + $0xf0] sm:$0xff]
        %v7010 = vld [vmem:[%s5165 + $0xf8] sm:$0xff]
        %v7011 = vld [vmem:[%s5165 + $0x100] sm:$0xff]
        %v7012 = vld [vmem:[%s5165 + $0x108] sm:$0xff]
        %v7013 = vld [vmem:[%s5165 + $0x120] sm:$0xff]
        %v7014 = vld [vmem:[%s5165 + $0x128] sm:$0xff]
        %v7015 = vld [vmem:[%s5165 + $0x130] sm:$0xff]
        %v7016 = vld [vmem:[%s5165 + $0x138] sm:$0xff]
        %v7017 = vld [vmem:[%s5165 + $0x150] sm:$0xff]
        %v7018 = vld [vmem:[%s5165 + $0x158] sm:$0xff]
        %v7019 = vld [vmem:[%s5165 + $0x160] sm:$0xff]
        %v7020 = vld [vmem:[%s5165 + $0x168] sm:$0xff]
        %v7021 = vld [vmem:[%s5165 + $0x180] sm:$0xff]
        %v7022 = vld [vmem:[%s5165 + $0x188] sm:$0xff]
        %v7023 = vld [vmem:[%s5165 + $0x190] sm:$0xff]
        %v7024 = vld [vmem:[%s5165 + $0x198] sm:$0xff]
        %v7025 = vld [vmem:[%s5165 + $0x1b0] sm:$0xff]
        %v7026 = vld [vmem:[%s5165 + $0x1b8] sm:$0xff]
        %v7027 = vld [vmem:[%s5165 + $0x1c0] sm:$0xff]
        %v7028 = vld [vmem:[%s5165 + $0x1c8] sm:$0xff]
        %v7029 = vld [vmem:[%s5165 + $0x1e0] sm:$0xff]
        %v7030 = vld [vmem:[%s5165 + $0x1e8] sm:$0xff]
        %v7031 = vld [vmem:[%s5165 + $0x1f0] sm:$0xff]
        %v7032 = vld [vmem:[%s5165 + $0x1f8] sm:$0xff]
        %v7033 = vld [vmem:[%s5165 + $0x210] sm:$0xff]
        %v7034 = vld [vmem:[%s5165 + $0x218] sm:$0xff]
        %v7035 = vld [vmem:[%s5165 + $0x220] sm:$0xff]
        %v7036 = vld [vmem:[%s5165 + $0x228] sm:$0xff]
        %v7037 = vld [vmem:[%s5165 + $0x240] sm:$0xff]
        %v7038 = vld [vmem:[%s5165 + $0x248] sm:$0xff]
        %v7039 = vld [vmem:[%s5165 + $0x250] sm:$0xff]
        %v7040 = vld [vmem:[%s5165 + $0x258] sm:$0xff]
        %v7041 = vld [vmem:[%s5165 + $0x270] sm:$0xff]
        %v7042 = vld [vmem:[%s5165 + $0x278] sm:$0xff]
        %v7043 = vld [vmem:[%s5165 + $0x280] sm:$0xff]
        %v7044 = vld [vmem:[%s5165 + $0x288] sm:$0xff]
        %v7045 = vld [vmem:[%s5165 + $0x2a0] sm:$0xff]
        %v7046 = vld [vmem:[%s5165 + $0x2a8] sm:$0xff]
        %v7047 = vld [vmem:[%s5165 + $0x2b0] sm:$0xff]
        %v7048 = vld [vmem:[%s5165 + $0x2b8] sm:$0xff]
        %v7049 = vld [vmem:[%s5165 + $0x2d0] sm:$0xff]
        %v7050 = vld [vmem:[%s5165 + $0x2d8] sm:$0xff]
        %v7051 = vld [vmem:[%s5165 + $0x2e0] sm:$0xff]
        %v7052 = vld [vmem:[%s5165 + $0x2e8] sm:$0xff]
        %v7053 = vld [vmem:[#allocation12 + $0x240] sm:$0xff]
        %v7054 = vld [vmem:[#allocation12 + $0x248] sm:$0xff]
        %v7055 = vld [vmem:[#allocation12 + $0x250] sm:$0xff]
        %v7056 = vld [vmem:[#allocation12 + $0x258] sm:$0xff]
        %v7057 = vld [vmem:[#allocation12 + $0x260] sm:$0xff]
        %v7058 = vld [vmem:[#allocation12 + $0x268] sm:$0xff]
        %v7059 = vld [vmem:[#allocation12 + $0x270] sm:$0xff]
        %v7060 = vld [vmem:[#allocation12 + $0x278] sm:$0xff]
        %v7061 = vld [vmem:[#allocation12 + $0x280] sm:$0xff]
        %v7062 = vld [vmem:[#allocation12 + $0x288] sm:$0xff]
        %v7063 = vld [vmem:[#allocation12 + $0x290] sm:$0xff]
        %v7064 = vld [vmem:[#allocation12 + $0x298] sm:$0xff]
        %v7065 = vld [vmem:[#allocation12 + $0x2a0] sm:$0xff]
        %v7066 = vld [vmem:[#allocation12 + $0x2a8] sm:$0xff]
        %v7067 = vld [vmem:[#allocation12 + $0x2b0] sm:$0xff]
        %v7068 = vld [vmem:[#allocation12 + $0x2b8] sm:$0xff]
        %v7069 = vld [vmem:[#allocation12 + $0x2c0] sm:$0xff]
        %v7070 = vld [vmem:[#allocation12 + $0x2c8] sm:$0xff]
        %v7071 = vld [vmem:[#allocation12 + $0x2d0] sm:$0xff]
        %v7072 = vld [vmem:[#allocation12 + $0x2d8] sm:$0xff]
        %v7073 = vld [vmem:[#allocation12 + $0x2e0] sm:$0xff]
        %v7074 = vld [vmem:[#allocation12 + $0x2e8] sm:$0xff]
        %v7075 = vld [vmem:[#allocation12 + $0x2f0] sm:$0xff]
        %v7076 = vld [vmem:[#allocation12 + $0x2f8] sm:$0xff]
        %v7078 = vsel %vm4799, %v6990, 0
        %v7081 = vsel %vm4799, %v6992, 0
        %v7084 = vsel %vm4799, %v6994, 0
        %v7087 = vsel %vm4799, %v6996, 0
        %v7090 = vsel %vm4799, %v6998, 0
        %v7093 = vsel %vm4799, %v7000, 0
        %v7096 = vsel %vm4799, %v7002, 0
        %v7099 = vsel %vm4799, %v7004, 0
        %v7102 = vsel %vm4799, %v7006, 0
        %v7105 = vsel %vm4799, %v7008, 0
        %v7108 = vsel %vm4799, %v7010, 0
        %v7111 = vsel %vm4799, %v7012, 0
        %v7114 = vsel %vm4799, %v7014, 0
        %v7117 = vsel %vm4799, %v7016, 0
        %v7120 = vsel %vm4799, %v7018, 0
        %v7123 = vsel %vm4799, %v7020, 0
        %v7126 = vsel %vm4799, %v7022, 0
        %v7129 = vsel %vm4799, %v7024, 0
        %v7132 = vsel %vm4799, %v7026, 0
        %v7135 = vsel %vm4799, %v7028, 0
        %v7138 = vsel %vm4799, %v7030, 0
        %v7141 = vsel %vm4799, %v7032, 0
        %v7144 = vsel %vm4799, %v7034, 0
        %v7147 = vsel %vm4799, %v7036, 0
        %v7150 = vsel %vm4799, %v7038, 0
        %v7153 = vsel %vm4799, %v7040, 0
        %v7156 = vsel %vm4799, %v7042, 0
        %v7159 = vsel %vm4799, %v7044, 0
        %v7162 = vsel %vm4799, %v7046, 0
        %v7165 = vsel %vm4799, %v7048, 0
        %v7168 = vsel %vm4799, %v7050, 0
        %v7171 = vsel %vm4799, %v7052, 0
        %7173 = vmatprep.subr.mxu0 0.0
        %7174 = vmatpush1.msra.mxu0 %v7053
        %7175 = vmatprep.subr.mxu0 0.0
        %7176 = vmatpush1.msra.mxu0 %v7054
        %7177 = vmatprep.subr.mxu0 0.0
        %7178 = vmatpush1.msra.mxu0 %v7055
        %7179 = vmatprep.subr.mxu0 0.0
        %7180 = vmatpush1.msra.mxu0 %v7056
        %7181 = vmatprep.subr.mxu0 0.0
        %7182 = vmatpush1.msra.mxu0 %v7057
        %7183 = vmatprep.subr.mxu0 0.0
        %7184 = vmatpush1.msra.mxu0 %v7058
        %7185 = vmatprep.subr.mxu0 0.0
        %7186 = vmatpush1.msra.mxu0 %v7059
        %7187 = vmatprep.subr.mxu0 0.0
        %7188 = vmatpush1.msra.mxu0 %v7060
        %7189 = vmatprep.subr.mxu0 0.0
        %7190 = vmatpush1.msra.mxu0 %v7061
        %7191 = vmatprep.subr.mxu0 0.0
        %7192 = vmatpush1.msra.mxu0 %v7062
        %7193 = vmatprep.subr.mxu0 0.0
        %7194 = vmatpush1.msra.mxu0 %v7063
        %7195 = vmatprep.subr.mxu0 0.0
        %7196 = vmatpush1.msra.mxu0 %v7064
        %7197 = vmatprep.subr.mxu0 0.0
        %7198 = vmatpush1.msra.mxu0 %v7065
        %7199 = vmatprep.subr.mxu0 0.0
        %7200 = vmatpush1.msra.mxu0 %v7066
        %7201 = vmatprep.subr.mxu0 0.0
        %7202 = vmatpush1.msra.mxu0 %v7067
        %7203 = vmatprep.subr.mxu0 0.0
        %7204 = vmatpush1.msra.mxu0 %v7068
        %7205 = vmatprep.subr.mxu0 0.0
        %7206 = vmatpush1.msra.mxu0 %v7069
        %7207 = vmatprep.subr.mxu0 0.0
        %7208 = vmatpush1.msra.mxu0 %v7070
        %7209 = vmatprep.subr.mxu0 0.0
        %7210 = vmatpush1.msra.mxu0 %v7071
        %7211 = vmatprep.subr.mxu0 0.0
        %7212 = vmatpush1.msra.mxu0 %v7072
        %7213 = vmatprep.subr.mxu0 0.0
        %7214 = vmatpush1.msra.mxu0 %v7073
        %7215 = vmatprep.subr.mxu0 0.0
        %7216 = vmatpush1.msra.mxu0 %v7074
        %7217 = vmatprep.subr.mxu0 0.0
        %7218 = vmatpush1.msra.mxu0 %v7075
        %7219 = vmatprep.subr.mxu0 0.0
        %7220 = vmatpush1.msra.mxu0 %v7076
        %7221 = vmatprep.subr.mxu0 0.0
        %7222 = vmatpush1.msra.mxu0 0.0
        %7223 = vmatprep.subr.mxu0 0.0
        %7224 = vmatpush1.msra.mxu0 0.0
        %7225 = vmatprep.subr.mxu0 0.0
        %7226 = vmatpush1.msra.mxu0 0.0
        %7227 = vmatprep.subr.mxu0 0.0
        %7228 = vmatpush1.msra.mxu0 0.0
        %7229 = vmatprep.subr.mxu0 0.0
        %7230 = vmatpush1.msra.mxu0 0.0
        %7231 = vmatprep.subr.mxu0 0.0
        %7232 = vmatpush1.msra.mxu0 0.0
        %7233 = vmatprep.subr.mxu0 0.0
        %7234 = vmatpush1.msra.mxu0 0.0
        %7235 = vmatprep.subr.mxu0 0.0
        %7236 = vmatpush1.msra.mxu0 0.0
        %7237 = vmatprep.mubr.f32.mxu0 %v7078
        %7238 = vmatmul.mubr.f32.gmra.mrb[0].mxu0 %v6989
        %v7239 = vpop.f32.mrb[0].mxu0
        %v7240 = vadd.f32 0.0, %v7239
        %v7241 = vpop.f32.mrb[0].mxu0
        %7242 = vmatprep.mubr.f32.mxu0 %v7081
        %7243 = vmatmul.mubr.f32.gmra.mrb[0].mxu0 %v6991
        %v7244 = vpop.f32.mrb[0].mxu0
        %v7245 = vadd.f32 0.0, %v7244
        %v7246 = vpop.f32.mrb[0].mxu0
        %7247 = vmatprep.mubr.f32.mxu0 %v7084
        %7248 = vmatmul.mubr.f32.gmra.mrb[0].mxu0 %v6993
        %v7249 = vpop.f32.mrb[0].mxu0
        %v7250 = vadd.f32 0.0, %v7249
        %v7251 = vpop.f32.mrb[0].mxu0
        %7252 = vmatprep.mubr.f32.mxu0 %v7087
        %7253 = vmatmul.mubr.f32.gmra.mrb[0].mxu0 %v6995
        %v7254 = vpop.f32.mrb[0].mxu0
        %v7255 = vadd.f32 0.0, %v7254
        %v7256 = vpop.f32.mrb[0].mxu0
        %7257 = vmatprep.mubr.f32.mxu0 %v7090
        %7258 = vmatmul.mubr.f32.gmra.mrb[0].mxu0 %v6997
        %v7259 = vpop.f32.mrb[0].mxu0
        %v7260 = vadd.f32 0.0, %v7259
        %v7261 = vpop.f32.mrb[0].mxu0
        %7262 = vmatprep.mubr.f32.mxu0 %v7093
        %7263 = vmatmul.mubr.f32.gmra.mrb[0].mxu0 %v6999
        %v7264 = vpop.f32.mrb[0].mxu0
        %v7265 = vadd.f32 0.0, %v7264
        %v7266 = vpop.f32.mrb[0].mxu0
        %7267 = vmatprep.mubr.f32.mxu0 %v7096
        %7268 = vmatmul.mubr.f32.gmra.mrb[0].mxu0 %v7001
        %v7269 = vpop.f32.mrb[0].mxu0
        %v7270 = vadd.f32 0.0, %v7269
        %v7271 = vpop.f32.mrb[0].mxu0
        %7272 = vmatprep.mubr.f32.mxu0 %v7099
        %7273 = vmatmul.mubr.f32.gmra.mrb[0].mxu0 %v7003
        %v7274 = vpop.f32.mrb[0].mxu0
        %v7275 = vadd.f32 0.0, %v7274
        %v7276 = vpop.f32.mrb[0].mxu0
        %7277 = vmatprep.mubr.f32.mxu0 %v7102
        %7278 = vmatmul.mubr.f32.gmra.mrb[0].mxu0 %v7005
        %v7279 = vpop.f32.mrb[0].mxu0
        %v7280 = vadd.f32 0.0, %v7279
        %v7281 = vpop.f32.mrb[0].mxu0
        %7282 = vmatprep.mubr.f32.mxu0 %v7105
        %7283 = vmatmul.mubr.f32.gmra.mrb[0].mxu0 %v7007
        %v7284 = vpop.f32.mrb[0].mxu0
        %v7285 = vadd.f32 0.0, %v7284
        %v7286 = vpop.f32.mrb[0].mxu0
        %7287 = vmatprep.mubr.f32.mxu0 %v7108
        %7288 = vmatmul.mubr.f32.gmra.mrb[0].mxu0 %v7009
        %v7289 = vpop.f32.mrb[0].mxu0
        %v7290 = vadd.f32 0.0, %v7289
        %v7291 = vpop.f32.mrb[0].mxu0
        %7292 = vmatprep.mubr.f32.mxu0 %v7111
        %7293 = vmatmul.mubr.f32.gmra.mrb[0].mxu0 %v7011
        %v7294 = vpop.f32.mrb[0].mxu0
        %v7295 = vadd.f32 0.0, %v7294
        %v7296 = vpop.f32.mrb[0].mxu0
        %7297 = vmatprep.mubr.f32.mxu0 %v7114
        %7298 = vmatmul.mubr.f32.gmra.mrb[0].mxu0 %v7013
        %v7299 = vpop.f32.mrb[0].mxu0
        %v7300 = vadd.f32 0.0, %v7299
        %v7301 = vpop.f32.mrb[0].mxu0
        %7302 = vmatprep.mubr.f32.mxu0 %v7117
        %7303 = vmatmul.mubr.f32.gmra.mrb[0].mxu0 %v7015
        %v7304 = vpop.f32.mrb[0].mxu0
        %v7305 = vadd.f32 0.0, %v7304
        %v7306 = vpop.f32.mrb[0].mxu0
        %7307 = vmatprep.mubr.f32.mxu0 %v7120
        %7308 = vmatmul.mubr.f32.gmra.mrb[0].mxu0 %v7017
        %v7309 = vpop.f32.mrb[0].mxu0
        %v7310 = vadd.f32 0.0, %v7309
        %v7311 = vpop.f32.mrb[0].mxu0
        %7312 = vmatprep.mubr.f32.mxu0 %v7123
        %7313 = vmatmul.mubr.f32.gmra.mrb[0].mxu0 %v7019
        %v7314 = vpop.f32.mrb[0].mxu0
        %v7315 = vadd.f32 0.0, %v7314
        %v7316 = vpop.f32.mrb[0].mxu0
        %7317 = vmatprep.mubr.f32.mxu0 %v7126
        %7318 = vmatmul.mubr.f32.gmra.mrb[0].mxu0 %v7021
        %v7319 = vpop.f32.mrb[0].mxu0
        %v7320 = vadd.f32 0.0, %v7319
        %v7321 = vpop.f32.mrb[0].mxu0
        %7322 = vmatprep.mubr.f32.mxu0 %v7129
        %7323 = vmatmul.mubr.f32.gmra.mrb[0].mxu0 %v7023
        %v7324 = vpop.f32.mrb[0].mxu0
        %v7325 = vadd.f32 0.0, %v7324
        %v7326 = vpop.f32.mrb[0].mxu0
        %7327 = vmatprep.mubr.f32.mxu0 %v7132
        %7328 = vmatmul.mubr.f32.gmra.mrb[0].mxu0 %v7025
        %v7329 = vpop.f32.mrb[0].mxu0
        %v7330 = vadd.f32 0.0, %v7329
        %v7331 = vpop.f32.mrb[0].mxu0
        %7332 = vmatprep.mubr.f32.mxu0 %v7135
        %7333 = vmatmul.mubr.f32.gmra.mrb[0].mxu0 %v7027
        %v7334 = vpop.f32.mrb[0].mxu0
        %v7335 = vadd.f32 0.0, %v7334
        %v7336 = vpop.f32.mrb[0].mxu0
        %7337 = vmatprep.mubr.f32.mxu0 %v7138
        %7338 = vmatmul.mubr.f32.gmra.mrb[0].mxu0 %v7029
        %v7339 = vpop.f32.mrb[0].mxu0
        %v7340 = vadd.f32 0.0, %v7339
        %v7341 = vpop.f32.mrb[0].mxu0
        %7342 = vmatprep.mubr.f32.mxu0 %v7141
        %7343 = vmatmul.mubr.f32.gmra.mrb[0].mxu0 %v7031
        %v7344 = vpop.f32.mrb[0].mxu0
        %v7345 = vadd.f32 0.0, %v7344
        %v7346 = vpop.f32.mrb[0].mxu0
        %7347 = vmatprep.mubr.f32.mxu0 %v7144
        %7348 = vmatmul.mubr.f32.gmra.mrb[0].mxu0 %v7033
        %v7349 = vpop.f32.mrb[0].mxu0
        %v7350 = vadd.f32 0.0, %v7349
        %v7351 = vpop.f32.mrb[0].mxu0
        %7352 = vmatprep.mubr.f32.mxu0 %v7147
        %7353 = vmatmul.mubr.f32.gmra.mrb[0].mxu0 %v7035
        %v7354 = vpop.f32.mrb[0].mxu0
        %v7355 = vadd.f32 0.0, %v7354
        %v7356 = vpop.f32.mrb[0].mxu0
        %7357 = vmatprep.mubr.f32.mxu0 %v7150
        %7358 = vmatmul.mubr.f32.gmra.mrb[0].mxu0 %v7037
        %v7359 = vpop.f32.mrb[0].mxu0
        %v7360 = vadd.f32 0.0, %v7359
        %v7361 = vpop.f32.mrb[0].mxu0
        %7362 = vmatprep.mubr.f32.mxu0 %v7153
        %7363 = vmatmul.mubr.f32.gmra.mrb[0].mxu0 %v7039
        %v7364 = vpop.f32.mrb[0].mxu0
        %v7365 = vadd.f32 0.0, %v7364
        %v7366 = vpop.f32.mrb[0].mxu0
        %7367 = vmatprep.mubr.f32.mxu0 %v7156
        %7368 = vmatmul.mubr.f32.gmra.mrb[0].mxu0 %v7041
        %v7369 = vpop.f32.mrb[0].mxu0
        %v7370 = vadd.f32 0.0, %v7369
        %v7371 = vpop.f32.mrb[0].mxu0
        %7372 = vmatprep.mubr.f32.mxu0 %v7159
        %7373 = vmatmul.mubr.f32.gmra.mrb[0].mxu0 %v7043
        %v7374 = vpop.f32.mrb[0].mxu0
        %v7375 = vadd.f32 0.0, %v7374
        %v7376 = vpop.f32.mrb[0].mxu0
        %7377 = vmatprep.mubr.f32.mxu0 %v7162
        %7378 = vmatmul.mubr.f32.gmra.mrb[0].mxu0 %v7045
        %v7379 = vpop.f32.mrb[0].mxu0
        %v7380 = vadd.f32 0.0, %v7379
        %v7381 = vpop.f32.mrb[0].mxu0
        %7382 = vmatprep.mubr.f32.mxu0 %v7165
        %7383 = vmatmul.mubr.f32.gmra.mrb[0].mxu0 %v7047
        %v7384 = vpop.f32.mrb[0].mxu0
        %v7385 = vadd.f32 0.0, %v7384
        %v7386 = vpop.f32.mrb[0].mxu0
        %7387 = vmatprep.mubr.f32.mxu0 %v7168
        %7388 = vmatmul.mubr.f32.gmra.mrb[0].mxu0 %v7049
        %v7389 = vpop.f32.mrb[0].mxu0
        %v7390 = vadd.f32 0.0, %v7389
        %v7391 = vpop.f32.mrb[0].mxu0
        %7392 = vmatprep.mubr.f32.mxu0 %v7171
        %7393 = vmatmul.mubr.f32.gmra.mrb[0].mxu0 %v7051
        %v7394 = vpop.f32.mrb[0].mxu0
        %v7395 = vadd.f32 0.0, %v7394
        %v7396 = vpop.f32.mrb[0].mxu0
        %7397 = vdwg.mxu0
        %v7398 = vadd.f32 %v6957, %v7240
        %v7399 = vadd.f32 %v6958, %v7245
        %v7400 = vadd.f32 %v6959, %v7250
        %v7401 = vadd.f32 %v6960, %v7255
        %v7402 = vadd.f32 %v6961, %v7260
        %v7403 = vadd.f32 %v6962, %v7265
        %v7404 = vadd.f32 %v6963, %v7270
        %v7405 = vadd.f32 %v6964, %v7275
        %v7406 = vadd.f32 %v6965, %v7280
        %v7407 = vadd.f32 %v6966, %v7285
        %v7408 = vadd.f32 %v6967, %v7290
        %v7409 = vadd.f32 %v6968, %v7295
        %v7410 = vadd.f32 %v6969, %v7300
        %v7411 = vadd.f32 %v6970, %v7305
        %v7412 = vadd.f32 %v6971, %v7310
        %v7413 = vadd.f32 %v6972, %v7315
        %v7414 = vadd.f32 %v6973, %v7320
        %v7415 = vadd.f32 %v6974, %v7325
        %v7416 = vadd.f32 %v6975, %v7330
        %v7417 = vadd.f32 %v6976, %v7335
        %v7418 = vadd.f32 %v6977, %v7340
        %v7419 = vadd.f32 %v6978, %v7345
        %v7420 = vadd.f32 %v6979, %v7350
        %v7421 = vadd.f32 %v6980, %v7355
        %v7422 = vadd.f32 %v6981, %v7360
        %v7423 = vadd.f32 %v6982, %v7365
        %v7424 = vadd.f32 %v6983, %v7370
        %v7425 = vadd.f32 %v6984, %v7375
        %v7426 = vadd.f32 %v6985, %v7380
        %v7427 = vadd.f32 %v6986, %v7385
        %v7428 = vadd.f32 %v6987, %v7390
        %v7429 = vadd.f32 %v6988, %v7395
        %v7430 = vld [vmem:[%s5165] sm:$0xfe]
        %v7431 = vld [vmem:[%s5165 + $0x8] sm:$0xfe]
        %v7432 = vld [vmem:[%s5165 + $0x10] sm:$0xff]
        %v7433 = vld [vmem:[%s5165 + $0x18] sm:$0xff]
        %v7434 = vld [vmem:[%s5165 + $0x20] sm:$0x1]
        %v7435 = vld [vmem:[%s5165 + $0x28] sm:$0x1]
        %v7436 = vld [vmem:[%s5165 + $0x30] sm:$0xfe]
        %v7437 = vld [vmem:[%s5165 + $0x38] sm:$0xfe]
        %v7438 = vld [vmem:[%s5165 + $0x40] sm:$0xff]
        %v7439 = vld [vmem:[%s5165 + $0x48] sm:$0xff]
        %v7440 = vld [vmem:[%s5165 + $0x50] sm:$0x1]
        %v7441 = vld [vmem:[%s5165 + $0x58] sm:$0x1]
        %v7442 = vld [vmem:[%s5165 + $0x60] sm:$0xfe]
        %v7443 = vld [vmem:[%s5165 + $0x68] sm:$0xfe]
        %v7444 = vld [vmem:[%s5165 + $0x70] sm:$0xff]
        %v7445 = vld [vmem:[%s5165 + $0x78] sm:$0xff]
        %v7446 = vld [vmem:[%s5165 + $0x80] sm:$0x1]
        %v7447 = vld [vmem:[%s5165 + $0x88] sm:$0x1]
        %v7448 = vld [vmem:[%s5165 + $0x90] sm:$0xfe]
        %v7449 = vld [vmem:[%s5165 + $0x98] sm:$0xfe]
        %v7450 = vld [vmem:[%s5165 + $0xa0] sm:$0xff]
        %v7451 = vld [vmem:[%s5165 + $0xa8] sm:$0xff]
        %v7452 = vld [vmem:[%s5165 + $0xb0] sm:$0x1]
        %v7453 = vld [vmem:[%s5165 + $0xb8] sm:$0x1]
        %v7454 = vld [vmem:[%s5165 + $0xc0] sm:$0xfe]
        %v7455 = vld [vmem:[%s5165 + $0xc8] sm:$0xfe]
        %v7456 = vld [vmem:[%s5165 + $0xd0] sm:$0xff]
        %v7457 = vld [vmem:[%s5165 + $0xd8] sm:$0xff]
        %v7458 = vld [vmem:[%s5165 + $0xe0] sm:$0x1]
        %v7459 = vld [vmem:[%s5165 + $0xe8] sm:$0x1]
        %v7460 = vld [vmem:[%s5165 + $0xf0] sm:$0xfe]
        %v7461 = vld [vmem:[%s5165 + $0xf8] sm:$0xfe]
        %v7462 = vld [vmem:[%s5165 + $0x100] sm:$0xff]
        %v7463 = vld [vmem:[%s5165 + $0x108] sm:$0xff]
        %v7464 = vld [vmem:[%s5165 + $0x110] sm:$0x1]
        %v7465 = vld [vmem:[%s5165 + $0x118] sm:$0x1]
        %v7466 = vld [vmem:[%s5165 + $0x120] sm:$0xfe]
        %v7467 = vld [vmem:[%s5165 + $0x128] sm:$0xfe]
        %v7468 = vld [vmem:[%s5165 + $0x130] sm:$0xff]
        %v7469 = vld [vmem:[%s5165 + $0x138] sm:$0xff]
        %v7470 = vld [vmem:[%s5165 + $0x140] sm:$0x1]
        %v7471 = vld [vmem:[%s5165 + $0x148] sm:$0x1]
        %v7472 = vld [vmem:[%s5165 + $0x150] sm:$0xfe]
        %v7473 = vld [vmem:[%s5165 + $0x158] sm:$0xfe]
        %v7474 = vld [vmem:[%s5165 + $0x160] sm:$0xff]
        %v7475 = vld [vmem:[%s5165 + $0x168] sm:$0xff]
        %v7476 = vld [vmem:[%s5165 + $0x170] sm:$0x1]
        %v7477 = vld [vmem:[%s5165 + $0x178] sm:$0x1]
        %v7478 = vld [vmem:[%s5165 + $0x180] sm:$0xfe]
        %v7479 = vld [vmem:[%s5165 + $0x188] sm:$0xfe]
        %v7480 = vld [vmem:[%s5165 + $0x190] sm:$0xff]
        %v7481 = vld [vmem:[%s5165 + $0x198] sm:$0xff]
        %v7482 = vld [vmem:[%s5165 + $0x1a0] sm:$0x1]
        %v7483 = vld [vmem:[%s5165 + $0x1a8] sm:$0x1]
        %v7484 = vld [vmem:[%s5165 + $0x1b0] sm:$0xfe]
        %v7485 = vld [vmem:[%s5165 + $0x1b8] sm:$0xfe]
        %v7486 = vld [vmem:[%s5165 + $0x1c0] sm:$0xff]
        %v7487 = vld [vmem:[%s5165 + $0x1c8] sm:$0xff]
        %v7488 = vld [vmem:[%s5165 + $0x1d0] sm:$0x1]
        %v7489 = vld [vmem:[%s5165 + $0x1d8] sm:$0x1]
        %v7490 = vld [vmem:[%s5165 + $0x1e0] sm:$0xfe]
        %v7491 = vld [vmem:[%s5165 + $0x1e8] sm:$0xfe]
        %v7492 = vld [vmem:[%s5165 + $0x1f0] sm:$0xff]
        %v7493 = vld [vmem:[%s5165 + $0x1f8] sm:$0xff]
        %v7494 = vld [vmem:[%s5165 + $0x200] sm:$0x1]
        %v7495 = vld [vmem:[%s5165 + $0x208] sm:$0x1]
        %v7496 = vld [vmem:[%s5165 + $0x210] sm:$0xfe]
        %v7497 = vld [vmem:[%s5165 + $0x218] sm:$0xfe]
        %v7498 = vld [vmem:[%s5165 + $0x220] sm:$0xff]
        %v7499 = vld [vmem:[%s5165 + $0x228] sm:$0xff]
        %v7500 = vld [vmem:[%s5165 + $0x230] sm:$0x1]
        %v7501 = vld [vmem:[%s5165 + $0x238] sm:$0x1]
        %v7502 = vld [vmem:[%s5165 + $0x240] sm:$0xfe]
        %v7503 = vld [vmem:[%s5165 + $0x248] sm:$0xfe]
        %v7504 = vld [vmem:[%s5165 + $0x250] sm:$0xff]
        %v7505 = vld [vmem:[%s5165 + $0x258] sm:$0xff]
        %v7506 = vld [vmem:[%s5165 + $0x260] sm:$0x1]
        %v7507 = vld [vmem:[%s5165 + $0x268] sm:$0x1]
        %v7508 = vld [vmem:[%s5165 + $0x270] sm:$0xfe]
        %v7509 = vld [vmem:[%s5165 + $0x278] sm:$0xfe]
        %v7510 = vld [vmem:[%s5165 + $0x280] sm:$0xff]
        %v7511 = vld [vmem:[%s5165 + $0x288] sm:$0xff]
        %v7512 = vld [vmem:[%s5165 + $0x290] sm:$0x1]
        %v7513 = vld [vmem:[%s5165 + $0x298] sm:$0x1]
        %v7514 = vld [vmem:[%s5165 + $0x2a0] sm:$0xfe]
        %v7515 = vld [vmem:[%s5165 + $0x2a8] sm:$0xfe]
        %v7516 = vld [vmem:[%s5165 + $0x2b0] sm:$0xff]
        %v7517 = vld [vmem:[%s5165 + $0x2b8] sm:$0xff]
        %v7518 = vld [vmem:[%s5165 + $0x2c0] sm:$0x1]
        %v7519 = vld [vmem:[%s5165 + $0x2c8] sm:$0x1]
        %v7520 = vld [vmem:[%s5165 + $0x2d0] sm:$0xfe]
        %v7521 = vld [vmem:[%s5165 + $0x2d8] sm:$0xfe]
        %v7522 = vld [vmem:[%s5165 + $0x2e0] sm:$0xff]
        %v7523 = vld [vmem:[%s5165 + $0x2e8] sm:$0xff]
        %v7524 = vld [vmem:[%s5165 + $0x2f0] sm:$0x1]
        %v7525 = vld [vmem:[%s5165 + $0x2f8] sm:$0x1]
        %v7622 = vrot.slane %v7430, 1
        %v7623 = vrot.slane %v7432, 1
        %v7624 = vsel %vm5512, %v7622, %v7623
        %v7625 = vrot.slane %v7431, 1
        %v7626 = vrot.slane %v7433, 1
        %v7627 = vsel %vm5512, %v7625, %v7626
        %v7628 = vrot.slane %v7434, 1
        %v7629 = vsel %vm5512, %v7623, %v7628
        %v7630 = vrot.slane %v7435, 1
        %v7631 = vsel %vm5512, %v7626, %v7630
        %v7632 = vrot.slane %v7436, 1
        %v7633 = vrot.slane %v7438, 1
        %v7634 = vsel %vm5512, %v7632, %v7633
        %v7635 = vrot.slane %v7437, 1
        %v7636 = vrot.slane %v7439, 1
        %v7637 = vsel %vm5512, %v7635, %v7636
        %v7638 = vrot.slane %v7440, 1
        %v7639 = vsel %vm5512, %v7633, %v7638
        %v7640 = vrot.slane %v7441, 1
        %v7641 = vsel %vm5512, %v7636, %v7640
        %v7642 = vrot.slane %v7442, 1
        %v7643 = vrot.slane %v7444, 1
        %v7644 = vsel %vm5512, %v7642, %v7643
        %v7645 = vrot.slane %v7443, 1
        %v7646 = vrot.slane %v7445, 1
        %v7647 = vsel %vm5512, %v7645, %v7646
        %v7648 = vrot.slane %v7446, 1
        %v7649 = vsel %vm5512, %v7643, %v7648
        %v7650 = vrot.slane %v7447, 1
        %v7651 = vsel %vm5512, %v7646, %v7650
        %v7652 = vrot.slane %v7448, 1
        %v7653 = vrot.slane %v7450, 1
        %v7654 = vsel %vm5512, %v7652, %v7653
        %v7655 = vrot.slane %v7449, 1
        %v7656 = vrot.slane %v7451, 1
        %v7657 = vsel %vm5512, %v7655, %v7656
        %v7658 = vrot.slane %v7452, 1
        %v7659 = vsel %vm5512, %v7653, %v7658
        %v7660 = vrot.slane %v7453, 1
        %v7661 = vsel %vm5512, %v7656, %v7660
        %v7662 = vrot.slane %v7454, 1
        %v7663 = vrot.slane %v7456, 1
        %v7664 = vsel %vm5512, %v7662, %v7663
        %v7665 = vrot.slane %v7455, 1
        %v7666 = vrot.slane %v7457, 1
        %v7667 = vsel %vm5512, %v7665, %v7666
        %v7668 = vrot.slane %v7458, 1
        %v7669 = vsel %vm5512, %v7663, %v7668
        %v7670 = vrot.slane %v7459, 1
        %v7671 = vsel %vm5512, %v7666, %v7670
        %v7672 = vrot.slane %v7460, 1
        %v7673 = vrot.slane %v7462, 1
        %v7674 = vsel %vm5512, %v7672, %v7673
        %v7675 = vrot.slane %v7461, 1
        %v7676 = vrot.slane %v7463, 1
        %v7677 = vsel %vm5512, %v7675, %v7676
        %v7678 = vrot.slane %v7464, 1
        %v7679 = vsel %vm5512, %v7673, %v7678
        %v7680 = vrot.slane %v7465, 1
        %v7681 = vsel %vm5512, %v7676, %v7680
        %v7682 = vrot.slane %v7466, 1
        %v7683 = vrot.slane %v7468, 1
        %v7684 = vsel %vm5512, %v7682, %v7683
        %v7685 = vrot.slane %v7467, 1
        %v7686 = vrot.slane %v7469, 1
        %v7687 = vsel %vm5512, %v7685, %v7686
        %v7688 = vrot.slane %v7470, 1
        %v7689 = vsel %vm5512, %v7683, %v7688
        %v7690 = vrot.slane %v7471, 1
        %v7691 = vsel %vm5512, %v7686, %v7690
        %v7692 = vrot.slane %v7472, 1
        %v7693 = vrot.slane %v7474, 1
        %v7694 = vsel %vm5512, %v7692, %v7693
        %v7695 = vrot.slane %v7473, 1
        %v7696 = vrot.slane %v7475, 1
        %v7697 = vsel %vm5512, %v7695, %v7696
        %v7698 = vrot.slane %v7476, 1
        %v7699 = vsel %vm5512, %v7693, %v7698
        %v7700 = vrot.slane %v7477, 1
        %v7701 = vsel %vm5512, %v7696, %v7700
        %v7702 = vrot.slane %v7478, 1
        %v7703 = vrot.slane %v7480, 1
        %v7704 = vsel %vm5512, %v7702, %v7703
        %v7705 = vrot.slane %v7479, 1
        %v7706 = vrot.slane %v7481, 1
        %v7707 = vsel %vm5512, %v7705, %v7706
        %v7708 = vrot.slane %v7482, 1
        %v7709 = vsel %vm5512, %v7703, %v7708
        %v7710 = vrot.slane %v7483, 1
        %v7711 = vsel %vm5512, %v7706, %v7710
        %v7712 = vrot.slane %v7484, 1
        %v7713 = vrot.slane %v7486, 1
        %v7714 = vsel %vm5512, %v7712, %v7713
        %v7715 = vrot.slane %v7485, 1
        %v7716 = vrot.slane %v7487, 1
        %v7717 = vsel %vm5512, %v7715, %v7716
        %v7718 = vrot.slane %v7488, 1
        %v7719 = vsel %vm5512, %v7713, %v7718
        %v7720 = vrot.slane %v7489, 1
        %v7721 = vsel %vm5512, %v7716, %v7720
        %v7722 = vrot.slane %v7490, 1
        %v7723 = vrot.slane %v7492, 1
        %v7724 = vsel %vm5512, %v7722, %v7723
        %v7725 = vrot.slane %v7491, 1
        %v7726 = vrot.slane %v7493, 1
        %v7727 = vsel %vm5512, %v7725, %v7726
        %v7728 = vrot.slane %v7494, 1
        %v7729 = vsel %vm5512, %v7723, %v7728
        %v7730 = vrot.slane %v7495, 1
        %v7731 = vsel %vm5512, %v7726, %v7730
        %v7732 = vrot.slane %v7496, 1
        %v7733 = vrot.slane %v7498, 1
        %v7734 = vsel %vm5512, %v7732, %v7733
        %v7735 = vrot.slane %v7497, 1
        %v7736 = vrot.slane %v7499, 1
        %v7737 = vsel %vm5512, %v7735, %v7736
        %v7738 = vrot.slane %v7500, 1
        %v7739 = vsel %vm5512, %v7733, %v7738
        %v7740 = vrot.slane %v7501, 1
        %v7741 = vsel %vm5512, %v7736, %v7740
        %v7742 = vrot.slane %v7502, 1
        %v7743 = vrot.slane %v7504, 1
        %v7744 = vsel %vm5512, %v7742, %v7743
        %v7745 = vrot.slane %v7503, 1
        %v7746 = vrot.slane %v7505, 1
        %v7747 = vsel %vm5512, %v7745, %v7746
        %v7748 = vrot.slane %v7506, 1
        %v7749 = vsel %vm5512, %v7743, %v7748
        %v7750 = vrot.slane %v7507, 1
        %v7751 = vsel %vm5512, %v7746, %v7750
        %v7752 = vrot.slane %v7508, 1
        %v7753 = vrot.slane %v7510, 1
        %v7754 = vsel %vm5512, %v7752, %v7753
        %v7755 = vrot.slane %v7509, 1
        %v7756 = vrot.slane %v7511, 1
        %v7757 = vsel %vm5512, %v7755, %v7756
        %v7758 = vrot.slane %v7512, 1
        %v7759 = vsel %vm5512, %v7753, %v7758
        %v7760 = vrot.slane %v7513, 1
        %v7761 = vsel %vm5512, %v7756, %v7760
        %v7762 = vrot.slane %v7514, 1
        %v7763 = vrot.slane %v7516, 1
        %v7764 = vsel %vm5512, %v7762, %v7763
        %v7765 = vrot.slane %v7515, 1
        %v7766 = vrot.slane %v7517, 1
        %v7767 = vsel %vm5512, %v7765, %v7766
        %v7768 = vrot.slane %v7518, 1
        %v7769 = vsel %vm5512, %v7763, %v7768
        %v7770 = vrot.slane %v7519, 1
        %v7771 = vsel %vm5512, %v7766, %v7770
        %v7772 = vrot.slane %v7520, 1
        %v7773 = vrot.slane %v7522, 1
        %v7774 = vsel %vm5512, %v7772, %v7773
        %v7775 = vrot.slane %v7521, 1
        %v7776 = vrot.slane %v7523, 1
        %v7777 = vsel %vm5512, %v7775, %v7776
        %v7778 = vrot.slane %v7524, 1
        %v7779 = vsel %vm5512, %v7773, %v7778
        %v7780 = vrot.slane %v7525, 1
        %v7781 = vsel %vm5512, %v7776, %v7780
        %v7814 = vld [vmem:[#allocation12 + $0x300] sm:$0xff]
        %v7815 = vld [vmem:[#allocation12 + $0x308] sm:$0xff]
        %v7816 = vld [vmem:[#allocation12 + $0x310] sm:$0xff]
        %v7817 = vld [vmem:[#allocation12 + $0x318] sm:$0xff]
        %v7818 = vld [vmem:[#allocation12 + $0x320] sm:$0xff]
        %v7819 = vld [vmem:[#allocation12 + $0x328] sm:$0xff]
        %v7820 = vld [vmem:[#allocation12 + $0x330] sm:$0xff]
        %v7821 = vld [vmem:[#allocation12 + $0x338] sm:$0xff]
        %v7822 = vld [vmem:[#allocation12 + $0x340] sm:$0xff]
        %v7823 = vld [vmem:[#allocation12 + $0x348] sm:$0xff]
        %v7824 = vld [vmem:[#allocation12 + $0x350] sm:$0xff]
        %v7825 = vld [vmem:[#allocation12 + $0x358] sm:$0xff]
        %v7826 = vld [vmem:[#allocation12 + $0x360] sm:$0xff]
        %v7827 = vld [vmem:[#allocation12 + $0x368] sm:$0xff]
        %v7828 = vld [vmem:[#allocation12 + $0x370] sm:$0xff]
        %v7829 = vld [vmem:[#allocation12 + $0x378] sm:$0xff]
        %v7830 = vld [vmem:[#allocation12 + $0x380] sm:$0xff]
        %v7831 = vld [vmem:[#allocation12 + $0x388] sm:$0xff]
        %v7832 = vld [vmem:[#allocation12 + $0x390] sm:$0xff]
        %v7833 = vld [vmem:[#allocation12 + $0x398] sm:$0xff]
        %v7834 = vld [vmem:[#allocation12 + $0x3a0] sm:$0xff]
        %v7835 = vld [vmem:[#allocation12 + $0x3a8] sm:$0xff]
        %v7836 = vld [vmem:[#allocation12 + $0x3b0] sm:$0xff]
        %v7837 = vld [vmem:[#allocation12 + $0x3b8] sm:$0xff]
        %v7838 = vsel %vm4799, %v7627, 0
        %v7840 = vsel %vm4799, %v7631, 0
        %v7842 = vsel %vm4799, %v7637, 0
        %v7844 = vsel %vm4799, %v7641, 0
        %v7846 = vsel %vm4799, %v7647, 0
        %v7848 = vsel %vm4799, %v7651, 0
        %v7850 = vsel %vm4799, %v7657, 0
        %v7852 = vsel %vm4799, %v7661, 0
        %v7854 = vsel %vm4799, %v7667, 0
        %v7856 = vsel %vm4799, %v7671, 0
        %v7858 = vsel %vm4799, %v7677, 0
        %v7860 = vsel %vm4799, %v7681, 0
        %v7862 = vsel %vm4799, %v7687, 0
        %v7864 = vsel %vm4799, %v7691, 0
        %v7866 = vsel %vm4799, %v7697, 0
        %v7868 = vsel %vm4799, %v7701, 0
        %v7870 = vsel %vm4799, %v7707, 0
        %v7872 = vsel %vm4799, %v7711, 0
        %v7874 = vsel %vm4799, %v7717, 0
        %v7876 = vsel %vm4799, %v7721, 0
        %v7878 = vsel %vm4799, %v7727, 0
        %v7880 = vsel %vm4799, %v7731, 0
        %v7882 = vsel %vm4799, %v7737, 0
        %v7884 = vsel %vm4799, %v7741, 0
        %v7886 = vsel %vm4799, %v7747, 0
        %v7888 = vsel %vm4799, %v7751, 0
        %v7890 = vsel %vm4799, %v7757, 0
        %v7892 = vsel %vm4799, %v7761, 0
        %v7894 = vsel %vm4799, %v7767, 0
        %v7896 = vsel %vm4799, %v7771, 0
        %v7898 = vsel %vm4799, %v7777, 0
        %v7900 = vsel %vm4799, %v7781, 0
        %7902 = vmatprep.subr.mxu0 0.0
        %7903 = vmatpush1.msra.mxu0 %v7814
        %7904 = vmatprep.subr.mxu0 0.0
        %7905 = vmatpush1.msra.mxu0 %v7815
        %7906 = vmatprep.subr.mxu0 0.0
        %7907 = vmatpush1.msra.mxu0 %v7816
        %7908 = vmatprep.subr.mxu0 0.0
        %7909 = vmatpush1.msra.mxu0 %v7817
        %7910 = vmatprep.subr.mxu0 0.0
        %7911 = vmatpush1.msra.mxu0 %v7818
        %7912 = vmatprep.subr.mxu0 0.0
        %7913 = vmatpush1.msra.mxu0 %v7819
        %7914 = vmatprep.subr.mxu0 0.0
        %7915 = vmatpush1.msra.mxu0 %v7820
        %7916 = vmatprep.subr.mxu0 0.0
        %7917 = vmatpush1.msra.mxu0 %v7821
        %7918 = vmatprep.subr.mxu0 0.0
        %7919 = vmatpush1.msra.mxu0 %v7822
        %7920 = vmatprep.subr.mxu0 0.0
        %7921 = vmatpush1.msra.mxu0 %v7823
        %7922 = vmatprep.subr.mxu0 0.0
        %7923 = vmatpush1.msra.mxu0 %v7824
        %7924 = vmatprep.subr.mxu0 0.0
        %7925 = vmatpush1.msra.mxu0 %v7825
        %7926 = vmatprep.subr.mxu0 0.0
        %7927 = vmatpush1.msra.mxu0 %v7826
        %7928 = vmatprep.subr.mxu0 0.0
        %7929 = vmatpush1.msra.mxu0 %v7827
        %7930 = vmatprep.subr.mxu0 0.0
        %7931 = vmatpush1.msra.mxu0 %v7828
        %7932 = vmatprep.subr.mxu0 0.0
        %7933 = vmatpush1.msra.mxu0 %v7829
        %7934 = vmatprep.subr.mxu0 0.0
        %7935 = vmatpush1.msra.mxu0 %v7830
        %7936 = vmatprep.subr.mxu0 0.0
        %7937 = vmatpush1.msra.mxu0 %v7831
        %7938 = vmatprep.subr.mxu0 0.0
        %7939 = vmatpush1.msra.mxu0 %v7832
        %7940 = vmatprep.subr.mxu0 0.0
        %7941 = vmatpush1.msra.mxu0 %v7833
        %7942 = vmatprep.subr.mxu0 0.0
        %7943 = vmatpush1.msra.mxu0 %v7834
        %7944 = vmatprep.subr.mxu0 0.0
        %7945 = vmatpush1.msra.mxu0 %v7835
        %7946 = vmatprep.subr.mxu0 0.0
        %7947 = vmatpush1.msra.mxu0 %v7836
        %7948 = vmatprep.subr.mxu0 0.0
        %7949 = vmatpush1.msra.mxu0 %v7837
        %7950 = vmatprep.subr.mxu0 0.0
        %7951 = vmatpush1.msra.mxu0 0.0
        %7952 = vmatprep.subr.mxu0 0.0
        %7953 = vmatpush1.msra.mxu0 0.0
        %7954 = vmatprep.subr.mxu0 0.0
        %7955 = vmatpush1.msra.mxu0 0.0
        %7956 = vmatprep.subr.mxu0 0.0
        %7957 = vmatpush1.msra.mxu0 0.0
        %7958 = vmatprep.subr.mxu0 0.0
        %7959 = vmatpush1.msra.mxu0 0.0
        %7960 = vmatprep.subr.mxu0 0.0
        %7961 = vmatpush1.msra.mxu0 0.0
        %7962 = vmatprep.subr.mxu0 0.0
        %7963 = vmatpush1.msra.mxu0 0.0
        %7964 = vmatprep.subr.mxu0 0.0
        %7965 = vmatpush1.msra.mxu0 0.0
        %7966 = vmatprep.mubr.f32.mxu0 %v7838
        %7967 = vmatmul.mubr.f32.gmra.mrb[0].mxu0 %v7624
        %v7968 = vpop.f32.mrb[0].mxu0
        %v7969 = vadd.f32 0.0, %v7968
        %v7970 = vpop.f32.mrb[0].mxu0
        %7971 = vmatprep.mubr.f32.mxu0 %v7840
        %7972 = vmatmul.mubr.f32.gmra.mrb[0].mxu0 %v7629
        %v7973 = vpop.f32.mrb[0].mxu0
        %v7974 = vadd.f32 0.0, %v7973
        %v7975 = vpop.f32.mrb[0].mxu0
        %7976 = vmatprep.mubr.f32.mxu0 %v7842
        %7977 = vmatmul.mubr.f32.gmra.mrb[0].mxu0 %v7634
        %v7978 = vpop.f32.mrb[0].mxu0
        %v7979 = vadd.f32 0.0, %v7978
        %v7980 = vpop.f32.mrb[0].mxu0
        %7981 = vmatprep.mubr.f32.mxu0 %v7844
        %7982 = vmatmul.mubr.f32.gmra.mrb[0].mxu0 %v7639
        %v7983 = vpop.f32.mrb[0].mxu0
        %v7984 = vadd.f32 0.0, %v7983
        %v7985 = vpop.f32.mrb[0].mxu0
        %7986 = vmatprep.mubr.f32.mxu0 %v7846
        %7987 = vmatmul.mubr.f32.gmra.mrb[0].mxu0 %v7644
        %v7988 = vpop.f32.mrb[0].mxu0
        %v7989 = vadd.f32 0.0, %v7988
        %v7990 = vpop.f32.mrb[0].mxu0
        %7991 = vmatprep.mubr.f32.mxu0 %v7848
        %7992 = vmatmul.mubr.f32.gmra.mrb[0].mxu0 %v7649
        %v7993 = vpop.f32.mrb[0].mxu0
        %v7994 = vadd.f32 0.0, %v7993
        %v7995 = vpop.f32.mrb[0].mxu0
        %7996 = vmatprep.mubr.f32.mxu0 %v7850
        %7997 = vmatmul.mubr.f32.gmra.mrb[0].mxu0 %v7654
        %v7998 = vpop.f32.mrb[0].mxu0
        %v7999 = vadd.f32 0.0, %v7998
        %v8000 = vpop.f32.mrb[0].mxu0
        %8001 = vmatprep.mubr.f32.mxu0 %v7852
        %8002 = vmatmul.mubr.f32.gmra.mrb[0].mxu0 %v7659
        %v8003 = vpop.f32.mrb[0].mxu0
        %v8004 = vadd.f32 0.0, %v8003
        %v8005 = vpop.f32.mrb[0].mxu0
        %8006 = vmatprep.mubr.f32.mxu0 %v7854
        %8007 = vmatmul.mubr.f32.gmra.mrb[0].mxu0 %v7664
        %v8008 = vpop.f32.mrb[0].mxu0
        %v8009 = vadd.f32 0.0, %v8008
        %v8010 = vpop.f32.mrb[0].mxu0
        %8011 = vmatprep.mubr.f32.mxu0 %v7856
        %8012 = vmatmul.mubr.f32.gmra.mrb[0].mxu0 %v7669
        %v8013 = vpop.f32.mrb[0].mxu0
        %v8014 = vadd.f32 0.0, %v8013
        %v8015 = vpop.f32.mrb[0].mxu0
        %8016 = vmatprep.mubr.f32.mxu0 %v7858
        %8017 = vmatmul.mubr.f32.gmra.mrb[0].mxu0 %v7674
        %v8018 = vpop.f32.mrb[0].mxu0
        %v8019 = vadd.f32 0.0, %v8018
        %v8020 = vpop.f32.mrb[0].mxu0
        %8021 = vmatprep.mubr.f32.mxu0 %v7860
        %8022 = vmatmul.mubr.f32.gmra.mrb[0].mxu0 %v7679
        %v8023 = vpop.f32.mrb[0].mxu0
        %v8024 = vadd.f32 0.0, %v8023
        %v8025 = vpop.f32.mrb[0].mxu0
        %8026 = vmatprep.mubr.f32.mxu0 %v7862
        %8027 = vmatmul.mubr.f32.gmra.mrb[0].mxu0 %v7684
        %v8028 = vpop.f32.mrb[0].mxu0
        %v8029 = vadd.f32 0.0, %v8028
        %v8030 = vpop.f32.mrb[0].mxu0
        %8031 = vmatprep.mubr.f32.mxu0 %v7864
        %8032 = vmatmul.mubr.f32.gmra.mrb[0].mxu0 %v7689
        %v8033 = vpop.f32.mrb[0].mxu0
        %v8034 = vadd.f32 0.0, %v8033
        %v8035 = vpop.f32.mrb[0].mxu0
        %8036 = vmatprep.mubr.f32.mxu0 %v7866
        %8037 = vmatmul.mubr.f32.gmra.mrb[0].mxu0 %v7694
        %v8038 = vpop.f32.mrb[0].mxu0
        %v8039 = vadd.f32 0.0, %v8038
        %v8040 = vpop.f32.mrb[0].mxu0
        %8041 = vmatprep.mubr.f32.mxu0 %v7868
        %8042 = vmatmul.mubr.f32.gmra.mrb[0].mxu0 %v7699
        %v8043 = vpop.f32.mrb[0].mxu0
        %v8044 = vadd.f32 0.0, %v8043
        %v8045 = vpop.f32.mrb[0].mxu0
        %8046 = vmatprep.mubr.f32.mxu0 %v7870
        %8047 = vmatmul.mubr.f32.gmra.mrb[0].mxu0 %v7704
        %v8048 = vpop.f32.mrb[0].mxu0
        %v8049 = vadd.f32 0.0, %v8048
        %v8050 = vpop.f32.mrb[0].mxu0
        %8051 = vmatprep.mubr.f32.mxu0 %v7872
        %8052 = vmatmul.mubr.f32.gmra.mrb[0].mxu0 %v7709
        %v8053 = vpop.f32.mrb[0].mxu0
        %v8054 = vadd.f32 0.0, %v8053
        %v8055 = vpop.f32.mrb[0].mxu0
        %8056 = vmatprep.mubr.f32.mxu0 %v7874
        %8057 = vmatmul.mubr.f32.gmra.mrb[0].mxu0 %v7714
        %v8058 = vpop.f32.mrb[0].mxu0
        %v8059 = vadd.f32 0.0, %v8058
        %v8060 = vpop.f32.mrb[0].mxu0
        %8061 = vmatprep.mubr.f32.mxu0 %v7876
        %8062 = vmatmul.mubr.f32.gmra.mrb[0].mxu0 %v7719
        %v8063 = vpop.f32.mrb[0].mxu0
        %v8064 = vadd.f32 0.0, %v8063
        %v8065 = vpop.f32.mrb[0].mxu0
        %8066 = vmatprep.mubr.f32.mxu0 %v7878
        %8067 = vmatmul.mubr.f32.gmra.mrb[0].mxu0 %v7724
        %v8068 = vpop.f32.mrb[0].mxu0
        %v8069 = vadd.f32 0.0, %v8068
        %v8070 = vpop.f32.mrb[0].mxu0
        %8071 = vmatprep.mubr.f32.mxu0 %v7880
        %8072 = vmatmul.mubr.f32.gmra.mrb[0].mxu0 %v7729
        %v8073 = vpop.f32.mrb[0].mxu0
        %v8074 = vadd.f32 0.0, %v8073
        %v8075 = vpop.f32.mrb[0].mxu0
        %8076 = vmatprep.mubr.f32.mxu0 %v7882
        %8077 = vmatmul.mubr.f32.gmra.mrb[0].mxu0 %v7734
        %v8078 = vpop.f32.mrb[0].mxu0
        %v8079 = vadd.f32 0.0, %v8078
        %v8080 = vpop.f32.mrb[0].mxu0
        %8081 = vmatprep.mubr.f32.mxu0 %v7884
        %8082 = vmatmul.mubr.f32.gmra.mrb[0].mxu0 %v7739
        %v8083 = vpop.f32.mrb[0].mxu0
        %v8084 = vadd.f32 0.0, %v8083
        %v8085 = vpop.f32.mrb[0].mxu0
        %8086 = vmatprep.mubr.f32.mxu0 %v7886
        %8087 = vmatmul.mubr.f32.gmra.mrb[0].mxu0 %v7744
        %v8088 = vpop.f32.mrb[0].mxu0
        %v8089 = vadd.f32 0.0, %v8088
        %v8090 = vpop.f32.mrb[0].mxu0
        %8091 = vmatprep.mubr.f32.mxu0 %v7888
        %8092 = vmatmul.mubr.f32.gmra.mrb[0].mxu0 %v7749
        %v8093 = vpop.f32.mrb[0].mxu0
        %v8094 = vadd.f32 0.0, %v8093
        %v8095 = vpop.f32.mrb[0].mxu0
        %8096 = vmatprep.mubr.f32.mxu0 %v7890
        %8097 = vmatmul.mubr.f32.gmra.mrb[0].mxu0 %v7754
        %v8098 = vpop.f32.mrb[0].mxu0
        %v8099 = vadd.f32 0.0, %v8098
        %v8100 = vpop.f32.mrb[0].mxu0
        %8101 = vmatprep.mubr.f32.mxu0 %v7892
        %8102 = vmatmul.mubr.f32.gmra.mrb[0].mxu0 %v7759
        %v8103 = vpop.f32.mrb[0].mxu0
        %v8104 = vadd.f32 0.0, %v8103
        %v8105 = vpop.f32.mrb[0].mxu0
        %8106 = vmatprep.mubr.f32.mxu0 %v7894
        %8107 = vmatmul.mubr.f32.gmra.mrb[0].mxu0 %v7764
        %v8108 = vpop.f32.mrb[0].mxu0
        %v8109 = vadd.f32 0.0, %v8108
        %v8110 = vpop.f32.mrb[0].mxu0
        %8111 = vmatprep.mubr.f32.mxu0 %v7896
        %8112 = vmatmul.mubr.f32.gmra.mrb[0].mxu0 %v7769
        %v8113 = vpop.f32.mrb[0].mxu0
        %v8114 = vadd.f32 0.0, %v8113
        %v8115 = vpop.f32.mrb[0].mxu0
        %8116 = vmatprep.mubr.f32.mxu0 %v7898
        %8117 = vmatmul.mubr.f32.gmra.mrb[0].mxu0 %v7774
        %v8118 = vpop.f32.mrb[0].mxu0
        %v8119 = vadd.f32 0.0, %v8118
        %v8120 = vpop.f32.mrb[0].mxu0
        %8121 = vmatprep.mubr.f32.mxu0 %v7900
        %8122 = vmatmul.mubr.f32.gmra.mrb[0].mxu0 %v7779
        %v8123 = vpop.f32.mrb[0].mxu0
        %v8124 = vadd.f32 0.0, %v8123
        %v8125 = vpop.f32.mrb[0].mxu0
        %8126 = vdwg.mxu0
        %v8127 = vadd.f32 %v7398, %v7969
        %v8128 = vadd.f32 %v7399, %v7974
        %v8129 = vadd.f32 %v7400, %v7979
        %v8130 = vadd.f32 %v7401, %v7984
        %v8131 = vadd.f32 %v7402, %v7989
        %v8132 = vadd.f32 %v7403, %v7994
        %v8133 = vadd.f32 %v7404, %v7999
        %v8134 = vadd.f32 %v7405, %v8004
        %v8135 = vadd.f32 %v7406, %v8009
        %v8136 = vadd.f32 %v7407, %v8014
        %v8137 = vadd.f32 %v7408, %v8019
        %v8138 = vadd.f32 %v7409, %v8024
        %v8139 = vadd.f32 %v7410, %v8029
        %v8140 = vadd.f32 %v7411, %v8034
        %v8141 = vadd.f32 %v7412, %v8039
        %v8142 = vadd.f32 %v7413, %v8044
        %v8143 = vadd.f32 %v7414, %v8049
        %v8144 = vadd.f32 %v7415, %v8054
        %v8145 = vadd.f32 %v7416, %v8059
        %v8146 = vadd.f32 %v7417, %v8064
        %v8147 = vadd.f32 %v7418, %v8069
        %v8148 = vadd.f32 %v7419, %v8074
        %v8149 = vadd.f32 %v7420, %v8079
        %v8150 = vadd.f32 %v7421, %v8084
        %v8151 = vadd.f32 %v7422, %v8089
        %v8152 = vadd.f32 %v7423, %v8094
        %v8153 = vadd.f32 %v7424, %v8099
        %v8154 = vadd.f32 %v7425, %v8104
        %v8155 = vadd.f32 %v7426, %v8109
        %v8156 = vadd.f32 %v7427, %v8114
        %v8157 = vadd.f32 %v7428, %v8119
        %v8158 = vadd.f32 %v7429, %v8124
        %v8159 = vld [vmem:[%s5165] sm:$0xfc]
        %v8160 = vld [vmem:[%s5165 + $0x8] sm:$0xfc]
        %v8161 = vld [vmem:[%s5165 + $0x20] sm:$0x3]
        %v8162 = vld [vmem:[%s5165 + $0x28] sm:$0x3]
        %v8163 = vld [vmem:[%s5165 + $0x30] sm:$0xfc]
        %v8164 = vld [vmem:[%s5165 + $0x38] sm:$0xfc]
        %v8165 = vld [vmem:[%s5165 + $0x50] sm:$0x3]
        %v8166 = vld [vmem:[%s5165 + $0x58] sm:$0x3]
        %v8167 = vld [vmem:[%s5165 + $0x60] sm:$0xfc]
        %v8168 = vld [vmem:[%s5165 + $0x68] sm:$0xfc]
        %v8169 = vld [vmem:[%s5165 + $0x80] sm:$0x3]
        %v8170 = vld [vmem:[%s5165 + $0x88] sm:$0x3]
        %v8171 = vld [vmem:[%s5165 + $0x90] sm:$0xfc]
        %v8172 = vld [vmem:[%s5165 + $0x98] sm:$0xfc]
        %v8173 = vld [vmem:[%s5165 + $0xb0] sm:$0x3]
        %v8174 = vld [vmem:[%s5165 + $0xb8] sm:$0x3]
        %v8175 = vld [vmem:[%s5165 + $0xc0] sm:$0xfc]
        %v8176 = vld [vmem:[%s5165 + $0xc8] sm:$0xfc]
        %v8177 = vld [vmem:[%s5165 + $0xe0] sm:$0x3]
        %v8178 = vld [vmem:[%s5165 + $0xe8] sm:$0x3]
        %v8179 = vld [vmem:[%s5165 + $0xf0] sm:$0xfc]
        %v8180 = vld [vmem:[%s5165 + $0xf8] sm:$0xfc]
        %v8181 = vld [vmem:[%s5165 + $0x110] sm:$0x3]
        %v8182 = vld [vmem:[%s5165 + $0x118] sm:$0x3]
        %v8183 = vld [vmem:[%s5165 + $0x120] sm:$0xfc]
        %v8184 = vld [vmem:[%s5165 + $0x128] sm:$0xfc]
        %v8185 = vld [vmem:[%s5165 + $0x140] sm:$0x3]
        %v8186 = vld [vmem:[%s5165 + $0x148] sm:$0x3]
        %v8187 = vld [vmem:[%s5165 + $0x150] sm:$0xfc]
        %v8188 = vld [vmem:[%s5165 + $0x158] sm:$0xfc]
        %v8189 = vld [vmem:[%s5165 + $0x170] sm:$0x3]
        %v8190 = vld [vmem:[%s5165 + $0x178] sm:$0x3]
        %v8191 = vld [vmem:[%s5165 + $0x180] sm:$0xfc]
        %v8192 = vld [vmem:[%s5165 + $0x188] sm:$0xfc]
        %v8193 = vld [vmem:[%s5165 + $0x1a0] sm:$0x3]
        %v8194 = vld [vmem:[%s5165 + $0x1a8] sm:$0x3]
        %v8195 = vld [vmem:[%s5165 + $0x1b0] sm:$0xfc]
        %v8196 = vld [vmem:[%s5165 + $0x1b8] sm:$0xfc]
        %v8197 = vld [vmem:[%s5165 + $0x1d0] sm:$0x3]
        %v8198 = vld [vmem:[%s5165 + $0x1d8] sm:$0x3]
        %v8199 = vld [vmem:[%s5165 + $0x1e0] sm:$0xfc]
        %v8200 = vld [vmem:[%s5165 + $0x1e8] sm:$0xfc]
        %v8201 = vld [vmem:[%s5165 + $0x200] sm:$0x3]
        %v8202 = vld [vmem:[%s5165 + $0x208] sm:$0x3]
        %v8203 = vld [vmem:[%s5165 + $0x210] sm:$0xfc]
        %v8204 = vld [vmem:[%s5165 + $0x218] sm:$0xfc]
        %v8205 = vld [vmem:[%s5165 + $0x230] sm:$0x3]
        %v8206 = vld [vmem:[%s5165 + $0x238] sm:$0x3]
        %v8207 = vld [vmem:[%s5165 + $0x240] sm:$0xfc]
        %v8208 = vld [vmem:[%s5165 + $0x248] sm:$0xfc]
        %v8209 = vld [vmem:[%s5165 + $0x260] sm:$0x3]
        %v8210 = vld [vmem:[%s5165 + $0x268] sm:$0x3]
        %v8211 = vld [vmem:[%s5165 + $0x270] sm:$0xfc]
        %v8212 = vld [vmem:[%s5165 + $0x278] sm:$0xfc]
        %v8213 = vld [vmem:[%s5165 + $0x290] sm:$0x3]
        %v8214 = vld [vmem:[%s5165 + $0x298] sm:$0x3]
        %v8215 = vld [vmem:[%s5165 + $0x2a0] sm:$0xfc]
        %v8216 = vld [vmem:[%s5165 + $0x2a8] sm:$0xfc]
        %v8217 = vld [vmem:[%s5165 + $0x2c0] sm:$0x3]
        %v8218 = vld [vmem:[%s5165 + $0x2c8] sm:$0x3]
        %v8219 = vld [vmem:[%s5165 + $0x2d0] sm:$0xfc]
        %v8220 = vld [vmem:[%s5165 + $0x2d8] sm:$0xfc]
        %v8221 = vld [vmem:[%s5165 + $0x2f0] sm:$0x3]
        %v8222 = vld [vmem:[%s5165 + $0x2f8] sm:$0x3]
        %v8287 = vrot.slane %v8159, 2
        %v8288 = vrot.slane %v7432, 2
        %v8289 = vsel %vm6451, %v8287, %v8288
        %v8290 = vrot.slane %v8160, 2
        %v8291 = vrot.slane %v7433, 2
        %v8292 = vsel %vm6451, %v8290, %v8291
        %v8293 = vrot.slane %v8161, 2
        %v8294 = vsel %vm6451, %v8288, %v8293
        %v8295 = vrot.slane %v8162, 2
        %v8296 = vsel %vm6451, %v8291, %v8295
        %v8297 = vrot.slane %v8163, 2
        %v8298 = vrot.slane %v7438, 2
        %v8299 = vsel %vm6451, %v8297, %v8298
        %v8300 = vrot.slane %v8164, 2
        %v8301 = vrot.slane %v7439, 2
        %v8302 = vsel %vm6451, %v8300, %v8301
        %v8303 = vrot.slane %v8165, 2
        %v8304 = vsel %vm6451, %v8298, %v8303
        %v8305 = vrot.slane %v8166, 2
        %v8306 = vsel %vm6451, %v8301, %v8305
        %v8307 = vrot.slane %v8167, 2
        %v8308 = vrot.slane %v7444, 2
        %v8309 = vsel %vm6451, %v8307, %v8308
        %v8310 = vrot.slane %v8168, 2
        %v8311 = vrot.slane %v7445, 2
        %v8312 = vsel %vm6451, %v8310, %v8311
        %v8313 = vrot.slane %v8169, 2
        %v8314 = vsel %vm6451, %v8308, %v8313
        %v8315 = vrot.slane %v8170, 2
        %v8316 = vsel %vm6451, %v8311, %v8315
        %v8317 = vrot.slane %v8171, 2
        %v8318 = vrot.slane %v7450, 2
        %v8319 = vsel %vm6451, %v8317, %v8318
        %v8320 = vrot.slane %v8172, 2
        %v8321 = vrot.slane %v7451, 2
        %v8322 = vsel %vm6451, %v8320, %v8321
        %v8323 = vrot.slane %v8173, 2
        %v8324 = vsel %vm6451, %v8318, %v8323
        %v8325 = vrot.slane %v8174, 2
        %v8326 = vsel %vm6451, %v8321, %v8325
        %v8327 = vrot.slane %v8175, 2
        %v8328 = vrot.slane %v7456, 2
        %v8329 = vsel %vm6451, %v8327, %v8328
        %v8330 = vrot.slane %v8176, 2
        %v8331 = vrot.slane %v7457, 2
        %v8332 = vsel %vm6451, %v8330, %v8331
        %v8333 = vrot.slane %v8177, 2
        %v8334 = vsel %vm6451, %v8328, %v8333
        %v8335 = vrot.slane %v8178, 2
        %v8336 = vsel %vm6451, %v8331, %v8335
        %v8337 = vrot.slane %v8179, 2
        %v8338 = vrot.slane %v7462, 2
        %v8339 = vsel %vm6451, %v8337, %v8338
        %v8340 = vrot.slane %v8180, 2
        %v8341 = vrot.slane %v7463, 2
        %v8342 = vsel %vm6451, %v8340, %v8341
        %v8343 = vrot.slane %v8181, 2
        %v8344 = vsel %vm6451, %v8338, %v8343
        %v8345 = vrot.slane %v8182, 2
        %v8346 = vsel %vm6451, %v8341, %v8345
        %v8347 = vrot.slane %v8183, 2
        %v8348 = vrot.slane %v7468, 2
        %v8349 = vsel %vm6451, %v8347, %v8348
        %v8350 = vrot.slane %v8184, 2
        %v8351 = vrot.slane %v7469, 2
        %v8352 = vsel %vm6451, %v8350, %v8351
        %v8353 = vrot.slane %v8185, 2
        %v8354 = vsel %vm6451, %v8348, %v8353
        %v8355 = vrot.slane %v8186, 2
        %v8356 = vsel %vm6451, %v8351, %v8355
        %v8357 = vrot.slane %v8187, 2
        %v8358 = vrot.slane %v7474, 2
        %v8359 = vsel %vm6451, %v8357, %v8358
        %v8360 = vrot.slane %v8188, 2
        %v8361 = vrot.slane %v7475, 2
        %v8362 = vsel %vm6451, %v8360, %v8361
        %v8363 = vrot.slane %v8189, 2
        %v8364 = vsel %vm6451, %v8358, %v8363
        %v8365 = vrot.slane %v8190, 2
        %v8366 = vsel %vm6451, %v8361, %v8365
        %v8367 = vrot.slane %v8191, 2
        %v8368 = vrot.slane %v7480, 2
        %v8369 = vsel %vm6451, %v8367, %v8368
        %v8370 = vrot.slane %v8192, 2
        %v8371 = vrot.slane %v7481, 2
        %v8372 = vsel %vm6451, %v8370, %v8371
        %v8373 = vrot.slane %v8193, 2
        %v8374 = vsel %vm6451, %v8368, %v8373
        %v8375 = vrot.slane %v8194, 2
        %v8376 = vsel %vm6451, %v8371, %v8375
        %v8377 = vrot.slane %v8195, 2
        %v8378 = vrot.slane %v7486, 2
        %v8379 = vsel %vm6451, %v8377, %v8378
        %v8380 = vrot.slane %v8196, 2
        %v8381 = vrot.slane %v7487, 2
        %v8382 = vsel %vm6451, %v8380, %v8381
        %v8383 = vrot.slane %v8197, 2
        %v8384 = vsel %vm6451, %v8378, %v8383
        %v8385 = vrot.slane %v8198, 2
        %v8386 = vsel %vm6451, %v8381, %v8385
        %v8387 = vrot.slane %v8199, 2
        %v8388 = vrot.slane %v7492, 2
        %v8389 = vsel %vm6451, %v8387, %v8388
        %v8390 = vrot.slane %v8200, 2
        %v8391 = vrot.slane %v7493, 2
        %v8392 = vsel %vm6451, %v8390, %v8391
        %v8393 = vrot.slane %v8201, 2
        %v8394 = vsel %vm6451, %v8388, %v8393
        %v8395 = vrot.slane %v8202, 2
        %v8396 = vsel %vm6451, %v8391, %v8395
        %v8397 = vrot.slane %v8203, 2
        %v8398 = vrot.slane %v7498, 2
        %v8399 = vsel %vm6451, %v8397, %v8398
        %v8400 = vrot.slane %v8204, 2
        %v8401 = vrot.slane %v7499, 2
        %v8402 = vsel %vm6451, %v8400, %v8401
        %v8403 = vrot.slane %v8205, 2
        %v8404 = vsel %vm6451, %v8398, %v8403
        %v8405 = vrot.slane %v8206, 2
        %v8406 = vsel %vm6451, %v8401, %v8405
        %v8407 = vrot.slane %v8207, 2
        %v8408 = vrot.slane %v7504, 2
        %v8409 = vsel %vm6451, %v8407, %v8408
        %v8410 = vrot.slane %v8208, 2
        %v8411 = vrot.slane %v7505, 2
        %v8412 = vsel %vm6451, %v8410, %v8411
        %v8413 = vrot.slane %v8209, 2
        %v8414 = vsel %vm6451, %v8408, %v8413
        %v8415 = vrot.slane %v8210, 2
        %v8416 = vsel %vm6451, %v8411, %v8415
        %v8417 = vrot.slane %v8211, 2
        %v8418 = vrot.slane %v7510, 2
        %v8419 = vsel %vm6451, %v8417, %v8418
        %v8420 = vrot.slane %v8212, 2
        %v8421 = vrot.slane %v7511, 2
        %v8422 = vsel %vm6451, %v8420, %v8421
        %v8423 = vrot.slane %v8213, 2
        %v8424 = vsel %vm6451, %v8418, %v8423
        %v8425 = vrot.slane %v8214, 2
        %v8426 = vsel %vm6451, %v8421, %v8425
        %v8427 = vrot.slane %v8215, 2
        %v8428 = vrot.slane %v7516, 2
        %v8429 = vsel %vm6451, %v8427, %v8428
        %v8430 = vrot.slane %v8216, 2
        %v8431 = vrot.slane %v7517, 2
        %v8432 = vsel %vm6451, %v8430, %v8431
        %v8433 = vrot.slane %v8217, 2
        %v8434 = vsel %vm6451, %v8428, %v8433
        %v8435 = vrot.slane %v8218, 2
        %v8436 = vsel %vm6451, %v8431, %v8435
        %v8437 = vrot.slane %v8219, 2
        %v8438 = vrot.slane %v7522, 2
        %v8439 = vsel %vm6451, %v8437, %v8438
        %v8440 = vrot.slane %v8220, 2
        %v8441 = vrot.slane %v7523, 2
        %v8442 = vsel %vm6451, %v8440, %v8441
        %v8443 = vrot.slane %v8221, 2
        %v8444 = vsel %vm6451, %v8438, %v8443
        %v8445 = vrot.slane %v8222, 2
        %v8446 = vsel %vm6451, %v8441, %v8445
        %v8479 = vld [vmem:[#allocation12 + $0x3c0] sm:$0xff]
        %v8480 = vld [vmem:[#allocation12 + $0x3c8] sm:$0xff]
        %v8481 = vld [vmem:[#allocation12 + $0x3d0] sm:$0xff]
        %v8482 = vld [vmem:[#allocation12 + $0x3d8] sm:$0xff]
        %v8483 = vld [vmem:[#allocation12 + $0x3e0] sm:$0xff]
        %v8484 = vld [vmem:[#allocation12 + $0x3e8] sm:$0xff]
        %v8485 = vld [vmem:[#allocation12 + $0x3f0] sm:$0xff]
        %v8486 = vld [vmem:[#allocation12 + $0x3f8] sm:$0xff]
        %v8487 = vld [vmem:[#allocation12 + $0x400] sm:$0xff]
        %v8488 = vld [vmem:[#allocation12 + $0x408] sm:$0xff]
        %v8489 = vld [vmem:[#allocation12 + $0x410] sm:$0xff]
        %v8490 = vld [vmem:[#allocation12 + $0x418] sm:$0xff]
        %v8491 = vld [vmem:[#allocation12 + $0x420] sm:$0xff]
        %v8492 = vld [vmem:[#allocation12 + $0x428] sm:$0xff]
        %v8493 = vld [vmem:[#allocation12 + $0x430] sm:$0xff]
        %v8494 = vld [vmem:[#allocation12 + $0x438] sm:$0xff]
        %v8495 = vld [vmem:[#allocation12 + $0x440] sm:$0xff]
        %v8496 = vld [vmem:[#allocation12 + $0x448] sm:$0xff]
        %v8497 = vld [vmem:[#allocation12 + $0x450] sm:$0xff]
        %v8498 = vld [vmem:[#allocation12 + $0x458] sm:$0xff]
        %v8499 = vld [vmem:[#allocation12 + $0x460] sm:$0xff]
        %v8500 = vld [vmem:[#allocation12 + $0x468] sm:$0xff]
        %v8501 = vld [vmem:[#allocation12 + $0x470] sm:$0xff]
        %v8502 = vld [vmem:[#allocation12 + $0x478] sm:$0xff]
        %v8503 = vsel %vm4799, %v8292, 0
        %v8505 = vsel %vm4799, %v8296, 0
        %v8507 = vsel %vm4799, %v8302, 0
        %v8509 = vsel %vm4799, %v8306, 0
        %v8511 = vsel %vm4799, %v8312, 0
        %v8513 = vsel %vm4799, %v8316, 0
        %v8515 = vsel %vm4799, %v8322, 0
        %v8517 = vsel %vm4799, %v8326, 0
        %v8519 = vsel %vm4799, %v8332, 0
        %v8521 = vsel %vm4799, %v8336, 0
        %v8523 = vsel %vm4799, %v8342, 0
        %v8525 = vsel %vm4799, %v8346, 0
        %v8527 = vsel %vm4799, %v8352, 0
        %v8529 = vsel %vm4799, %v8356, 0
        %v8531 = vsel %vm4799, %v8362, 0
        %v8533 = vsel %vm4799, %v8366, 0
        %v8535 = vsel %vm4799, %v8372, 0
        %v8537 = vsel %vm4799, %v8376, 0
        %v8539 = vsel %vm4799, %v8382, 0
        %v8541 = vsel %vm4799, %v8386, 0
        %v8543 = vsel %vm4799, %v8392, 0
        %v8545 = vsel %vm4799, %v8396, 0
        %v8547 = vsel %vm4799, %v8402, 0
        %v8549 = vsel %vm4799, %v8406, 0
        %v8551 = vsel %vm4799, %v8412, 0
        %v8553 = vsel %vm4799, %v8416, 0
        %v8555 = vsel %vm4799, %v8422, 0
        %v8557 = vsel %vm4799, %v8426, 0
        %v8559 = vsel %vm4799, %v8432, 0
        %v8561 = vsel %vm4799, %v8436, 0
        %v8563 = vsel %vm4799, %v8442, 0
        %v8565 = vsel %vm4799, %v8446, 0
        %8567 = vmatprep.subr.mxu0 0.0
        %8568 = vmatpush1.msra.mxu0 %v8479
        %8569 = vmatprep.subr.mxu0 0.0
        %8570 = vmatpush1.msra.mxu0 %v8480
        %8571 = vmatprep.subr.mxu0 0.0
        %8572 = vmatpush1.msra.mxu0 %v8481
        %8573 = vmatprep.subr.mxu0 0.0
        %8574 = vmatpush1.msra.mxu0 %v8482
        %8575 = vmatprep.subr.mxu0 0.0
        %8576 = vmatpush1.msra.mxu0 %v8483
        %8577 = vmatprep.subr.mxu0 0.0
        %8578 = vmatpush1.msra.mxu0 %v8484
        %8579 = vmatprep.subr.mxu0 0.0
        %8580 = vmatpush1.msra.mxu0 %v8485
        %8581 = vmatprep.subr.mxu0 0.0
        %8582 = vmatpush1.msra.mxu0 %v8486
        %8583 = vmatprep.subr.mxu0 0.0
        %8584 = vmatpush1.msra.mxu0 %v8487
        %8585 = vmatprep.subr.mxu0 0.0
        %8586 = vmatpush1.msra.mxu0 %v8488
        %8587 = vmatprep.subr.mxu0 0.0
        %8588 = vmatpush1.msra.mxu0 %v8489
        %8589 = vmatprep.subr.mxu0 0.0
        %8590 = vmatpush1.msra.mxu0 %v8490
        %8591 = vmatprep.subr.mxu0 0.0
        %8592 = vmatpush1.msra.mxu0 %v8491
        %8593 = vmatprep.subr.mxu0 0.0
        %8594 = vmatpush1.msra.mxu0 %v8492
        %8595 = vmatprep.subr.mxu0 0.0
        %8596 = vmatpush1.msra.mxu0 %v8493
        %8597 = vmatprep.subr.mxu0 0.0
        %8598 = vmatpush1.msra.mxu0 %v8494
        %8599 = vmatprep.subr.mxu0 0.0
        %8600 = vmatpush1.msra.mxu0 %v8495
        %8601 = vmatprep.subr.mxu0 0.0
        %8602 = vmatpush1.msra.mxu0 %v8496
        %8603 = vmatprep.subr.mxu0 0.0
        %8604 = vmatpush1.msra.mxu0 %v8497
        %8605 = vmatprep.subr.mxu0 0.0
        %8606 = vmatpush1.msra.mxu0 %v8498
        %8607 = vmatprep.subr.mxu0 0.0
        %8608 = vmatpush1.msra.mxu0 %v8499
        %8609 = vmatprep.subr.mxu0 0.0
        %8610 = vmatpush1.msra.mxu0 %v8500
        %8611 = vmatprep.subr.mxu0 0.0
        %8612 = vmatpush1.msra.mxu0 %v8501
        %8613 = vmatprep.subr.mxu0 0.0
        %8614 = vmatpush1.msra.mxu0 %v8502
        %8615 = vmatprep.subr.mxu0 0.0
        %8616 = vmatpush1.msra.mxu0 0.0
        %8617 = vmatprep.subr.mxu0 0.0
        %8618 = vmatpush1.msra.mxu0 0.0
        %8619 = vmatprep.subr.mxu0 0.0
        %8620 = vmatpush1.msra.mxu0 0.0
        %8621 = vmatprep.subr.mxu0 0.0
        %8622 = vmatpush1.msra.mxu0 0.0
        %8623 = vmatprep.subr.mxu0 0.0
        %8624 = vmatpush1.msra.mxu0 0.0
        %8625 = vmatprep.subr.mxu0 0.0
        %8626 = vmatpush1.msra.mxu0 0.0
        %8627 = vmatprep.subr.mxu0 0.0
        %8628 = vmatpush1.msra.mxu0 0.0
        %8629 = vmatprep.subr.mxu0 0.0
        %8630 = vmatpush1.msra.mxu0 0.0
        %8631 = vmatprep.mubr.f32.mxu0 %v8503
        %8632 = vmatmul.mubr.f32.gmra.mrb[0].mxu0 %v8289
        %v8633 = vpop.f32.mrb[0].mxu0
        %v8634 = vadd.f32 0.0, %v8633
        %v8635 = vpop.f32.mrb[0].mxu0
        %8636 = vmatprep.mubr.f32.mxu0 %v8505
        %8637 = vmatmul.mubr.f32.gmra.mrb[0].mxu0 %v8294
        %v8638 = vpop.f32.mrb[0].mxu0
        %v8639 = vadd.f32 0.0, %v8638
        %v8640 = vpop.f32.mrb[0].mxu0
        %8641 = vmatprep.mubr.f32.mxu0 %v8507
        %8642 = vmatmul.mubr.f32.gmra.mrb[0].mxu0 %v8299
        %v8643 = vpop.f32.mrb[0].mxu0
        %v8644 = vadd.f32 0.0, %v8643
        %v8645 = vpop.f32.mrb[0].mxu0
        %8646 = vmatprep.mubr.f32.mxu0 %v8509
        %8647 = vmatmul.mubr.f32.gmra.mrb[0].mxu0 %v8304
        %v8648 = vpop.f32.mrb[0].mxu0
        %v8649 = vadd.f32 0.0, %v8648
        %v8650 = vpop.f32.mrb[0].mxu0
        %8651 = vmatprep.mubr.f32.mxu0 %v8511
        %8652 = vmatmul.mubr.f32.gmra.mrb[0].mxu0 %v8309
        %v8653 = vpop.f32.mrb[0].mxu0
        %v8654 = vadd.f32 0.0, %v8653
        %v8655 = vpop.f32.mrb[0].mxu0
        %8656 = vmatprep.mubr.f32.mxu0 %v8513
        %8657 = vmatmul.mubr.f32.gmra.mrb[0].mxu0 %v8314
        %v8658 = vpop.f32.mrb[0].mxu0
        %v8659 = vadd.f32 0.0, %v8658
        %v8660 = vpop.f32.mrb[0].mxu0
        %8661 = vmatprep.mubr.f32.mxu0 %v8515
        %8662 = vmatmul.mubr.f32.gmra.mrb[0].mxu0 %v8319
        %v8663 = vpop.f32.mrb[0].mxu0
        %v8664 = vadd.f32 0.0, %v8663
        %v8665 = vpop.f32.mrb[0].mxu0
        %8666 = vmatprep.mubr.f32.mxu0 %v8517
        %8667 = vmatmul.mubr.f32.gmra.mrb[0].mxu0 %v8324
        %v8668 = vpop.f32.mrb[0].mxu0
        %v8669 = vadd.f32 0.0, %v8668
        %v8670 = vpop.f32.mrb[0].mxu0
        %8671 = vmatprep.mubr.f32.mxu0 %v8519
        %8672 = vmatmul.mubr.f32.gmra.mrb[0].mxu0 %v8329
        %v8673 = vpop.f32.mrb[0].mxu0
        %v8674 = vadd.f32 0.0, %v8673
        %v8675 = vpop.f32.mrb[0].mxu0
        %8676 = vmatprep.mubr.f32.mxu0 %v8521
        %8677 = vmatmul.mubr.f32.gmra.mrb[0].mxu0 %v8334
        %v8678 = vpop.f32.mrb[0].mxu0
        %v8679 = vadd.f32 0.0, %v8678
        %v8680 = vpop.f32.mrb[0].mxu0
        %8681 = vmatprep.mubr.f32.mxu0 %v8523
        %8682 = vmatmul.mubr.f32.gmra.mrb[0].mxu0 %v8339
        %v8683 = vpop.f32.mrb[0].mxu0
        %v8684 = vadd.f32 0.0, %v8683
        %v8685 = vpop.f32.mrb[0].mxu0
        %8686 = vmatprep.mubr.f32.mxu0 %v8525
        %8687 = vmatmul.mubr.f32.gmra.mrb[0].mxu0 %v8344
        %v8688 = vpop.f32.mrb[0].mxu0
        %v8689 = vadd.f32 0.0, %v8688
        %v8690 = vpop.f32.mrb[0].mxu0
        %8691 = vmatprep.mubr.f32.mxu0 %v8527
        %8692 = vmatmul.mubr.f32.gmra.mrb[0].mxu0 %v8349
        %v8693 = vpop.f32.mrb[0].mxu0
        %v8694 = vadd.f32 0.0, %v8693
        %v8695 = vpop.f32.mrb[0].mxu0
        %8696 = vmatprep.mubr.f32.mxu0 %v8529
        %8697 = vmatmul.mubr.f32.gmra.mrb[0].mxu0 %v8354
        %v8698 = vpop.f32.mrb[0].mxu0
        %v8699 = vadd.f32 0.0, %v8698
        %v8700 = vpop.f32.mrb[0].mxu0
        %8701 = vmatprep.mubr.f32.mxu0 %v8531
        %8702 = vmatmul.mubr.f32.gmra.mrb[0].mxu0 %v8359
        %v8703 = vpop.f32.mrb[0].mxu0
        %v8704 = vadd.f32 0.0, %v8703
        %v8705 = vpop.f32.mrb[0].mxu0
        %8706 = vmatprep.mubr.f32.mxu0 %v8533
        %8707 = vmatmul.mubr.f32.gmra.mrb[0].mxu0 %v8364
        %v8708 = vpop.f32.mrb[0].mxu0
        %v8709 = vadd.f32 0.0, %v8708
        %v8710 = vpop.f32.mrb[0].mxu0
        %8711 = vmatprep.mubr.f32.mxu0 %v8535
        %8712 = vmatmul.mubr.f32.gmra.mrb[0].mxu0 %v8369
        %v8713 = vpop.f32.mrb[0].mxu0
        %v8714 = vadd.f32 0.0, %v8713
        %v8715 = vpop.f32.mrb[0].mxu0
        %8716 = vmatprep.mubr.f32.mxu0 %v8537
        %8717 = vmatmul.mubr.f32.gmra.mrb[0].mxu0 %v8374
        %v8718 = vpop.f32.mrb[0].mxu0
        %v8719 = vadd.f32 0.0, %v8718
        %v8720 = vpop.f32.mrb[0].mxu0
        %8721 = vmatprep.mubr.f32.mxu0 %v8539
        %8722 = vmatmul.mubr.f32.gmra.mrb[0].mxu0 %v8379
        %v8723 = vpop.f32.mrb[0].mxu0
        %v8724 = vadd.f32 0.0, %v8723
        %v8725 = vpop.f32.mrb[0].mxu0
        %8726 = vmatprep.mubr.f32.mxu0 %v8541
        %8727 = vmatmul.mubr.f32.gmra.mrb[0].mxu0 %v8384
        %v8728 = vpop.f32.mrb[0].mxu0
        %v8729 = vadd.f32 0.0, %v8728
        %v8730 = vpop.f32.mrb[0].mxu0
        %8731 = vmatprep.mubr.f32.mxu0 %v8543
        %8732 = vmatmul.mubr.f32.gmra.mrb[0].mxu0 %v8389
        %v8733 = vpop.f32.mrb[0].mxu0
        %v8734 = vadd.f32 0.0, %v8733
        %v8735 = vpop.f32.mrb[0].mxu0
        %8736 = vmatprep.mubr.f32.mxu0 %v8545
        %8737 = vmatmul.mubr.f32.gmra.mrb[0].mxu0 %v8394
        %v8738 = vpop.f32.mrb[0].mxu0
        %v8739 = vadd.f32 0.0, %v8738
        %v8740 = vpop.f32.mrb[0].mxu0
        %8741 = vmatprep.mubr.f32.mxu0 %v8547
        %8742 = vmatmul.mubr.f32.gmra.mrb[0].mxu0 %v8399
        %v8743 = vpop.f32.mrb[0].mxu0
        %v8744 = vadd.f32 0.0, %v8743
        %v8745 = vpop.f32.mrb[0].mxu0
        %8746 = vmatprep.mubr.f32.mxu0 %v8549
        %8747 = vmatmul.mubr.f32.gmra.mrb[0].mxu0 %v8404
        %v8748 = vpop.f32.mrb[0].mxu0
        %v8749 = vadd.f32 0.0, %v8748
        %v8750 = vpop.f32.mrb[0].mxu0
        %8751 = vmatprep.mubr.f32.mxu0 %v8551
        %8752 = vmatmul.mubr.f32.gmra.mrb[0].mxu0 %v8409
        %v8753 = vpop.f32.mrb[0].mxu0
        %v8754 = vadd.f32 0.0, %v8753
        %v8755 = vpop.f32.mrb[0].mxu0
        %8756 = vmatprep.mubr.f32.mxu0 %v8553
        %8757 = vmatmul.mubr.f32.gmra.mrb[0].mxu0 %v8414
        %v8758 = vpop.f32.mrb[0].mxu0
        %v8759 = vadd.f32 0.0, %v8758
        %v8760 = vpop.f32.mrb[0].mxu0
        %8761 = vmatprep.mubr.f32.mxu0 %v8555
        %8762 = vmatmul.mubr.f32.gmra.mrb[0].mxu0 %v8419
        %v8763 = vpop.f32.mrb[0].mxu0
        %v8764 = vadd.f32 0.0, %v8763
        %v8765 = vpop.f32.mrb[0].mxu0
        %8766 = vmatprep.mubr.f32.mxu0 %v8557
        %8767 = vmatmul.mubr.f32.gmra.mrb[0].mxu0 %v8424
        %v8768 = vpop.f32.mrb[0].mxu0
        %v8769 = vadd.f32 0.0, %v8768
        %v8770 = vpop.f32.mrb[0].mxu0
        %8771 = vmatprep.mubr.f32.mxu0 %v8559
        %8772 = vmatmul.mubr.f32.gmra.mrb[0].mxu0 %v8429
        %v8773 = vpop.f32.mrb[0].mxu0
        %v8774 = vadd.f32 0.0, %v8773
        %v8775 = vpop.f32.mrb[0].mxu0
        %8776 = vmatprep.mubr.f32.mxu0 %v8561
        %8777 = vmatmul.mubr.f32.gmra.mrb[0].mxu0 %v8434
        %v8778 = vpop.f32.mrb[0].mxu0
        %v8779 = vadd.f32 0.0, %v8778
        %v8780 = vpop.f32.mrb[0].mxu0
        %8781 = vmatprep.mubr.f32.mxu0 %v8563
        %8782 = vmatmul.mubr.f32.gmra.mrb[0].mxu0 %v8439
        %v8783 = vpop.f32.mrb[0].mxu0
        %v8784 = vadd.f32 0.0, %v8783
        %v8785 = vpop.f32.mrb[0].mxu0
        %8786 = vmatprep.mubr.f32.mxu0 %v8565
        %8787 = vmatmul.mubr.f32.gmra.mrb[0].mxu0 %v8444
        %v8788 = vpop.f32.mrb[0].mxu0
        %v8789 = vadd.f32 0.0, %v8788
        %v8790 = vpop.f32.mrb[0].mxu0
        %8791 = vdwg.mxu0
        %v8792 = vadd.f32 %v8127, %v8634
        %v8793 = vadd.f32 %v8128, %v8639
        %v8794 = vadd.f32 %v8129, %v8644
        %v8795 = vadd.f32 %v8130, %v8649
        %v8796 = vadd.f32 %v8131, %v8654
        %v8797 = vadd.f32 %v8132, %v8659
        %v8798 = vadd.f32 %v8133, %v8664
        %v8799 = vadd.f32 %v8134, %v8669
        %v8800 = vadd.f32 %v8135, %v8674
        %v8801 = vadd.f32 %v8136, %v8679
        %v8802 = vadd.f32 %v8137, %v8684
        %v8803 = vadd.f32 %v8138, %v8689
        %v8804 = vadd.f32 %v8139, %v8694
        %v8805 = vadd.f32 %v8140, %v8699
        %v8806 = vadd.f32 %v8141, %v8704
        %v8807 = vadd.f32 %v8142, %v8709
        %v8808 = vadd.f32 %v8143, %v8714
        %v8809 = vadd.f32 %v8144, %v8719
        %v8810 = vadd.f32 %v8145, %v8724
        %v8811 = vadd.f32 %v8146, %v8729
        %v8812 = vadd.f32 %v8147, %v8734
        %v8813 = vadd.f32 %v8148, %v8739
        %v8814 = vadd.f32 %v8149, %v8744
        %v8815 = vadd.f32 %v8150, %v8749
        %v8816 = vadd.f32 %v8151, %v8754
        %v8817 = vadd.f32 %v8152, %v8759
        %v8818 = vadd.f32 %v8153, %v8764
        %v8819 = vadd.f32 %v8154, %v8769
        %v8820 = vadd.f32 %v8155, %v8774
        %v8821 = vadd.f32 %v8156, %v8779
        %v8822 = vadd.f32 %v8157, %v8784
        %v8823 = vadd.f32 %v8158, %v8789
        %s8824 = scalar_lea.vmem [#allocation6], 96
        %v8825 = vld [vmem:[%s8824] sm:$0xff]
        %v8826 = vld [vmem:[%s8824 + $0x8] sm:$0xff]
        %v8827 = vld [vmem:[%s8824 + $0x10] sm:$0xff]
        %v8828 = vld [vmem:[%s8824 + $0x18] sm:$0xff]
        %v8829 = vld [vmem:[%s8824 + $0x30] sm:$0xff]
        %v8830 = vld [vmem:[%s8824 + $0x38] sm:$0xff]
        %v8831 = vld [vmem:[%s8824 + $0x40] sm:$0xff]
        %v8832 = vld [vmem:[%s8824 + $0x48] sm:$0xff]
        %v8833 = vld [vmem:[%s8824 + $0x60] sm:$0xff]
        %v8834 = vld [vmem:[%s8824 + $0x68] sm:$0xff]
        %v8835 = vld [vmem:[%s8824 + $0x70] sm:$0xff]
        %v8836 = vld [vmem:[%s8824 + $0x78] sm:$0xff]
        %v8837 = vld [vmem:[%s8824 + $0x90] sm:$0xff]
        %v8838 = vld [vmem:[%s8824 + $0x98] sm:$0xff]
        %v8839 = vld [vmem:[%s8824 + $0xa0] sm:$0xff]
        %v8840 = vld [vmem:[%s8824 + $0xa8] sm:$0xff]
        %v8841 = vld [vmem:[%s8824 + $0xc0] sm:$0xff]
        %v8842 = vld [vmem:[%s8824 + $0xc8] sm:$0xff]
        %v8843 = vld [vmem:[%s8824 + $0xd0] sm:$0xff]
        %v8844 = vld [vmem:[%s8824 + $0xd8] sm:$0xff]
        %v8845 = vld [vmem:[%s8824 + $0xf0] sm:$0xff]
        %v8846 = vld [vmem:[%s8824 + $0xf8] sm:$0xff]
        %v8847 = vld [vmem:[%s8824 + $0x100] sm:$0xff]
        %v8848 = vld [vmem:[%s8824 + $0x108] sm:$0xff]
        %v8849 = vld [vmem:[%s8824 + $0x120] sm:$0xff]
        %v8850 = vld [vmem:[%s8824 + $0x128] sm:$0xff]
        %v8851 = vld [vmem:[%s8824 + $0x130] sm:$0xff]
        %v8852 = vld [vmem:[%s8824 + $0x138] sm:$0xff]
        %v8853 = vld [vmem:[%s8824 + $0x150] sm:$0xff]
        %v8854 = vld [vmem:[%s8824 + $0x158] sm:$0xff]
        %v8855 = vld [vmem:[%s8824 + $0x160] sm:$0xff]
        %v8856 = vld [vmem:[%s8824 + $0x168] sm:$0xff]
        %v8857 = vld [vmem:[%s8824 + $0x180] sm:$0xff]
        %v8858 = vld [vmem:[%s8824 + $0x188] sm:$0xff]
        %v8859 = vld [vmem:[%s8824 + $0x190] sm:$0xff]
        %v8860 = vld [vmem:[%s8824 + $0x198] sm:$0xff]
        %v8861 = vld [vmem:[%s8824 + $0x1b0] sm:$0xff]
        %v8862 = vld [vmem:[%s8824 + $0x1b8] sm:$0xff]
        %v8863 = vld [vmem:[%s8824 + $0x1c0] sm:$0xff]
        %v8864 = vld [vmem:[%s8824 + $0x1c8] sm:$0xff]
        %v8865 = vld [vmem:[%s8824 + $0x1e0] sm:$0xff]
        %v8866 = vld [vmem:[%s8824 + $0x1e8] sm:$0xff]
        %v8867 = vld [vmem:[%s8824 + $0x1f0] sm:$0xff]
        %v8868 = vld [vmem:[%s8824 + $0x1f8] sm:$0xff]
        %v8869 = vld [vmem:[%s8824 + $0x210] sm:$0xff]
        %v8870 = vld [vmem:[%s8824 + $0x218] sm:$0xff]
        %v8871 = vld [vmem:[%s8824 + $0x220] sm:$0xff]
        %v8872 = vld [vmem:[%s8824 + $0x228] sm:$0xff]
        %v8873 = vld [vmem:[%s8824 + $0x240] sm:$0xff]
        %v8874 = vld [vmem:[%s8824 + $0x248] sm:$0xff]
        %v8875 = vld [vmem:[%s8824 + $0x250] sm:$0xff]
        %v8876 = vld [vmem:[%s8824 + $0x258] sm:$0xff]
        %v8877 = vld [vmem:[%s8824 + $0x270] sm:$0xff]
        %v8878 = vld [vmem:[%s8824 + $0x278] sm:$0xff]
        %v8879 = vld [vmem:[%s8824 + $0x280] sm:$0xff]
        %v8880 = vld [vmem:[%s8824 + $0x288] sm:$0xff]
        %v8881 = vld [vmem:[%s8824 + $0x2a0] sm:$0xff]
        %v8882 = vld [vmem:[%s8824 + $0x2a8] sm:$0xff]
        %v8883 = vld [vmem:[%s8824 + $0x2b0] sm:$0xff]
        %v8884 = vld [vmem:[%s8824 + $0x2b8] sm:$0xff]
        %v8885 = vld [vmem:[%s8824 + $0x2d0] sm:$0xff]
        %v8886 = vld [vmem:[%s8824 + $0x2d8] sm:$0xff]
        %v8887 = vld [vmem:[%s8824 + $0x2e0] sm:$0xff]
        %v8888 = vld [vmem:[%s8824 + $0x2e8] sm:$0xff]
        %v8889 = vld [vmem:[#allocation12 + $0x480] sm:$0xff]
        %v8890 = vld [vmem:[#allocation12 + $0x488] sm:$0xff]
        %v8891 = vld [vmem:[#allocation12 + $0x490] sm:$0xff]
        %v8892 = vld [vmem:[#allocation12 + $0x498] sm:$0xff]
        %v8893 = vld [vmem:[#allocation12 + $0x4a0] sm:$0xff]
        %v8894 = vld [vmem:[#allocation12 + $0x4a8] sm:$0xff]
        %v8895 = vld [vmem:[#allocation12 + $0x4b0] sm:$0xff]
        %v8896 = vld [vmem:[#allocation12 + $0x4b8] sm:$0xff]
        %v8897 = vld [vmem:[#allocation12 + $0x4c0] sm:$0xff]
        %v8898 = vld [vmem:[#allocation12 + $0x4c8] sm:$0xff]
        %v8899 = vld [vmem:[#allocation12 + $0x4d0] sm:$0xff]
        %v8900 = vld [vmem:[#allocation12 + $0x4d8] sm:$0xff]
        %v8901 = vld [vmem:[#allocation12 + $0x4e0] sm:$0xff]
        %v8902 = vld [vmem:[#allocation12 + $0x4e8] sm:$0xff]
        %v8903 = vld [vmem:[#allocation12 + $0x4f0] sm:$0xff]
        %v8904 = vld [vmem:[#allocation12 + $0x4f8] sm:$0xff]
        %v8905 = vld [vmem:[#allocation12 + $0x500] sm:$0xff]
        %v8906 = vld [vmem:[#allocation12 + $0x508] sm:$0xff]
        %v8907 = vld [vmem:[#allocation12 + $0x510] sm:$0xff]
        %v8908 = vld [vmem:[#allocation12 + $0x518] sm:$0xff]
        %v8909 = vld [vmem:[#allocation12 + $0x520] sm:$0xff]
        %v8910 = vld [vmem:[#allocation12 + $0x528] sm:$0xff]
        %v8911 = vld [vmem:[#allocation12 + $0x530] sm:$0xff]
        %v8912 = vld [vmem:[#allocation12 + $0x538] sm:$0xff]
        %v8914 = vsel %vm4799, %v8826, 0
        %v8917 = vsel %vm4799, %v8828, 0
        %v8920 = vsel %vm4799, %v8830, 0
        %v8923 = vsel %vm4799, %v8832, 0
        %v8926 = vsel %vm4799, %v8834, 0
        %v8929 = vsel %vm4799, %v8836, 0
        %v8932 = vsel %vm4799, %v8838, 0
        %v8935 = vsel %vm4799, %v8840, 0
        %v8938 = vsel %vm4799, %v8842, 0
        %v8941 = vsel %vm4799, %v8844, 0
        %v8944 = vsel %vm4799, %v8846, 0
        %v8947 = vsel %vm4799, %v8848, 0
        %v8950 = vsel %vm4799, %v8850, 0
        %v8953 = vsel %vm4799, %v8852, 0
        %v8956 = vsel %vm4799, %v8854, 0
        %v8959 = vsel %vm4799, %v8856, 0
        %v8962 = vsel %vm4799, %v8858, 0
        %v8965 = vsel %vm4799, %v8860, 0
        %v8968 = vsel %vm4799, %v8862, 0
        %v8971 = vsel %vm4799, %v8864, 0
        %v8974 = vsel %vm4799, %v8866, 0
        %v8977 = vsel %vm4799, %v8868, 0
        %v8980 = vsel %vm4799, %v8870, 0
        %v8983 = vsel %vm4799, %v8872, 0
        %v8986 = vsel %vm4799, %v8874, 0
        %v8989 = vsel %vm4799, %v8876, 0
        %v8992 = vsel %vm4799, %v8878, 0
        %v8995 = vsel %vm4799, %v8880, 0
        %v8998 = vsel %vm4799, %v8882, 0
        %v9001 = vsel %vm4799, %v8884, 0
        %v9004 = vsel %vm4799, %v8886, 0
        %v9007 = vsel %vm4799, %v8888, 0
        %9009 = vmatprep.subr.mxu0 0.0
        %9010 = vmatpush1.msra.mxu0 %v8889
        %9011 = vmatprep.subr.mxu0 0.0
        %9012 = vmatpush1.msra.mxu0 %v8890
        %9013 = vmatprep.subr.mxu0 0.0
        %9014 = vmatpush1.msra.mxu0 %v8891
        %9015 = vmatprep.subr.mxu0 0.0
        %9016 = vmatpush1.msra.mxu0 %v8892
        %9017 = vmatprep.subr.mxu0 0.0
        %9018 = vmatpush1.msra.mxu0 %v8893
        %9019 = vmatprep.subr.mxu0 0.0
        %9020 = vmatpush1.msra.mxu0 %v8894
        %9021 = vmatprep.subr.mxu0 0.0
        %9022 = vmatpush1.msra.mxu0 %v8895
        %9023 = vmatprep.subr.mxu0 0.0
        %9024 = vmatpush1.msra.mxu0 %v8896
        %9025 = vmatprep.subr.mxu0 0.0
        %9026 = vmatpush1.msra.mxu0 %v8897
        %9027 = vmatprep.subr.mxu0 0.0
        %9028 = vmatpush1.msra.mxu0 %v8898
        %9029 = vmatprep.subr.mxu0 0.0
        %9030 = vmatpush1.msra.mxu0 %v8899
        %9031 = vmatprep.subr.mxu0 0.0
        %9032 = vmatpush1.msra.mxu0 %v8900
        %9033 = vmatprep.subr.mxu0 0.0
        %9034 = vmatpush1.msra.mxu0 %v8901
        %9035 = vmatprep.subr.mxu0 0.0
        %9036 = vmatpush1.msra.mxu0 %v8902
        %9037 = vmatprep.subr.mxu0 0.0
        %9038 = vmatpush1.msra.mxu0 %v8903
        %9039 = vmatprep.subr.mxu0 0.0
        %9040 = vmatpush1.msra.mxu0 %v8904
        %9041 = vmatprep.subr.mxu0 0.0
        %9042 = vmatpush1.msra.mxu0 %v8905
        %9043 = vmatprep.subr.mxu0 0.0
        %9044 = vmatpush1.msra.mxu0 %v8906
        %9045 = vmatprep.subr.mxu0 0.0
        %9046 = vmatpush1.msra.mxu0 %v8907
        %9047 = vmatprep.subr.mxu0 0.0
        %9048 = vmatpush1.msra.mxu0 %v8908
        %9049 = vmatprep.subr.mxu0 0.0
        %9050 = vmatpush1.msra.mxu0 %v8909
        %9051 = vmatprep.subr.mxu0 0.0
        %9052 = vmatpush1.msra.mxu0 %v8910
        %9053 = vmatprep.subr.mxu0 0.0
        %9054 = vmatpush1.msra.mxu0 %v8911
        %9055 = vmatprep.subr.mxu0 0.0
        %9056 = vmatpush1.msra.mxu0 %v8912
        %9057 = vmatprep.subr.mxu0 0.0
        %9058 = vmatpush1.msra.mxu0 0.0
        %9059 = vmatprep.subr.mxu0 0.0
        %9060 = vmatpush1.msra.mxu0 0.0
        %9061 = vmatprep.subr.mxu0 0.0
        %9062 = vmatpush1.msra.mxu0 0.0
        %9063 = vmatprep.subr.mxu0 0.0
        %9064 = vmatpush1.msra.mxu0 0.0
        %9065 = vmatprep.subr.mxu0 0.0
        %9066 = vmatpush1.msra.mxu0 0.0
        %9067 = vmatprep.subr.mxu0 0.0
        %9068 = vmatpush1.msra.mxu0 0.0
        %9069 = vmatprep.subr.mxu0 0.0
        %9070 = vmatpush1.msra.mxu0 0.0
        %9071 = vmatprep.subr.mxu0 0.0
        %9072 = vmatpush1.msra.mxu0 0.0
        %9073 = vmatprep.mubr.f32.mxu0 %v8914
        %9074 = vmatmul.mubr.f32.gmra.mrb[0].mxu0 %v8825
        %v9075 = vpop.f32.mrb[0].mxu0
        %v9076 = vadd.f32 0.0, %v9075
        %v9077 = vpop.f32.mrb[0].mxu0
        %9078 = vmatprep.mubr.f32.mxu0 %v8917
        %9079 = vmatmul.mubr.f32.gmra.mrb[0].mxu0 %v8827
        %v9080 = vpop.f32.mrb[0].mxu0
        %v9081 = vadd.f32 0.0, %v9080
        %v9082 = vpop.f32.mrb[0].mxu0
        %9083 = vmatprep.mubr.f32.mxu0 %v8920
        %9084 = vmatmul.mubr.f32.gmra.mrb[0].mxu0 %v8829
        %v9085 = vpop.f32.mrb[0].mxu0
        %v9086 = vadd.f32 0.0, %v9085
        %v9087 = vpop.f32.mrb[0].mxu0
        %9088 = vmatprep.mubr.f32.mxu0 %v8923
        %9089 = vmatmul.mubr.f32.gmra.mrb[0].mxu0 %v8831
        %v9090 = vpop.f32.mrb[0].mxu0
        %v9091 = vadd.f32 0.0, %v9090
        %v9092 = vpop.f32.mrb[0].mxu0
        %9093 = vmatprep.mubr.f32.mxu0 %v8926
        %9094 = vmatmul.mubr.f32.gmra.mrb[0].mxu0 %v8833
        %v9095 = vpop.f32.mrb[0].mxu0
        %v9096 = vadd.f32 0.0, %v9095
        %v9097 = vpop.f32.mrb[0].mxu0
        %9098 = vmatprep.mubr.f32.mxu0 %v8929
        %9099 = vmatmul.mubr.f32.gmra.mrb[0].mxu0 %v8835
        %v9100 = vpop.f32.mrb[0].mxu0
        %v9101 = vadd.f32 0.0, %v9100
        %v9102 = vpop.f32.mrb[0].mxu0
        %9103 = vmatprep.mubr.f32.mxu0 %v8932
        %9104 = vmatmul.mubr.f32.gmra.mrb[0].mxu0 %v8837
        %v9105 = vpop.f32.mrb[0].mxu0
        %v9106 = vadd.f32 0.0, %v9105
        %v9107 = vpop.f32.mrb[0].mxu0
        %9108 = vmatprep.mubr.f32.mxu0 %v8935
        %9109 = vmatmul.mubr.f32.gmra.mrb[0].mxu0 %v8839
        %v9110 = vpop.f32.mrb[0].mxu0
        %v9111 = vadd.f32 0.0, %v9110
        %v9112 = vpop.f32.mrb[0].mxu0
        %9113 = vmatprep.mubr.f32.mxu0 %v8938
        %9114 = vmatmul.mubr.f32.gmra.mrb[0].mxu0 %v8841
        %v9115 = vpop.f32.mrb[0].mxu0
        %v9116 = vadd.f32 0.0, %v9115
        %v9117 = vpop.f32.mrb[0].mxu0
        %9118 = vmatprep.mubr.f32.mxu0 %v8941
        %9119 = vmatmul.mubr.f32.gmra.mrb[0].mxu0 %v8843
        %v9120 = vpop.f32.mrb[0].mxu0
        %v9121 = vadd.f32 0.0, %v9120
        %v9122 = vpop.f32.mrb[0].mxu0
        %9123 = vmatprep.mubr.f32.mxu0 %v8944
        %9124 = vmatmul.mubr.f32.gmra.mrb[0].mxu0 %v8845
        %v9125 = vpop.f32.mrb[0].mxu0
        %v9126 = vadd.f32 0.0, %v9125
        %v9127 = vpop.f32.mrb[0].mxu0
        %9128 = vmatprep.mubr.f32.mxu0 %v8947
        %9129 = vmatmul.mubr.f32.gmra.mrb[0].mxu0 %v8847
        %v9130 = vpop.f32.mrb[0].mxu0
        %v9131 = vadd.f32 0.0, %v9130
        %v9132 = vpop.f32.mrb[0].mxu0
        %9133 = vmatprep.mubr.f32.mxu0 %v8950
        %9134 = vmatmul.mubr.f32.gmra.mrb[0].mxu0 %v8849
        %v9135 = vpop.f32.mrb[0].mxu0
        %v9136 = vadd.f32 0.0, %v9135
        %v9137 = vpop.f32.mrb[0].mxu0
        %9138 = vmatprep.mubr.f32.mxu0 %v8953
        %9139 = vmatmul.mubr.f32.gmra.mrb[0].mxu0 %v8851
        %v9140 = vpop.f32.mrb[0].mxu0
        %v9141 = vadd.f32 0.0, %v9140
        %v9142 = vpop.f32.mrb[0].mxu0
        %9143 = vmatprep.mubr.f32.mxu0 %v8956
        %9144 = vmatmul.mubr.f32.gmra.mrb[0].mxu0 %v8853
        %v9145 = vpop.f32.mrb[0].mxu0
        %v9146 = vadd.f32 0.0, %v9145
        %v9147 = vpop.f32.mrb[0].mxu0
        %9148 = vmatprep.mubr.f32.mxu0 %v8959
        %9149 = vmatmul.mubr.f32.gmra.mrb[0].mxu0 %v8855
        %v9150 = vpop.f32.mrb[0].mxu0
        %v9151 = vadd.f32 0.0, %v9150
        %v9152 = vpop.f32.mrb[0].mxu0
        %9153 = vmatprep.mubr.f32.mxu0 %v8962
        %9154 = vmatmul.mubr.f32.gmra.mrb[0].mxu0 %v8857
        %v9155 = vpop.f32.mrb[0].mxu0
        %v9156 = vadd.f32 0.0, %v9155
        %v9157 = vpop.f32.mrb[0].mxu0
        %9158 = vmatprep.mubr.f32.mxu0 %v8965
        %9159 = vmatmul.mubr.f32.gmra.mrb[0].mxu0 %v8859
        %v9160 = vpop.f32.mrb[0].mxu0
        %v9161 = vadd.f32 0.0, %v9160
        %v9162 = vpop.f32.mrb[0].mxu0
        %9163 = vmatprep.mubr.f32.mxu0 %v8968
        %9164 = vmatmul.mubr.f32.gmra.mrb[0].mxu0 %v8861
        %v9165 = vpop.f32.mrb[0].mxu0
        %v9166 = vadd.f32 0.0, %v9165
        %v9167 = vpop.f32.mrb[0].mxu0
        %9168 = vmatprep.mubr.f32.mxu0 %v8971
        %9169 = vmatmul.mubr.f32.gmra.mrb[0].mxu0 %v8863
        %v9170 = vpop.f32.mrb[0].mxu0
        %v9171 = vadd.f32 0.0, %v9170
        %v9172 = vpop.f32.mrb[0].mxu0
        %9173 = vmatprep.mubr.f32.mxu0 %v8974
        %9174 = vmatmul.mubr.f32.gmra.mrb[0].mxu0 %v8865
        %v9175 = vpop.f32.mrb[0].mxu0
        %v9176 = vadd.f32 0.0, %v9175
        %v9177 = vpop.f32.mrb[0].mxu0
        %9178 = vmatprep.mubr.f32.mxu0 %v8977
        %9179 = vmatmul.mubr.f32.gmra.mrb[0].mxu0 %v8867
        %v9180 = vpop.f32.mrb[0].mxu0
        %v9181 = vadd.f32 0.0, %v9180
        %v9182 = vpop.f32.mrb[0].mxu0
        %9183 = vmatprep.mubr.f32.mxu0 %v8980
        %9184 = vmatmul.mubr.f32.gmra.mrb[0].mxu0 %v8869
        %v9185 = vpop.f32.mrb[0].mxu0
        %v9186 = vadd.f32 0.0, %v9185
        %v9187 = vpop.f32.mrb[0].mxu0
        %9188 = vmatprep.mubr.f32.mxu0 %v8983
        %9189 = vmatmul.mubr.f32.gmra.mrb[0].mxu0 %v8871
        %v9190 = vpop.f32.mrb[0].mxu0
        %v9191 = vadd.f32 0.0, %v9190
        %v9192 = vpop.f32.mrb[0].mxu0
        %9193 = vmatprep.mubr.f32.mxu0 %v8986
        %9194 = vmatmul.mubr.f32.gmra.mrb[0].mxu0 %v8873
        %v9195 = vpop.f32.mrb[0].mxu0
        %v9196 = vadd.f32 0.0, %v9195
        %v9197 = vpop.f32.mrb[0].mxu0
        %9198 = vmatprep.mubr.f32.mxu0 %v8989
        %9199 = vmatmul.mubr.f32.gmra.mrb[0].mxu0 %v8875
        %v9200 = vpop.f32.mrb[0].mxu0
        %v9201 = vadd.f32 0.0, %v9200
        %v9202 = vpop.f32.mrb[0].mxu0
        %9203 = vmatprep.mubr.f32.mxu0 %v8992
        %9204 = vmatmul.mubr.f32.gmra.mrb[0].mxu0 %v8877
        %v9205 = vpop.f32.mrb[0].mxu0
        %v9206 = vadd.f32 0.0, %v9205
        %v9207 = vpop.f32.mrb[0].mxu0
        %9208 = vmatprep.mubr.f32.mxu0 %v8995
        %9209 = vmatmul.mubr.f32.gmra.mrb[0].mxu0 %v8879
        %v9210 = vpop.f32.mrb[0].mxu0
        %v9211 = vadd.f32 0.0, %v9210
        %v9212 = vpop.f32.mrb[0].mxu0
        %9213 = vmatprep.mubr.f32.mxu0 %v8998
        %9214 = vmatmul.mubr.f32.gmra.mrb[0].mxu0 %v8881
        %v9215 = vpop.f32.mrb[0].mxu0
        %v9216 = vadd.f32 0.0, %v9215
        %v9217 = vpop.f32.mrb[0].mxu0
        %9218 = vmatprep.mubr.f32.mxu0 %v9001
        %9219 = vmatmul.mubr.f32.gmra.mrb[0].mxu0 %v8883
        %v9220 = vpop.f32.mrb[0].mxu0
        %v9221 = vadd.f32 0.0, %v9220
        %v9222 = vpop.f32.mrb[0].mxu0
        %9223 = vmatprep.mubr.f32.mxu0 %v9004
        %9224 = vmatmul.mubr.f32.gmra.mrb[0].mxu0 %v8885
        %v9225 = vpop.f32.mrb[0].mxu0
        %v9226 = vadd.f32 0.0, %v9225
        %v9227 = vpop.f32.mrb[0].mxu0
        %9228 = vmatprep.mubr.f32.mxu0 %v9007
        %9229 = vmatmul.mubr.f32.gmra.mrb[0].mxu0 %v8887
        %v9230 = vpop.f32.mrb[0].mxu0
        %v9231 = vadd.f32 0.0, %v9230
        %v9232 = vpop.f32.mrb[0].mxu0
        %9233 = vdwg.mxu0
        %v9234 = vadd.f32 %v8792, %v9076
        %v9235 = vadd.f32 %v8793, %v9081
        %v9236 = vadd.f32 %v8794, %v9086
        %v9237 = vadd.f32 %v8795, %v9091
        %v9238 = vadd.f32 %v8796, %v9096
        %v9239 = vadd.f32 %v8797, %v9101
        %v9240 = vadd.f32 %v8798, %v9106
        %v9241 = vadd.f32 %v8799, %v9111
        %v9242 = vadd.f32 %v8800, %v9116
        %v9243 = vadd.f32 %v8801, %v9121
        %v9244 = vadd.f32 %v8802, %v9126
        %v9245 = vadd.f32 %v8803, %v9131
        %v9246 = vadd.f32 %v8804, %v9136
        %v9247 = vadd.f32 %v8805, %v9141
        %v9248 = vadd.f32 %v8806, %v9146
        %v9249 = vadd.f32 %v8807, %v9151
        %v9250 = vadd.f32 %v8808, %v9156
        %v9251 = vadd.f32 %v8809, %v9161
        %v9252 = vadd.f32 %v8810, %v9166
        %v9253 = vadd.f32 %v8811, %v9171
        %v9254 = vadd.f32 %v8812, %v9176
        %v9255 = vadd.f32 %v8813, %v9181
        %v9256 = vadd.f32 %v8814, %v9186
        %v9257 = vadd.f32 %v8815, %v9191
        %v9258 = vadd.f32 %v8816, %v9196
        %v9259 = vadd.f32 %v8817, %v9201
        %v9260 = vadd.f32 %v8818, %v9206
        %v9261 = vadd.f32 %v8819, %v9211
        %v9262 = vadd.f32 %v8820, %v9216
        %v9263 = vadd.f32 %v8821, %v9221
        %v9264 = vadd.f32 %v8822, %v9226
        %v9265 = vadd.f32 %v8823, %v9231
        %v9266 = vld [vmem:[%s8824] sm:$0xfe]
        %v9267 = vld [vmem:[%s8824 + $0x8] sm:$0xfe]
        %v9268 = vld [vmem:[%s8824 + $0x10] sm:$0xff]
        %v9269 = vld [vmem:[%s8824 + $0x18] sm:$0xff]
        %v9270 = vld [vmem:[%s8824 + $0x20] sm:$0x1]
        %v9271 = vld [vmem:[%s8824 + $0x28] sm:$0x1]
        %v9272 = vld [vmem:[%s8824 + $0x30] sm:$0xfe]
        %v9273 = vld [vmem:[%s8824 + $0x38] sm:$0xfe]
        %v9274 = vld [vmem:[%s8824 + $0x40] sm:$0xff]
        %v9275 = vld [vmem:[%s8824 + $0x48] sm:$0xff]
        %v9276 = vld [vmem:[%s8824 + $0x50] sm:$0x1]
        %v9277 = vld [vmem:[%s8824 + $0x58] sm:$0x1]
        %v9278 = vld [vmem:[%s8824 + $0x60] sm:$0xfe]
        %v9279 = vld [vmem:[%s8824 + $0x68] sm:$0xfe]
        %v9280 = vld [vmem:[%s8824 + $0x70] sm:$0xff]
        %v9281 = vld [vmem:[%s8824 + $0x78] sm:$0xff]
        %v9282 = vld [vmem:[%s8824 + $0x80] sm:$0x1]
        %v9283 = vld [vmem:[%s8824 + $0x88] sm:$0x1]
        %v9284 = vld [vmem:[%s8824 + $0x90] sm:$0xfe]
        %v9285 = vld [vmem:[%s8824 + $0x98] sm:$0xfe]
        %v9286 = vld [vmem:[%s8824 + $0xa0] sm:$0xff]
        %v9287 = vld [vmem:[%s8824 + $0xa8] sm:$0xff]
        %v9288 = vld [vmem:[%s8824 + $0xb0] sm:$0x1]
        %v9289 = vld [vmem:[%s8824 + $0xb8] sm:$0x1]
        %v9290 = vld [vmem:[%s8824 + $0xc0] sm:$0xfe]
        %v9291 = vld [vmem:[%s8824 + $0xc8] sm:$0xfe]
        %v9292 = vld [vmem:[%s8824 + $0xd0] sm:$0xff]
        %v9293 = vld [vmem:[%s8824 + $0xd8] sm:$0xff]
        %v9294 = vld [vmem:[%s8824 + $0xe0] sm:$0x1]
        %v9295 = vld [vmem:[%s8824 + $0xe8] sm:$0x1]
        %v9296 = vld [vmem:[%s8824 + $0xf0] sm:$0xfe]
        %v9297 = vld [vmem:[%s8824 + $0xf8] sm:$0xfe]
        %v9298 = vld [vmem:[%s8824 + $0x100] sm:$0xff]
        %v9299 = vld [vmem:[%s8824 + $0x108] sm:$0xff]
        %v9300 = vld [vmem:[%s8824 + $0x110] sm:$0x1]
        %v9301 = vld [vmem:[%s8824 + $0x118] sm:$0x1]
        %v9302 = vld [vmem:[%s8824 + $0x120] sm:$0xfe]
        %v9303 = vld [vmem:[%s8824 + $0x128] sm:$0xfe]
        %v9304 = vld [vmem:[%s8824 + $0x130] sm:$0xff]
        %v9305 = vld [vmem:[%s8824 + $0x138] sm:$0xff]
        %v9306 = vld [vmem:[%s8824 + $0x140] sm:$0x1]
        %v9307 = vld [vmem:[%s8824 + $0x148] sm:$0x1]
        %v9308 = vld [vmem:[%s8824 + $0x150] sm:$0xfe]
        %v9309 = vld [vmem:[%s8824 + $0x158] sm:$0xfe]
        %v9310 = vld [vmem:[%s8824 + $0x160] sm:$0xff]
        %v9311 = vld [vmem:[%s8824 + $0x168] sm:$0xff]
        %v9312 = vld [vmem:[%s8824 + $0x170] sm:$0x1]
        %v9313 = vld [vmem:[%s8824 + $0x178] sm:$0x1]
        %v9314 = vld [vmem:[%s8824 + $0x180] sm:$0xfe]
        %v9315 = vld [vmem:[%s8824 + $0x188] sm:$0xfe]
        %v9316 = vld [vmem:[%s8824 + $0x190] sm:$0xff]
        %v9317 = vld [vmem:[%s8824 + $0x198] sm:$0xff]
        %v9318 = vld [vmem:[%s8824 + $0x1a0] sm:$0x1]
        %v9319 = vld [vmem:[%s8824 + $0x1a8] sm:$0x1]
        %v9320 = vld [vmem:[%s8824 + $0x1b0] sm:$0xfe]
        %v9321 = vld [vmem:[%s8824 + $0x1b8] sm:$0xfe]
        %v9322 = vld [vmem:[%s8824 + $0x1c0] sm:$0xff]
        %v9323 = vld [vmem:[%s8824 + $0x1c8] sm:$0xff]
        %v9324 = vld [vmem:[%s8824 + $0x1d0] sm:$0x1]
        %v9325 = vld [vmem:[%s8824 + $0x1d8] sm:$0x1]
        %v9326 = vld [vmem:[%s8824 + $0x1e0] sm:$0xfe]
        %v9327 = vld [vmem:[%s8824 + $0x1e8] sm:$0xfe]
        %v9328 = vld [vmem:[%s8824 + $0x1f0] sm:$0xff]
        %v9329 = vld [vmem:[%s8824 + $0x1f8] sm:$0xff]
        %v9330 = vld [vmem:[%s8824 + $0x200] sm:$0x1]
        %v9331 = vld [vmem:[%s8824 + $0x208] sm:$0x1]
        %v9332 = vld [vmem:[%s8824 + $0x210] sm:$0xfe]
        %v9333 = vld [vmem:[%s8824 + $0x218] sm:$0xfe]
        %v9334 = vld [vmem:[%s8824 + $0x220] sm:$0xff]
        %v9335 = vld [vmem:[%s8824 + $0x228] sm:$0xff]
        %v9336 = vld [vmem:[%s8824 + $0x230] sm:$0x1]
        %v9337 = vld [vmem:[%s8824 + $0x238] sm:$0x1]
        %v9338 = vld [vmem:[%s8824 + $0x240] sm:$0xfe]
        %v9339 = vld [vmem:[%s8824 + $0x248] sm:$0xfe]
        %v9340 = vld [vmem:[%s8824 + $0x250] sm:$0xff]
        %v9341 = vld [vmem:[%s8824 + $0x258] sm:$0xff]
        %v9342 = vld [vmem:[%s8824 + $0x260] sm:$0x1]
        %v9343 = vld [vmem:[%s8824 + $0x268] sm:$0x1]
        %v9344 = vld [vmem:[%s8824 + $0x270] sm:$0xfe]
        %v9345 = vld [vmem:[%s8824 + $0x278] sm:$0xfe]
        %v9346 = vld [vmem:[%s8824 + $0x280] sm:$0xff]
        %v9347 = vld [vmem:[%s8824 + $0x288] sm:$0xff]
        %v9348 = vld [vmem:[%s8824 + $0x290] sm:$0x1]
        %v9349 = vld [vmem:[%s8824 + $0x298] sm:$0x1]
        %v9350 = vld [vmem:[%s8824 + $0x2a0] sm:$0xfe]
        %v9351 = vld [vmem:[%s8824 + $0x2a8] sm:$0xfe]
        %v9352 = vld [vmem:[%s8824 + $0x2b0] sm:$0xff]
        %v9353 = vld [vmem:[%s8824 + $0x2b8] sm:$0xff]
        %v9354 = vld [vmem:[%s8824 + $0x2c0] sm:$0x1]
        %v9355 = vld [vmem:[%s8824 + $0x2c8] sm:$0x1]
        %v9356 = vld [vmem:[%s8824 + $0x2d0] sm:$0xfe]
        %v9357 = vld [vmem:[%s8824 + $0x2d8] sm:$0xfe]
        %v9358 = vld [vmem:[%s8824 + $0x2e0] sm:$0xff]
        %v9359 = vld [vmem:[%s8824 + $0x2e8] sm:$0xff]
        %v9360 = vld [vmem:[%s8824 + $0x2f0] sm:$0x1]
        %v9361 = vld [vmem:[%s8824 + $0x2f8] sm:$0x1]
        %v9458 = vrot.slane %v9266, 1
        %v9459 = vrot.slane %v9268, 1
        %v9460 = vsel %vm5512, %v9458, %v9459
        %v9461 = vrot.slane %v9267, 1
        %v9462 = vrot.slane %v9269, 1
        %v9463 = vsel %vm5512, %v9461, %v9462
        %v9464 = vrot.slane %v9270, 1
        %v9465 = vsel %vm5512, %v9459, %v9464
        %v9466 = vrot.slane %v9271, 1
        %v9467 = vsel %vm5512, %v9462, %v9466
        %v9468 = vrot.slane %v9272, 1
        %v9469 = vrot.slane %v9274, 1
        %v9470 = vsel %vm5512, %v9468, %v9469
        %v9471 = vrot.slane %v9273, 1
        %v9472 = vrot.slane %v9275, 1
        %v9473 = vsel %vm5512, %v9471, %v9472
        %v9474 = vrot.slane %v9276, 1
        %v9475 = vsel %vm5512, %v9469, %v9474
        %v9476 = vrot.slane %v9277, 1
        %v9477 = vsel %vm5512, %v9472, %v9476
        %v9478 = vrot.slane %v9278, 1
        %v9479 = vrot.slane %v9280, 1
        %v9480 = vsel %vm5512, %v9478, %v9479
        %v9481 = vrot.slane %v9279, 1
        %v9482 = vrot.slane %v9281, 1
        %v9483 = vsel %vm5512, %v9481, %v9482
        %v9484 = vrot.slane %v9282, 1
        %v9485 = vsel %vm5512, %v9479, %v9484
        %v9486 = vrot.slane %v9283, 1
        %v9487 = vsel %vm5512, %v9482, %v9486
        %v9488 = vrot.slane %v9284, 1
        %v9489 = vrot.slane %v9286, 1
        %v9490 = vsel %vm5512, %v9488, %v9489
        %v9491 = vrot.slane %v9285, 1
        %v9492 = vrot.slane %v9287, 1
        %v9493 = vsel %vm5512, %v9491, %v9492
        %v9494 = vrot.slane %v9288, 1
        %v9495 = vsel %vm5512, %v9489, %v9494
        %v9496 = vrot.slane %v9289, 1
        %v9497 = vsel %vm5512, %v9492, %v9496
        %v9498 = vrot.slane %v9290, 1
        %v9499 = vrot.slane %v9292, 1
        %v9500 = vsel %vm5512, %v9498, %v9499
        %v9501 = vrot.slane %v9291, 1
        %v9502 = vrot.slane %v9293, 1
        %v9503 = vsel %vm5512, %v9501, %v9502
        %v9504 = vrot.slane %v9294, 1
        %v9505 = vsel %vm5512, %v9499, %v9504
        %v9506 = vrot.slane %v9295, 1
        %v9507 = vsel %vm5512, %v9502, %v9506
        %v9508 = vrot.slane %v9296, 1
        %v9509 = vrot.slane %v9298, 1
        %v9510 = vsel %vm5512, %v9508, %v9509
        %v9511 = vrot.slane %v9297, 1
        %v9512 = vrot.slane %v9299, 1
        %v9513 = vsel %vm5512, %v9511, %v9512
        %v9514 = vrot.slane %v9300, 1
        %v9515 = vsel %vm5512, %v9509, %v9514
        %v9516 = vrot.slane %v9301, 1
        %v9517 = vsel %vm5512, %v9512, %v9516
        %v9518 = vrot.slane %v9302, 1
        %v9519 = vrot.slane %v9304, 1
        %v9520 = vsel %vm5512, %v9518, %v9519
        %v9521 = vrot.slane %v9303, 1
        %v9522 = vrot.slane %v9305, 1
        %v9523 = vsel %vm5512, %v9521, %v9522
        %v9524 = vrot.slane %v9306, 1
        %v9525 = vsel %vm5512, %v9519, %v9524
        %v9526 = vrot.slane %v9307, 1
        %v9527 = vsel %vm5512, %v9522, %v9526
        %v9528 = vrot.slane %v9308, 1
        %v9529 = vrot.slane %v9310, 1
        %v9530 = vsel %vm5512, %v9528, %v9529
        %v9531 = vrot.slane %v9309, 1
        %v9532 = vrot.slane %v9311, 1
        %v9533 = vsel %vm5512, %v9531, %v9532
        %v9534 = vrot.slane %v9312, 1
        %v9535 = vsel %vm5512, %v9529, %v9534
        %v9536 = vrot.slane %v9313, 1
        %v9537 = vsel %vm5512, %v9532, %v9536
        %v9538 = vrot.slane %v9314, 1
        %v9539 = vrot.slane %v9316, 1
        %v9540 = vsel %vm5512, %v9538, %v9539
        %v9541 = vrot.slane %v9315, 1
        %v9542 = vrot.slane %v9317, 1
        %v9543 = vsel %vm5512, %v9541, %v9542
        %v9544 = vrot.slane %v9318, 1
        %v9545 = vsel %vm5512, %v9539, %v9544
        %v9546 = vrot.slane %v9319, 1
        %v9547 = vsel %vm5512, %v9542, %v9546
        %v9548 = vrot.slane %v9320, 1
        %v9549 = vrot.slane %v9322, 1
        %v9550 = vsel %vm5512, %v9548, %v9549
        %v9551 = vrot.slane %v9321, 1
        %v9552 = vrot.slane %v9323, 1
        %v9553 = vsel %vm5512, %v9551, %v9552
        %v9554 = vrot.slane %v9324, 1
        %v9555 = vsel %vm5512, %v9549, %v9554
        %v9556 = vrot.slane %v9325, 1
        %v9557 = vsel %vm5512, %v9552, %v9556
        %v9558 = vrot.slane %v9326, 1
        %v9559 = vrot.slane %v9328, 1
        %v9560 = vsel %vm5512, %v9558, %v9559
        %v9561 = vrot.slane %v9327, 1
        %v9562 = vrot.slane %v9329, 1
        %v9563 = vsel %vm5512, %v9561, %v9562
        %v9564 = vrot.slane %v9330, 1
        %v9565 = vsel %vm5512, %v9559, %v9564
        %v9566 = vrot.slane %v9331, 1
        %v9567 = vsel %vm5512, %v9562, %v9566
        %v9568 = vrot.slane %v9332, 1
        %v9569 = vrot.slane %v9334, 1
        %v9570 = vsel %vm5512, %v9568, %v9569
        %v9571 = vrot.slane %v9333, 1
        %v9572 = vrot.slane %v9335, 1
        %v9573 = vsel %vm5512, %v9571, %v9572
        %v9574 = vrot.slane %v9336, 1
        %v9575 = vsel %vm5512, %v9569, %v9574
        %v9576 = vrot.slane %v9337, 1
        %v9577 = vsel %vm5512, %v9572, %v9576
        %v9578 = vrot.slane %v9338, 1
        %v9579 = vrot.slane %v9340, 1
        %v9580 = vsel %vm5512, %v9578, %v9579
        %v9581 = vrot.slane %v9339, 1
        %v9582 = vrot.slane %v9341, 1
        %v9583 = vsel %vm5512, %v9581, %v9582
        %v9584 = vrot.slane %v9342, 1
        %v9585 = vsel %vm5512, %v9579, %v9584
        %v9586 = vrot.slane %v9343, 1
        %v9587 = vsel %vm5512, %v9582, %v9586
        %v9588 = vrot.slane %v9344, 1
        %v9589 = vrot.slane %v9346, 1
        %v9590 = vsel %vm5512, %v9588, %v9589
        %v9591 = vrot.slane %v9345, 1
        %v9592 = vrot.slane %v9347, 1
        %v9593 = vsel %vm5512, %v9591, %v9592
        %v9594 = vrot.slane %v9348, 1
        %v9595 = vsel %vm5512, %v9589, %v9594
        %v9596 = vrot.slane %v9349, 1
        %v9597 = vsel %vm5512, %v9592, %v9596
        %v9598 = vrot.slane %v9350, 1
        %v9599 = vrot.slane %v9352, 1
        %v9600 = vsel %vm5512, %v9598, %v9599
        %v9601 = vrot.slane %v9351, 1
        %v9602 = vrot.slane %v9353, 1
        %v9603 = vsel %vm5512, %v9601, %v9602
        %v9604 = vrot.slane %v9354, 1
        %v9605 = vsel %vm5512, %v9599, %v9604
        %v9606 = vrot.slane %v9355, 1
        %v9607 = vsel %vm5512, %v9602, %v9606
        %v9608 = vrot.slane %v9356, 1
        %v9609 = vrot.slane %v9358, 1
        %v9610 = vsel %vm5512, %v9608, %v9609
        %v9611 = vrot.slane %v9357, 1
        %v9612 = vrot.slane %v9359, 1
        %v9613 = vsel %vm5512, %v9611, %v9612
        %v9614 = vrot.slane %v9360, 1
        %v9615 = vsel %vm5512, %v9609, %v9614
        %v9616 = vrot.slane %v9361, 1
        %v9617 = vsel %vm5512, %v9612, %v9616
        %v9650 = vld [vmem:[#allocation12 + $0x540] sm:$0xff]
        %v9651 = vld [vmem:[#allocation12 + $0x548] sm:$0xff]
        %v9652 = vld [vmem:[#allocation12 + $0x550] sm:$0xff]
        %v9653 = vld [vmem:[#allocation12 + $0x558] sm:$0xff]
        %v9654 = vld [vmem:[#allocation12 + $0x560] sm:$0xff]
        %v9655 = vld [vmem:[#allocation12 + $0x568] sm:$0xff]
        %v9656 = vld [vmem:[#allocation12 + $0x570] sm:$0xff]
        %v9657 = vld [vmem:[#allocation12 + $0x578] sm:$0xff]
        %v9658 = vld [vmem:[#allocation12 + $0x580] sm:$0xff]
        %v9659 = vld [vmem:[#allocation12 + $0x588] sm:$0xff]
        %v9660 = vld [vmem:[#allocation12 + $0x590] sm:$0xff]
        %v9661 = vld [vmem:[#allocation12 + $0x598] sm:$0xff]
        %v9662 = vld [vmem:[#allocation12 + $0x5a0] sm:$0xff]
        %v9663 = vld [vmem:[#allocation12 + $0x5a8] sm:$0xff]
        %v9664 = vld [vmem:[#allocation12 + $0x5b0] sm:$0xff]
        %v9665 = vld [vmem:[#allocation12 + $0x5b8] sm:$0xff]
        %v9666 = vld [vmem:[#allocation12 + $0x5c0] sm:$0xff]
        %v9667 = vld [vmem:[#allocation12 + $0x5c8] sm:$0xff]
        %v9668 = vld [vmem:[#allocation12 + $0x5d0] sm:$0xff]
        %v9669 = vld [vmem:[#allocation12 + $0x5d8] sm:$0xff]
        %v9670 = vld [vmem:[#allocation12 + $0x5e0] sm:$0xff]
        %v9671 = vld [vmem:[#allocation12 + $0x5e8] sm:$0xff]
        %v9672 = vld [vmem:[#allocation12 + $0x5f0] sm:$0xff]
        %v9673 = vld [vmem:[#allocation12 + $0x5f8] sm:$0xff]
        %v9674 = vsel %vm4799, %v9463, 0
        %v9676 = vsel %vm4799, %v9467, 0
        %v9678 = vsel %vm4799, %v9473, 0
        %v9680 = vsel %vm4799, %v9477, 0
        %v9682 = vsel %vm4799, %v9483, 0
        %v9684 = vsel %vm4799, %v9487, 0
        %v9686 = vsel %vm4799, %v9493, 0
        %v9688 = vsel %vm4799, %v9497, 0
        %v9690 = vsel %vm4799, %v9503, 0
        %v9692 = vsel %vm4799, %v9507, 0
        %v9694 = vsel %vm4799, %v9513, 0
        %v9696 = vsel %vm4799, %v9517, 0
        %v9698 = vsel %vm4799, %v9523, 0
        %v9700 = vsel %vm4799, %v9527, 0
        %v9702 = vsel %vm4799, %v9533, 0
        %v9704 = vsel %vm4799, %v9537, 0
        %v9706 = vsel %vm4799, %v9543, 0
        %v9708 = vsel %vm4799, %v9547, 0
        %v9710 = vsel %vm4799, %v9553, 0
        %v9712 = vsel %vm4799, %v9557, 0
        %v9714 = vsel %vm4799, %v9563, 0
        %v9716 = vsel %vm4799, %v9567, 0
        %v9718 = vsel %vm4799, %v9573, 0
        %v9720 = vsel %vm4799, %v9577, 0
        %v9722 = vsel %vm4799, %v9583, 0
        %v9724 = vsel %vm4799, %v9587, 0
        %v9726 = vsel %vm4799, %v9593, 0
        %v9728 = vsel %vm4799, %v9597, 0
        %v9730 = vsel %vm4799, %v9603, 0
        %v9732 = vsel %vm4799, %v9607, 0
        %v9734 = vsel %vm4799, %v9613, 0
        %v9736 = vsel %vm4799, %v9617, 0
        %9738 = vmatprep.subr.mxu0 0.0
        %9739 = vmatpush1.msra.mxu0 %v9650
        %9740 = vmatprep.subr.mxu0 0.0
        %9741 = vmatpush1.msra.mxu0 %v9651
        %9742 = vmatprep.subr.mxu0 0.0
        %9743 = vmatpush1.msra.mxu0 %v9652
        %9744 = vmatprep.subr.mxu0 0.0
        %9745 = vmatpush1.msra.mxu0 %v9653
        %9746 = vmatprep.subr.mxu0 0.0
        %9747 = vmatpush1.msra.mxu0 %v9654
        %9748 = vmatprep.subr.mxu0 0.0
        %9749 = vmatpush1.msra.mxu0 %v9655
        %9750 = vmatprep.subr.mxu0 0.0
        %9751 = vmatpush1.msra.mxu0 %v9656
        %9752 = vmatprep.subr.mxu0 0.0
        %9753 = vmatpush1.msra.mxu0 %v9657
        %9754 = vmatprep.subr.mxu0 0.0
        %9755 = vmatpush1.msra.mxu0 %v9658
        %9756 = vmatprep.subr.mxu0 0.0
        %9757 = vmatpush1.msra.mxu0 %v9659
        %9758 = vmatprep.subr.mxu0 0.0
        %9759 = vmatpush1.msra.mxu0 %v9660
        %9760 = vmatprep.subr.mxu0 0.0
        %9761 = vmatpush1.msra.mxu0 %v9661
        %9762 = vmatprep.subr.mxu0 0.0
        %9763 = vmatpush1.msra.mxu0 %v9662
        %9764 = vmatprep.subr.mxu0 0.0
        %9765 = vmatpush1.msra.mxu0 %v9663
        %9766 = vmatprep.subr.mxu0 0.0
        %9767 = vmatpush1.msra.mxu0 %v9664
        %9768 = vmatprep.subr.mxu0 0.0
        %9769 = vmatpush1.msra.mxu0 %v9665
        %9770 = vmatprep.subr.mxu0 0.0
        %9771 = vmatpush1.msra.mxu0 %v9666
        %9772 = vmatprep.subr.mxu0 0.0
        %9773 = vmatpush1.msra.mxu0 %v9667
        %9774 = vmatprep.subr.mxu0 0.0
        %9775 = vmatpush1.msra.mxu0 %v9668
        %9776 = vmatprep.subr.mxu0 0.0
        %9777 = vmatpush1.msra.mxu0 %v9669
        %9778 = vmatprep.subr.mxu0 0.0
        %9779 = vmatpush1.msra.mxu0 %v9670
        %9780 = vmatprep.subr.mxu0 0.0
        %9781 = vmatpush1.msra.mxu0 %v9671
        %9782 = vmatprep.subr.mxu0 0.0
        %9783 = vmatpush1.msra.mxu0 %v9672
        %9784 = vmatprep.subr.mxu0 0.0
        %9785 = vmatpush1.msra.mxu0 %v9673
        %9786 = vmatprep.subr.mxu0 0.0
        %9787 = vmatpush1.msra.mxu0 0.0
        %9788 = vmatprep.subr.mxu0 0.0
        %9789 = vmatpush1.msra.mxu0 0.0
        %9790 = vmatprep.subr.mxu0 0.0
        %9791 = vmatpush1.msra.mxu0 0.0
        %9792 = vmatprep.subr.mxu0 0.0
        %9793 = vmatpush1.msra.mxu0 0.0
        %9794 = vmatprep.subr.mxu0 0.0
        %9795 = vmatpush1.msra.mxu0 0.0
        %9796 = vmatprep.subr.mxu0 0.0
        %9797 = vmatpush1.msra.mxu0 0.0
        %9798 = vmatprep.subr.mxu0 0.0
        %9799 = vmatpush1.msra.mxu0 0.0
        %9800 = vmatprep.subr.mxu0 0.0
        %9801 = vmatpush1.msra.mxu0 0.0
        %9802 = vmatprep.mubr.f32.mxu0 %v9674
        %9803 = vmatmul.mubr.f32.gmra.mrb[0].mxu0 %v9460
        %v9804 = vpop.f32.mrb[0].mxu0
        %v9805 = vadd.f32 0.0, %v9804
        %v9806 = vpop.f32.mrb[0].mxu0
        %9807 = vmatprep.mubr.f32.mxu0 %v9676
        %9808 = vmatmul.mubr.f32.gmra.mrb[0].mxu0 %v9465
        %v9809 = vpop.f32.mrb[0].mxu0
        %v9810 = vadd.f32 0.0, %v9809
        %v9811 = vpop.f32.mrb[0].mxu0
        %9812 = vmatprep.mubr.f32.mxu0 %v9678
        %9813 = vmatmul.mubr.f32.gmra.mrb[0].mxu0 %v9470
        %v9814 = vpop.f32.mrb[0].mxu0
        %v9815 = vadd.f32 0.0, %v9814
        %v9816 = vpop.f32.mrb[0].mxu0
        %9817 = vmatprep.mubr.f32.mxu0 %v9680
        %9818 = vmatmul.mubr.f32.gmra.mrb[0].mxu0 %v9475
        %v9819 = vpop.f32.mrb[0].mxu0
        %v9820 = vadd.f32 0.0, %v9819
        %v9821 = vpop.f32.mrb[0].mxu0
        %9822 = vmatprep.mubr.f32.mxu0 %v9682
        %9823 = vmatmul.mubr.f32.gmra.mrb[0].mxu0 %v9480
        %v9824 = vpop.f32.mrb[0].mxu0
        %v9825 = vadd.f32 0.0, %v9824
        %v9826 = vpop.f32.mrb[0].mxu0
        %9827 = vmatprep.mubr.f32.mxu0 %v9684
        %9828 = vmatmul.mubr.f32.gmra.mrb[0].mxu0 %v9485
        %v9829 = vpop.f32.mrb[0].mxu0
        %v9830 = vadd.f32 0.0, %v9829
        %v9831 = vpop.f32.mrb[0].mxu0
        %9832 = vmatprep.mubr.f32.mxu0 %v9686
        %9833 = vmatmul.mubr.f32.gmra.mrb[0].mxu0 %v9490
        %v9834 = vpop.f32.mrb[0].mxu0
        %v9835 = vadd.f32 0.0, %v9834
        %v9836 = vpop.f32.mrb[0].mxu0
        %9837 = vmatprep.mubr.f32.mxu0 %v9688
        %9838 = vmatmul.mubr.f32.gmra.mrb[0].mxu0 %v9495
        %v9839 = vpop.f32.mrb[0].mxu0
        %v9840 = vadd.f32 0.0, %v9839
        %v9841 = vpop.f32.mrb[0].mxu0
        %9842 = vmatprep.mubr.f32.mxu0 %v9690
        %9843 = vmatmul.mubr.f32.gmra.mrb[0].mxu0 %v9500
        %v9844 = vpop.f32.mrb[0].mxu0
        %v9845 = vadd.f32 0.0, %v9844
        %v9846 = vpop.f32.mrb[0].mxu0
        %9847 = vmatprep.mubr.f32.mxu0 %v9692
        %9848 = vmatmul.mubr.f32.gmra.mrb[0].mxu0 %v9505
        %v9849 = vpop.f32.mrb[0].mxu0
        %v9850 = vadd.f32 0.0, %v9849
        %v9851 = vpop.f32.mrb[0].mxu0
        %9852 = vmatprep.mubr.f32.mxu0 %v9694
        %9853 = vmatmul.mubr.f32.gmra.mrb[0].mxu0 %v9510
        %v9854 = vpop.f32.mrb[0].mxu0
        %v9855 = vadd.f32 0.0, %v9854
        %v9856 = vpop.f32.mrb[0].mxu0
        %9857 = vmatprep.mubr.f32.mxu0 %v9696
        %9858 = vmatmul.mubr.f32.gmra.mrb[0].mxu0 %v9515
        %v9859 = vpop.f32.mrb[0].mxu0
        %v9860 = vadd.f32 0.0, %v9859
        %v9861 = vpop.f32.mrb[0].mxu0
        %9862 = vmatprep.mubr.f32.mxu0 %v9698
        %9863 = vmatmul.mubr.f32.gmra.mrb[0].mxu0 %v9520
        %v9864 = vpop.f32.mrb[0].mxu0
        %v9865 = vadd.f32 0.0, %v9864
        %v9866 = vpop.f32.mrb[0].mxu0
        %9867 = vmatprep.mubr.f32.mxu0 %v9700
        %9868 = vmatmul.mubr.f32.gmra.mrb[0].mxu0 %v9525
        %v9869 = vpop.f32.mrb[0].mxu0
        %v9870 = vadd.f32 0.0, %v9869
        %v9871 = vpop.f32.mrb[0].mxu0
        %9872 = vmatprep.mubr.f32.mxu0 %v9702
        %9873 = vmatmul.mubr.f32.gmra.mrb[0].mxu0 %v9530
        %v9874 = vpop.f32.mrb[0].mxu0
        %v9875 = vadd.f32 0.0, %v9874
        %v9876 = vpop.f32.mrb[0].mxu0
        %9877 = vmatprep.mubr.f32.mxu0 %v9704
        %9878 = vmatmul.mubr.f32.gmra.mrb[0].mxu0 %v9535
        %v9879 = vpop.f32.mrb[0].mxu0
        %v9880 = vadd.f32 0.0, %v9879
        %v9881 = vpop.f32.mrb[0].mxu0
        %9882 = vmatprep.mubr.f32.mxu0 %v9706
        %9883 = vmatmul.mubr.f32.gmra.mrb[0].mxu0 %v9540
        %v9884 = vpop.f32.mrb[0].mxu0
        %v9885 = vadd.f32 0.0, %v9884
        %v9886 = vpop.f32.mrb[0].mxu0
        %9887 = vmatprep.mubr.f32.mxu0 %v9708
        %9888 = vmatmul.mubr.f32.gmra.mrb[0].mxu0 %v9545
        %v9889 = vpop.f32.mrb[0].mxu0
        %v9890 = vadd.f32 0.0, %v9889
        %v9891 = vpop.f32.mrb[0].mxu0
        %9892 = vmatprep.mubr.f32.mxu0 %v9710
        %9893 = vmatmul.mubr.f32.gmra.mrb[0].mxu0 %v9550
        %v9894 = vpop.f32.mrb[0].mxu0
        %v9895 = vadd.f32 0.0, %v9894
        %v9896 = vpop.f32.mrb[0].mxu0
        %9897 = vmatprep.mubr.f32.mxu0 %v9712
        %9898 = vmatmul.mubr.f32.gmra.mrb[0].mxu0 %v9555
        %v9899 = vpop.f32.mrb[0].mxu0
        %v9900 = vadd.f32 0.0, %v9899
        %v9901 = vpop.f32.mrb[0].mxu0
        %9902 = vmatprep.mubr.f32.mxu0 %v9714
        %9903 = vmatmul.mubr.f32.gmra.mrb[0].mxu0 %v9560
        %v9904 = vpop.f32.mrb[0].mxu0
        %v9905 = vadd.f32 0.0, %v9904
        %v9906 = vpop.f32.mrb[0].mxu0
        %9907 = vmatprep.mubr.f32.mxu0 %v9716
        %9908 = vmatmul.mubr.f32.gmra.mrb[0].mxu0 %v9565
        %v9909 = vpop.f32.mrb[0].mxu0
        %v9910 = vadd.f32 0.0, %v9909
        %v9911 = vpop.f32.mrb[0].mxu0
        %9912 = vmatprep.mubr.f32.mxu0 %v9718
        %9913 = vmatmul.mubr.f32.gmra.mrb[0].mxu0 %v9570
        %v9914 = vpop.f32.mrb[0].mxu0
        %v9915 = vadd.f32 0.0, %v9914
        %v9916 = vpop.f32.mrb[0].mxu0
        %9917 = vmatprep.mubr.f32.mxu0 %v9720
        %9918 = vmatmul.mubr.f32.gmra.mrb[0].mxu0 %v9575
        %v9919 = vpop.f32.mrb[0].mxu0
        %v9920 = vadd.f32 0.0, %v9919
        %v9921 = vpop.f32.mrb[0].mxu0
        %9922 = vmatprep.mubr.f32.mxu0 %v9722
        %9923 = vmatmul.mubr.f32.gmra.mrb[0].mxu0 %v9580
        %v9924 = vpop.f32.mrb[0].mxu0
        %v9925 = vadd.f32 0.0, %v9924
        %v9926 = vpop.f32.mrb[0].mxu0
        %9927 = vmatprep.mubr.f32.mxu0 %v9724
        %9928 = vmatmul.mubr.f32.gmra.mrb[0].mxu0 %v9585
        %v9929 = vpop.f32.mrb[0].mxu0
        %v9930 = vadd.f32 0.0, %v9929
        %v9931 = vpop.f32.mrb[0].mxu0
        %9932 = vmatprep.mubr.f32.mxu0 %v9726
        %9933 = vmatmul.mubr.f32.gmra.mrb[0].mxu0 %v9590
        %v9934 = vpop.f32.mrb[0].mxu0
        %v9935 = vadd.f32 0.0, %v9934
        %v9936 = vpop.f32.mrb[0].mxu0
        %9937 = vmatprep.mubr.f32.mxu0 %v9728
        %9938 = vmatmul.mubr.f32.gmra.mrb[0].mxu0 %v9595
        %v9939 = vpop.f32.mrb[0].mxu0
        %v9940 = vadd.f32 0.0, %v9939
        %v9941 = vpop.f32.mrb[0].mxu0
        %9942 = vmatprep.mubr.f32.mxu0 %v9730
        %9943 = vmatmul.mubr.f32.gmra.mrb[0].mxu0 %v9600
        %v9944 = vpop.f32.mrb[0].mxu0
        %v9945 = vadd.f32 0.0, %v9944
        %v9946 = vpop.f32.mrb[0].mxu0
        %9947 = vmatprep.mubr.f32.mxu0 %v9732
        %9948 = vmatmul.mubr.f32.gmra.mrb[0].mxu0 %v9605
        %v9949 = vpop.f32.mrb[0].mxu0
        %v9950 = vadd.f32 0.0, %v9949
        %v9951 = vpop.f32.mrb[0].mxu0
        %9952 = vmatprep.mubr.f32.mxu0 %v9734
        %9953 = vmatmul.mubr.f32.gmra.mrb[0].mxu0 %v9610
        %v9954 = vpop.f32.mrb[0].mxu0
        %v9955 = vadd.f32 0.0, %v9954
        %v9956 = vpop.f32.mrb[0].mxu0
        %9957 = vmatprep.mubr.f32.mxu0 %v9736
        %9958 = vmatmul.mubr.f32.gmra.mrb[0].mxu0 %v9615
        %v9959 = vpop.f32.mrb[0].mxu0
        %v9960 = vadd.f32 0.0, %v9959
        %v9961 = vpop.f32.mrb[0].mxu0
        %9962 = vdwg.mxu0
        %v9963 = vadd.f32 %v9234, %v9805
        %v9964 = vadd.f32 %v9235, %v9810
        %v9965 = vadd.f32 %v9236, %v9815
        %v9966 = vadd.f32 %v9237, %v9820
        %v9967 = vadd.f32 %v9238, %v9825
        %v9968 = vadd.f32 %v9239, %v9830
        %v9969 = vadd.f32 %v9240, %v9835
        %v9970 = vadd.f32 %v9241, %v9840
        %v9971 = vadd.f32 %v9242, %v9845
        %v9972 = vadd.f32 %v9243, %v9850
        %v9973 = vadd.f32 %v9244, %v9855
        %v9974 = vadd.f32 %v9245, %v9860
        %v9975 = vadd.f32 %v9246, %v9865
        %v9976 = vadd.f32 %v9247, %v9870
        %v9977 = vadd.f32 %v9248, %v9875
        %v9978 = vadd.f32 %v9249, %v9880
        %v9979 = vadd.f32 %v9250, %v9885
        %v9980 = vadd.f32 %v9251, %v9890
        %v9981 = vadd.f32 %v9252, %v9895
        %v9982 = vadd.f32 %v9253, %v9900
        %v9983 = vadd.f32 %v9254, %v9905
        %v9984 = vadd.f32 %v9255, %v9910
        %v9985 = vadd.f32 %v9256, %v9915
        %v9986 = vadd.f32 %v9257, %v9920
        %v9987 = vadd.f32 %v9258, %v9925
        %v9988 = vadd.f32 %v9259, %v9930
        %v9989 = vadd.f32 %v9260, %v9935
        %v9990 = vadd.f32 %v9261, %v9940
        %v9991 = vadd.f32 %v9262, %v9945
        %v9992 = vadd.f32 %v9263, %v9950
        %v9993 = vadd.f32 %v9264, %v9955
        %v9994 = vadd.f32 %v9265, %v9960
        %v9995 = vld [vmem:[%s8824] sm:$0xfc]
        %v9996 = vld [vmem:[%s8824 + $0x8] sm:$0xfc]
        %v9997 = vld [vmem:[%s8824 + $0x20] sm:$0x3]
        %v9998 = vld [vmem:[%s8824 + $0x28] sm:$0x3]
        %v9999 = vld [vmem:[%s8824 + $0x30] sm:$0xfc]
        %v10000 = vld [vmem:[%s8824 + $0x38] sm:$0xfc]
        %v10001 = vld [vmem:[%s8824 + $0x50] sm:$0x3]
        %v10002 = vld [vmem:[%s8824 + $0x58] sm:$0x3]
        %v10003 = vld [vmem:[%s8824 + $0x60] sm:$0xfc]
        %v10004 = vld [vmem:[%s8824 + $0x68] sm:$0xfc]
        %v10005 = vld [vmem:[%s8824 + $0x80] sm:$0x3]
        %v10006 = vld [vmem:[%s8824 + $0x88] sm:$0x3]
        %v10007 = vld [vmem:[%s8824 + $0x90] sm:$0xfc]
        %v10008 = vld [vmem:[%s8824 + $0x98] sm:$0xfc]
        %v10009 = vld [vmem:[%s8824 + $0xb0] sm:$0x3]
        %v10010 = vld [vmem:[%s8824 + $0xb8] sm:$0x3]
        %v10011 = vld [vmem:[%s8824 + $0xc0] sm:$0xfc]
        %v10012 = vld [vmem:[%s8824 + $0xc8] sm:$0xfc]
        %v10013 = vld [vmem:[%s8824 + $0xe0] sm:$0x3]
        %v10014 = vld [vmem:[%s8824 + $0xe8] sm:$0x3]
        %v10015 = vld [vmem:[%s8824 + $0xf0] sm:$0xfc]
        %v10016 = vld [vmem:[%s8824 + $0xf8] sm:$0xfc]
        %v10017 = vld [vmem:[%s8824 + $0x110] sm:$0x3]
        %v10018 = vld [vmem:[%s8824 + $0x118] sm:$0x3]
        %v10019 = vld [vmem:[%s8824 + $0x120] sm:$0xfc]
        %v10020 = vld [vmem:[%s8824 + $0x128] sm:$0xfc]
        %v10021 = vld [vmem:[%s8824 + $0x140] sm:$0x3]
        %v10022 = vld [vmem:[%s8824 + $0x148] sm:$0x3]
        %v10023 = vld [vmem:[%s8824 + $0x150] sm:$0xfc]
        %v10024 = vld [vmem:[%s8824 + $0x158] sm:$0xfc]
        %v10025 = vld [vmem:[%s8824 + $0x170] sm:$0x3]
        %v10026 = vld [vmem:[%s8824 + $0x178] sm:$0x3]
        %v10027 = vld [vmem:[%s8824 + $0x180] sm:$0xfc]
        %v10028 = vld [vmem:[%s8824 + $0x188] sm:$0xfc]
        %v10029 = vld [vmem:[%s8824 + $0x1a0] sm:$0x3]
        %v10030 = vld [vmem:[%s8824 + $0x1a8] sm:$0x3]
        %v10031 = vld [vmem:[%s8824 + $0x1b0] sm:$0xfc]
        %v10032 = vld [vmem:[%s8824 + $0x1b8] sm:$0xfc]
        %v10033 = vld [vmem:[%s8824 + $0x1d0] sm:$0x3]
        %v10034 = vld [vmem:[%s8824 + $0x1d8] sm:$0x3]
        %v10035 = vld [vmem:[%s8824 + $0x1e0] sm:$0xfc]
        %v10036 = vld [vmem:[%s8824 + $0x1e8] sm:$0xfc]
        %v10037 = vld [vmem:[%s8824 + $0x200] sm:$0x3]
        %v10038 = vld [vmem:[%s8824 + $0x208] sm:$0x3]
        %v10039 = vld [vmem:[%s8824 + $0x210] sm:$0xfc]
        %v10040 = vld [vmem:[%s8824 + $0x218] sm:$0xfc]
        %v10041 = vld [vmem:[%s8824 + $0x230] sm:$0x3]
        %v10042 = vld [vmem:[%s8824 + $0x238] sm:$0x3]
        %v10043 = vld [vmem:[%s8824 + $0x240] sm:$0xfc]
        %v10044 = vld [vmem:[%s8824 + $0x248] sm:$0xfc]
        %v10045 = vld [vmem:[%s8824 + $0x260] sm:$0x3]
        %v10046 = vld [vmem:[%s8824 + $0x268] sm:$0x3]
        %v10047 = vld [vmem:[%s8824 + $0x270] sm:$0xfc]
        %v10048 = vld [vmem:[%s8824 + $0x278] sm:$0xfc]
        %v10049 = vld [vmem:[%s8824 + $0x290] sm:$0x3]
        %v10050 = vld [vmem:[%s8824 + $0x298] sm:$0x3]
        %v10051 = vld [vmem:[%s8824 + $0x2a0] sm:$0xfc]
        %v10052 = vld [vmem:[%s8824 + $0x2a8] sm:$0xfc]
        %v10053 = vld [vmem:[%s8824 + $0x2c0] sm:$0x3]
        %v10054 = vld [vmem:[%s8824 + $0x2c8] sm:$0x3]
        %v10055 = vld [vmem:[%s8824 + $0x2d0] sm:$0xfc]
        %v10056 = vld [vmem:[%s8824 + $0x2d8] sm:$0xfc]
        %v10057 = vld [vmem:[%s8824 + $0x2f0] sm:$0x3]
        %v10058 = vld [vmem:[%s8824 + $0x2f8] sm:$0x3]
        %v10123 = vrot.slane %v9995, 2
        %v10124 = vrot.slane %v9268, 2
        %v10125 = vsel %vm6451, %v10123, %v10124
        %v10126 = vrot.slane %v9996, 2
        %v10127 = vrot.slane %v9269, 2
        %v10128 = vsel %vm6451, %v10126, %v10127
        %v10129 = vrot.slane %v9997, 2
        %v10130 = vsel %vm6451, %v10124, %v10129
        %v10131 = vrot.slane %v9998, 2
        %v10132 = vsel %vm6451, %v10127, %v10131
        %v10133 = vrot.slane %v9999, 2
        %v10134 = vrot.slane %v9274, 2
        %v10135 = vsel %vm6451, %v10133, %v10134
        %v10136 = vrot.slane %v10000, 2
        %v10137 = vrot.slane %v9275, 2
        %v10138 = vsel %vm6451, %v10136, %v10137
        %v10139 = vrot.slane %v10001, 2
        %v10140 = vsel %vm6451, %v10134, %v10139
        %v10141 = vrot.slane %v10002, 2
        %v10142 = vsel %vm6451, %v10137, %v10141
        %v10143 = vrot.slane %v10003, 2
        %v10144 = vrot.slane %v9280, 2
        %v10145 = vsel %vm6451, %v10143, %v10144
        %v10146 = vrot.slane %v10004, 2
        %v10147 = vrot.slane %v9281, 2
        %v10148 = vsel %vm6451, %v10146, %v10147
        %v10149 = vrot.slane %v10005, 2
        %v10150 = vsel %vm6451, %v10144, %v10149
        %v10151 = vrot.slane %v10006, 2
        %v10152 = vsel %vm6451, %v10147, %v10151
        %v10153 = vrot.slane %v10007, 2
        %v10154 = vrot.slane %v9286, 2
        %v10155 = vsel %vm6451, %v10153, %v10154
        %v10156 = vrot.slane %v10008, 2
        %v10157 = vrot.slane %v9287, 2
        %v10158 = vsel %vm6451, %v10156, %v10157
        %v10159 = vrot.slane %v10009, 2
        %v10160 = vsel %vm6451, %v10154, %v10159
        %v10161 = vrot.slane %v10010, 2
        %v10162 = vsel %vm6451, %v10157, %v10161
        %v10163 = vrot.slane %v10011, 2
        %v10164 = vrot.slane %v9292, 2
        %v10165 = vsel %vm6451, %v10163, %v10164
        %v10166 = vrot.slane %v10012, 2
        %v10167 = vrot.slane %v9293, 2
        %v10168 = vsel %vm6451, %v10166, %v10167
        %v10169 = vrot.slane %v10013, 2
        %v10170 = vsel %vm6451, %v10164, %v10169
        %v10171 = vrot.slane %v10014, 2
        %v10172 = vsel %vm6451, %v10167, %v10171
        %v10173 = vrot.slane %v10015, 2
        %v10174 = vrot.slane %v9298, 2
        %v10175 = vsel %vm6451, %v10173, %v10174
        %v10176 = vrot.slane %v10016, 2
        %v10177 = vrot.slane %v9299, 2
        %v10178 = vsel %vm6451, %v10176, %v10177
        %v10179 = vrot.slane %v10017, 2
        %v10180 = vsel %vm6451, %v10174, %v10179
        %v10181 = vrot.slane %v10018, 2
        %v10182 = vsel %vm6451, %v10177, %v10181
        %v10183 = vrot.slane %v10019, 2
        %v10184 = vrot.slane %v9304, 2
        %v10185 = vsel %vm6451, %v10183, %v10184
        %v10186 = vrot.slane %v10020, 2
        %v10187 = vrot.slane %v9305, 2
        %v10188 = vsel %vm6451, %v10186, %v10187
        %v10189 = vrot.slane %v10021, 2
        %v10190 = vsel %vm6451, %v10184, %v10189
        %v10191 = vrot.slane %v10022, 2
        %v10192 = vsel %vm6451, %v10187, %v10191
        %v10193 = vrot.slane %v10023, 2
        %v10194 = vrot.slane %v9310, 2
        %v10195 = vsel %vm6451, %v10193, %v10194
        %v10196 = vrot.slane %v10024, 2
        %v10197 = vrot.slane %v9311, 2
        %v10198 = vsel %vm6451, %v10196, %v10197
        %v10199 = vrot.slane %v10025, 2
        %v10200 = vsel %vm6451, %v10194, %v10199
        %v10201 = vrot.slane %v10026, 2
        %v10202 = vsel %vm6451, %v10197, %v10201
        %v10203 = vrot.slane %v10027, 2
        %v10204 = vrot.slane %v9316, 2
        %v10205 = vsel %vm6451, %v10203, %v10204
        %v10206 = vrot.slane %v10028, 2
        %v10207 = vrot.slane %v9317, 2
        %v10208 = vsel %vm6451, %v10206, %v10207
        %v10209 = vrot.slane %v10029, 2
        %v10210 = vsel %vm6451, %v10204, %v10209
        %v10211 = vrot.slane %v10030, 2
        %v10212 = vsel %vm6451, %v10207, %v10211
        %v10213 = vrot.slane %v10031, 2
        %v10214 = vrot.slane %v9322, 2
        %v10215 = vsel %vm6451, %v10213, %v10214
        %v10216 = vrot.slane %v10032, 2
        %v10217 = vrot.slane %v9323, 2
        %v10218 = vsel %vm6451, %v10216, %v10217
        %v10219 = vrot.slane %v10033, 2
        %v10220 = vsel %vm6451, %v10214, %v10219
        %v10221 = vrot.slane %v10034, 2
        %v10222 = vsel %vm6451, %v10217, %v10221
        %v10223 = vrot.slane %v10035, 2
        %v10224 = vrot.slane %v9328, 2
        %v10225 = vsel %vm6451, %v10223, %v10224
        %v10226 = vrot.slane %v10036, 2
        %v10227 = vrot.slane %v9329, 2
        %v10228 = vsel %vm6451, %v10226, %v10227
        %v10229 = vrot.slane %v10037, 2
        %v10230 = vsel %vm6451, %v10224, %v10229
        %v10231 = vrot.slane %v10038, 2
        %v10232 = vsel %vm6451, %v10227, %v10231
        %v10233 = vrot.slane %v10039, 2
        %v10234 = vrot.slane %v9334, 2
        %v10235 = vsel %vm6451, %v10233, %v10234
        %v10236 = vrot.slane %v10040, 2
        %v10237 = vrot.slane %v9335, 2
        %v10238 = vsel %vm6451, %v10236, %v10237
        %v10239 = vrot.slane %v10041, 2
        %v10240 = vsel %vm6451, %v10234, %v10239
        %v10241 = vrot.slane %v10042, 2
        %v10242 = vsel %vm6451, %v10237, %v10241
        %v10243 = vrot.slane %v10043, 2
        %v10244 = vrot.slane %v9340, 2
        %v10245 = vsel %vm6451, %v10243, %v10244
        %v10246 = vrot.slane %v10044, 2
        %v10247 = vrot.slane %v9341, 2
        %v10248 = vsel %vm6451, %v10246, %v10247
        %v10249 = vrot.slane %v10045, 2
        %v10250 = vsel %vm6451, %v10244, %v10249
        %v10251 = vrot.slane %v10046, 2
        %v10252 = vsel %vm6451, %v10247, %v10251
        %v10253 = vrot.slane %v10047, 2
        %v10254 = vrot.slane %v9346, 2
        %v10255 = vsel %vm6451, %v10253, %v10254
        %v10256 = vrot.slane %v10048, 2
        %v10257 = vrot.slane %v9347, 2
        %v10258 = vsel %vm6451, %v10256, %v10257
        %v10259 = vrot.slane %v10049, 2
        %v10260 = vsel %vm6451, %v10254, %v10259
        %v10261 = vrot.slane %v10050, 2
        %v10262 = vsel %vm6451, %v10257, %v10261
        %v10263 = vrot.slane %v10051, 2
        %v10264 = vrot.slane %v9352, 2
        %v10265 = vsel %vm6451, %v10263, %v10264
        %v10266 = vrot.slane %v10052, 2
        %v10267 = vrot.slane %v9353, 2
        %v10268 = vsel %vm6451, %v10266, %v10267
        %v10269 = vrot.slane %v10053, 2
        %v10270 = vsel %vm6451, %v10264, %v10269
        %v10271 = vrot.slane %v10054, 2
        %v10272 = vsel %vm6451, %v10267, %v10271
        %v10273 = vrot.slane %v10055, 2
        %v10274 = vrot.slane %v9358, 2
        %v10275 = vsel %vm6451, %v10273, %v10274
        %v10276 = vrot.slane %v10056, 2
        %v10277 = vrot.slane %v9359, 2
        %v10278 = vsel %vm6451, %v10276, %v10277
        %v10279 = vrot.slane %v10057, 2
        %v10280 = vsel %vm6451, %v10274, %v10279
        %v10281 = vrot.slane %v10058, 2
        %v10282 = vsel %vm6451, %v10277, %v10281
        %v10315 = vld [vmem:[#allocation12 + $0x600] sm:$0xff]
        %v10316 = vld [vmem:[#allocation12 + $0x608] sm:$0xff]
        %v10317 = vld [vmem:[#allocation12 + $0x610] sm:$0xff]
        %v10318 = vld [vmem:[#allocation12 + $0x618] sm:$0xff]
        %v10319 = vld [vmem:[#allocation12 + $0x620] sm:$0xff]
        %v10320 = vld [vmem:[#allocation12 + $0x628] sm:$0xff]
        %v10321 = vld [vmem:[#allocation12 + $0x630] sm:$0xff]
        %v10322 = vld [vmem:[#allocation12 + $0x638] sm:$0xff]
        %v10323 = vld [vmem:[#allocation12 + $0x640] sm:$0xff]
        %v10324 = vld [vmem:[#allocation12 + $0x648] sm:$0xff]
        %v10325 = vld [vmem:[#allocation12 + $0x650] sm:$0xff]
        %v10326 = vld [vmem:[#allocation12 + $0x658] sm:$0xff]
        %v10327 = vld [vmem:[#allocation12 + $0x660] sm:$0xff]
        %v10328 = vld [vmem:[#allocation12 + $0x668] sm:$0xff]
        %v10329 = vld [vmem:[#allocation12 + $0x670] sm:$0xff]
        %v10330 = vld [vmem:[#allocation12 + $0x678] sm:$0xff]
        %v10331 = vld [vmem:[#allocation12 + $0x680] sm:$0xff]
        %v10332 = vld [vmem:[#allocation12 + $0x688] sm:$0xff]
        %v10333 = vld [vmem:[#allocation12 + $0x690] sm:$0xff]
        %v10334 = vld [vmem:[#allocation12 + $0x698] sm:$0xff]
        %v10335 = vld [vmem:[#allocation12 + $0x6a0] sm:$0xff]
        %v10336 = vld [vmem:[#allocation12 + $0x6a8] sm:$0xff]
        %v10337 = vld [vmem:[#allocation12 + $0x6b0] sm:$0xff]
        %v10338 = vld [vmem:[#allocation12 + $0x6b8] sm:$0xff]
        %v10339 = vsel %vm4799, %v10128, 0
        %v10341 = vsel %vm4799, %v10132, 0
        %v10343 = vsel %vm4799, %v10138, 0
        %v10345 = vsel %vm4799, %v10142, 0
        %v10347 = vsel %vm4799, %v10148, 0
        %v10349 = vsel %vm4799, %v10152, 0
        %v10351 = vsel %vm4799, %v10158, 0
        %v10353 = vsel %vm4799, %v10162, 0
        %v10355 = vsel %vm4799, %v10168, 0
        %v10357 = vsel %vm4799, %v10172, 0
        %v10359 = vsel %vm4799, %v10178, 0
        %v10361 = vsel %vm4799, %v10182, 0
        %v10363 = vsel %vm4799, %v10188, 0
        %v10365 = vsel %vm4799, %v10192, 0
        %v10367 = vsel %vm4799, %v10198, 0
        %v10369 = vsel %vm4799, %v10202, 0
        %v10371 = vsel %vm4799, %v10208, 0
        %v10373 = vsel %vm4799, %v10212, 0
        %v10375 = vsel %vm4799, %v10218, 0
        %v10377 = vsel %vm4799, %v10222, 0
        %v10379 = vsel %vm4799, %v10228, 0
        %v10381 = vsel %vm4799, %v10232, 0
        %v10383 = vsel %vm4799, %v10238, 0
        %v10385 = vsel %vm4799, %v10242, 0
        %v10387 = vsel %vm4799, %v10248, 0
        %v10389 = vsel %vm4799, %v10252, 0
        %v10391 = vsel %vm4799, %v10258, 0
        %v10393 = vsel %vm4799, %v10262, 0
        %v10395 = vsel %vm4799, %v10268, 0
        %v10397 = vsel %vm4799, %v10272, 0
        %v10399 = vsel %vm4799, %v10278, 0
        %v10401 = vsel %vm4799, %v10282, 0
        %10403 = vmatprep.subr.mxu0 0.0
        %10404 = vmatpush1.msra.mxu0 %v10315
        %10405 = vmatprep.subr.mxu0 0.0
        %10406 = vmatpush1.msra.mxu0 %v10316
        %10407 = vmatprep.subr.mxu0 0.0
        %10408 = vmatpush1.msra.mxu0 %v10317
        %10409 = vmatprep.subr.mxu0 0.0
        %10410 = vmatpush1.msra.mxu0 %v10318
        %10411 = vmatprep.subr.mxu0 0.0
        %10412 = vmatpush1.msra.mxu0 %v10319
        %10413 = vmatprep.subr.mxu0 0.0
        %10414 = vmatpush1.msra.mxu0 %v10320
        %10415 = vmatprep.subr.mxu0 0.0
        %10416 = vmatpush1.msra.mxu0 %v10321
        %10417 = vmatprep.subr.mxu0 0.0
        %10418 = vmatpush1.msra.mxu0 %v10322
        %10419 = vmatprep.subr.mxu0 0.0
        %10420 = vmatpush1.msra.mxu0 %v10323
        %10421 = vmatprep.subr.mxu0 0.0
        %10422 = vmatpush1.msra.mxu0 %v10324
        %10423 = vmatprep.subr.mxu0 0.0
        %10424 = vmatpush1.msra.mxu0 %v10325
        %10425 = vmatprep.subr.mxu0 0.0
        %10426 = vmatpush1.msra.mxu0 %v10326
        %10427 = vmatprep.subr.mxu0 0.0
        %10428 = vmatpush1.msra.mxu0 %v10327
        %10429 = vmatprep.subr.mxu0 0.0
        %10430 = vmatpush1.msra.mxu0 %v10328
        %10431 = vmatprep.subr.mxu0 0.0
        %10432 = vmatpush1.msra.mxu0 %v10329
        %10433 = vmatprep.subr.mxu0 0.0
        %10434 = vmatpush1.msra.mxu0 %v10330
        %10435 = vmatprep.subr.mxu0 0.0
        %10436 = vmatpush1.msra.mxu0 %v10331
        %10437 = vmatprep.subr.mxu0 0.0
        %10438 = vmatpush1.msra.mxu0 %v10332
        %10439 = vmatprep.subr.mxu0 0.0
        %10440 = vmatpush1.msra.mxu0 %v10333
        %10441 = vmatprep.subr.mxu0 0.0
        %10442 = vmatpush1.msra.mxu0 %v10334
        %10443 = vmatprep.subr.mxu0 0.0
        %10444 = vmatpush1.msra.mxu0 %v10335
        %10445 = vmatprep.subr.mxu0 0.0
        %10446 = vmatpush1.msra.mxu0 %v10336
        %10447 = vmatprep.subr.mxu0 0.0
        %10448 = vmatpush1.msra.mxu0 %v10337
        %10449 = vmatprep.subr.mxu0 0.0
        %10450 = vmatpush1.msra.mxu0 %v10338
        %10451 = vmatprep.subr.mxu0 0.0
        %10452 = vmatpush1.msra.mxu0 0.0
        %10453 = vmatprep.subr.mxu0 0.0
        %10454 = vmatpush1.msra.mxu0 0.0
        %10455 = vmatprep.subr.mxu0 0.0
        %10456 = vmatpush1.msra.mxu0 0.0
        %10457 = vmatprep.subr.mxu0 0.0
        %10458 = vmatpush1.msra.mxu0 0.0
        %10459 = vmatprep.subr.mxu0 0.0
        %10460 = vmatpush1.msra.mxu0 0.0
        %10461 = vmatprep.subr.mxu0 0.0
        %10462 = vmatpush1.msra.mxu0 0.0
        %10463 = vmatprep.subr.mxu0 0.0
        %10464 = vmatpush1.msra.mxu0 0.0
        %10465 = vmatprep.subr.mxu0 0.0
        %10466 = vmatpush1.msra.mxu0 0.0
        %10467 = vmatprep.mubr.f32.mxu0 %v10339
        %10468 = vmatmul.mubr.f32.gmra.mrb[0].mxu0 %v10125
        %v10469 = vpop.f32.mrb[0].mxu0
        %v10470 = vadd.f32 0.0, %v10469
        %v10471 = vpop.f32.mrb[0].mxu0
        %10472 = vmatprep.mubr.f32.mxu0 %v10341
        %10473 = vmatmul.mubr.f32.gmra.mrb[0].mxu0 %v10130
        %v10474 = vpop.f32.mrb[0].mxu0
        %v10475 = vadd.f32 0.0, %v10474
        %v10476 = vpop.f32.mrb[0].mxu0
        %10477 = vmatprep.mubr.f32.mxu0 %v10343
        %10478 = vmatmul.mubr.f32.gmra.mrb[0].mxu0 %v10135
        %v10479 = vpop.f32.mrb[0].mxu0
        %v10480 = vadd.f32 0.0, %v10479
        %v10481 = vpop.f32.mrb[0].mxu0
        %10482 = vmatprep.mubr.f32.mxu0 %v10345
        %10483 = vmatmul.mubr.f32.gmra.mrb[0].mxu0 %v10140
        %v10484 = vpop.f32.mrb[0].mxu0
        %v10485 = vadd.f32 0.0, %v10484
        %v10486 = vpop.f32.mrb[0].mxu0
        %10487 = vmatprep.mubr.f32.mxu0 %v10347
        %10488 = vmatmul.mubr.f32.gmra.mrb[0].mxu0 %v10145
        %v10489 = vpop.f32.mrb[0].mxu0
        %v10490 = vadd.f32 0.0, %v10489
        %v10491 = vpop.f32.mrb[0].mxu0
        %10492 = vmatprep.mubr.f32.mxu0 %v10349
        %10493 = vmatmul.mubr.f32.gmra.mrb[0].mxu0 %v10150
        %v10494 = vpop.f32.mrb[0].mxu0
        %v10495 = vadd.f32 0.0, %v10494
        %v10496 = vpop.f32.mrb[0].mxu0
        %10497 = vmatprep.mubr.f32.mxu0 %v10351
        %10498 = vmatmul.mubr.f32.gmra.mrb[0].mxu0 %v10155
        %v10499 = vpop.f32.mrb[0].mxu0
        %v10500 = vadd.f32 0.0, %v10499
        %v10501 = vpop.f32.mrb[0].mxu0
        %10502 = vmatprep.mubr.f32.mxu0 %v10353
        %10503 = vmatmul.mubr.f32.gmra.mrb[0].mxu0 %v10160
        %v10504 = vpop.f32.mrb[0].mxu0
        %v10505 = vadd.f32 0.0, %v10504
        %v10506 = vpop.f32.mrb[0].mxu0
        %10507 = vmatprep.mubr.f32.mxu0 %v10355
        %10508 = vmatmul.mubr.f32.gmra.mrb[0].mxu0 %v10165
        %v10509 = vpop.f32.mrb[0].mxu0
        %v10510 = vadd.f32 0.0, %v10509
        %v10511 = vpop.f32.mrb[0].mxu0
        %10512 = vmatprep.mubr.f32.mxu0 %v10357
        %10513 = vmatmul.mubr.f32.gmra.mrb[0].mxu0 %v10170
        %v10514 = vpop.f32.mrb[0].mxu0
        %v10515 = vadd.f32 0.0, %v10514
        %v10516 = vpop.f32.mrb[0].mxu0
        %10517 = vmatprep.mubr.f32.mxu0 %v10359
        %10518 = vmatmul.mubr.f32.gmra.mrb[0].mxu0 %v10175
        %v10519 = vpop.f32.mrb[0].mxu0
        %v10520 = vadd.f32 0.0, %v10519
        %v10521 = vpop.f32.mrb[0].mxu0
        %10522 = vmatprep.mubr.f32.mxu0 %v10361
        %10523 = vmatmul.mubr.f32.gmra.mrb[0].mxu0 %v10180
        %v10524 = vpop.f32.mrb[0].mxu0
        %v10525 = vadd.f32 0.0, %v10524
        %v10526 = vpop.f32.mrb[0].mxu0
        %10527 = vmatprep.mubr.f32.mxu0 %v10363
        %10528 = vmatmul.mubr.f32.gmra.mrb[0].mxu0 %v10185
        %v10529 = vpop.f32.mrb[0].mxu0
        %v10530 = vadd.f32 0.0, %v10529
        %v10531 = vpop.f32.mrb[0].mxu0
        %10532 = vmatprep.mubr.f32.mxu0 %v10365
        %10533 = vmatmul.mubr.f32.gmra.mrb[0].mxu0 %v10190
        %v10534 = vpop.f32.mrb[0].mxu0
        %v10535 = vadd.f32 0.0, %v10534
        %v10536 = vpop.f32.mrb[0].mxu0
        %10537 = vmatprep.mubr.f32.mxu0 %v10367
        %10538 = vmatmul.mubr.f32.gmra.mrb[0].mxu0 %v10195
        %v10539 = vpop.f32.mrb[0].mxu0
        %v10540 = vadd.f32 0.0, %v10539
        %v10541 = vpop.f32.mrb[0].mxu0
        %10542 = vmatprep.mubr.f32.mxu0 %v10369
        %10543 = vmatmul.mubr.f32.gmra.mrb[0].mxu0 %v10200
        %v10544 = vpop.f32.mrb[0].mxu0
        %v10545 = vadd.f32 0.0, %v10544
        %v10546 = vpop.f32.mrb[0].mxu0
        %10547 = vmatprep.mubr.f32.mxu0 %v10371
        %10548 = vmatmul.mubr.f32.gmra.mrb[0].mxu0 %v10205
        %v10549 = vpop.f32.mrb[0].mxu0
        %v10550 = vadd.f32 0.0, %v10549
        %v10551 = vpop.f32.mrb[0].mxu0
        %10552 = vmatprep.mubr.f32.mxu0 %v10373
        %10553 = vmatmul.mubr.f32.gmra.mrb[0].mxu0 %v10210
        %v10554 = vpop.f32.mrb[0].mxu0
        %v10555 = vadd.f32 0.0, %v10554
        %v10556 = vpop.f32.mrb[0].mxu0
        %10557 = vmatprep.mubr.f32.mxu0 %v10375
        %10558 = vmatmul.mubr.f32.gmra.mrb[0].mxu0 %v10215
        %v10559 = vpop.f32.mrb[0].mxu0
        %v10560 = vadd.f32 0.0, %v10559
        %v10561 = vpop.f32.mrb[0].mxu0
        %10562 = vmatprep.mubr.f32.mxu0 %v10377
        %10563 = vmatmul.mubr.f32.gmra.mrb[0].mxu0 %v10220
        %v10564 = vpop.f32.mrb[0].mxu0
        %v10565 = vadd.f32 0.0, %v10564
        %v10566 = vpop.f32.mrb[0].mxu0
        %10567 = vmatprep.mubr.f32.mxu0 %v10379
        %10568 = vmatmul.mubr.f32.gmra.mrb[0].mxu0 %v10225
        %v10569 = vpop.f32.mrb[0].mxu0
        %v10570 = vadd.f32 0.0, %v10569
        %v10571 = vpop.f32.mrb[0].mxu0
        %10572 = vmatprep.mubr.f32.mxu0 %v10381
        %10573 = vmatmul.mubr.f32.gmra.mrb[0].mxu0 %v10230
        %v10574 = vpop.f32.mrb[0].mxu0
        %v10575 = vadd.f32 0.0, %v10574
        %v10576 = vpop.f32.mrb[0].mxu0
        %10577 = vmatprep.mubr.f32.mxu0 %v10383
        %10578 = vmatmul.mubr.f32.gmra.mrb[0].mxu0 %v10235
        %v10579 = vpop.f32.mrb[0].mxu0
        %v10580 = vadd.f32 0.0, %v10579
        %v10581 = vpop.f32.mrb[0].mxu0
        %10582 = vmatprep.mubr.f32.mxu0 %v10385
        %10583 = vmatmul.mubr.f32.gmra.mrb[0].mxu0 %v10240
        %v10584 = vpop.f32.mrb[0].mxu0
        %v10585 = vadd.f32 0.0, %v10584
        %v10586 = vpop.f32.mrb[0].mxu0
        %10587 = vmatprep.mubr.f32.mxu0 %v10387
        %10588 = vmatmul.mubr.f32.gmra.mrb[0].mxu0 %v10245
        %v10589 = vpop.f32.mrb[0].mxu0
        %v10590 = vadd.f32 0.0, %v10589
        %v10591 = vpop.f32.mrb[0].mxu0
        %10592 = vmatprep.mubr.f32.mxu0 %v10389
        %10593 = vmatmul.mubr.f32.gmra.mrb[0].mxu0 %v10250
        %v10594 = vpop.f32.mrb[0].mxu0
        %v10595 = vadd.f32 0.0, %v10594
        %v10596 = vpop.f32.mrb[0].mxu0
        %10597 = vmatprep.mubr.f32.mxu0 %v10391
        %10598 = vmatmul.mubr.f32.gmra.mrb[0].mxu0 %v10255
        %v10599 = vpop.f32.mrb[0].mxu0
        %v10600 = vadd.f32 0.0, %v10599
        %v10601 = vpop.f32.mrb[0].mxu0
        %10602 = vmatprep.mubr.f32.mxu0 %v10393
        %10603 = vmatmul.mubr.f32.gmra.mrb[0].mxu0 %v10260
        %v10604 = vpop.f32.mrb[0].mxu0
        %v10605 = vadd.f32 0.0, %v10604
        %v10606 = vpop.f32.mrb[0].mxu0
        %10607 = vmatprep.mubr.f32.mxu0 %v10395
        %10608 = vmatmul.mubr.f32.gmra.mrb[0].mxu0 %v10265
        %v10609 = vpop.f32.mrb[0].mxu0
        %v10610 = vadd.f32 0.0, %v10609
        %v10611 = vpop.f32.mrb[0].mxu0
        %10612 = vmatprep.mubr.f32.mxu0 %v10397
        %10613 = vmatmul.mubr.f32.gmra.mrb[0].mxu0 %v10270
        %v10614 = vpop.f32.mrb[0].mxu0
        %v10615 = vadd.f32 0.0, %v10614
        %v10616 = vpop.f32.mrb[0].mxu0
        %10617 = vmatprep.mubr.f32.mxu0 %v10399
        %10618 = vmatmul.mubr.f32.gmra.mrb[0].mxu0 %v10275
        %v10619 = vpop.f32.mrb[0].mxu0
        %v10620 = vadd.f32 0.0, %v10619
        %v10621 = vpop.f32.mrb[0].mxu0
        %10622 = vmatprep.mubr.f32.mxu0 %v10401
        %10623 = vmatmul.mubr.f32.gmra.mrb[0].mxu0 %v10280
        %v10624 = vpop.f32.mrb[0].mxu0
        %v10625 = vadd.f32 0.0, %v10624
        %v10626 = vpop.f32.mrb[0].mxu0
        %10627 = vdwg.mxu0
        %v10628 = vadd.f32 %v9963, %v10470
        %v10629 = vadd.f32 %v9964, %v10475
        %v10630 = vadd.f32 %v9965, %v10480
        %v10631 = vadd.f32 %v9966, %v10485
        %v10632 = vadd.f32 %v9967, %v10490
        %v10633 = vadd.f32 %v9968, %v10495
        %v10634 = vadd.f32 %v9969, %v10500
        %v10635 = vadd.f32 %v9970, %v10505
        %v10636 = vadd.f32 %v9971, %v10510
        %v10637 = vadd.f32 %v9972, %v10515
        %v10638 = vadd.f32 %v9973, %v10520
        %v10639 = vadd.f32 %v9974, %v10525
        %v10640 = vadd.f32 %v9975, %v10530
        %v10641 = vadd.f32 %v9976, %v10535
        %v10642 = vadd.f32 %v9977, %v10540
        %v10643 = vadd.f32 %v9978, %v10545
        %v10644 = vadd.f32 %v9979, %v10550
        %v10645 = vadd.f32 %v9980, %v10555
        %v10646 = vadd.f32 %v9981, %v10560
        %v10647 = vadd.f32 %v9982, %v10565
        %v10648 = vadd.f32 %v9983, %v10570
        %v10649 = vadd.f32 %v9984, %v10575
        %v10650 = vadd.f32 %v9985, %v10580
        %v10651 = vadd.f32 %v9986, %v10585
        %v10652 = vadd.f32 %v9987, %v10590
        %v10653 = vadd.f32 %v9988, %v10595
        %v10654 = vadd.f32 %v9989, %v10600
        %v10655 = vadd.f32 %v9990, %v10605
        %v10656 = vadd.f32 %v9991, %v10610
        %v10657 = vadd.f32 %v9992, %v10615
        %v10658 = vadd.f32 %v9993, %v10620
        %v10659 = vadd.f32 %v9994, %v10625
        %v10660 = vld [vmem:[%s6] sm:$0x1]
        %v10662 = vlaneseq
        %v10663 = vshrl.u32 %v10662, 7
        %v10664 = vsub.s32 0, %v10663
        %v10665 = vrot.slane %v10660, %v10664
        %v10667 = vadd.f32 %v10628, %v10665
        %v10668 = vadd.f32 %v10629, %v10665
        %v10669 = vadd.f32 %v10630, %v10665
        %v10670 = vadd.f32 %v10631, %v10665
        %v10671 = vadd.f32 %v10632, %v10665
        %v10672 = vadd.f32 %v10633, %v10665
        %v10673 = vadd.f32 %v10634, %v10665
        %v10674 = vadd.f32 %v10635, %v10665
        %v10675 = vadd.f32 %v10636, %v10665
        %v10676 = vadd.f32 %v10637, %v10665
        %v10677 = vadd.f32 %v10638, %v10665
        %v10678 = vadd.f32 %v10639, %v10665
        %v10679 = vadd.f32 %v10640, %v10665
        %v10680 = vadd.f32 %v10641, %v10665
        %v10681 = vadd.f32 %v10642, %v10665
        %v10682 = vadd.f32 %v10643, %v10665
        %v10683 = vadd.f32 %v10644, %v10665
        %v10684 = vadd.f32 %v10645, %v10665
        %v10685 = vadd.f32 %v10646, %v10665
        %v10686 = vadd.f32 %v10647, %v10665
        %v10687 = vadd.f32 %v10648, %v10665
        %v10688 = vadd.f32 %v10649, %v10665
        %v10689 = vadd.f32 %v10650, %v10665
        %v10690 = vadd.f32 %v10651, %v10665
        %v10691 = vadd.f32 %v10652, %v10665
        %v10692 = vadd.f32 %v10653, %v10665
        %v10693 = vadd.f32 %v10654, %v10665
        %v10694 = vadd.f32 %v10655, %v10665
        %v10695 = vadd.f32 %v10656, %v10665
        %v10696 = vadd.f32 %v10657, %v10665
        %v10697 = vadd.f32 %v10658, %v10665
        %v10698 = vadd.f32 %v10659, %v10665
        %10699 = vxpose.xlu0.b32.start [1/16] %v10667, 128
        %10700 = vxpose.xlu0.b32.cont [2/16] %v10668, 128
        %10701 = vxpose.xlu0.b32.cont [3/16] %v10669, 128
        %10702 = vxpose.xlu0.b32.cont [4/16] %v10670, 128
        %10703 = vxpose.xlu0.b32.cont [5/16] %v10671, 128
        %10704 = vxpose.xlu0.b32.cont [6/16] %v10672, 128
        %10705 = vxpose.xlu0.b32.cont [7/16] %v10673, 128
        %10706 = vxpose.xlu0.b32.cont [8/16] %v10674, 128
        %10707 = vxpose.xlu0.b32.cont [9/16] %v10675, 128
        %10708 = vxpose.xlu0.b32.cont [10/16] %v10676, 128
        %10709 = vxpose.xlu0.b32.cont [11/16] %v10677, 128
        %10710 = vxpose.xlu0.b32.cont [12/16] %v10678, 128
        %10711 = vxpose.xlu0.b32.cont [13/16] %v10679, 128
        %10712 = vxpose.xlu0.b32.cont [14/16] %v10680, 128
        %10713 = vxpose.xlu0.b32.cont [15/16] %v10681, 128
        %10714 = vxpose.xlu0.b32.end [16/16] %v10682, 128
        %v10715 = vpop.trf.xlu0
        %v10716 = vpop.trf.xlu0
        %v10717 = vpop.trf.xlu0
        %v10718 = vpop.trf.xlu0
        %v10719 = vpop.trf.xlu0
        %v10720 = vpop.trf.xlu0
        %v10721 = vpop.trf.xlu0
        %v10722 = vpop.trf.xlu0
        %v10723 = vpop.trf.xlu0
        %v10724 = vpop.trf.xlu0
        %v10725 = vpop.trf.xlu0
        %v10726 = vpop.trf.xlu0
        %v10727 = vpop.trf.xlu0
        %v10728 = vpop.trf.xlu0
        %v10729 = vpop.trf.xlu0
        %v10730 = vpop.trf.xlu0
        %10731 = vxpose.xlu0.b32.start [1/16] %v10683, 128
        %10732 = vxpose.xlu0.b32.cont [2/16] %v10684, 128
        %10733 = vxpose.xlu0.b32.cont [3/16] %v10685, 128
        %10734 = vxpose.xlu0.b32.cont [4/16] %v10686, 128
        %10735 = vxpose.xlu0.b32.cont [5/16] %v10687, 128
        %10736 = vxpose.xlu0.b32.cont [6/16] %v10688, 128
        %10737 = vxpose.xlu0.b32.cont [7/16] %v10689, 128
        %10738 = vxpose.xlu0.b32.cont [8/16] %v10690, 128
        %10739 = vxpose.xlu0.b32.cont [9/16] %v10691, 128
        %10740 = vxpose.xlu0.b32.cont [10/16] %v10692, 128
        %10741 = vxpose.xlu0.b32.cont [11/16] %v10693, 128
        %10742 = vxpose.xlu0.b32.cont [12/16] %v10694, 128
        %10743 = vxpose.xlu0.b32.cont [13/16] %v10695, 128
        %10744 = vxpose.xlu0.b32.cont [14/16] %v10696, 128
        %10745 = vxpose.xlu0.b32.cont [15/16] %v10697, 128
        %10746 = vxpose.xlu0.b32.end [16/16] %v10698, 128
        %v10747 = vpop.trf.xlu0
        %v10748 = vpop.trf.xlu0
        %v10749 = vpop.trf.xlu0
        %v10750 = vpop.trf.xlu0
        %v10751 = vpop.trf.xlu0
        %v10752 = vpop.trf.xlu0
        %v10753 = vpop.trf.xlu0
        %v10754 = vpop.trf.xlu0
        %v10755 = vpop.trf.xlu0
        %v10756 = vpop.trf.xlu0
        %v10757 = vpop.trf.xlu0
        %v10758 = vpop.trf.xlu0
        %v10759 = vpop.trf.xlu0
        %v10760 = vpop.trf.xlu0
        %v10761 = vpop.trf.xlu0
        %v10762 = vpop.trf.xlu0
        %v10763 = vlaneseq
        %v10764 = vshrl.u32 %v10763, 7
        %v10765 = vadd.s32 %v10764, 8
        %v10766 = vadd.s32 %v10764, 16
        %v10767 = vadd.s32 %v10764, 24
        %v10768 = vadd.s32 %v10764, 32
        %v10769 = vadd.s32 %v10764, 40
        %v10770 = vadd.s32 %v10764, 48
        %v10771 = vadd.s32 %v10764, 56
        %v10772 = vadd.s32 %v10764, 64
        %v10773 = vadd.s32 %v10764, 72
        %v10774 = vadd.s32 %v10764, 80
        %v10775 = vadd.s32 %v10764, 88
        %v10776 = vadd.s32 %v10764, 96
        %v10777 = vadd.s32 %v10764, 104
        %v10778 = vadd.s32 %v10764, 112
        %v10779 = vadd.s32 %v10764, 120
        %vm10780 = vcmp.ge.s32.totalorder %v10764, 10
        %vm10781 = vcmp.ge.s32.totalorder %v10765, 10
        %vm10782 = vcmp.ge.s32.totalorder %v10766, 10
        %vm10783 = vcmp.ge.s32.totalorder %v10767, 10
        %vm10784 = vcmp.ge.s32.totalorder %v10768, 10
        %vm10785 = vcmp.ge.s32.totalorder %v10769, 10
        %vm10786 = vcmp.ge.s32.totalorder %v10770, 10
        %vm10787 = vcmp.ge.s32.totalorder %v10771, 10
        %vm10788 = vcmp.ge.s32.totalorder %v10772, 10
        %vm10789 = vcmp.ge.s32.totalorder %v10773, 10
        %vm10790 = vcmp.ge.s32.totalorder %v10774, 10
        %vm10791 = vcmp.ge.s32.totalorder %v10775, 10
        %vm10792 = vcmp.ge.s32.totalorder %v10776, 10
        %vm10793 = vcmp.ge.s32.totalorder %v10777, 10
        %vm10794 = vcmp.ge.s32.totalorder %v10778, 10
        %vm10795 = vcmp.ge.s32.totalorder %v10779, 10
        %vm10796 = vcmp.lt.s32.totalorder %v10764, 13
        %vm10797 = vcmp.lt.s32.totalorder %v10765, 13
        %vm10798 = vcmp.lt.s32.totalorder %v10766, 13
        %vm10799 = vcmp.lt.s32.totalorder %v10767, 13
        %vm10800 = vcmp.lt.s32.totalorder %v10768, 13
        %vm10801 = vcmp.lt.s32.totalorder %v10769, 13
        %vm10802 = vcmp.lt.s32.totalorder %v10770, 13
        %vm10803 = vcmp.lt.s32.totalorder %v10771, 13
        %vm10804 = vcmp.lt.s32.totalorder %v10772, 13
        %vm10805 = vcmp.lt.s32.totalorder %v10773, 13
        %vm10806 = vcmp.lt.s32.totalorder %v10774, 13
        %vm10807 = vcmp.lt.s32.totalorder %v10775, 13
        %vm10808 = vcmp.lt.s32.totalorder %v10776, 13
        %vm10809 = vcmp.lt.s32.totalorder %v10777, 13
        %vm10810 = vcmp.lt.s32.totalorder %v10778, 13
        %vm10811 = vcmp.lt.s32.totalorder %v10779, 13
        %vm10812 = vmand %vm10780, %vm10796
        %vm10813 = vmand %vm10781, %vm10797
        %vm10814 = vmand %vm10782, %vm10798
        %vm10815 = vmand %vm10783, %vm10799
        %vm10816 = vmand %vm10784, %vm10800
        %vm10817 = vmand %vm10785, %vm10801
        %vm10818 = vmand %vm10786, %vm10802
        %vm10819 = vmand %vm10787, %vm10803
        %vm10820 = vmand %vm10788, %vm10804
        %vm10821 = vmand %vm10789, %vm10805
        %vm10822 = vmand %vm10790, %vm10806
        %vm10823 = vmand %vm10791, %vm10807
        %vm10824 = vmand %vm10792, %vm10808
        %vm10825 = vmand %vm10793, %vm10809
        %vm10826 = vmand %vm10794, %vm10810
        %vm10827 = vmand %vm10795, %vm10811
        %vm10828 = vcmp.ge.s32.totalorder %v10764, 3
        %vm10829 = vcmp.ge.s32.totalorder %v10765, 3
        %vm10830 = vcmp.ge.s32.totalorder %v10766, 3
        %vm10831 = vcmp.ge.s32.totalorder %v10767, 3
        %vm10832 = vcmp.ge.s32.totalorder %v10768, 3
        %vm10833 = vcmp.ge.s32.totalorder %v10769, 3
        %vm10834 = vcmp.ge.s32.totalorder %v10770, 3
        %vm10835 = vcmp.ge.s32.totalorder %v10771, 3
        %vm10836 = vcmp.ge.s32.totalorder %v10772, 3
        %vm10837 = vcmp.ge.s32.totalorder %v10773, 3
        %vm10838 = vcmp.ge.s32.totalorder %v10774, 3
        %vm10839 = vcmp.ge.s32.totalorder %v10775, 3
        %vm10840 = vcmp.ge.s32.totalorder %v10776, 3
        %vm10841 = vcmp.ge.s32.totalorder %v10777, 3
        %vm10842 = vcmp.ge.s32.totalorder %v10778, 3
        %vm10843 = vcmp.ge.s32.totalorder %v10779, 3
        %vm10844 = vcmp.lt.s32.totalorder %v10764, 6
        %vm10845 = vcmp.lt.s32.totalorder %v10765, 6
        %vm10846 = vcmp.lt.s32.totalorder %v10766, 6
        %vm10847 = vcmp.lt.s32.totalorder %v10767, 6
        %vm10848 = vcmp.lt.s32.totalorder %v10768, 6
        %vm10849 = vcmp.lt.s32.totalorder %v10769, 6
        %vm10850 = vcmp.lt.s32.totalorder %v10770, 6
        %vm10851 = vcmp.lt.s32.totalorder %v10771, 6
        %vm10852 = vcmp.lt.s32.totalorder %v10772, 6
        %vm10853 = vcmp.lt.s32.totalorder %v10773, 6
        %vm10854 = vcmp.lt.s32.totalorder %v10774, 6
        %vm10855 = vcmp.lt.s32.totalorder %v10775, 6
        %vm10856 = vcmp.lt.s32.totalorder %v10776, 6
        %vm10857 = vcmp.lt.s32.totalorder %v10777, 6
        %vm10858 = vcmp.lt.s32.totalorder %v10778, 6
        %vm10859 = vcmp.lt.s32.totalorder %v10779, 6
        %vm10860 = vmand %vm10828, %vm10844
        %vm10861 = vmand %vm10829, %vm10845
        %vm10862 = vmand %vm10830, %vm10846
        %vm10863 = vmand %vm10831, %vm10847
        %vm10864 = vmand %vm10832, %vm10848
        %vm10865 = vmand %vm10833, %vm10849
        %vm10866 = vmand %vm10834, %vm10850
        %vm10867 = vmand %vm10835, %vm10851
        %vm10868 = vmand %vm10836, %vm10852
        %vm10869 = vmand %vm10837, %vm10853
        %vm10870 = vmand %vm10838, %vm10854
        %vm10871 = vmand %vm10839, %vm10855
        %vm10872 = vmand %vm10840, %vm10856
        %vm10873 = vmand %vm10841, %vm10857
        %vm10874 = vmand %vm10842, %vm10858
        %vm10875 = vmand %vm10843, %vm10859
        %v10876 = vxor.u32 %v10715, 2147483648
        %v10877 = vxor.u32 %v10747, 2147483648
        %v10878 = vxor.u32 %v10716, 2147483648
        %v10879 = vxor.u32 %v10748, 2147483648
        %v10880 = vxor.u32 %v10717, 2147483648
        %v10881 = vxor.u32 %v10749, 2147483648
        %v10882 = vxor.u32 %v10718, 2147483648
        %v10883 = vxor.u32 %v10750, 2147483648
        %v10884 = vxor.u32 %v10719, 2147483648
        %v10885 = vxor.u32 %v10751, 2147483648
        %v10886 = vxor.u32 %v10720, 2147483648
        %v10887 = vxor.u32 %v10752, 2147483648
        %v10888 = vxor.u32 %v10721, 2147483648
        %v10889 = vxor.u32 %v10753, 2147483648
        %v10890 = vxor.u32 %v10722, 2147483648
        %v10891 = vxor.u32 %v10754, 2147483648
        %v10892 = vxor.u32 %v10723, 2147483648
        %v10893 = vxor.u32 %v10755, 2147483648
        %v10894 = vxor.u32 %v10724, 2147483648
        %v10895 = vxor.u32 %v10756, 2147483648
        %v10896 = vxor.u32 %v10725, 2147483648
        %v10897 = vxor.u32 %v10757, 2147483648
        %v10898 = vxor.u32 %v10726, 2147483648
        %v10899 = vxor.u32 %v10758, 2147483648
        %v10900 = vxor.u32 %v10727, 2147483648
        %v10901 = vxor.u32 %v10759, 2147483648
        %v10902 = vxor.u32 %v10728, 2147483648
        %v10903 = vxor.u32 %v10760, 2147483648
        %v10904 = vxor.u32 %v10729, 2147483648
        %v10905 = vxor.u32 %v10761, 2147483648
        %v10906 = vxor.u32 %v10730, 2147483648
        %v10907 = vxor.u32 %v10762, 2147483648
        %v10908 = vmul.f32 %v10876, 1.442695
        %v10909 = vpow.pop %v10908
        %v10910 = vmul.f32 %v10877, 1.442695
        %v10911 = vpow.pop %v10910
        %v10912 = vmul.f32 %v10878, 1.442695
        %v10913 = vpow.pop %v10912
        %v10914 = vmul.f32 %v10879, 1.442695
        %v10915 = vpow.pop %v10914
        %v10916 = vmul.f32 %v10880, 1.442695
        %v10917 = vpow.pop %v10916
        %v10918 = vmul.f32 %v10881, 1.442695
        %v10919 = vpow.pop %v10918
        %v10920 = vmul.f32 %v10882, 1.442695
        %v10921 = vpow.pop %v10920
        %v10922 = vmul.f32 %v10883, 1.442695
        %v10923 = vpow.pop %v10922
        %v10924 = vmul.f32 %v10884, 1.442695
        %v10925 = vpow.pop %v10924
        %v10926 = vmul.f32 %v10885, 1.442695
        %v10927 = vpow.pop %v10926
        %v10928 = vmul.f32 %v10886, 1.442695
        %v10929 = vpow.pop %v10928
        %v10930 = vmul.f32 %v10887, 1.442695
        %v10931 = vpow.pop %v10930
        %v10932 = vmul.f32 %v10888, 1.442695
        %v10933 = vpow.pop %v10932
        %v10934 = vmul.f32 %v10889, 1.442695
        %v10935 = vpow.pop %v10934
        %v10936 = vmul.f32 %v10890, 1.442695
        %v10937 = vpow.pop %v10936
        %v10938 = vmul.f32 %v10891, 1.442695
        %v10939 = vpow.pop %v10938
        %v10940 = vmul.f32 %v10892, 1.442695
        %v10941 = vpow.pop %v10940
        %v10942 = vmul.f32 %v10893, 1.442695
        %v10943 = vpow.pop %v10942
        %v10944 = vmul.f32 %v10894, 1.442695
        %v10945 = vpow.pop %v10944
        %v10946 = vmul.f32 %v10895, 1.442695
        %v10947 = vpow.pop %v10946
        %v10948 = vmul.f32 %v10896, 1.442695
        %v10949 = vpow.pop %v10948
        %v10950 = vmul.f32 %v10897, 1.442695
        %v10951 = vpow.pop %v10950
        %v10952 = vmul.f32 %v10898, 1.442695
        %v10953 = vpow.pop %v10952
        %v10954 = vmul.f32 %v10899, 1.442695
        %v10955 = vpow.pop %v10954
        %v10956 = vmul.f32 %v10900, 1.442695
        %v10957 = vpow.pop %v10956
        %v10958 = vmul.f32 %v10901, 1.442695
        %v10959 = vpow.pop %v10958
        %v10960 = vmul.f32 %v10902, 1.442695
        %v10961 = vpow.pop %v10960
        %v10962 = vmul.f32 %v10903, 1.442695
        %v10963 = vpow.pop %v10962
        %v10964 = vmul.f32 %v10904, 1.442695
        %v10965 = vpow.pop %v10964
        %v10966 = vmul.f32 %v10905, 1.442695
        %v10967 = vpow.pop %v10966
        %v10968 = vmul.f32 %v10906, 1.442695
        %v10969 = vpow.pop %v10968
        %v10970 = vmul.f32 %v10907, 1.442695
        %v10971 = vpow.pop %v10970
        %v10972 = vadd.f32 %v10909, 1.0
        %v10973 = vadd.f32 %v10911, 1.0
        %v10974 = vadd.f32 %v10913, 1.0
        %v10975 = vadd.f32 %v10915, 1.0
        %v10976 = vadd.f32 %v10917, 1.0
        %v10977 = vadd.f32 %v10919, 1.0
        %v10978 = vadd.f32 %v10921, 1.0
        %v10979 = vadd.f32 %v10923, 1.0
        %v10980 = vadd.f32 %v10925, 1.0
        %v10981 = vadd.f32 %v10927, 1.0
        %v10982 = vadd.f32 %v10929, 1.0
        %v10983 = vadd.f32 %v10931, 1.0
        %v10984 = vadd.f32 %v10933, 1.0
        %v10985 = vadd.f32 %v10935, 1.0
        %v10986 = vadd.f32 %v10937, 1.0
        %v10987 = vadd.f32 %v10939, 1.0
        %v10988 = vadd.f32 %v10941, 1.0
        %v10989 = vadd.f32 %v10943, 1.0
        %v10990 = vadd.f32 %v10945, 1.0
        %v10991 = vadd.f32 %v10947, 1.0
        %v10992 = vadd.f32 %v10949, 1.0
        %v10993 = vadd.f32 %v10951, 1.0
        %v10994 = vadd.f32 %v10953, 1.0
        %v10995 = vadd.f32 %v10955, 1.0
        %v10996 = vadd.f32 %v10957, 1.0
        %v10997 = vadd.f32 %v10959, 1.0
        %v10998 = vadd.f32 %v10961, 1.0
        %v10999 = vadd.f32 %v10963, 1.0
        %v11000 = vadd.f32 %v10965, 1.0
        %v11001 = vadd.f32 %v10967, 1.0
        %v11002 = vadd.f32 %v10969, 1.0
        %v11003 = vadd.f32 %v10971, 1.0
        %v11004 = vrcp.pop %v10972
        %v11005 = vmul.f32 1.0, %v11004
        %v11006 = vrcp.pop %v10973
        %v11007 = vmul.f32 1.0, %v11006
        %v11008 = vrcp.pop %v10974
        %v11009 = vmul.f32 1.0, %v11008
        %v11010 = vrcp.pop %v10975
        %v11011 = vmul.f32 1.0, %v11010
        %v11012 = vrcp.pop %v10976
        %v11013 = vmul.f32 1.0, %v11012
        %v11014 = vrcp.pop %v10977
        %v11015 = vmul.f32 1.0, %v11014
        %v11016 = vrcp.pop %v10978
        %v11017 = vmul.f32 1.0, %v11016
        %v11018 = vrcp.pop %v10979
        %v11019 = vmul.f32 1.0, %v11018
        %v11020 = vrcp.pop %v10980
        %v11021 = vmul.f32 1.0, %v11020
        %v11022 = vrcp.pop %v10981
        %v11023 = vmul.f32 1.0, %v11022
        %v11024 = vrcp.pop %v10982
        %v11025 = vmul.f32 1.0, %v11024
        %v11026 = vrcp.pop %v10983
        %v11027 = vmul.f32 1.0, %v11026
        %v11028 = vrcp.pop %v10984
        %v11029 = vmul.f32 1.0, %v11028
        %v11030 = vrcp.pop %v10985
        %v11031 = vmul.f32 1.0, %v11030
        %v11032 = vrcp.pop %v10986
        %v11033 = vmul.f32 1.0, %v11032
        %v11034 = vrcp.pop %v10987
        %v11035 = vmul.f32 1.0, %v11034
        %v11036 = vrcp.pop %v10988
        %v11037 = vmul.f32 1.0, %v11036
        %v11038 = vrcp.pop %v10989
        %v11039 = vmul.f32 1.0, %v11038
        %v11040 = vrcp.pop %v10990
        %v11041 = vmul.f32 1.0, %v11040
        %v11042 = vrcp.pop %v10991
        %v11043 = vmul.f32 1.0, %v11042
        %v11044 = vrcp.pop %v10992
        %v11045 = vmul.f32 1.0, %v11044
        %v11046 = vrcp.pop %v10993
        %v11047 = vmul.f32 1.0, %v11046
        %v11048 = vrcp.pop %v10994
        %v11049 = vmul.f32 1.0, %v11048
        %v11050 = vrcp.pop %v10995
        %v11051 = vmul.f32 1.0, %v11050
        %v11052 = vrcp.pop %v10996
        %v11053 = vmul.f32 1.0, %v11052
        %v11054 = vrcp.pop %v10997
        %v11055 = vmul.f32 1.0, %v11054
        %v11056 = vrcp.pop %v10998
        %v11057 = vmul.f32 1.0, %v11056
        %v11058 = vrcp.pop %v10999
        %v11059 = vmul.f32 1.0, %v11058
        %v11060 = vrcp.pop %v11000
        %v11061 = vmul.f32 1.0, %v11060
        %v11062 = vrcp.pop %v11001
        %v11063 = vmul.f32 1.0, %v11062
        %v11064 = vrcp.pop %v11002
        %v11065 = vmul.f32 1.0, %v11064
        %v11066 = vrcp.pop %v11003
        %v11067 = vmul.f32 1.0, %v11066
        %v11068 = vmul.f32 %v10715, 1.442695
        %v11069 = vpow.pop %v11068
        %v11070 = vmul.f32 %v10747, 1.442695
        %v11071 = vpow.pop %v11070
        %v11072 = vmul.f32 %v10716, 1.442695
        %v11073 = vpow.pop %v11072
        %v11074 = vmul.f32 %v10748, 1.442695
        %v11075 = vpow.pop %v11074
        %v11076 = vmul.f32 %v10717, 1.442695
        %v11077 = vpow.pop %v11076
        %v11078 = vmul.f32 %v10749, 1.442695
        %v11079 = vpow.pop %v11078
        %v11080 = vmul.f32 %v10718, 1.442695
        %v11081 = vpow.pop %v11080
        %v11082 = vmul.f32 %v10750, 1.442695
        %v11083 = vpow.pop %v11082
        %v11084 = vmul.f32 %v10719, 1.442695
        %v11085 = vpow.pop %v11084
        %v11086 = vmul.f32 %v10751, 1.442695
        %v11087 = vpow.pop %v11086
        %v11088 = vmul.f32 %v10720, 1.442695
        %v11089 = vpow.pop %v11088
        %v11090 = vmul.f32 %v10752, 1.442695
        %v11091 = vpow.pop %v11090
        %v11092 = vmul.f32 %v10721, 1.442695
        %v11093 = vpow.pop %v11092
        %v11094 = vmul.f32 %v10753, 1.442695
        %v11095 = vpow.pop %v11094
        %v11096 = vmul.f32 %v10722, 1.442695
        %v11097 = vpow.pop %v11096
        %v11098 = vmul.f32 %v10754, 1.442695
        %v11099 = vpow.pop %v11098
        %v11100 = vmul.f32 %v10723, 1.442695
        %v11101 = vpow.pop %v11100
        %v11102 = vmul.f32 %v10755, 1.442695
        %v11103 = vpow.pop %v11102
        %v11104 = vmul.f32 %v10724, 1.442695
        %v11105 = vpow.pop %v11104
        %v11106 = vmul.f32 %v10756, 1.442695
        %v11107 = vpow.pop %v11106
        %v11108 = vmul.f32 %v10725, 1.442695
        %v11109 = vpow.pop %v11108
        %v11110 = vmul.f32 %v10757, 1.442695
        %v11111 = vpow.pop %v11110
        %v11112 = vmul.f32 %v10726, 1.442695
        %v11113 = vpow.pop %v11112
        %v11114 = vmul.f32 %v10758, 1.442695
        %v11115 = vpow.pop %v11114
        %v11116 = vmul.f32 %v10727, 1.442695
        %v11117 = vpow.pop %v11116
        %v11118 = vmul.f32 %v10759, 1.442695
        %v11119 = vpow.pop %v11118
        %v11120 = vmul.f32 %v10728, 1.442695
        %v11121 = vpow.pop %v11120
        %v11122 = vmul.f32 %v10760, 1.442695
        %v11123 = vpow.pop %v11122
        %v11124 = vmul.f32 %v10729, 1.442695
        %v11125 = vpow.pop %v11124
        %v11126 = vmul.f32 %v10761, 1.442695
        %v11127 = vpow.pop %v11126
        %v11128 = vmul.f32 %v10730, 1.442695
        %v11129 = vpow.pop %v11128
        %v11130 = vmul.f32 %v10762, 1.442695
        %v11131 = vpow.pop %v11130
        %v11132 = vsel %vm10860, %v11069, %v10715
        %v11133 = vsel %vm10860, %v11071, %v10747
        %v11134 = vsel %vm10861, %v11073, %v10716
        %v11135 = vsel %vm10861, %v11075, %v10748
        %v11136 = vsel %vm10862, %v11077, %v10717
        %v11137 = vsel %vm10862, %v11079, %v10749
        %v11138 = vsel %vm10863, %v11081, %v10718
        %v11139 = vsel %vm10863, %v11083, %v10750
        %v11140 = vsel %vm10864, %v11085, %v10719
        %v11141 = vsel %vm10864, %v11087, %v10751
        %v11142 = vsel %vm10865, %v11089, %v10720
        %v11143 = vsel %vm10865, %v11091, %v10752
        %v11144 = vsel %vm10866, %v11093, %v10721
        %v11145 = vsel %vm10866, %v11095, %v10753
        %v11146 = vsel %vm10867, %v11097, %v10722
        %v11147 = vsel %vm10867, %v11099, %v10754
        %v11148 = vsel %vm10868, %v11101, %v10723
        %v11149 = vsel %vm10868, %v11103, %v10755
        %v11150 = vsel %vm10869, %v11105, %v10724
        %v11151 = vsel %vm10869, %v11107, %v10756
        %v11152 = vsel %vm10870, %v11109, %v10725
        %v11153 = vsel %vm10870, %v11111, %v10757
        %v11154 = vsel %vm10871, %v11113, %v10726
        %v11155 = vsel %vm10871, %v11115, %v10758
        %v11156 = vsel %vm10872, %v11117, %v10727
        %v11157 = vsel %vm10872, %v11119, %v10759
        %v11158 = vsel %vm10873, %v11121, %v10728
        %v11159 = vsel %vm10873, %v11123, %v10760
        %v11160 = vsel %vm10874, %v11125, %v10729
        %v11161 = vsel %vm10874, %v11127, %v10761
        %v11162 = vsel %vm10875, %v11129, %v10730
        %v11163 = vsel %vm10875, %v11131, %v10762
        %v11164 = vsel %vm10812, %v11005, %v11132
        %v11165 = vsel %vm10812, %v11007, %v11133
        %v11166 = vsel %vm10813, %v11009, %v11134
        %v11167 = vsel %vm10813, %v11011, %v11135
        %v11168 = vsel %vm10814, %v11013, %v11136
        %v11169 = vsel %vm10814, %v11015, %v11137
        %v11170 = vsel %vm10815, %v11017, %v11138
        %v11171 = vsel %vm10815, %v11019, %v11139
        %v11172 = vsel %vm10816, %v11021, %v11140
        %v11173 = vsel %vm10816, %v11023, %v11141
        %v11174 = vsel %vm10817, %v11025, %v11142
        %v11175 = vsel %vm10817, %v11027, %v11143
        %v11176 = vsel %vm10818, %v11029, %v11144
        %v11177 = vsel %vm10818, %v11031, %v11145
        %v11178 = vsel %vm10819, %v11033, %v11146
        %v11179 = vsel %vm10819, %v11035, %v11147
        %v11180 = vsel %vm10820, %v11037, %v11148
        %v11181 = vsel %vm10820, %v11039, %v11149
        %v11182 = vsel %vm10821, %v11041, %v11150
        %v11183 = vsel %vm10821, %v11043, %v11151
        %v11184 = vsel %vm10822, %v11045, %v11152
        %v11185 = vsel %vm10822, %v11047, %v11153
        %v11186 = vsel %vm10823, %v11049, %v11154
        %v11187 = vsel %vm10823, %v11051, %v11155
        %v11188 = vsel %vm10824, %v11053, %v11156
        %v11189 = vsel %vm10824, %v11055, %v11157
        %v11190 = vsel %vm10825, %v11057, %v11158
        %v11191 = vsel %vm10825, %v11059, %v11159
        %v11192 = vsel %vm10826, %v11061, %v11160
        %v11193 = vsel %vm10826, %v11063, %v11161
        %v11194 = vsel %vm10827, %v11065, %v11162
        %v11195 = vsel %vm10827, %v11067, %v11163
        %11196 = vst [vmem:[%s325] sm:$0xff] %v11164
        %11197 = vst [vmem:[%s325 + $0x8] sm:$0xff] %v11165
        %11198 = vst [vmem:[%s325 + $0x10] sm:$0xff] %v11166
        %11199 = vst [vmem:[%s325 + $0x18] sm:$0xff] %v11167
        %11200 = vst [vmem:[%s325 + $0x20] sm:$0xff] %v11168
        %11201 = vst [vmem:[%s325 + $0x28] sm:$0xff] %v11169
        %11202 = vst [vmem:[%s325 + $0x30] sm:$0xff] %v11170
        %11203 = vst [vmem:[%s325 + $0x38] sm:$0xff] %v11171
        %11204 = vst [vmem:[%s325 + $0x40] sm:$0xff] %v11172
        %11205 = vst [vmem:[%s325 + $0x48] sm:$0xff] %v11173
        %11206 = vst [vmem:[%s325 + $0x50] sm:$0xff] %v11174
        %11207 = vst [vmem:[%s325 + $0x58] sm:$0xff] %v11175
        %11208 = vst [vmem:[%s325 + $0x60] sm:$0xff] %v11176
        %11209 = vst [vmem:[%s325 + $0x68] sm:$0xff] %v11177
        %11210 = vst [vmem:[%s325 + $0x70] sm:$0xff] %v11178
        %11211 = vst [vmem:[%s325 + $0x78] sm:$0xff] %v11179
        %11212 = vst [vmem:[%s325 + $0x80] sm:$0xff] %v11180
        %11213 = vst [vmem:[%s325 + $0x88] sm:$0xff] %v11181
        %11214 = vst [vmem:[%s325 + $0x90] sm:$0xff] %v11182
        %11215 = vst [vmem:[%s325 + $0x98] sm:$0xff] %v11183
        %11216 = vst [vmem:[%s325 + $0xa0] sm:$0xff] %v11184
        %11217 = vst [vmem:[%s325 + $0xa8] sm:$0xff] %v11185
        %11218 = vst [vmem:[%s325 + $0xb0] sm:$0xff] %v11186
        %11219 = vst [vmem:[%s325 + $0xb8] sm:$0xff] %v11187
        %11220 = vst [vmem:[%s325 + $0xc0] sm:$0xff] %v11188
        %11221 = vst [vmem:[%s325 + $0xc8] sm:$0xff] %v11189
        %11222 = vst [vmem:[%s325 + $0xd0] sm:$0xff] %v11190
        %11223 = vst [vmem:[%s325 + $0xd8] sm:$0xff] %v11191
        %11224 = vst [vmem:[%s325 + $0xe0] sm:$0xff] %v11192
        %11225 = vst [vmem:[%s325 + $0xe8] sm:$0xff] %v11193
        %11226 = vst [vmem:[%s325 + $0xf0] sm:$0xff] %v11194
        %11227 = vst [vmem:[%s325 + $0xf8] sm:$0xff] %v11195
        %s11228 = sand.u32 %s185, 1
        %s11229 = scalar_lea.sflag [#allocation9], %s11228
        %s11230 = sand.u32 %s185, 1
        %s11231 = smul.addr %s11230, 256
        %s11232 = scalar_lea.vmem [#allocation13], %s11231
        // Predicated region
        $region61: #{tpu_custom_call.1} parent=47 // pred_check
          %p11233 = pneg %p195
        $region62: #{tpu_custom_call.1} parent=47 // pred_check_branch
          %11235 = sbr.rel (%p11233) target = $region64
        $region63: #{tpu_custom_call.1} parent=47 // pred_region
          %s11237 = ssub.s32 4096, 4096
          %11238 = vsyncadd %s11229, %s11237
          %s11239 = smul.addr %s25, 32
          %s11240 = smul.addr %s11239, 128
          %s11241 = scalar_lea.hbm %s7, %s11240
          %s11242 = sshll.u32 %s11232, 4
          %s11243 = int_to_ptr.vmem [resolvable:$true] %s11242
          %11248 = dma.vmem_to_hbm [thread:$0]  %s11243, 4096, %s11241, %s11229, 256, 256, 16
        $region64: #{tpu_custom_call.1} parent=47 // pred_fallthru
          _
      $region48: #{tpu_custom_call.1} parent=5 // pred_fallthru
        _
      %p11249 = scmp.le.s32.totalorder 2, %s20
      // Predicated region
      $region65: #{tpu_custom_call.1} parent=5 // pred_check
        %p11250 = pneg %p11249
      $region66: #{tpu_custom_call.1} parent=5 // pred_check_branch
        %11252 = sbr.rel (%p11250) target = $region68
      $region67: #{tpu_custom_call.1} parent=5 // pred_region
        %s11253 = ssub.s32 %s20, 2
        // Predicated region
        $region69: #{tpu_custom_call.1} parent=67 // pred_check
          %p11254 = pneg %p201
        $region70: #{tpu_custom_call.1} parent=67 // pred_check_branch
          %11256 = sbr.rel (%p11254) target = $region72
        $region71: #{tpu_custom_call.1} parent=67 // pred_region
          %s11257 = sand.u32 %s186, 1
          %s11258 = scalar_lea.sflag [#allocation9], %s11257
          %s11259 = sand.u32 %s186, 1
          %s11260 = smul.addr %s11259, 256
          %s11261 = scalar_lea.vmem [#allocation13], %s11260
          %11262 = dma.done %s11258, 4096
        $region72: #{tpu_custom_call.1} parent=67 // pred_fallthru
          _
      $region68: #{tpu_custom_call.1} parent=5 // pred_fallthru
        _
    $region6: #{tpu_custom_call.1} parent=1 // loop_footer
      %s24 = sadd.s32 1, %s20
    $region7: #{tpu_custom_call.1} parent=1 // loop_footer_branch
      %19 = sbr.rel target = $region3
    $region8: #{tpu_custom_call.1} parent=1 // loop_exit
      _
    %11263 = vsyncpa [#allocation8], 1
    %s11264 = scalar_lea.sflag [#allocation8], 1
    %11265 = vsyncpa %s11264, 1
    %11266 = vsyncpa [#allocation11], 1
    %11267 = vsyncpa [#allocation9], 1
    %s11268 = scalar_lea.sflag [#allocation9], 1
    %11269 = vsyncpa %s11268, 1

</llo_original>
